<compile_context>
chip_gen: v7x
topology: tpu7x:2x2x1
jax: 0.10.0
libtpu: 0.0.40
codegen_flags: <defaults>
</compile_context>

<pallas_src>
import functools

import jax
import jax.numpy as jnp
from jax.experimental import pallas as pl
from jax.experimental.pallas import tpu as pltpu


FEAT_IN = 25       # module's Linear(25, ...) input
FEAT_PAD = 32      # padded feature dim fed to the kernel (col 25 = bias "ones" column)
HID = 1024
OUT = 4


def _cdiv(a, b):
    return (a + b - 1) // b


def _round_up(n, m):
    return ((n + m - 1) // m) * m


# ----------------------------------------------------------------------------
# Kernel: one batch tile per grid step; all weights resident in VMEM.
#   inputs : x (bf16, bias column folded), w1_aug (bf16), w2_q (int8), s2 (f32),
#            b2 (f32), w3 (bf16), b3 (f32)
#   scratch: w2b (bf16)  -- dequantized w2, written once at grid step 0, persists.
# ----------------------------------------------------------------------------
def actor_mlp_kernel(x_ref, w1_ref, w2q_ref, s2_ref, b2_ref, w3_ref, b3_ref,
                     o_ref, w2b_ref):
    # One-time dequant of int8 w2 -> bf16 (per-output-channel scale baked in) into a
    # VMEM scratch that persists across batch tiles. Requires the batch axis to be
    # "arbitrary" (see CompilerParams below).
    @pl.when(pl.program_id(0) == 0)
    def _():
        w2b_ref[...] = (
            w2q_ref[...].astype(jnp.float32) * s2_ref[...]
        ).astype(jnp.bfloat16)

    x = x_ref[...]                                                     # (tb, 32) bf16

    # Layer 1: bias already folded into w1 row 25 (x col 25 is 1.0).
    h1 = jnp.dot(x, w1_ref[...], preferred_element_type=jnp.float32)   # (tb, 1024) f32
    h1 = jnp.maximum(h1, 0.0)                                          # ReLU, f32

    # Layer 2: bf16 MXU against the dequantized resident weights, f32 accumulation.
    h2 = jnp.dot(h1.astype(jnp.bfloat16), w2b_ref[...],
                 preferred_element_type=jnp.float32)                   # (tb, 1024) f32
    h2 = jnp.maximum(h2 + b2_ref[...], 0.0)                            # ReLU, f32

    # Layer 3 + Tanh.
    h3 = jnp.dot(h2.astype(jnp.bfloat16), w3_ref[...],
                 preferred_element_type=jnp.float32)                   # (tb, 4) f32
    o_ref[...] = jnp.tanh(h3 + b3_ref[...])                            # Tanh, f32


# ----------------------------------------------------------------------------
# Wrapper: pads batch/feature dims, builds the batch grid, keeps weights resident.
# ----------------------------------------------------------------------------
@functools.partial(jax.jit, static_argnames=("batch_tile",))
def actor_forward(x, w1, w2q, s2, b2, w3, b3, *, batch_tile=512):
    B, F = x.shape
    assert F == FEAT_IN

    # Balanced batch tiling: padding bounded by ~tile-granularity, not up to tile-1.
    ntiles = _cdiv(B, batch_tile)
    tb = _round_up(_cdiv(B, ntiles), 16)       # multiple of 16 (bf16 sublane tile)
    Bp = _round_up(B, tb)                      # padded batch, multiple of tb

    # Augment x with a ones column (bias folding) + zero pad to 32 features; bf16.
    ones_col = jnp.ones((B, 1), x.dtype)
    x_aug = jnp.concatenate([x, ones_col], axis=1)                     # (B, 26)
    x_p = jnp.pad(
        x_aug, ((0, Bp - B), (0, FEAT_PAD - FEAT_IN - 1))
    ).astype(jnp.bfloat16)                                             # (Bp, 32) bf16

    grid = (Bp // tb,)
    const = lambda i: (0, 0)                   # weights/biases: fetched once, stay in VMEM

    out_p = pl.pallas_call(
        actor_mlp_kernel,
        out_shape=jax.ShapeDtypeStruct((Bp, OUT), jnp.float32),
        grid=grid,
        in_specs=[
            pl.BlockSpec((tb, FEAT_PAD), lambda i: (i, 0)),   # x tile (bf16)
            pl.BlockSpec((FEAT_PAD, HID), const),             # w1_aug (bf16, b1 folded)
            pl.BlockSpec((HID, HID), const),                  # w2 quantized (int8)
            pl.BlockSpec((1, HID), const),                    # w2 per-channel scale (f32)
            pl.BlockSpec((1, HID), const),                    # b2 (f32)
            pl.BlockSpec((HID, OUT), const),                  # w3 (bf16)
            pl.BlockSpec((1, OUT), const),                    # b3 (f32)
        ],
        out_specs=pl.BlockSpec((tb, OUT), lambda i: (i, 0)),
        scratch_shapes=[pltpu.VMEM((HID, HID), jnp.bfloat16)],  # dequantized w2
        compiler_params=pltpu.CompilerParams(
            # "arbitrary": the program_id==0 dequant-into-scratch must run before any
            # other tile; a megacore-parallel split would skip it on the second core.
            dimension_semantics=("arbitrary",),
            vmem_limit_bytes=32 << 20,
        ),
    )(x_p, w1, w2q, s2, b2, w3, b3)

    return out_p[:B]


# ----------------------------------------------------------------------------
# Parameter init (matches nn.init.xavier_uniform_ / zeros_ of the PyTorch module).
# Returns the kernel-format params (bf16 w1/w3, int8 w2 + f32 scales, b1 folded into w1)
# and f32 "master" params for reference checking.
# ----------------------------------------------------------------------------
def xavier_uniform(key, fan_in, fan_out):
    bound = (6.0 / (fan_in + fan_out)) ** 0.5
    return jax.random.uniform(
        key, (fan_in, fan_out), dtype=jnp.float32, minval=-bound, maxval=bound
    )


def init_actor_params(key):
    k1, k2, k3 = jax.random.split(key, 3)
    w1_f32 = xavier_uniform(k1, FEAT_IN, HID)          # (25, 1024)
    w2_f32 = xavier_uniform(k2, HID, HID)              # (1024, 1024)
    w3_f32 = xavier_uniform(k3, HID, OUT)              # (1024, 4)
    b1 = jnp.zeros((1, HID), jnp.float32)
    b2 = jnp.zeros((1, HID), jnp.float32)
    b3 = jnp.zeros((1, OUT), jnp.float32)

    # w1 augmented: rows 0..24 = w1, row 25 = b1 (matches the ones column in x),
    # rows 26..31 = zero padding. Stored in bf16.
    w1_aug = jnp.concatenate(
        [w1_f32, b1, jnp.zeros((FEAT_PAD - FEAT_IN - 1, HID), jnp.float32)], axis=0
    )
    w1_k = w1_aug.astype(jnp.bfloat16)                 # (32, 1024) bf16

    # w2: symmetric int8 quantization with per-output-channel scales.
    s2 = jnp.maximum(jnp.max(jnp.abs(w2_f32), axis=0, keepdims=True), 1e-8) / 127.0
    w2_q = jnp.clip(jnp.round(w2_f32 / s2), -127, 127).astype(jnp.int8)

    w3_k = w3_f32.astype(jnp.bfloat16)                 # (1024, 4) bf16

    kernel_params = (w1_k, w2_q, s2, b2, w3_k, b3)
    master_params = (w1_f32, b1, w2_f32, b2, w3_f32, b3)
    return kernel_params, master_params


# ----------------------------------------------------------------------------
# References.
# ----------------------------------------------------------------------------
def actor_forward_ref_quant(x, w1_aug, w2q, s2, b2, w3, b3):
    """Pure-JAX reference mirroring the kernel's exact dtype handling."""
    Bn = x.shape[0]
    x_aug = jnp.concatenate([x, jnp.ones((Bn, 1), x.dtype)], axis=1)
    x_aug = jnp.pad(x_aug, ((0, 0), (0, FEAT_PAD - FEAT_IN - 1))).astype(jnp.bfloat16)
    w2_deq = (w2q.astype(jnp.float32) * s2).astype(jnp.bfloat16)

    h1 = jnp.maximum(jnp.dot(x_aug, w1_aug, preferred_element_type=jnp.float32), 0.0)
    h2 = jnp.maximum(
        jnp.dot(h1.astype(jnp.bfloat16), w2_deq, preferred_element_type=jnp.float32) + b2,
        0.0,
    )
    return jnp.tanh(
        jnp.dot(h2.astype(jnp.bfloat16), w3, preferred_element_type=jnp.float32) + b3
    )


def actor_forward_ref_f32(x, w1, b1, w2, b2, w3, b3):
    """Full-precision reference of the PyTorch trunk (f32 master weights)."""
    h1 = jnp.maximum(x @ w1 + b1, 0.0)
    h2 = jnp.maximum(h1 @ w2 + b2, 0.0)
    return jnp.tanh(h2 @ w3 + b3)


if __name__ == "__main__":
    key = jax.random.PRNGKey(0)
    pkey, xkey = jax.random.split(key)

    kernel_params, master_params = init_actor_params(pkey)

    # Small batch of 25-dim state vectors (matches the module's Linear(25, ...) input).
    B = 2
    x = jax.random.normal(xkey, (B, FEAT_IN), dtype=jnp.float32)

    out = actor_forward(x, *kernel_params)
    out = jax.block_until_ready(out)

    assert out.shape == (B, OUT) and out.dtype == jnp.float32

    # Tight check vs a reference with identical bf16/int8/f32 dtype handling.
    ref_q = actor_forward_ref_quant(x, *kernel_params)
    assert jnp.allclose(out, ref_q, atol=2e-3, rtol=2e-3), \
        "Pallas output mismatch vs quant-matched reference"

    # Loose check vs the full f32 PyTorch-equivalent reference (bf16/int8 weight quant).
    ref_f32 = actor_forward_ref_f32(x, *master_params)
    assert jnp.allclose(out, ref_f32, atol=5e-2, rtol=5e-2), \
        "Pallas output mismatch vs f32 reference"

    print("KERNEL_OK")
</pallas_src>

<mosaic_0001>
module attributes {stable_mosaic.version = 11 : i64} {
  func.func @actor_mlp_kernel(%arg0: i32, %arg1: memref<16x32xbf16, #tpu.memory_space<vmem>>, %arg2: memref<32x1024xbf16, #tpu.memory_space<vmem>>, %arg3: memref<1024x1024xi8, #tpu.memory_space<vmem>>, %arg4: memref<1x1024xf32, #tpu.memory_space<vmem>>, %arg5: memref<1x1024xf32, #tpu.memory_space<vmem>>, %arg6: memref<1024x4xbf16, #tpu.memory_space<vmem>>, %arg7: memref<1x4xf32, #tpu.memory_space<vmem>>, %arg8: memref<16x4xf32, #tpu.memory_space<vmem>>, %arg9: memref<1024x1024xbf16, #tpu.memory_space<vmem>>) attributes {dimension_semantics = [#tpu.dimension_semantics<arbitrary>], iteration_bounds = array<i64: 1>, scalar_prefetch = 0 : i64, scratch_operands = 1 : i64, tpu.core_type = #tpu.core_type<tc>, window_params = [{transform_indices = @transform_0, window_bounds = array<i64: 16, 32>}, {pipeline_mode = #tpu.pipeline_mode<synchronous>, transform_indices = @transform_1, window_bounds = array<i64: 32, 1024>}, {pipeline_mode = #tpu.pipeline_mode<synchronous>, transform_indices = @transform_2, window_bounds = array<i64: 1024, 1024>}, {pipeline_mode = #tpu.pipeline_mode<synchronous>, transform_indices = @transform_3, window_bounds = array<i64: 1, 1024>}, {pipeline_mode = #tpu.pipeline_mode<synchronous>, transform_indices = @transform_4, window_bounds = array<i64: 1, 1024>}, {pipeline_mode = #tpu.pipeline_mode<synchronous>, transform_indices = @transform_5, window_bounds = array<i64: 1024, 4>}, {pipeline_mode = #tpu.pipeline_mode<synchronous>, transform_indices = @transform_6, window_bounds = array<i64: 1, 4>}, {transform_indices = @transform_7, window_bounds = array<i64: 16, 4>}]} {
    %c0_i32 = arith.constant 0 : i32
    %0 = arith.cmpi eq, %arg0, %c0_i32 : i32
    %1 = arith.extui %0 : i1 to i32
    %c0_i32_0 = arith.constant 0 : i32
    %2 = arith.cmpi ne, %1, %c0_i32_0 : i32
    scf.if %2 {
      %c0_18 = arith.constant 0 : index
      %c0_19 = arith.constant 0 : index
      %24 = vector.load %arg3[%c0_18, %c0_19] : memref<1024x1024xi8, #tpu.memory_space<vmem>>, vector<1024x1024xi8>
      %25 = arith.sitofp %24 : vector<1024x1024xi8> to vector<1024x1024xf32>
      %c0_20 = arith.constant 0 : index
      %c0_21 = arith.constant 0 : index
      %26 = vector.load %arg4[%c0_20, %c0_21] : memref<1x1024xf32, #tpu.memory_space<vmem>>, vector<1x1024xf32>
      %27 = vector.broadcast %26 : vector<1x1024xf32> to vector<1024x1024xf32>
      %28 = arith.mulf %25, %27 : vector<1024x1024xf32>
      %29 = arith.truncf %28 : vector<1024x1024xf32> to vector<1024x1024xbf16>
      %c0_22 = arith.constant 0 : index
      %c0_23 = arith.constant 0 : index
      %30 = vector.load %arg9[%c0_22, %c0_23] : memref<1024x1024xbf16, #tpu.memory_space<vmem>>, vector<1024x1024xbf16>
      tpu.vector_store %arg9[%c0_22, %c0_23], %29 {strides = array<i32>} : memref<1024x1024xbf16, #tpu.memory_space<vmem>>, vector<1024x1024xbf16>,
    } else {
    }
    %c0 = arith.constant 0 : index
    %c0_1 = arith.constant 0 : index
    %3 = vector.load %arg1[%c0, %c0_1] : memref<16x32xbf16, #tpu.memory_space<vmem>>, vector<16x32xbf16>
    %c0_2 = arith.constant 0 : index
    %c0_3 = arith.constant 0 : index
    %4 = vector.load %arg2[%c0_2, %c0_3] : memref<32x1024xbf16, #tpu.memory_space<vmem>>, vector<32x1024xbf16>
    %cst = arith.constant dense<0.000000e+00> : vector<16x1024xf32>
    %5 = tpu.matmul %3, %4, %cst {dimension_numbers = #tpu.dot_dimension_numbers<[1], [0], [0], [1], [0, 0, 1, 1], [], []>} : vector<16x32xbf16>, vector<32x1024xbf16>, vector<16x1024xf32> -> vector<16x1024xf32>
    %cst_4 = arith.constant 0.000000e+00 : f32
    %6 = vector.broadcast %cst_4 : f32 to vector<16x1024xf32>
    %7 = arith.maximumf %5, %6 : vector<16x1024xf32>
    %8 = arith.truncf %7 : vector<16x1024xf32> to vector<16x1024xbf16>
    %c0_5 = arith.constant 0 : index
    %c0_6 = arith.constant 0 : index
    %9 = vector.load %arg9[%c0_5, %c0_6] : memref<1024x1024xbf16, #tpu.memory_space<vmem>>, vector<1024x1024xbf16>
    %cst_7 = arith.constant dense<0.000000e+00> : vector<16x1024xf32>
    %10 = tpu.matmul %8, %9, %cst_7 {dimension_numbers = #tpu.dot_dimension_numbers<[1], [0], [0], [1], [0, 0, 1, 1], [], []>} : vector<16x1024xbf16>, vector<1024x1024xbf16>, vector<16x1024xf32> -> vector<16x1024xf32>
    %c0_8 = arith.constant 0 : index
    %c0_9 = arith.constant 0 : index
    %11 = vector.load %arg5[%c0_8, %c0_9] : memref<1x1024xf32, #tpu.memory_space<vmem>>, vector<1x1024xf32>
    %12 = vector.broadcast %11 : vector<1x1024xf32> to vector<16x1024xf32>
    %13 = arith.addf %10, %12 : vector<16x1024xf32>
    %cst_10 = arith.constant 0.000000e+00 : f32
    %14 = vector.broadcast %cst_10 : f32 to vector<16x1024xf32>
    %15 = arith.maximumf %13, %14 : vector<16x1024xf32>
    %16 = arith.truncf %15 : vector<16x1024xf32> to vector<16x1024xbf16>
    %c0_11 = arith.constant 0 : index
    %c0_12 = arith.constant 0 : index
    %17 = vector.load %arg6[%c0_11, %c0_12] : memref<1024x4xbf16, #tpu.memory_space<vmem>>, vector<1024x4xbf16>
    %cst_13 = arith.constant dense<0.000000e+00> : vector<16x4xf32>
    %18 = tpu.matmul %16, %17, %cst_13 {dimension_numbers = #tpu.dot_dimension_numbers<[1], [0], [0], [1], [0, 0, 1, 1], [], []>} : vector<16x1024xbf16>, vector<1024x4xbf16>, vector<16x4xf32> -> vector<16x4xf32>
    %c0_14 = arith.constant 0 : index
    %c0_15 = arith.constant 0 : index
    %19 = vector.load %arg7[%c0_14, %c0_15] : memref<1x4xf32, #tpu.memory_space<vmem>>, vector<1x4xf32>
    %20 = vector.broadcast %19 : vector<1x4xf32> to vector<16x4xf32>
    %21 = arith.addf %18, %20 : vector<16x4xf32>
    %22 = math.tanh %21 : vector<16x4xf32>
    %c0_16 = arith.constant 0 : index
    %c0_17 = arith.constant 0 : index
    %23 = vector.load %arg8[%c0_16, %c0_17] : memref<16x4xf32, #tpu.memory_space<vmem>>, vector<16x4xf32>
    tpu.vector_store %arg8[%c0_16, %c0_17], %22 {strides = array<i32>} : memref<16x4xf32, #tpu.memory_space<vmem>>, vector<16x4xf32>,
    return
  }
  func.func @transform_0(%arg0: i32) -> (i32, i32) {
    %c0_i32 = arith.constant 0 : i32
    %c0_i32_0 = arith.constant 0 : i32
    return %arg0, %c0_i32 : i32, i32
  }
  func.func @transform_1(%arg0: i32) -> (i32, i32) {
    %c0_i32 = arith.constant 0 : i32
    %c0_i32_0 = arith.constant 0 : i32
    %c0_i32_1 = arith.constant 0 : i32
    return %c0_i32, %c0_i32_0 : i32, i32
  }
  func.func @transform_2(%arg0: i32) -> (i32, i32) {
    %c0_i32 = arith.constant 0 : i32
    %c0_i32_0 = arith.constant 0 : i32
    %c0_i32_1 = arith.constant 0 : i32
    return %c0_i32, %c0_i32_0 : i32, i32
  }
  func.func @transform_3(%arg0: i32) -> (i32, i32) {
    %c0_i32 = arith.constant 0 : i32
    %c0_i32_0 = arith.constant 0 : i32
    %c0_i32_1 = arith.constant 0 : i32
    return %c0_i32, %c0_i32_0 : i32, i32
  }
  func.func @transform_4(%arg0: i32) -> (i32, i32) {
    %c0_i32 = arith.constant 0 : i32
    %c0_i32_0 = arith.constant 0 : i32
    %c0_i32_1 = arith.constant 0 : i32
    return %c0_i32, %c0_i32_0 : i32, i32
  }
  func.func @transform_5(%arg0: i32) -> (i32, i32) {
    %c0_i32 = arith.constant 0 : i32
    %c0_i32_0 = arith.constant 0 : i32
    %c0_i32_1 = arith.constant 0 : i32
    return %c0_i32, %c0_i32_0 : i32, i32
  }
  func.func @transform_6(%arg0: i32) -> (i32, i32) {
    %c0_i32 = arith.constant 0 : i32
    %c0_i32_0 = arith.constant 0 : i32
    %c0_i32_1 = arith.constant 0 : i32
    return %c0_i32, %c0_i32_0 : i32, i32
  }
  func.func @transform_7(%arg0: i32) -> (i32, i32) {
    %c0_i32 = arith.constant 0 : i32
    %c0_i32_0 = arith.constant 0 : i32
    return %arg0, %c0_i32 : i32, i32
  }
}

</mosaic_0001>

<llo_original>
// kernel: actor_forward.1
$region0: #{actor_forward.1}
  #allocation0 [shape = 'u32[]', space=smem, size = 0x4, offset = 0x4, fixed_abs, tag = 'smem constant byte address 0x4 - core index']
  #allocation1 [shape = 'u32[144,128]{1,0:T(1,128)}', space=vmem, size = 0x12000, scoped, tag = 'internal scratch']
  #allocation2 [shape = 'bf16[1024,1024]{1,0:T(16,128)(2,1)}', space=vmem, size = 0x200000, scoped, tag = 'scratch operand']
  %s0 = inlined_call_operand.vmem [shape: bf16[16,32], index: 0, kind: input, shape index: {}]
  %s1 = inlined_call_operand.vmem [shape: bf16[32,1024], index: 1, kind: input, shape index: {}]
  %s2 = inlined_call_operand.hbm [shape: s8[1024,1024], index: 2, kind: input, shape index: {}]
  %s3 = inlined_call_operand.vmem [shape: f32[1,1024], index: 3, kind: input, shape index: {}]
  %s4 = inlined_call_operand.vmem [shape: f32[1,1024], index: 4, kind: input, shape index: {}]
  %s5 = inlined_call_operand.vmem [shape: bf16[1024,4], index: 5, kind: input, shape index: {}]
  %s6 = inlined_call_operand.vmem [shape: f32[1,4], index: 6, kind: input, shape index: {}]
  %s7 = inlined_call_operand.vmem [shape: f32[16,4], index: 7, kind: output, shape index: {}]
  %s8 = sld [smem:[#allocation0]]
  $region46: #{actor_forward.1} parent=0
    _
  %s10 = ssub.s32 1, %s8
  %s11 = scalar_select 0, %s10, %s8
  $region1: #{actor_forward.1} parent=0
    #allocation3 [shape = 'u8[1048576]{0}', space=vmem, size = 0x100000, scoped, tag = 'input window, operand 2, single buffered']
    #allocation4 [shape = 's32[1]{0}', space=sflag, size = 0x4, scoped, tag = 'scoped memory for actor_forward.1']
    %12 = vsyncpa [#allocation4], 0
    // Predicated region
    $region2: #{actor_forward.1} parent=1 // pred_check
      _
    $region3: #{actor_forward.1} parent=1 // pred_check_branch
      %14 = sbr.rel (0) target = $region5
    $region4: #{actor_forward.1} parent=1 // pred_region
      _
    $region5: #{actor_forward.1} parent=1 // pred_fallthru
      _
    // Predicated region
    $region6: #{actor_forward.1} parent=1 // pred_check
      _
    $region7: #{actor_forward.1} parent=1 // pred_check_branch
      %16 = sbr.rel (0) target = $region9
    $region8: #{actor_forward.1} parent=1 // pred_region
      _
    $region9: #{actor_forward.1} parent=1 // pred_fallthru
      _
    // Predicated region
    $region10: #{actor_forward.1} parent=1 // pred_check
      _
    $region11: #{actor_forward.1} parent=1 // pred_check_branch
      %18 = sbr.rel (0) target = $region13
    $region12: #{actor_forward.1} parent=1 // pred_region
      %s20 = ssub.s32 32768, 32768
      %21 = vsyncadd [#allocation4], %s20
      %s22 = sshll.u32 [#allocation3], 4
      %s23 = int_to_ptr.vmem [resolvable:$true] %s22
      %28 = dma.hbm_to_vmem [thread:$0]  %s2, 32768, %s23, [#allocation4], 1024, 1024, 64
    $region13: #{actor_forward.1} parent=1 // pred_fallthru
      _
    // Predicated region
    $region14: #{actor_forward.1} parent=1 // pred_check
      _
    $region15: #{actor_forward.1} parent=1 // pred_check_branch
      %30 = sbr.rel (0) target = $region17
    $region16: #{actor_forward.1} parent=1 // pred_region
      _
    $region17: #{actor_forward.1} parent=1 // pred_fallthru
      _
    // Predicated region
    $region18: #{actor_forward.1} parent=1 // pred_check
      _
    $region19: #{actor_forward.1} parent=1 // pred_check_branch
      %32 = sbr.rel (0) target = $region21
    $region20: #{actor_forward.1} parent=1 // pred_region
      _
    $region21: #{actor_forward.1} parent=1 // pred_fallthru
      _
    // Predicated region
    $region22: #{actor_forward.1} parent=1 // pred_check
      _
    $region23: #{actor_forward.1} parent=1 // pred_check_branch
      %34 = sbr.rel (0) target = $region25
    $region24: #{actor_forward.1} parent=1 // pred_region
      _
    $region25: #{actor_forward.1} parent=1 // pred_fallthru
      _
    // Predicated region
    $region26: #{actor_forward.1} parent=1 // pred_check
      _
    $region27: #{actor_forward.1} parent=1 // pred_check_branch
      %36 = sbr.rel (0) target = $region29
    $region28: #{actor_forward.1} parent=1 // pred_region
      _
    $region29: #{actor_forward.1} parent=1 // pred_fallthru
      _
    // Predicated region
    $region30: #{actor_forward.1} parent=1 // pred_check
      _
    $region31: #{actor_forward.1} parent=1 // pred_check_branch
      %38 = sbr.rel (0) target = $region33
    $region32: #{actor_forward.1} parent=1 // pred_region
      %39 = dma.done [#allocation4], 32768
    $region33: #{actor_forward.1} parent=1 // pred_fallthru
      _
    %p41 = scmp.eq.s32.totalorder 0, 0
    // Predicated region
    $region34: #{actor_forward.1} parent=1 // pred_check
      %p42 = pneg %p41
    $region35: #{actor_forward.1} parent=1 // pred_check_branch
      %44 = sbr.rel (%p42) target = $region37
    $region36: #{actor_forward.1} parent=1 // pred_region
      %v45 = vld [vmem:[#allocation3] sm:$0xff]
      %v46 = vld [vmem:[#allocation3 + $0x8] sm:$0xff]
      %v47 = vld [vmem:[#allocation3 + $0x10] sm:$0xff]
      %v48 = vld [vmem:[#allocation3 + $0x18] sm:$0xff]
      %v49 = vld [vmem:[#allocation3 + $0x20] sm:$0xff]
      %v50 = vld [vmem:[#allocation3 + $0x28] sm:$0xff]
      %v51 = vld [vmem:[#allocation3 + $0x30] sm:$0xff]
      %v52 = vld [vmem:[#allocation3 + $0x38] sm:$0xff]
      %v53 = vld [vmem:[#allocation3 + $0x40] sm:$0xff]
      %v54 = vld [vmem:[#allocation3 + $0x48] sm:$0xff]
      %v55 = vld [vmem:[#allocation3 + $0x50] sm:$0xff]
      %v56 = vld [vmem:[#allocation3 + $0x58] sm:$0xff]
      %v57 = vld [vmem:[#allocation3 + $0x60] sm:$0xff]
      %v58 = vld [vmem:[#allocation3 + $0x68] sm:$0xff]
      %v59 = vld [vmem:[#allocation3 + $0x70] sm:$0xff]
      %v60 = vld [vmem:[#allocation3 + $0x78] sm:$0xff]
      %v61 = vld [vmem:[#allocation3 + $0x80] sm:$0xff]
      %v62 = vld [vmem:[#allocation3 + $0x88] sm:$0xff]
      %v63 = vld [vmem:[#allocation3 + $0x90] sm:$0xff]
      %v64 = vld [vmem:[#allocation3 + $0x98] sm:$0xff]
      %v65 = vld [vmem:[#allocation3 + $0xa0] sm:$0xff]
      %v66 = vld [vmem:[#allocation3 + $0xa8] sm:$0xff]
      %v67 = vld [vmem:[#allocation3 + $0xb0] sm:$0xff]
      %v68 = vld [vmem:[#allocation3 + $0xb8] sm:$0xff]
      %v69 = vld [vmem:[#allocation3 + $0xc0] sm:$0xff]
      %v70 = vld [vmem:[#allocation3 + $0xc8] sm:$0xff]
      %v71 = vld [vmem:[#allocation3 + $0xd0] sm:$0xff]
      %v72 = vld [vmem:[#allocation3 + $0xd8] sm:$0xff]
      %v73 = vld [vmem:[#allocation3 + $0xe0] sm:$0xff]
      %v74 = vld [vmem:[#allocation3 + $0xe8] sm:$0xff]
      %v75 = vld [vmem:[#allocation3 + $0xf0] sm:$0xff]
      %v76 = vld [vmem:[#allocation3 + $0xf8] sm:$0xff]
      %v77 = vld [vmem:[#allocation3 + $0x100] sm:$0xff]
      %v78 = vld [vmem:[#allocation3 + $0x108] sm:$0xff]
      %v79 = vld [vmem:[#allocation3 + $0x110] sm:$0xff]
      %v80 = vld [vmem:[#allocation3 + $0x118] sm:$0xff]
      %v81 = vld [vmem:[#allocation3 + $0x120] sm:$0xff]
      %v82 = vld [vmem:[#allocation3 + $0x128] sm:$0xff]
      %v83 = vld [vmem:[#allocation3 + $0x130] sm:$0xff]
      %v84 = vld [vmem:[#allocation3 + $0x138] sm:$0xff]
      %v85 = vld [vmem:[#allocation3 + $0x140] sm:$0xff]
      %v86 = vld [vmem:[#allocation3 + $0x148] sm:$0xff]
      %v87 = vld [vmem:[#allocation3 + $0x150] sm:$0xff]
      %v88 = vld [vmem:[#allocation3 + $0x158] sm:$0xff]
      %v89 = vld [vmem:[#allocation3 + $0x160] sm:$0xff]
      %v90 = vld [vmem:[#allocation3 + $0x168] sm:$0xff]
      %v91 = vld [vmem:[#allocation3 + $0x170] sm:$0xff]
      %v92 = vld [vmem:[#allocation3 + $0x178] sm:$0xff]
      %v93 = vld [vmem:[#allocation3 + $0x180] sm:$0xff]
      %v94 = vld [vmem:[#allocation3 + $0x188] sm:$0xff]
      %v95 = vld [vmem:[#allocation3 + $0x190] sm:$0xff]
      %v96 = vld [vmem:[#allocation3 + $0x198] sm:$0xff]
      %v97 = vld [vmem:[#allocation3 + $0x1a0] sm:$0xff]
      %v98 = vld [vmem:[#allocation3 + $0x1a8] sm:$0xff]
      %v99 = vld [vmem:[#allocation3 + $0x1b0] sm:$0xff]
      %v100 = vld [vmem:[#allocation3 + $0x1b8] sm:$0xff]
      %v101 = vld [vmem:[#allocation3 + $0x1c0] sm:$0xff]
      %v102 = vld [vmem:[#allocation3 + $0x1c8] sm:$0xff]
      %v103 = vld [vmem:[#allocation3 + $0x1d0] sm:$0xff]
      %v104 = vld [vmem:[#allocation3 + $0x1d8] sm:$0xff]
      %v105 = vld [vmem:[#allocation3 + $0x1e0] sm:$0xff]
      %v106 = vld [vmem:[#allocation3 + $0x1e8] sm:$0xff]
      %v107 = vld [vmem:[#allocation3 + $0x1f0] sm:$0xff]
      %v108 = vld [vmem:[#allocation3 + $0x1f8] sm:$0xff]
      %v109 = vld [vmem:[#allocation3 + $0x200] sm:$0xff]
      %v110 = vld [vmem:[#allocation3 + $0x208] sm:$0xff]
      %v111 = vld [vmem:[#allocation3 + $0x210] sm:$0xff]
      %v112 = vld [vmem:[#allocation3 + $0x218] sm:$0xff]
      %v113 = vld [vmem:[#allocation3 + $0x220] sm:$0xff]
      %v114 = vld [vmem:[#allocation3 + $0x228] sm:$0xff]
      %v115 = vld [vmem:[#allocation3 + $0x230] sm:$0xff]
      %v116 = vld [vmem:[#allocation3 + $0x238] sm:$0xff]
      %v117 = vld [vmem:[#allocation3 + $0x240] sm:$0xff]
      %v118 = vld [vmem:[#allocation3 + $0x248] sm:$0xff]
      %v119 = vld [vmem:[#allocation3 + $0x250] sm:$0xff]
      %v120 = vld [vmem:[#allocation3 + $0x258] sm:$0xff]
      %v121 = vld [vmem:[#allocation3 + $0x260] sm:$0xff]
      %v122 = vld [vmem:[#allocation3 + $0x268] sm:$0xff]
      %v123 = vld [vmem:[#allocation3 + $0x270] sm:$0xff]
      %v124 = vld [vmem:[#allocation3 + $0x278] sm:$0xff]
      %v125 = vld [vmem:[#allocation3 + $0x280] sm:$0xff]
      %v126 = vld [vmem:[#allocation3 + $0x288] sm:$0xff]
      %v127 = vld [vmem:[#allocation3 + $0x290] sm:$0xff]
      %v128 = vld [vmem:[#allocation3 + $0x298] sm:$0xff]
      %v129 = vld [vmem:[#allocation3 + $0x2a0] sm:$0xff]
      %v130 = vld [vmem:[#allocation3 + $0x2a8] sm:$0xff]
      %v131 = vld [vmem:[#allocation3 + $0x2b0] sm:$0xff]
      %v132 = vld [vmem:[#allocation3 + $0x2b8] sm:$0xff]
      %v133 = vld [vmem:[#allocation3 + $0x2c0] sm:$0xff]
      %v134 = vld [vmem:[#allocation3 + $0x2c8] sm:$0xff]
      %v135 = vld [vmem:[#allocation3 + $0x2d0] sm:$0xff]
      %v136 = vld [vmem:[#allocation3 + $0x2d8] sm:$0xff]
      %v137 = vld [vmem:[#allocation3 + $0x2e0] sm:$0xff]
      %v138 = vld [vmem:[#allocation3 + $0x2e8] sm:$0xff]
      %v139 = vld [vmem:[#allocation3 + $0x2f0] sm:$0xff]
      %v140 = vld [vmem:[#allocation3 + $0x2f8] sm:$0xff]
      %v141 = vld [vmem:[#allocation3 + $0x300] sm:$0xff]
      %v142 = vld [vmem:[#allocation3 + $0x308] sm:$0xff]
      %v143 = vld [vmem:[#allocation3 + $0x310] sm:$0xff]
      %v144 = vld [vmem:[#allocation3 + $0x318] sm:$0xff]
      %v145 = vld [vmem:[#allocation3 + $0x320] sm:$0xff]
      %v146 = vld [vmem:[#allocation3 + $0x328] sm:$0xff]
      %v147 = vld [vmem:[#allocation3 + $0x330] sm:$0xff]
      %v148 = vld [vmem:[#allocation3 + $0x338] sm:$0xff]
      %v149 = vld [vmem:[#allocation3 + $0x340] sm:$0xff]
      %v150 = vld [vmem:[#allocation3 + $0x348] sm:$0xff]
      %v151 = vld [vmem:[#allocation3 + $0x350] sm:$0xff]
      %v152 = vld [vmem:[#allocation3 + $0x358] sm:$0xff]
      %v153 = vld [vmem:[#allocation3 + $0x360] sm:$0xff]
      %v154 = vld [vmem:[#allocation3 + $0x368] sm:$0xff]
      %v155 = vld [vmem:[#allocation3 + $0x370] sm:$0xff]
      %v156 = vld [vmem:[#allocation3 + $0x378] sm:$0xff]
      %v157 = vld [vmem:[#allocation3 + $0x380] sm:$0xff]
      %v158 = vld [vmem:[#allocation3 + $0x388] sm:$0xff]
      %v159 = vld [vmem:[#allocation3 + $0x390] sm:$0xff]
      %v160 = vld [vmem:[#allocation3 + $0x398] sm:$0xff]
      %v161 = vld [vmem:[#allocation3 + $0x3a0] sm:$0xff]
      %v162 = vld [vmem:[#allocation3 + $0x3a8] sm:$0xff]
      %v163 = vld [vmem:[#allocation3 + $0x3b0] sm:$0xff]
      %v164 = vld [vmem:[#allocation3 + $0x3b8] sm:$0xff]
      %v165 = vld [vmem:[#allocation3 + $0x3c0] sm:$0xff]
      %v166 = vld [vmem:[#allocation3 + $0x3c8] sm:$0xff]
      %v167 = vld [vmem:[#allocation3 + $0x3d0] sm:$0xff]
      %v168 = vld [vmem:[#allocation3 + $0x3d8] sm:$0xff]
      %v169 = vld [vmem:[#allocation3 + $0x3e0] sm:$0xff]
      %v170 = vld [vmem:[#allocation3 + $0x3e8] sm:$0xff]
      %v171 = vld [vmem:[#allocation3 + $0x3f0] sm:$0xff]
      %v172 = vld [vmem:[#allocation3 + $0x3f8] sm:$0xff]
      %v173 = vld [vmem:[#allocation3 + $0x400] sm:$0xff]
      %v174 = vld [vmem:[#allocation3 + $0x408] sm:$0xff]
      %v175 = vld [vmem:[#allocation3 + $0x410] sm:$0xff]
      %v176 = vld [vmem:[#allocation3 + $0x418] sm:$0xff]
      %v177 = vld [vmem:[#allocation3 + $0x420] sm:$0xff]
      %v178 = vld [vmem:[#allocation3 + $0x428] sm:$0xff]
      %v179 = vld [vmem:[#allocation3 + $0x430] sm:$0xff]
      %v180 = vld [vmem:[#allocation3 + $0x438] sm:$0xff]
      %v181 = vld [vmem:[#allocation3 + $0x440] sm:$0xff]
      %v182 = vld [vmem:[#allocation3 + $0x448] sm:$0xff]
      %v183 = vld [vmem:[#allocation3 + $0x450] sm:$0xff]
      %v184 = vld [vmem:[#allocation3 + $0x458] sm:$0xff]
      %v185 = vld [vmem:[#allocation3 + $0x460] sm:$0xff]
      %v186 = vld [vmem:[#allocation3 + $0x468] sm:$0xff]
      %v187 = vld [vmem:[#allocation3 + $0x470] sm:$0xff]
      %v188 = vld [vmem:[#allocation3 + $0x478] sm:$0xff]
      %v189 = vld [vmem:[#allocation3 + $0x480] sm:$0xff]
      %v190 = vld [vmem:[#allocation3 + $0x488] sm:$0xff]
      %v191 = vld [vmem:[#allocation3 + $0x490] sm:$0xff]
      %v192 = vld [vmem:[#allocation3 + $0x498] sm:$0xff]
      %v193 = vld [vmem:[#allocation3 + $0x4a0] sm:$0xff]
      %v194 = vld [vmem:[#allocation3 + $0x4a8] sm:$0xff]
      %v195 = vld [vmem:[#allocation3 + $0x4b0] sm:$0xff]
      %v196 = vld [vmem:[#allocation3 + $0x4b8] sm:$0xff]
      %v197 = vld [vmem:[#allocation3 + $0x4c0] sm:$0xff]
      %v198 = vld [vmem:[#allocation3 + $0x4c8] sm:$0xff]
      %v199 = vld [vmem:[#allocation3 + $0x4d0] sm:$0xff]
      %v200 = vld [vmem:[#allocation3 + $0x4d8] sm:$0xff]
      %v201 = vld [vmem:[#allocation3 + $0x4e0] sm:$0xff]
      %v202 = vld [vmem:[#allocation3 + $0x4e8] sm:$0xff]
      %v203 = vld [vmem:[#allocation3 + $0x4f0] sm:$0xff]
      %v204 = vld [vmem:[#allocation3 + $0x4f8] sm:$0xff]
      %v205 = vld [vmem:[#allocation3 + $0x500] sm:$0xff]
      %v206 = vld [vmem:[#allocation3 + $0x508] sm:$0xff]
      %v207 = vld [vmem:[#allocation3 + $0x510] sm:$0xff]
      %v208 = vld [vmem:[#allocation3 + $0x518] sm:$0xff]
      %v209 = vld [vmem:[#allocation3 + $0x520] sm:$0xff]
      %v210 = vld [vmem:[#allocation3 + $0x528] sm:$0xff]
      %v211 = vld [vmem:[#allocation3 + $0x530] sm:$0xff]
      %v212 = vld [vmem:[#allocation3 + $0x538] sm:$0xff]
      %v213 = vld [vmem:[#allocation3 + $0x540] sm:$0xff]
      %v214 = vld [vmem:[#allocation3 + $0x548] sm:$0xff]
      %v215 = vld [vmem:[#allocation3 + $0x550] sm:$0xff]
      %v216 = vld [vmem:[#allocation3 + $0x558] sm:$0xff]
      %v217 = vld [vmem:[#allocation3 + $0x560] sm:$0xff]
      %v218 = vld [vmem:[#allocation3 + $0x568] sm:$0xff]
      %v219 = vld [vmem:[#allocation3 + $0x570] sm:$0xff]
      %v220 = vld [vmem:[#allocation3 + $0x578] sm:$0xff]
      %v221 = vld [vmem:[#allocation3 + $0x580] sm:$0xff]
      %v222 = vld [vmem:[#allocation3 + $0x588] sm:$0xff]
      %v223 = vld [vmem:[#allocation3 + $0x590] sm:$0xff]
      %v224 = vld [vmem:[#allocation3 + $0x598] sm:$0xff]
      %v225 = vld [vmem:[#allocation3 + $0x5a0] sm:$0xff]
      %v226 = vld [vmem:[#allocation3 + $0x5a8] sm:$0xff]
      %v227 = vld [vmem:[#allocation3 + $0x5b0] sm:$0xff]
      %v228 = vld [vmem:[#allocation3 + $0x5b8] sm:$0xff]
      %v229 = vld [vmem:[#allocation3 + $0x5c0] sm:$0xff]
      %v230 = vld [vmem:[#allocation3 + $0x5c8] sm:$0xff]
      %v231 = vld [vmem:[#allocation3 + $0x5d0] sm:$0xff]
      %v232 = vld [vmem:[#allocation3 + $0x5d8] sm:$0xff]
      %v233 = vld [vmem:[#allocation3 + $0x5e0] sm:$0xff]
      %v234 = vld [vmem:[#allocation3 + $0x5e8] sm:$0xff]
      %v235 = vld [vmem:[#allocation3 + $0x5f0] sm:$0xff]
      %v236 = vld [vmem:[#allocation3 + $0x5f8] sm:$0xff]
      %v237 = vld [vmem:[#allocation3 + $0x600] sm:$0xff]
      %v238 = vld [vmem:[#allocation3 + $0x608] sm:$0xff]
      %v239 = vld [vmem:[#allocation3 + $0x610] sm:$0xff]
      %v240 = vld [vmem:[#allocation3 + $0x618] sm:$0xff]
      %v241 = vld [vmem:[#allocation3 + $0x620] sm:$0xff]
      %v242 = vld [vmem:[#allocation3 + $0x628] sm:$0xff]
      %v243 = vld [vmem:[#allocation3 + $0x630] sm:$0xff]
      %v244 = vld [vmem:[#allocation3 + $0x638] sm:$0xff]
      %v245 = vld [vmem:[#allocation3 + $0x640] sm:$0xff]
      %v246 = vld [vmem:[#allocation3 + $0x648] sm:$0xff]
      %v247 = vld [vmem:[#allocation3 + $0x650] sm:$0xff]
      %v248 = vld [vmem:[#allocation3 + $0x658] sm:$0xff]
      %v249 = vld [vmem:[#allocation3 + $0x660] sm:$0xff]
      %v250 = vld [vmem:[#allocation3 + $0x668] sm:$0xff]
      %v251 = vld [vmem:[#allocation3 + $0x670] sm:$0xff]
      %v252 = vld [vmem:[#allocation3 + $0x678] sm:$0xff]
      %v253 = vld [vmem:[#allocation3 + $0x680] sm:$0xff]
      %v254 = vld [vmem:[#allocation3 + $0x688] sm:$0xff]
      %v255 = vld [vmem:[#allocation3 + $0x690] sm:$0xff]
      %v256 = vld [vmem:[#allocation3 + $0x698] sm:$0xff]
      %v257 = vld [vmem:[#allocation3 + $0x6a0] sm:$0xff]
      %v258 = vld [vmem:[#allocation3 + $0x6a8] sm:$0xff]
      %v259 = vld [vmem:[#allocation3 + $0x6b0] sm:$0xff]
      %v260 = vld [vmem:[#allocation3 + $0x6b8] sm:$0xff]
      %v261 = vld [vmem:[#allocation3 + $0x6c0] sm:$0xff]
      %v262 = vld [vmem:[#allocation3 + $0x6c8] sm:$0xff]
      %v263 = vld [vmem:[#allocation3 + $0x6d0] sm:$0xff]
      %v264 = vld [vmem:[#allocation3 + $0x6d8] sm:$0xff]
      %v265 = vld [vmem:[#allocation3 + $0x6e0] sm:$0xff]
      %v266 = vld [vmem:[#allocation3 + $0x6e8] sm:$0xff]
      %v267 = vld [vmem:[#allocation3 + $0x6f0] sm:$0xff]
      %v268 = vld [vmem:[#allocation3 + $0x6f8] sm:$0xff]
      %v269 = vld [vmem:[#allocation3 + $0x700] sm:$0xff]
      %v270 = vld [vmem:[#allocation3 + $0x708] sm:$0xff]
      %v271 = vld [vmem:[#allocation3 + $0x710] sm:$0xff]
      %v272 = vld [vmem:[#allocation3 + $0x718] sm:$0xff]
      %v273 = vld [vmem:[#allocation3 + $0x720] sm:$0xff]
      %v274 = vld [vmem:[#allocation3 + $0x728] sm:$0xff]
      %v275 = vld [vmem:[#allocation3 + $0x730] sm:$0xff]
      %v276 = vld [vmem:[#allocation3 + $0x738] sm:$0xff]
      %v277 = vld [vmem:[#allocation3 + $0x740] sm:$0xff]
      %v278 = vld [vmem:[#allocation3 + $0x748] sm:$0xff]
      %v279 = vld [vmem:[#allocation3 + $0x750] sm:$0xff]
      %v280 = vld [vmem:[#allocation3 + $0x758] sm:$0xff]
      %v281 = vld [vmem:[#allocation3 + $0x760] sm:$0xff]
      %v282 = vld [vmem:[#allocation3 + $0x768] sm:$0xff]
      %v283 = vld [vmem:[#allocation3 + $0x770] sm:$0xff]
      %v284 = vld [vmem:[#allocation3 + $0x778] sm:$0xff]
      %v285 = vld [vmem:[#allocation3 + $0x780] sm:$0xff]
      %v286 = vld [vmem:[#allocation3 + $0x788] sm:$0xff]
      %v287 = vld [vmem:[#allocation3 + $0x790] sm:$0xff]
      %v288 = vld [vmem:[#allocation3 + $0x798] sm:$0xff]
      %v289 = vld [vmem:[#allocation3 + $0x7a0] sm:$0xff]
      %v290 = vld [vmem:[#allocation3 + $0x7a8] sm:$0xff]
      %v291 = vld [vmem:[#allocation3 + $0x7b0] sm:$0xff]
      %v292 = vld [vmem:[#allocation3 + $0x7b8] sm:$0xff]
      %v293 = vld [vmem:[#allocation3 + $0x7c0] sm:$0xff]
      %v294 = vld [vmem:[#allocation3 + $0x7c8] sm:$0xff]
      %v295 = vld [vmem:[#allocation3 + $0x7d0] sm:$0xff]
      %v296 = vld [vmem:[#allocation3 + $0x7d8] sm:$0xff]
      %v297 = vld [vmem:[#allocation3 + $0x7e0] sm:$0xff]
      %v298 = vld [vmem:[#allocation3 + $0x7e8] sm:$0xff]
      %v299 = vld [vmem:[#allocation3 + $0x7f0] sm:$0xff]
      %v300 = vld [vmem:[#allocation3 + $0x7f8] sm:$0xff]
      %v301 = vunpack.c.0.s8 %v45
      %v302 = vunpack.c.0.s8 %v46
      %v303 = vunpack.c.0.s8 %v47
      %v304 = vunpack.c.0.s8 %v48
      %v305 = vunpack.c.0.s8 %v49
      %v306 = vunpack.c.0.s8 %v50
      %v307 = vunpack.c.0.s8 %v51
      %v308 = vunpack.c.0.s8 %v52
      %v309 = vunpack.c.1.s8 %v45
      %v310 = vunpack.c.1.s8 %v46
      %v311 = vunpack.c.1.s8 %v47
      %v312 = vunpack.c.1.s8 %v48
      %v313 = vunpack.c.1.s8 %v49
      %v314 = vunpack.c.1.s8 %v50
      %v315 = vunpack.c.1.s8 %v51
      %v316 = vunpack.c.1.s8 %v52
      %v317 = vunpack.c.2.s8 %v45
      %v318 = vunpack.c.2.s8 %v46
      %v319 = vunpack.c.2.s8 %v47
      %v320 = vunpack.c.2.s8 %v48
      %v321 = vunpack.c.2.s8 %v49
      %v322 = vunpack.c.2.s8 %v50
      %v323 = vunpack.c.2.s8 %v51
      %v324 = vunpack.c.2.s8 %v52
      %v325 = vunpack.c.3.s8 %v45
      %v326 = vunpack.c.3.s8 %v46
      %v327 = vunpack.c.3.s8 %v47
      %v328 = vunpack.c.3.s8 %v48
      %v329 = vunpack.c.3.s8 %v49
      %v330 = vunpack.c.3.s8 %v50
      %v331 = vunpack.c.3.s8 %v51
      %v332 = vunpack.c.3.s8 %v52
      %v333 = vunpack.c.0.s8 %v53
      %v334 = vunpack.c.0.s8 %v54
      %v335 = vunpack.c.0.s8 %v55
      %v336 = vunpack.c.0.s8 %v56
      %v337 = vunpack.c.0.s8 %v57
      %v338 = vunpack.c.0.s8 %v58
      %v339 = vunpack.c.0.s8 %v59
      %v340 = vunpack.c.0.s8 %v60
      %v341 = vunpack.c.1.s8 %v53
      %v342 = vunpack.c.1.s8 %v54
      %v343 = vunpack.c.1.s8 %v55
      %v344 = vunpack.c.1.s8 %v56
      %v345 = vunpack.c.1.s8 %v57
      %v346 = vunpack.c.1.s8 %v58
      %v347 = vunpack.c.1.s8 %v59
      %v348 = vunpack.c.1.s8 %v60
      %v349 = vunpack.c.2.s8 %v53
      %v350 = vunpack.c.2.s8 %v54
      %v351 = vunpack.c.2.s8 %v55
      %v352 = vunpack.c.2.s8 %v56
      %v353 = vunpack.c.2.s8 %v57
      %v354 = vunpack.c.2.s8 %v58
      %v355 = vunpack.c.2.s8 %v59
      %v356 = vunpack.c.2.s8 %v60
      %v357 = vunpack.c.3.s8 %v53
      %v358 = vunpack.c.3.s8 %v54
      %v359 = vunpack.c.3.s8 %v55
      %v360 = vunpack.c.3.s8 %v56
      %v361 = vunpack.c.3.s8 %v57
      %v362 = vunpack.c.3.s8 %v58
      %v363 = vunpack.c.3.s8 %v59
      %v364 = vunpack.c.3.s8 %v60
      %v365 = vunpack.c.0.s8 %v61
      %v366 = vunpack.c.0.s8 %v62
      %v367 = vunpack.c.0.s8 %v63
      %v368 = vunpack.c.0.s8 %v64
      %v369 = vunpack.c.0.s8 %v65
      %v370 = vunpack.c.0.s8 %v66
      %v371 = vunpack.c.0.s8 %v67
      %v372 = vunpack.c.0.s8 %v68
      %v373 = vunpack.c.1.s8 %v61
      %v374 = vunpack.c.1.s8 %v62
      %v375 = vunpack.c.1.s8 %v63
      %v376 = vunpack.c.1.s8 %v64
      %v377 = vunpack.c.1.s8 %v65
      %v378 = vunpack.c.1.s8 %v66
      %v379 = vunpack.c.1.s8 %v67
      %v380 = vunpack.c.1.s8 %v68
      %v381 = vunpack.c.2.s8 %v61
      %v382 = vunpack.c.2.s8 %v62
      %v383 = vunpack.c.2.s8 %v63
      %v384 = vunpack.c.2.s8 %v64
      %v385 = vunpack.c.2.s8 %v65
      %v386 = vunpack.c.2.s8 %v66
      %v387 = vunpack.c.2.s8 %v67
      %v388 = vunpack.c.2.s8 %v68
      %v389 = vunpack.c.3.s8 %v61
      %v390 = vunpack.c.3.s8 %v62
      %v391 = vunpack.c.3.s8 %v63
      %v392 = vunpack.c.3.s8 %v64
      %v393 = vunpack.c.3.s8 %v65
      %v394 = vunpack.c.3.s8 %v66
      %v395 = vunpack.c.3.s8 %v67
      %v396 = vunpack.c.3.s8 %v68
      %v397 = vunpack.c.0.s8 %v69
      %v398 = vunpack.c.0.s8 %v70
      %v399 = vunpack.c.0.s8 %v71
      %v400 = vunpack.c.0.s8 %v72
      %v401 = vunpack.c.0.s8 %v73
      %v402 = vunpack.c.0.s8 %v74
      %v403 = vunpack.c.0.s8 %v75
      %v404 = vunpack.c.0.s8 %v76
      %v405 = vunpack.c.1.s8 %v69
      %v406 = vunpack.c.1.s8 %v70
      %v407 = vunpack.c.1.s8 %v71
      %v408 = vunpack.c.1.s8 %v72
      %v409 = vunpack.c.1.s8 %v73
      %v410 = vunpack.c.1.s8 %v74
      %v411 = vunpack.c.1.s8 %v75
      %v412 = vunpack.c.1.s8 %v76
      %v413 = vunpack.c.2.s8 %v69
      %v414 = vunpack.c.2.s8 %v70
      %v415 = vunpack.c.2.s8 %v71
      %v416 = vunpack.c.2.s8 %v72
      %v417 = vunpack.c.2.s8 %v73
      %v418 = vunpack.c.2.s8 %v74
      %v419 = vunpack.c.2.s8 %v75
      %v420 = vunpack.c.2.s8 %v76
      %v421 = vunpack.c.3.s8 %v69
      %v422 = vunpack.c.3.s8 %v70
      %v423 = vunpack.c.3.s8 %v71
      %v424 = vunpack.c.3.s8 %v72
      %v425 = vunpack.c.3.s8 %v73
      %v426 = vunpack.c.3.s8 %v74
      %v427 = vunpack.c.3.s8 %v75
      %v428 = vunpack.c.3.s8 %v76
      %v429 = vunpack.c.0.s8 %v77
      %v430 = vunpack.c.0.s8 %v78
      %v431 = vunpack.c.0.s8 %v79
      %v432 = vunpack.c.0.s8 %v80
      %v433 = vunpack.c.0.s8 %v81
      %v434 = vunpack.c.0.s8 %v82
      %v435 = vunpack.c.0.s8 %v83
      %v436 = vunpack.c.0.s8 %v84
      %v437 = vunpack.c.1.s8 %v77
      %v438 = vunpack.c.1.s8 %v78
      %v439 = vunpack.c.1.s8 %v79
      %v440 = vunpack.c.1.s8 %v80
      %v441 = vunpack.c.1.s8 %v81
      %v442 = vunpack.c.1.s8 %v82
      %v443 = vunpack.c.1.s8 %v83
      %v444 = vunpack.c.1.s8 %v84
      %v445 = vunpack.c.2.s8 %v77
      %v446 = vunpack.c.2.s8 %v78
      %v447 = vunpack.c.2.s8 %v79
      %v448 = vunpack.c.2.s8 %v80
      %v449 = vunpack.c.2.s8 %v81
      %v450 = vunpack.c.2.s8 %v82
      %v451 = vunpack.c.2.s8 %v83
      %v452 = vunpack.c.2.s8 %v84
      %v453 = vunpack.c.3.s8 %v77
      %v454 = vunpack.c.3.s8 %v78
      %v455 = vunpack.c.3.s8 %v79
      %v456 = vunpack.c.3.s8 %v80
      %v457 = vunpack.c.3.s8 %v81
      %v458 = vunpack.c.3.s8 %v82
      %v459 = vunpack.c.3.s8 %v83
      %v460 = vunpack.c.3.s8 %v84
      %v461 = vunpack.c.0.s8 %v85
      %v462 = vunpack.c.0.s8 %v86
      %v463 = vunpack.c.0.s8 %v87
      %v464 = vunpack.c.0.s8 %v88
      %v465 = vunpack.c.0.s8 %v89
      %v466 = vunpack.c.0.s8 %v90
      %v467 = vunpack.c.0.s8 %v91
      %v468 = vunpack.c.0.s8 %v92
      %v469 = vunpack.c.1.s8 %v85
      %v470 = vunpack.c.1.s8 %v86
      %v471 = vunpack.c.1.s8 %v87
      %v472 = vunpack.c.1.s8 %v88
      %v473 = vunpack.c.1.s8 %v89
      %v474 = vunpack.c.1.s8 %v90
      %v475 = vunpack.c.1.s8 %v91
      %v476 = vunpack.c.1.s8 %v92
      %v477 = vunpack.c.2.s8 %v85
      %v478 = vunpack.c.2.s8 %v86
      %v479 = vunpack.c.2.s8 %v87
      %v480 = vunpack.c.2.s8 %v88
      %v481 = vunpack.c.2.s8 %v89
      %v482 = vunpack.c.2.s8 %v90
      %v483 = vunpack.c.2.s8 %v91
      %v484 = vunpack.c.2.s8 %v92
      %v485 = vunpack.c.3.s8 %v85
      %v486 = vunpack.c.3.s8 %v86
      %v487 = vunpack.c.3.s8 %v87
      %v488 = vunpack.c.3.s8 %v88
      %v489 = vunpack.c.3.s8 %v89
      %v490 = vunpack.c.3.s8 %v90
      %v491 = vunpack.c.3.s8 %v91
      %v492 = vunpack.c.3.s8 %v92
      %v493 = vunpack.c.0.s8 %v93
      %v494 = vunpack.c.0.s8 %v94
      %v495 = vunpack.c.0.s8 %v95
      %v496 = vunpack.c.0.s8 %v96
      %v497 = vunpack.c.0.s8 %v97
      %v498 = vunpack.c.0.s8 %v98
      %v499 = vunpack.c.0.s8 %v99
      %v500 = vunpack.c.0.s8 %v100
      %v501 = vunpack.c.1.s8 %v93
      %v502 = vunpack.c.1.s8 %v94
      %v503 = vunpack.c.1.s8 %v95
      %v504 = vunpack.c.1.s8 %v96
      %v505 = vunpack.c.1.s8 %v97
      %v506 = vunpack.c.1.s8 %v98
      %v507 = vunpack.c.1.s8 %v99
      %v508 = vunpack.c.1.s8 %v100
      %v509 = vunpack.c.2.s8 %v93
      %v510 = vunpack.c.2.s8 %v94
      %v511 = vunpack.c.2.s8 %v95
      %v512 = vunpack.c.2.s8 %v96
      %v513 = vunpack.c.2.s8 %v97
      %v514 = vunpack.c.2.s8 %v98
      %v515 = vunpack.c.2.s8 %v99
      %v516 = vunpack.c.2.s8 %v100
      %v517 = vunpack.c.3.s8 %v93
      %v518 = vunpack.c.3.s8 %v94
      %v519 = vunpack.c.3.s8 %v95
      %v520 = vunpack.c.3.s8 %v96
      %v521 = vunpack.c.3.s8 %v97
      %v522 = vunpack.c.3.s8 %v98
      %v523 = vunpack.c.3.s8 %v99
      %v524 = vunpack.c.3.s8 %v100
      %v525 = vunpack.c.0.s8 %v101
      %v526 = vunpack.c.0.s8 %v102
      %v527 = vunpack.c.0.s8 %v103
      %v528 = vunpack.c.0.s8 %v104
      %v529 = vunpack.c.0.s8 %v105
      %v530 = vunpack.c.0.s8 %v106
      %v531 = vunpack.c.0.s8 %v107
      %v532 = vunpack.c.0.s8 %v108
      %v533 = vunpack.c.1.s8 %v101
      %v534 = vunpack.c.1.s8 %v102
      %v535 = vunpack.c.1.s8 %v103
      %v536 = vunpack.c.1.s8 %v104
      %v537 = vunpack.c.1.s8 %v105
      %v538 = vunpack.c.1.s8 %v106
      %v539 = vunpack.c.1.s8 %v107
      %v540 = vunpack.c.1.s8 %v108
      %v541 = vunpack.c.2.s8 %v101
      %v542 = vunpack.c.2.s8 %v102
      %v543 = vunpack.c.2.s8 %v103
      %v544 = vunpack.c.2.s8 %v104
      %v545 = vunpack.c.2.s8 %v105
      %v546 = vunpack.c.2.s8 %v106
      %v547 = vunpack.c.2.s8 %v107
      %v548 = vunpack.c.2.s8 %v108
      %v549 = vunpack.c.3.s8 %v101
      %v550 = vunpack.c.3.s8 %v102
      %v551 = vunpack.c.3.s8 %v103
      %v552 = vunpack.c.3.s8 %v104
      %v553 = vunpack.c.3.s8 %v105
      %v554 = vunpack.c.3.s8 %v106
      %v555 = vunpack.c.3.s8 %v107
      %v556 = vunpack.c.3.s8 %v108
      %v557 = vunpack.c.0.s8 %v109
      %v558 = vunpack.c.0.s8 %v110
      %v559 = vunpack.c.0.s8 %v111
      %v560 = vunpack.c.0.s8 %v112
      %v561 = vunpack.c.0.s8 %v113
      %v562 = vunpack.c.0.s8 %v114
      %v563 = vunpack.c.0.s8 %v115
      %v564 = vunpack.c.0.s8 %v116
      %v565 = vunpack.c.1.s8 %v109
      %v566 = vunpack.c.1.s8 %v110
      %v567 = vunpack.c.1.s8 %v111
      %v568 = vunpack.c.1.s8 %v112
      %v569 = vunpack.c.1.s8 %v113
      %v570 = vunpack.c.1.s8 %v114
      %v571 = vunpack.c.1.s8 %v115
      %v572 = vunpack.c.1.s8 %v116
      %v573 = vunpack.c.2.s8 %v109
      %v574 = vunpack.c.2.s8 %v110
      %v575 = vunpack.c.2.s8 %v111
      %v576 = vunpack.c.2.s8 %v112
      %v577 = vunpack.c.2.s8 %v113
      %v578 = vunpack.c.2.s8 %v114
      %v579 = vunpack.c.2.s8 %v115
      %v580 = vunpack.c.2.s8 %v116
      %v581 = vunpack.c.3.s8 %v109
      %v582 = vunpack.c.3.s8 %v110
      %v583 = vunpack.c.3.s8 %v111
      %v584 = vunpack.c.3.s8 %v112
      %v585 = vunpack.c.3.s8 %v113
      %v586 = vunpack.c.3.s8 %v114
      %v587 = vunpack.c.3.s8 %v115
      %v588 = vunpack.c.3.s8 %v116
      %v589 = vunpack.c.0.s8 %v117
      %v590 = vunpack.c.0.s8 %v118
      %v591 = vunpack.c.0.s8 %v119
      %v592 = vunpack.c.0.s8 %v120
      %v593 = vunpack.c.0.s8 %v121
      %v594 = vunpack.c.0.s8 %v122
      %v595 = vunpack.c.0.s8 %v123
      %v596 = vunpack.c.0.s8 %v124
      %v597 = vunpack.c.1.s8 %v117
      %v598 = vunpack.c.1.s8 %v118
      %v599 = vunpack.c.1.s8 %v119
      %v600 = vunpack.c.1.s8 %v120
      %v601 = vunpack.c.1.s8 %v121
      %v602 = vunpack.c.1.s8 %v122
      %v603 = vunpack.c.1.s8 %v123
      %v604 = vunpack.c.1.s8 %v124
      %v605 = vunpack.c.2.s8 %v117
      %v606 = vunpack.c.2.s8 %v118
      %v607 = vunpack.c.2.s8 %v119
      %v608 = vunpack.c.2.s8 %v120
      %v609 = vunpack.c.2.s8 %v121
      %v610 = vunpack.c.2.s8 %v122
      %v611 = vunpack.c.2.s8 %v123
      %v612 = vunpack.c.2.s8 %v124
      %v613 = vunpack.c.3.s8 %v117
      %v614 = vunpack.c.3.s8 %v118
      %v615 = vunpack.c.3.s8 %v119
      %v616 = vunpack.c.3.s8 %v120
      %v617 = vunpack.c.3.s8 %v121
      %v618 = vunpack.c.3.s8 %v122
      %v619 = vunpack.c.3.s8 %v123
      %v620 = vunpack.c.3.s8 %v124
      %v621 = vunpack.c.0.s8 %v125
      %v622 = vunpack.c.0.s8 %v126
      %v623 = vunpack.c.0.s8 %v127
      %v624 = vunpack.c.0.s8 %v128
      %v625 = vunpack.c.0.s8 %v129
      %v626 = vunpack.c.0.s8 %v130
      %v627 = vunpack.c.0.s8 %v131
      %v628 = vunpack.c.0.s8 %v132
      %v629 = vunpack.c.1.s8 %v125
      %v630 = vunpack.c.1.s8 %v126
      %v631 = vunpack.c.1.s8 %v127
      %v632 = vunpack.c.1.s8 %v128
      %v633 = vunpack.c.1.s8 %v129
      %v634 = vunpack.c.1.s8 %v130
      %v635 = vunpack.c.1.s8 %v131
      %v636 = vunpack.c.1.s8 %v132
      %v637 = vunpack.c.2.s8 %v125
      %v638 = vunpack.c.2.s8 %v126
      %v639 = vunpack.c.2.s8 %v127
      %v640 = vunpack.c.2.s8 %v128
      %v641 = vunpack.c.2.s8 %v129
      %v642 = vunpack.c.2.s8 %v130
      %v643 = vunpack.c.2.s8 %v131
      %v644 = vunpack.c.2.s8 %v132
      %v645 = vunpack.c.3.s8 %v125
      %v646 = vunpack.c.3.s8 %v126
      %v647 = vunpack.c.3.s8 %v127
      %v648 = vunpack.c.3.s8 %v128
      %v649 = vunpack.c.3.s8 %v129
      %v650 = vunpack.c.3.s8 %v130
      %v651 = vunpack.c.3.s8 %v131
      %v652 = vunpack.c.3.s8 %v132
      %v653 = vunpack.c.0.s8 %v133
      %v654 = vunpack.c.0.s8 %v134
      %v655 = vunpack.c.0.s8 %v135
      %v656 = vunpack.c.0.s8 %v136
      %v657 = vunpack.c.0.s8 %v137
      %v658 = vunpack.c.0.s8 %v138
      %v659 = vunpack.c.0.s8 %v139
      %v660 = vunpack.c.0.s8 %v140
      %v661 = vunpack.c.1.s8 %v133
      %v662 = vunpack.c.1.s8 %v134
      %v663 = vunpack.c.1.s8 %v135
      %v664 = vunpack.c.1.s8 %v136
      %v665 = vunpack.c.1.s8 %v137
      %v666 = vunpack.c.1.s8 %v138
      %v667 = vunpack.c.1.s8 %v139
      %v668 = vunpack.c.1.s8 %v140
      %v669 = vunpack.c.2.s8 %v133
      %v670 = vunpack.c.2.s8 %v134
      %v671 = vunpack.c.2.s8 %v135
      %v672 = vunpack.c.2.s8 %v136
      %v673 = vunpack.c.2.s8 %v137
      %v674 = vunpack.c.2.s8 %v138
      %v675 = vunpack.c.2.s8 %v139
      %v676 = vunpack.c.2.s8 %v140
      %v677 = vunpack.c.3.s8 %v133
      %v678 = vunpack.c.3.s8 %v134
      %v679 = vunpack.c.3.s8 %v135
      %v680 = vunpack.c.3.s8 %v136
      %v681 = vunpack.c.3.s8 %v137
      %v682 = vunpack.c.3.s8 %v138
      %v683 = vunpack.c.3.s8 %v139
      %v684 = vunpack.c.3.s8 %v140
      %v685 = vunpack.c.0.s8 %v141
      %v686 = vunpack.c.0.s8 %v142
      %v687 = vunpack.c.0.s8 %v143
      %v688 = vunpack.c.0.s8 %v144
      %v689 = vunpack.c.0.s8 %v145
      %v690 = vunpack.c.0.s8 %v146
      %v691 = vunpack.c.0.s8 %v147
      %v692 = vunpack.c.0.s8 %v148
      %v693 = vunpack.c.1.s8 %v141
      %v694 = vunpack.c.1.s8 %v142
      %v695 = vunpack.c.1.s8 %v143
      %v696 = vunpack.c.1.s8 %v144
      %v697 = vunpack.c.1.s8 %v145
      %v698 = vunpack.c.1.s8 %v146
      %v699 = vunpack.c.1.s8 %v147
      %v700 = vunpack.c.1.s8 %v148
      %v701 = vunpack.c.2.s8 %v141
      %v702 = vunpack.c.2.s8 %v142
      %v703 = vunpack.c.2.s8 %v143
      %v704 = vunpack.c.2.s8 %v144
      %v705 = vunpack.c.2.s8 %v145
      %v706 = vunpack.c.2.s8 %v146
      %v707 = vunpack.c.2.s8 %v147
      %v708 = vunpack.c.2.s8 %v148
      %v709 = vunpack.c.3.s8 %v141
      %v710 = vunpack.c.3.s8 %v142
      %v711 = vunpack.c.3.s8 %v143
      %v712 = vunpack.c.3.s8 %v144
      %v713 = vunpack.c.3.s8 %v145
      %v714 = vunpack.c.3.s8 %v146
      %v715 = vunpack.c.3.s8 %v147
      %v716 = vunpack.c.3.s8 %v148
      %v717 = vunpack.c.0.s8 %v149
      %v718 = vunpack.c.0.s8 %v150
      %v719 = vunpack.c.0.s8 %v151
      %v720 = vunpack.c.0.s8 %v152
      %v721 = vunpack.c.0.s8 %v153
      %v722 = vunpack.c.0.s8 %v154
      %v723 = vunpack.c.0.s8 %v155
      %v724 = vunpack.c.0.s8 %v156
      %v725 = vunpack.c.1.s8 %v149
      %v726 = vunpack.c.1.s8 %v150
      %v727 = vunpack.c.1.s8 %v151
      %v728 = vunpack.c.1.s8 %v152
      %v729 = vunpack.c.1.s8 %v153
      %v730 = vunpack.c.1.s8 %v154
      %v731 = vunpack.c.1.s8 %v155
      %v732 = vunpack.c.1.s8 %v156
      %v733 = vunpack.c.2.s8 %v149
      %v734 = vunpack.c.2.s8 %v150
      %v735 = vunpack.c.2.s8 %v151
      %v736 = vunpack.c.2.s8 %v152
      %v737 = vunpack.c.2.s8 %v153
      %v738 = vunpack.c.2.s8 %v154
      %v739 = vunpack.c.2.s8 %v155
      %v740 = vunpack.c.2.s8 %v156
      %v741 = vunpack.c.3.s8 %v149
      %v742 = vunpack.c.3.s8 %v150
      %v743 = vunpack.c.3.s8 %v151
      %v744 = vunpack.c.3.s8 %v152
      %v745 = vunpack.c.3.s8 %v153
      %v746 = vunpack.c.3.s8 %v154
      %v747 = vunpack.c.3.s8 %v155
      %v748 = vunpack.c.3.s8 %v156
      %v749 = vunpack.c.0.s8 %v157
      %v750 = vunpack.c.0.s8 %v158
      %v751 = vunpack.c.0.s8 %v159
      %v752 = vunpack.c.0.s8 %v160
      %v753 = vunpack.c.0.s8 %v161
      %v754 = vunpack.c.0.s8 %v162
      %v755 = vunpack.c.0.s8 %v163
      %v756 = vunpack.c.0.s8 %v164
      %v757 = vunpack.c.1.s8 %v157
      %v758 = vunpack.c.1.s8 %v158
      %v759 = vunpack.c.1.s8 %v159
      %v760 = vunpack.c.1.s8 %v160
      %v761 = vunpack.c.1.s8 %v161
      %v762 = vunpack.c.1.s8 %v162
      %v763 = vunpack.c.1.s8 %v163
      %v764 = vunpack.c.1.s8 %v164
      %v765 = vunpack.c.2.s8 %v157
      %v766 = vunpack.c.2.s8 %v158
      %v767 = vunpack.c.2.s8 %v159
      %v768 = vunpack.c.2.s8 %v160
      %v769 = vunpack.c.2.s8 %v161
      %v770 = vunpack.c.2.s8 %v162
      %v771 = vunpack.c.2.s8 %v163
      %v772 = vunpack.c.2.s8 %v164
      %v773 = vunpack.c.3.s8 %v157
      %v774 = vunpack.c.3.s8 %v158
      %v775 = vunpack.c.3.s8 %v159
      %v776 = vunpack.c.3.s8 %v160
      %v777 = vunpack.c.3.s8 %v161
      %v778 = vunpack.c.3.s8 %v162
      %v779 = vunpack.c.3.s8 %v163
      %v780 = vunpack.c.3.s8 %v164
      %v781 = vunpack.c.0.s8 %v165
      %v782 = vunpack.c.0.s8 %v166
      %v783 = vunpack.c.0.s8 %v167
      %v784 = vunpack.c.0.s8 %v168
      %v785 = vunpack.c.0.s8 %v169
      %v786 = vunpack.c.0.s8 %v170
      %v787 = vunpack.c.0.s8 %v171
      %v788 = vunpack.c.0.s8 %v172
      %v789 = vunpack.c.1.s8 %v165
      %v790 = vunpack.c.1.s8 %v166
      %v791 = vunpack.c.1.s8 %v167
      %v792 = vunpack.c.1.s8 %v168
      %v793 = vunpack.c.1.s8 %v169
      %v794 = vunpack.c.1.s8 %v170
      %v795 = vunpack.c.1.s8 %v171
      %v796 = vunpack.c.1.s8 %v172
      %v797 = vunpack.c.2.s8 %v165
      %v798 = vunpack.c.2.s8 %v166
      %v799 = vunpack.c.2.s8 %v167
      %v800 = vunpack.c.2.s8 %v168
      %v801 = vunpack.c.2.s8 %v169
      %v802 = vunpack.c.2.s8 %v170
      %v803 = vunpack.c.2.s8 %v171
      %v804 = vunpack.c.2.s8 %v172
      %v805 = vunpack.c.3.s8 %v165
      %v806 = vunpack.c.3.s8 %v166
      %v807 = vunpack.c.3.s8 %v167
      %v808 = vunpack.c.3.s8 %v168
      %v809 = vunpack.c.3.s8 %v169
      %v810 = vunpack.c.3.s8 %v170
      %v811 = vunpack.c.3.s8 %v171
      %v812 = vunpack.c.3.s8 %v172
      %v813 = vunpack.c.0.s8 %v173
      %v814 = vunpack.c.0.s8 %v174
      %v815 = vunpack.c.0.s8 %v175
      %v816 = vunpack.c.0.s8 %v176
      %v817 = vunpack.c.0.s8 %v177
      %v818 = vunpack.c.0.s8 %v178
      %v819 = vunpack.c.0.s8 %v179
      %v820 = vunpack.c.0.s8 %v180
      %v821 = vunpack.c.1.s8 %v173
      %v822 = vunpack.c.1.s8 %v174
      %v823 = vunpack.c.1.s8 %v175
      %v824 = vunpack.c.1.s8 %v176
      %v825 = vunpack.c.1.s8 %v177
      %v826 = vunpack.c.1.s8 %v178
      %v827 = vunpack.c.1.s8 %v179
      %v828 = vunpack.c.1.s8 %v180
      %v829 = vunpack.c.2.s8 %v173
      %v830 = vunpack.c.2.s8 %v174
      %v831 = vunpack.c.2.s8 %v175
      %v832 = vunpack.c.2.s8 %v176
      %v833 = vunpack.c.2.s8 %v177
      %v834 = vunpack.c.2.s8 %v178
      %v835 = vunpack.c.2.s8 %v179
      %v836 = vunpack.c.2.s8 %v180
      %v837 = vunpack.c.3.s8 %v173
      %v838 = vunpack.c.3.s8 %v174
      %v839 = vunpack.c.3.s8 %v175
      %v840 = vunpack.c.3.s8 %v176
      %v841 = vunpack.c.3.s8 %v177
      %v842 = vunpack.c.3.s8 %v178
      %v843 = vunpack.c.3.s8 %v179
      %v844 = vunpack.c.3.s8 %v180
      %v845 = vunpack.c.0.s8 %v181
      %v846 = vunpack.c.0.s8 %v182
      %v847 = vunpack.c.0.s8 %v183
      %v848 = vunpack.c.0.s8 %v184
      %v849 = vunpack.c.0.s8 %v185
      %v850 = vunpack.c.0.s8 %v186
      %v851 = vunpack.c.0.s8 %v187
      %v852 = vunpack.c.0.s8 %v188
      %v853 = vunpack.c.1.s8 %v181
      %v854 = vunpack.c.1.s8 %v182
      %v855 = vunpack.c.1.s8 %v183
      %v856 = vunpack.c.1.s8 %v184
      %v857 = vunpack.c.1.s8 %v185
      %v858 = vunpack.c.1.s8 %v186
      %v859 = vunpack.c.1.s8 %v187
      %v860 = vunpack.c.1.s8 %v188
      %v861 = vunpack.c.2.s8 %v181
      %v862 = vunpack.c.2.s8 %v182
      %v863 = vunpack.c.2.s8 %v183
      %v864 = vunpack.c.2.s8 %v184
      %v865 = vunpack.c.2.s8 %v185
      %v866 = vunpack.c.2.s8 %v186
      %v867 = vunpack.c.2.s8 %v187
      %v868 = vunpack.c.2.s8 %v188
      %v869 = vunpack.c.3.s8 %v181
      %v870 = vunpack.c.3.s8 %v182
      %v871 = vunpack.c.3.s8 %v183
      %v872 = vunpack.c.3.s8 %v184
      %v873 = vunpack.c.3.s8 %v185
      %v874 = vunpack.c.3.s8 %v186
      %v875 = vunpack.c.3.s8 %v187
      %v876 = vunpack.c.3.s8 %v188
      %v877 = vunpack.c.0.s8 %v189
      %v878 = vunpack.c.0.s8 %v190
      %v879 = vunpack.c.0.s8 %v191
      %v880 = vunpack.c.0.s8 %v192
      %v881 = vunpack.c.0.s8 %v193
      %v882 = vunpack.c.0.s8 %v194
      %v883 = vunpack.c.0.s8 %v195
      %v884 = vunpack.c.0.s8 %v196
      %v885 = vunpack.c.1.s8 %v189
      %v886 = vunpack.c.1.s8 %v190
      %v887 = vunpack.c.1.s8 %v191
      %v888 = vunpack.c.1.s8 %v192
      %v889 = vunpack.c.1.s8 %v193
      %v890 = vunpack.c.1.s8 %v194
      %v891 = vunpack.c.1.s8 %v195
      %v892 = vunpack.c.1.s8 %v196
      %v893 = vunpack.c.2.s8 %v189
      %v894 = vunpack.c.2.s8 %v190
      %v895 = vunpack.c.2.s8 %v191
      %v896 = vunpack.c.2.s8 %v192
      %v897 = vunpack.c.2.s8 %v193
      %v898 = vunpack.c.2.s8 %v194
      %v899 = vunpack.c.2.s8 %v195
      %v900 = vunpack.c.2.s8 %v196
      %v901 = vunpack.c.3.s8 %v189
      %v902 = vunpack.c.3.s8 %v190
      %v903 = vunpack.c.3.s8 %v191
      %v904 = vunpack.c.3.s8 %v192
      %v905 = vunpack.c.3.s8 %v193
      %v906 = vunpack.c.3.s8 %v194
      %v907 = vunpack.c.3.s8 %v195
      %v908 = vunpack.c.3.s8 %v196
      %v909 = vunpack.c.0.s8 %v197
      %v910 = vunpack.c.0.s8 %v198
      %v911 = vunpack.c.0.s8 %v199
      %v912 = vunpack.c.0.s8 %v200
      %v913 = vunpack.c.0.s8 %v201
      %v914 = vunpack.c.0.s8 %v202
      %v915 = vunpack.c.0.s8 %v203
      %v916 = vunpack.c.0.s8 %v204
      %v917 = vunpack.c.1.s8 %v197
      %v918 = vunpack.c.1.s8 %v198
      %v919 = vunpack.c.1.s8 %v199
      %v920 = vunpack.c.1.s8 %v200
      %v921 = vunpack.c.1.s8 %v201
      %v922 = vunpack.c.1.s8 %v202
      %v923 = vunpack.c.1.s8 %v203
      %v924 = vunpack.c.1.s8 %v204
      %v925 = vunpack.c.2.s8 %v197
      %v926 = vunpack.c.2.s8 %v198
      %v927 = vunpack.c.2.s8 %v199
      %v928 = vunpack.c.2.s8 %v200
      %v929 = vunpack.c.2.s8 %v201
      %v930 = vunpack.c.2.s8 %v202
      %v931 = vunpack.c.2.s8 %v203
      %v932 = vunpack.c.2.s8 %v204
      %v933 = vunpack.c.3.s8 %v197
      %v934 = vunpack.c.3.s8 %v198
      %v935 = vunpack.c.3.s8 %v199
      %v936 = vunpack.c.3.s8 %v200
      %v937 = vunpack.c.3.s8 %v201
      %v938 = vunpack.c.3.s8 %v202
      %v939 = vunpack.c.3.s8 %v203
      %v940 = vunpack.c.3.s8 %v204
      %v941 = vunpack.c.0.s8 %v205
      %v942 = vunpack.c.0.s8 %v206
      %v943 = vunpack.c.0.s8 %v207
      %v944 = vunpack.c.0.s8 %v208
      %v945 = vunpack.c.0.s8 %v209
      %v946 = vunpack.c.0.s8 %v210
      %v947 = vunpack.c.0.s8 %v211
      %v948 = vunpack.c.0.s8 %v212
      %v949 = vunpack.c.1.s8 %v205
      %v950 = vunpack.c.1.s8 %v206
      %v951 = vunpack.c.1.s8 %v207
      %v952 = vunpack.c.1.s8 %v208
      %v953 = vunpack.c.1.s8 %v209
      %v954 = vunpack.c.1.s8 %v210
      %v955 = vunpack.c.1.s8 %v211
      %v956 = vunpack.c.1.s8 %v212
      %v957 = vunpack.c.2.s8 %v205
      %v958 = vunpack.c.2.s8 %v206
      %v959 = vunpack.c.2.s8 %v207
      %v960 = vunpack.c.2.s8 %v208
      %v961 = vunpack.c.2.s8 %v209
      %v962 = vunpack.c.2.s8 %v210
      %v963 = vunpack.c.2.s8 %v211
      %v964 = vunpack.c.2.s8 %v212
      %v965 = vunpack.c.3.s8 %v205
      %v966 = vunpack.c.3.s8 %v206
      %v967 = vunpack.c.3.s8 %v207
      %v968 = vunpack.c.3.s8 %v208
      %v969 = vunpack.c.3.s8 %v209
      %v970 = vunpack.c.3.s8 %v210
      %v971 = vunpack.c.3.s8 %v211
      %v972 = vunpack.c.3.s8 %v212
      %v973 = vunpack.c.0.s8 %v213
      %v974 = vunpack.c.0.s8 %v214
      %v975 = vunpack.c.0.s8 %v215
      %v976 = vunpack.c.0.s8 %v216
      %v977 = vunpack.c.0.s8 %v217
      %v978 = vunpack.c.0.s8 %v218
      %v979 = vunpack.c.0.s8 %v219
      %v980 = vunpack.c.0.s8 %v220
      %v981 = vunpack.c.1.s8 %v213
      %v982 = vunpack.c.1.s8 %v214
      %v983 = vunpack.c.1.s8 %v215
      %v984 = vunpack.c.1.s8 %v216
      %v985 = vunpack.c.1.s8 %v217
      %v986 = vunpack.c.1.s8 %v218
      %v987 = vunpack.c.1.s8 %v219
      %v988 = vunpack.c.1.s8 %v220
      %v989 = vunpack.c.2.s8 %v213
      %v990 = vunpack.c.2.s8 %v214
      %v991 = vunpack.c.2.s8 %v215
      %v992 = vunpack.c.2.s8 %v216
      %v993 = vunpack.c.2.s8 %v217
      %v994 = vunpack.c.2.s8 %v218
      %v995 = vunpack.c.2.s8 %v219
      %v996 = vunpack.c.2.s8 %v220
      %v997 = vunpack.c.3.s8 %v213
      %v998 = vunpack.c.3.s8 %v214
      %v999 = vunpack.c.3.s8 %v215
      %v1000 = vunpack.c.3.s8 %v216
      %v1001 = vunpack.c.3.s8 %v217
      %v1002 = vunpack.c.3.s8 %v218
      %v1003 = vunpack.c.3.s8 %v219
      %v1004 = vunpack.c.3.s8 %v220
      %v1005 = vunpack.c.0.s8 %v221
      %v1006 = vunpack.c.0.s8 %v222
      %v1007 = vunpack.c.0.s8 %v223
      %v1008 = vunpack.c.0.s8 %v224
      %v1009 = vunpack.c.0.s8 %v225
      %v1010 = vunpack.c.0.s8 %v226
      %v1011 = vunpack.c.0.s8 %v227
      %v1012 = vunpack.c.0.s8 %v228
      %v1013 = vunpack.c.1.s8 %v221
      %v1014 = vunpack.c.1.s8 %v222
      %v1015 = vunpack.c.1.s8 %v223
      %v1016 = vunpack.c.1.s8 %v224
      %v1017 = vunpack.c.1.s8 %v225
      %v1018 = vunpack.c.1.s8 %v226
      %v1019 = vunpack.c.1.s8 %v227
      %v1020 = vunpack.c.1.s8 %v228
      %v1021 = vunpack.c.2.s8 %v221
      %v1022 = vunpack.c.2.s8 %v222
      %v1023 = vunpack.c.2.s8 %v223
      %v1024 = vunpack.c.2.s8 %v224
      %v1025 = vunpack.c.2.s8 %v225
      %v1026 = vunpack.c.2.s8 %v226
      %v1027 = vunpack.c.2.s8 %v227
      %v1028 = vunpack.c.2.s8 %v228
      %v1029 = vunpack.c.3.s8 %v221
      %v1030 = vunpack.c.3.s8 %v222
      %v1031 = vunpack.c.3.s8 %v223
      %v1032 = vunpack.c.3.s8 %v224
      %v1033 = vunpack.c.3.s8 %v225
      %v1034 = vunpack.c.3.s8 %v226
      %v1035 = vunpack.c.3.s8 %v227
      %v1036 = vunpack.c.3.s8 %v228
      %v1037 = vunpack.c.0.s8 %v229
      %v1038 = vunpack.c.0.s8 %v230
      %v1039 = vunpack.c.0.s8 %v231
      %v1040 = vunpack.c.0.s8 %v232
      %v1041 = vunpack.c.0.s8 %v233
      %v1042 = vunpack.c.0.s8 %v234
      %v1043 = vunpack.c.0.s8 %v235
      %v1044 = vunpack.c.0.s8 %v236
      %v1045 = vunpack.c.1.s8 %v229
      %v1046 = vunpack.c.1.s8 %v230
      %v1047 = vunpack.c.1.s8 %v231
      %v1048 = vunpack.c.1.s8 %v232
      %v1049 = vunpack.c.1.s8 %v233
      %v1050 = vunpack.c.1.s8 %v234
      %v1051 = vunpack.c.1.s8 %v235
      %v1052 = vunpack.c.1.s8 %v236
      %v1053 = vunpack.c.2.s8 %v229
      %v1054 = vunpack.c.2.s8 %v230
      %v1055 = vunpack.c.2.s8 %v231
      %v1056 = vunpack.c.2.s8 %v232
      %v1057 = vunpack.c.2.s8 %v233
      %v1058 = vunpack.c.2.s8 %v234
      %v1059 = vunpack.c.2.s8 %v235
      %v1060 = vunpack.c.2.s8 %v236
      %v1061 = vunpack.c.3.s8 %v229
      %v1062 = vunpack.c.3.s8 %v230
      %v1063 = vunpack.c.3.s8 %v231
      %v1064 = vunpack.c.3.s8 %v232
      %v1065 = vunpack.c.3.s8 %v233
      %v1066 = vunpack.c.3.s8 %v234
      %v1067 = vunpack.c.3.s8 %v235
      %v1068 = vunpack.c.3.s8 %v236
      %v1069 = vunpack.c.0.s8 %v237
      %v1070 = vunpack.c.0.s8 %v238
      %v1071 = vunpack.c.0.s8 %v239
      %v1072 = vunpack.c.0.s8 %v240
      %v1073 = vunpack.c.0.s8 %v241
      %v1074 = vunpack.c.0.s8 %v242
      %v1075 = vunpack.c.0.s8 %v243
      %v1076 = vunpack.c.0.s8 %v244
      %v1077 = vunpack.c.1.s8 %v237
      %v1078 = vunpack.c.1.s8 %v238
      %v1079 = vunpack.c.1.s8 %v239
      %v1080 = vunpack.c.1.s8 %v240
      %v1081 = vunpack.c.1.s8 %v241
      %v1082 = vunpack.c.1.s8 %v242
      %v1083 = vunpack.c.1.s8 %v243
      %v1084 = vunpack.c.1.s8 %v244
      %v1085 = vunpack.c.2.s8 %v237
      %v1086 = vunpack.c.2.s8 %v238
      %v1087 = vunpack.c.2.s8 %v239
      %v1088 = vunpack.c.2.s8 %v240
      %v1089 = vunpack.c.2.s8 %v241
      %v1090 = vunpack.c.2.s8 %v242
      %v1091 = vunpack.c.2.s8 %v243
      %v1092 = vunpack.c.2.s8 %v244
      %v1093 = vunpack.c.3.s8 %v237
      %v1094 = vunpack.c.3.s8 %v238
      %v1095 = vunpack.c.3.s8 %v239
      %v1096 = vunpack.c.3.s8 %v240
      %v1097 = vunpack.c.3.s8 %v241
      %v1098 = vunpack.c.3.s8 %v242
      %v1099 = vunpack.c.3.s8 %v243
      %v1100 = vunpack.c.3.s8 %v244
      %v1101 = vunpack.c.0.s8 %v245
      %v1102 = vunpack.c.0.s8 %v246
      %v1103 = vunpack.c.0.s8 %v247
      %v1104 = vunpack.c.0.s8 %v248
      %v1105 = vunpack.c.0.s8 %v249
      %v1106 = vunpack.c.0.s8 %v250
      %v1107 = vunpack.c.0.s8 %v251
      %v1108 = vunpack.c.0.s8 %v252
      %v1109 = vunpack.c.1.s8 %v245
      %v1110 = vunpack.c.1.s8 %v246
      %v1111 = vunpack.c.1.s8 %v247
      %v1112 = vunpack.c.1.s8 %v248
      %v1113 = vunpack.c.1.s8 %v249
      %v1114 = vunpack.c.1.s8 %v250
      %v1115 = vunpack.c.1.s8 %v251
      %v1116 = vunpack.c.1.s8 %v252
      %v1117 = vunpack.c.2.s8 %v245
      %v1118 = vunpack.c.2.s8 %v246
      %v1119 = vunpack.c.2.s8 %v247
      %v1120 = vunpack.c.2.s8 %v248
      %v1121 = vunpack.c.2.s8 %v249
      %v1122 = vunpack.c.2.s8 %v250
      %v1123 = vunpack.c.2.s8 %v251
      %v1124 = vunpack.c.2.s8 %v252
      %v1125 = vunpack.c.3.s8 %v245
      %v1126 = vunpack.c.3.s8 %v246
      %v1127 = vunpack.c.3.s8 %v247
      %v1128 = vunpack.c.3.s8 %v248
      %v1129 = vunpack.c.3.s8 %v249
      %v1130 = vunpack.c.3.s8 %v250
      %v1131 = vunpack.c.3.s8 %v251
      %v1132 = vunpack.c.3.s8 %v252
      %v1133 = vunpack.c.0.s8 %v253
      %v1134 = vunpack.c.0.s8 %v254
      %v1135 = vunpack.c.0.s8 %v255
      %v1136 = vunpack.c.0.s8 %v256
      %v1137 = vunpack.c.0.s8 %v257
      %v1138 = vunpack.c.0.s8 %v258
      %v1139 = vunpack.c.0.s8 %v259
      %v1140 = vunpack.c.0.s8 %v260
      %v1141 = vunpack.c.1.s8 %v253
      %v1142 = vunpack.c.1.s8 %v254
      %v1143 = vunpack.c.1.s8 %v255
      %v1144 = vunpack.c.1.s8 %v256
      %v1145 = vunpack.c.1.s8 %v257
      %v1146 = vunpack.c.1.s8 %v258
      %v1147 = vunpack.c.1.s8 %v259
      %v1148 = vunpack.c.1.s8 %v260
      %v1149 = vunpack.c.2.s8 %v253
      %v1150 = vunpack.c.2.s8 %v254
      %v1151 = vunpack.c.2.s8 %v255
      %v1152 = vunpack.c.2.s8 %v256
      %v1153 = vunpack.c.2.s8 %v257
      %v1154 = vunpack.c.2.s8 %v258
      %v1155 = vunpack.c.2.s8 %v259
      %v1156 = vunpack.c.2.s8 %v260
      %v1157 = vunpack.c.3.s8 %v253
      %v1158 = vunpack.c.3.s8 %v254
      %v1159 = vunpack.c.3.s8 %v255
      %v1160 = vunpack.c.3.s8 %v256
      %v1161 = vunpack.c.3.s8 %v257
      %v1162 = vunpack.c.3.s8 %v258
      %v1163 = vunpack.c.3.s8 %v259
      %v1164 = vunpack.c.3.s8 %v260
      %v1165 = vunpack.c.0.s8 %v261
      %v1166 = vunpack.c.0.s8 %v262
      %v1167 = vunpack.c.0.s8 %v263
      %v1168 = vunpack.c.0.s8 %v264
      %v1169 = vunpack.c.0.s8 %v265
      %v1170 = vunpack.c.0.s8 %v266
      %v1171 = vunpack.c.0.s8 %v267
      %v1172 = vunpack.c.0.s8 %v268
      %v1173 = vunpack.c.1.s8 %v261
      %v1174 = vunpack.c.1.s8 %v262
      %v1175 = vunpack.c.1.s8 %v263
      %v1176 = vunpack.c.1.s8 %v264
      %v1177 = vunpack.c.1.s8 %v265
      %v1178 = vunpack.c.1.s8 %v266
      %v1179 = vunpack.c.1.s8 %v267
      %v1180 = vunpack.c.1.s8 %v268
      %v1181 = vunpack.c.2.s8 %v261
      %v1182 = vunpack.c.2.s8 %v262
      %v1183 = vunpack.c.2.s8 %v263
      %v1184 = vunpack.c.2.s8 %v264
      %v1185 = vunpack.c.2.s8 %v265
      %v1186 = vunpack.c.2.s8 %v266
      %v1187 = vunpack.c.2.s8 %v267
      %v1188 = vunpack.c.2.s8 %v268
      %v1189 = vunpack.c.3.s8 %v261
      %v1190 = vunpack.c.3.s8 %v262
      %v1191 = vunpack.c.3.s8 %v263
      %v1192 = vunpack.c.3.s8 %v264
      %v1193 = vunpack.c.3.s8 %v265
      %v1194 = vunpack.c.3.s8 %v266
      %v1195 = vunpack.c.3.s8 %v267
      %v1196 = vunpack.c.3.s8 %v268
      %v1197 = vunpack.c.0.s8 %v269
      %v1198 = vunpack.c.0.s8 %v270
      %v1199 = vunpack.c.0.s8 %v271
      %v1200 = vunpack.c.0.s8 %v272
      %v1201 = vunpack.c.0.s8 %v273
      %v1202 = vunpack.c.0.s8 %v274
      %v1203 = vunpack.c.0.s8 %v275
      %v1204 = vunpack.c.0.s8 %v276
      %v1205 = vunpack.c.1.s8 %v269
      %v1206 = vunpack.c.1.s8 %v270
      %v1207 = vunpack.c.1.s8 %v271
      %v1208 = vunpack.c.1.s8 %v272
      %v1209 = vunpack.c.1.s8 %v273
      %v1210 = vunpack.c.1.s8 %v274
      %v1211 = vunpack.c.1.s8 %v275
      %v1212 = vunpack.c.1.s8 %v276
      %v1213 = vunpack.c.2.s8 %v269
      %v1214 = vunpack.c.2.s8 %v270
      %v1215 = vunpack.c.2.s8 %v271
      %v1216 = vunpack.c.2.s8 %v272
      %v1217 = vunpack.c.2.s8 %v273
      %v1218 = vunpack.c.2.s8 %v274
      %v1219 = vunpack.c.2.s8 %v275
      %v1220 = vunpack.c.2.s8 %v276
      %v1221 = vunpack.c.3.s8 %v269
      %v1222 = vunpack.c.3.s8 %v270
      %v1223 = vunpack.c.3.s8 %v271
      %v1224 = vunpack.c.3.s8 %v272
      %v1225 = vunpack.c.3.s8 %v273
      %v1226 = vunpack.c.3.s8 %v274
      %v1227 = vunpack.c.3.s8 %v275
      %v1228 = vunpack.c.3.s8 %v276
      %v1229 = vunpack.c.0.s8 %v277
      %v1230 = vunpack.c.0.s8 %v278
      %v1231 = vunpack.c.0.s8 %v279
      %v1232 = vunpack.c.0.s8 %v280
      %v1233 = vunpack.c.0.s8 %v281
      %v1234 = vunpack.c.0.s8 %v282
      %v1235 = vunpack.c.0.s8 %v283
      %v1236 = vunpack.c.0.s8 %v284
      %v1237 = vunpack.c.1.s8 %v277
      %v1238 = vunpack.c.1.s8 %v278
      %v1239 = vunpack.c.1.s8 %v279
      %v1240 = vunpack.c.1.s8 %v280
      %v1241 = vunpack.c.1.s8 %v281
      %v1242 = vunpack.c.1.s8 %v282
      %v1243 = vunpack.c.1.s8 %v283
      %v1244 = vunpack.c.1.s8 %v284
      %v1245 = vunpack.c.2.s8 %v277
      %v1246 = vunpack.c.2.s8 %v278
      %v1247 = vunpack.c.2.s8 %v279
      %v1248 = vunpack.c.2.s8 %v280
      %v1249 = vunpack.c.2.s8 %v281
      %v1250 = vunpack.c.2.s8 %v282
      %v1251 = vunpack.c.2.s8 %v283
      %v1252 = vunpack.c.2.s8 %v284
      %v1253 = vunpack.c.3.s8 %v277
      %v1254 = vunpack.c.3.s8 %v278
      %v1255 = vunpack.c.3.s8 %v279
      %v1256 = vunpack.c.3.s8 %v280
      %v1257 = vunpack.c.3.s8 %v281
      %v1258 = vunpack.c.3.s8 %v282
      %v1259 = vunpack.c.3.s8 %v283
      %v1260 = vunpack.c.3.s8 %v284
      %v1261 = vunpack.c.0.s8 %v285
      %v1262 = vunpack.c.0.s8 %v286
      %v1263 = vunpack.c.0.s8 %v287
      %v1264 = vunpack.c.0.s8 %v288
      %v1265 = vunpack.c.0.s8 %v289
      %v1266 = vunpack.c.0.s8 %v290
      %v1267 = vunpack.c.0.s8 %v291
      %v1268 = vunpack.c.0.s8 %v292
      %v1269 = vunpack.c.1.s8 %v285
      %v1270 = vunpack.c.1.s8 %v286
      %v1271 = vunpack.c.1.s8 %v287
      %v1272 = vunpack.c.1.s8 %v288
      %v1273 = vunpack.c.1.s8 %v289
      %v1274 = vunpack.c.1.s8 %v290
      %v1275 = vunpack.c.1.s8 %v291
      %v1276 = vunpack.c.1.s8 %v292
      %v1277 = vunpack.c.2.s8 %v285
      %v1278 = vunpack.c.2.s8 %v286
      %v1279 = vunpack.c.2.s8 %v287
      %v1280 = vunpack.c.2.s8 %v288
      %v1281 = vunpack.c.2.s8 %v289
      %v1282 = vunpack.c.2.s8 %v290
      %v1283 = vunpack.c.2.s8 %v291
      %v1284 = vunpack.c.2.s8 %v292
      %v1285 = vunpack.c.3.s8 %v285
      %v1286 = vunpack.c.3.s8 %v286
      %v1287 = vunpack.c.3.s8 %v287
      %v1288 = vunpack.c.3.s8 %v288
      %v1289 = vunpack.c.3.s8 %v289
      %v1290 = vunpack.c.3.s8 %v290
      %v1291 = vunpack.c.3.s8 %v291
      %v1292 = vunpack.c.3.s8 %v292
      %v1293 = vunpack.c.0.s8 %v293
      %v1294 = vunpack.c.0.s8 %v294
      %v1295 = vunpack.c.0.s8 %v295
      %v1296 = vunpack.c.0.s8 %v296
      %v1297 = vunpack.c.0.s8 %v297
      %v1298 = vunpack.c.0.s8 %v298
      %v1299 = vunpack.c.0.s8 %v299
      %v1300 = vunpack.c.0.s8 %v300
      %v1301 = vunpack.c.1.s8 %v293
      %v1302 = vunpack.c.1.s8 %v294
      %v1303 = vunpack.c.1.s8 %v295
      %v1304 = vunpack.c.1.s8 %v296
      %v1305 = vunpack.c.1.s8 %v297
      %v1306 = vunpack.c.1.s8 %v298
      %v1307 = vunpack.c.1.s8 %v299
      %v1308 = vunpack.c.1.s8 %v300
      %v1309 = vunpack.c.2.s8 %v293
      %v1310 = vunpack.c.2.s8 %v294
      %v1311 = vunpack.c.2.s8 %v295
      %v1312 = vunpack.c.2.s8 %v296
      %v1313 = vunpack.c.2.s8 %v297
      %v1314 = vunpack.c.2.s8 %v298
      %v1315 = vunpack.c.2.s8 %v299
      %v1316 = vunpack.c.2.s8 %v300
      %v1317 = vunpack.c.3.s8 %v293
      %v1318 = vunpack.c.3.s8 %v294
      %v1319 = vunpack.c.3.s8 %v295
      %v1320 = vunpack.c.3.s8 %v296
      %v1321 = vunpack.c.3.s8 %v297
      %v1322 = vunpack.c.3.s8 %v298
      %v1323 = vunpack.c.3.s8 %v299
      %v1324 = vunpack.c.3.s8 %v300
      %v1325 = vcvt.s32.f32 %v301
      %v1326 = vcvt.s32.f32 %v302
      %v1327 = vcvt.s32.f32 %v303
      %v1328 = vcvt.s32.f32 %v304
      %v1329 = vcvt.s32.f32 %v305
      %v1330 = vcvt.s32.f32 %v306
      %v1331 = vcvt.s32.f32 %v307
      %v1332 = vcvt.s32.f32 %v308
      %v1333 = vcvt.s32.f32 %v309
      %v1334 = vcvt.s32.f32 %v310
      %v1335 = vcvt.s32.f32 %v311
      %v1336 = vcvt.s32.f32 %v312
      %v1337 = vcvt.s32.f32 %v313
      %v1338 = vcvt.s32.f32 %v314
      %v1339 = vcvt.s32.f32 %v315
      %v1340 = vcvt.s32.f32 %v316
      %v1341 = vcvt.s32.f32 %v317
      %v1342 = vcvt.s32.f32 %v318
      %v1343 = vcvt.s32.f32 %v319
      %v1344 = vcvt.s32.f32 %v320
      %v1345 = vcvt.s32.f32 %v321
      %v1346 = vcvt.s32.f32 %v322
      %v1347 = vcvt.s32.f32 %v323
      %v1348 = vcvt.s32.f32 %v324
      %v1349 = vcvt.s32.f32 %v325
      %v1350 = vcvt.s32.f32 %v326
      %v1351 = vcvt.s32.f32 %v327
      %v1352 = vcvt.s32.f32 %v328
      %v1353 = vcvt.s32.f32 %v329
      %v1354 = vcvt.s32.f32 %v330
      %v1355 = vcvt.s32.f32 %v331
      %v1356 = vcvt.s32.f32 %v332
      %v1357 = vcvt.s32.f32 %v333
      %v1358 = vcvt.s32.f32 %v334
      %v1359 = vcvt.s32.f32 %v335
      %v1360 = vcvt.s32.f32 %v336
      %v1361 = vcvt.s32.f32 %v337
      %v1362 = vcvt.s32.f32 %v338
      %v1363 = vcvt.s32.f32 %v339
      %v1364 = vcvt.s32.f32 %v340
      %v1365 = vcvt.s32.f32 %v341
      %v1366 = vcvt.s32.f32 %v342
      %v1367 = vcvt.s32.f32 %v343
      %v1368 = vcvt.s32.f32 %v344
      %v1369 = vcvt.s32.f32 %v345
      %v1370 = vcvt.s32.f32 %v346
      %v1371 = vcvt.s32.f32 %v347
      %v1372 = vcvt.s32.f32 %v348
      %v1373 = vcvt.s32.f32 %v349
      %v1374 = vcvt.s32.f32 %v350
      %v1375 = vcvt.s32.f32 %v351
      %v1376 = vcvt.s32.f32 %v352
      %v1377 = vcvt.s32.f32 %v353
      %v1378 = vcvt.s32.f32 %v354
      %v1379 = vcvt.s32.f32 %v355
      %v1380 = vcvt.s32.f32 %v356
      %v1381 = vcvt.s32.f32 %v357
      %v1382 = vcvt.s32.f32 %v358
      %v1383 = vcvt.s32.f32 %v359
      %v1384 = vcvt.s32.f32 %v360
      %v1385 = vcvt.s32.f32 %v361
      %v1386 = vcvt.s32.f32 %v362
      %v1387 = vcvt.s32.f32 %v363
      %v1388 = vcvt.s32.f32 %v364
      %v1389 = vcvt.s32.f32 %v365
      %v1390 = vcvt.s32.f32 %v366
      %v1391 = vcvt.s32.f32 %v367
      %v1392 = vcvt.s32.f32 %v368
      %v1393 = vcvt.s32.f32 %v369
      %v1394 = vcvt.s32.f32 %v370
      %v1395 = vcvt.s32.f32 %v371
      %v1396 = vcvt.s32.f32 %v372
      %v1397 = vcvt.s32.f32 %v373
      %v1398 = vcvt.s32.f32 %v374
      %v1399 = vcvt.s32.f32 %v375
      %v1400 = vcvt.s32.f32 %v376
      %v1401 = vcvt.s32.f32 %v377
      %v1402 = vcvt.s32.f32 %v378
      %v1403 = vcvt.s32.f32 %v379
      %v1404 = vcvt.s32.f32 %v380
      %v1405 = vcvt.s32.f32 %v381
      %v1406 = vcvt.s32.f32 %v382
      %v1407 = vcvt.s32.f32 %v383
      %v1408 = vcvt.s32.f32 %v384
      %v1409 = vcvt.s32.f32 %v385
      %v1410 = vcvt.s32.f32 %v386
      %v1411 = vcvt.s32.f32 %v387
      %v1412 = vcvt.s32.f32 %v388
      %v1413 = vcvt.s32.f32 %v389
      %v1414 = vcvt.s32.f32 %v390
      %v1415 = vcvt.s32.f32 %v391
      %v1416 = vcvt.s32.f32 %v392
      %v1417 = vcvt.s32.f32 %v393
      %v1418 = vcvt.s32.f32 %v394
      %v1419 = vcvt.s32.f32 %v395
      %v1420 = vcvt.s32.f32 %v396
      %v1421 = vcvt.s32.f32 %v397
      %v1422 = vcvt.s32.f32 %v398
      %v1423 = vcvt.s32.f32 %v399
      %v1424 = vcvt.s32.f32 %v400
      %v1425 = vcvt.s32.f32 %v401
      %v1426 = vcvt.s32.f32 %v402
      %v1427 = vcvt.s32.f32 %v403
      %v1428 = vcvt.s32.f32 %v404
      %v1429 = vcvt.s32.f32 %v405
      %v1430 = vcvt.s32.f32 %v406
      %v1431 = vcvt.s32.f32 %v407
      %v1432 = vcvt.s32.f32 %v408
      %v1433 = vcvt.s32.f32 %v409
      %v1434 = vcvt.s32.f32 %v410
      %v1435 = vcvt.s32.f32 %v411
      %v1436 = vcvt.s32.f32 %v412
      %v1437 = vcvt.s32.f32 %v413
      %v1438 = vcvt.s32.f32 %v414
      %v1439 = vcvt.s32.f32 %v415
      %v1440 = vcvt.s32.f32 %v416
      %v1441 = vcvt.s32.f32 %v417
      %v1442 = vcvt.s32.f32 %v418
      %v1443 = vcvt.s32.f32 %v419
      %v1444 = vcvt.s32.f32 %v420
      %v1445 = vcvt.s32.f32 %v421
      %v1446 = vcvt.s32.f32 %v422
      %v1447 = vcvt.s32.f32 %v423
      %v1448 = vcvt.s32.f32 %v424
      %v1449 = vcvt.s32.f32 %v425
      %v1450 = vcvt.s32.f32 %v426
      %v1451 = vcvt.s32.f32 %v427
      %v1452 = vcvt.s32.f32 %v428
      %v1453 = vcvt.s32.f32 %v429
      %v1454 = vcvt.s32.f32 %v430
      %v1455 = vcvt.s32.f32 %v431
      %v1456 = vcvt.s32.f32 %v432
      %v1457 = vcvt.s32.f32 %v433
      %v1458 = vcvt.s32.f32 %v434
      %v1459 = vcvt.s32.f32 %v435
      %v1460 = vcvt.s32.f32 %v436
      %v1461 = vcvt.s32.f32 %v437
      %v1462 = vcvt.s32.f32 %v438
      %v1463 = vcvt.s32.f32 %v439
      %v1464 = vcvt.s32.f32 %v440
      %v1465 = vcvt.s32.f32 %v441
      %v1466 = vcvt.s32.f32 %v442
      %v1467 = vcvt.s32.f32 %v443
      %v1468 = vcvt.s32.f32 %v444
      %v1469 = vcvt.s32.f32 %v445
      %v1470 = vcvt.s32.f32 %v446
      %v1471 = vcvt.s32.f32 %v447
      %v1472 = vcvt.s32.f32 %v448
      %v1473 = vcvt.s32.f32 %v449
      %v1474 = vcvt.s32.f32 %v450
      %v1475 = vcvt.s32.f32 %v451
      %v1476 = vcvt.s32.f32 %v452
      %v1477 = vcvt.s32.f32 %v453
      %v1478 = vcvt.s32.f32 %v454
      %v1479 = vcvt.s32.f32 %v455
      %v1480 = vcvt.s32.f32 %v456
      %v1481 = vcvt.s32.f32 %v457
      %v1482 = vcvt.s32.f32 %v458
      %v1483 = vcvt.s32.f32 %v459
      %v1484 = vcvt.s32.f32 %v460
      %v1485 = vcvt.s32.f32 %v461
      %v1486 = vcvt.s32.f32 %v462
      %v1487 = vcvt.s32.f32 %v463
      %v1488 = vcvt.s32.f32 %v464
      %v1489 = vcvt.s32.f32 %v465
      %v1490 = vcvt.s32.f32 %v466
      %v1491 = vcvt.s32.f32 %v467
      %v1492 = vcvt.s32.f32 %v468
      %v1493 = vcvt.s32.f32 %v469
      %v1494 = vcvt.s32.f32 %v470
      %v1495 = vcvt.s32.f32 %v471
      %v1496 = vcvt.s32.f32 %v472
      %v1497 = vcvt.s32.f32 %v473
      %v1498 = vcvt.s32.f32 %v474
      %v1499 = vcvt.s32.f32 %v475
      %v1500 = vcvt.s32.f32 %v476
      %v1501 = vcvt.s32.f32 %v477
      %v1502 = vcvt.s32.f32 %v478
      %v1503 = vcvt.s32.f32 %v479
      %v1504 = vcvt.s32.f32 %v480
      %v1505 = vcvt.s32.f32 %v481
      %v1506 = vcvt.s32.f32 %v482
      %v1507 = vcvt.s32.f32 %v483
      %v1508 = vcvt.s32.f32 %v484
      %v1509 = vcvt.s32.f32 %v485
      %v1510 = vcvt.s32.f32 %v486
      %v1511 = vcvt.s32.f32 %v487
      %v1512 = vcvt.s32.f32 %v488
      %v1513 = vcvt.s32.f32 %v489
      %v1514 = vcvt.s32.f32 %v490
      %v1515 = vcvt.s32.f32 %v491
      %v1516 = vcvt.s32.f32 %v492
      %v1517 = vcvt.s32.f32 %v493
      %v1518 = vcvt.s32.f32 %v494
      %v1519 = vcvt.s32.f32 %v495
      %v1520 = vcvt.s32.f32 %v496
      %v1521 = vcvt.s32.f32 %v497
      %v1522 = vcvt.s32.f32 %v498
      %v1523 = vcvt.s32.f32 %v499
      %v1524 = vcvt.s32.f32 %v500
      %v1525 = vcvt.s32.f32 %v501
      %v1526 = vcvt.s32.f32 %v502
      %v1527 = vcvt.s32.f32 %v503
      %v1528 = vcvt.s32.f32 %v504
      %v1529 = vcvt.s32.f32 %v505
      %v1530 = vcvt.s32.f32 %v506
      %v1531 = vcvt.s32.f32 %v507
      %v1532 = vcvt.s32.f32 %v508
      %v1533 = vcvt.s32.f32 %v509
      %v1534 = vcvt.s32.f32 %v510
      %v1535 = vcvt.s32.f32 %v511
      %v1536 = vcvt.s32.f32 %v512
      %v1537 = vcvt.s32.f32 %v513
      %v1538 = vcvt.s32.f32 %v514
      %v1539 = vcvt.s32.f32 %v515
      %v1540 = vcvt.s32.f32 %v516
      %v1541 = vcvt.s32.f32 %v517
      %v1542 = vcvt.s32.f32 %v518
      %v1543 = vcvt.s32.f32 %v519
      %v1544 = vcvt.s32.f32 %v520
      %v1545 = vcvt.s32.f32 %v521
      %v1546 = vcvt.s32.f32 %v522
      %v1547 = vcvt.s32.f32 %v523
      %v1548 = vcvt.s32.f32 %v524
      %v1549 = vcvt.s32.f32 %v525
      %v1550 = vcvt.s32.f32 %v526
      %v1551 = vcvt.s32.f32 %v527
      %v1552 = vcvt.s32.f32 %v528
      %v1553 = vcvt.s32.f32 %v529
      %v1554 = vcvt.s32.f32 %v530
      %v1555 = vcvt.s32.f32 %v531
      %v1556 = vcvt.s32.f32 %v532
      %v1557 = vcvt.s32.f32 %v533
      %v1558 = vcvt.s32.f32 %v534
      %v1559 = vcvt.s32.f32 %v535
      %v1560 = vcvt.s32.f32 %v536
      %v1561 = vcvt.s32.f32 %v537
      %v1562 = vcvt.s32.f32 %v538
      %v1563 = vcvt.s32.f32 %v539
      %v1564 = vcvt.s32.f32 %v540
      %v1565 = vcvt.s32.f32 %v541
      %v1566 = vcvt.s32.f32 %v542
      %v1567 = vcvt.s32.f32 %v543
      %v1568 = vcvt.s32.f32 %v544
      %v1569 = vcvt.s32.f32 %v545
      %v1570 = vcvt.s32.f32 %v546
      %v1571 = vcvt.s32.f32 %v547
      %v1572 = vcvt.s32.f32 %v548
      %v1573 = vcvt.s32.f32 %v549
      %v1574 = vcvt.s32.f32 %v550
      %v1575 = vcvt.s32.f32 %v551
      %v1576 = vcvt.s32.f32 %v552
      %v1577 = vcvt.s32.f32 %v553
      %v1578 = vcvt.s32.f32 %v554
      %v1579 = vcvt.s32.f32 %v555
      %v1580 = vcvt.s32.f32 %v556
      %v1581 = vcvt.s32.f32 %v557
      %v1582 = vcvt.s32.f32 %v558
      %v1583 = vcvt.s32.f32 %v559
      %v1584 = vcvt.s32.f32 %v560
      %v1585 = vcvt.s32.f32 %v561
      %v1586 = vcvt.s32.f32 %v562
      %v1587 = vcvt.s32.f32 %v563
      %v1588 = vcvt.s32.f32 %v564
      %v1589 = vcvt.s32.f32 %v565
      %v1590 = vcvt.s32.f32 %v566
      %v1591 = vcvt.s32.f32 %v567
      %v1592 = vcvt.s32.f32 %v568
      %v1593 = vcvt.s32.f32 %v569
      %v1594 = vcvt.s32.f32 %v570
      %v1595 = vcvt.s32.f32 %v571
      %v1596 = vcvt.s32.f32 %v572
      %v1597 = vcvt.s32.f32 %v573
      %v1598 = vcvt.s32.f32 %v574
      %v1599 = vcvt.s32.f32 %v575
      %v1600 = vcvt.s32.f32 %v576
      %v1601 = vcvt.s32.f32 %v577
      %v1602 = vcvt.s32.f32 %v578
      %v1603 = vcvt.s32.f32 %v579
      %v1604 = vcvt.s32.f32 %v580
      %v1605 = vcvt.s32.f32 %v581
      %v1606 = vcvt.s32.f32 %v582
      %v1607 = vcvt.s32.f32 %v583
      %v1608 = vcvt.s32.f32 %v584
      %v1609 = vcvt.s32.f32 %v585
      %v1610 = vcvt.s32.f32 %v586
      %v1611 = vcvt.s32.f32 %v587
      %v1612 = vcvt.s32.f32 %v588
      %v1613 = vcvt.s32.f32 %v589
      %v1614 = vcvt.s32.f32 %v590
      %v1615 = vcvt.s32.f32 %v591
      %v1616 = vcvt.s32.f32 %v592
      %v1617 = vcvt.s32.f32 %v593
      %v1618 = vcvt.s32.f32 %v594
      %v1619 = vcvt.s32.f32 %v595
      %v1620 = vcvt.s32.f32 %v596
      %v1621 = vcvt.s32.f32 %v597
      %v1622 = vcvt.s32.f32 %v598
      %v1623 = vcvt.s32.f32 %v599
      %v1624 = vcvt.s32.f32 %v600
      %v1625 = vcvt.s32.f32 %v601
      %v1626 = vcvt.s32.f32 %v602
      %v1627 = vcvt.s32.f32 %v603
      %v1628 = vcvt.s32.f32 %v604
      %v1629 = vcvt.s32.f32 %v605
      %v1630 = vcvt.s32.f32 %v606
      %v1631 = vcvt.s32.f32 %v607
      %v1632 = vcvt.s32.f32 %v608
      %v1633 = vcvt.s32.f32 %v609
      %v1634 = vcvt.s32.f32 %v610
      %v1635 = vcvt.s32.f32 %v611
      %v1636 = vcvt.s32.f32 %v612
      %v1637 = vcvt.s32.f32 %v613
      %v1638 = vcvt.s32.f32 %v614
      %v1639 = vcvt.s32.f32 %v615
      %v1640 = vcvt.s32.f32 %v616
      %v1641 = vcvt.s32.f32 %v617
      %v1642 = vcvt.s32.f32 %v618
      %v1643 = vcvt.s32.f32 %v619
      %v1644 = vcvt.s32.f32 %v620
      %v1645 = vcvt.s32.f32 %v621
      %v1646 = vcvt.s32.f32 %v622
      %v1647 = vcvt.s32.f32 %v623
      %v1648 = vcvt.s32.f32 %v624
      %v1649 = vcvt.s32.f32 %v625
      %v1650 = vcvt.s32.f32 %v626
      %v1651 = vcvt.s32.f32 %v627
      %v1652 = vcvt.s32.f32 %v628
      %v1653 = vcvt.s32.f32 %v629
      %v1654 = vcvt.s32.f32 %v630
      %v1655 = vcvt.s32.f32 %v631
      %v1656 = vcvt.s32.f32 %v632
      %v1657 = vcvt.s32.f32 %v633
      %v1658 = vcvt.s32.f32 %v634
      %v1659 = vcvt.s32.f32 %v635
      %v1660 = vcvt.s32.f32 %v636
      %v1661 = vcvt.s32.f32 %v637
      %v1662 = vcvt.s32.f32 %v638
      %v1663 = vcvt.s32.f32 %v639
      %v1664 = vcvt.s32.f32 %v640
      %v1665 = vcvt.s32.f32 %v641
      %v1666 = vcvt.s32.f32 %v642
      %v1667 = vcvt.s32.f32 %v643
      %v1668 = vcvt.s32.f32 %v644
      %v1669 = vcvt.s32.f32 %v645
      %v1670 = vcvt.s32.f32 %v646
      %v1671 = vcvt.s32.f32 %v647
      %v1672 = vcvt.s32.f32 %v648
      %v1673 = vcvt.s32.f32 %v649
      %v1674 = vcvt.s32.f32 %v650
      %v1675 = vcvt.s32.f32 %v651
      %v1676 = vcvt.s32.f32 %v652
      %v1677 = vcvt.s32.f32 %v653
      %v1678 = vcvt.s32.f32 %v654
      %v1679 = vcvt.s32.f32 %v655
      %v1680 = vcvt.s32.f32 %v656
      %v1681 = vcvt.s32.f32 %v657
      %v1682 = vcvt.s32.f32 %v658
      %v1683 = vcvt.s32.f32 %v659
      %v1684 = vcvt.s32.f32 %v660
      %v1685 = vcvt.s32.f32 %v661
      %v1686 = vcvt.s32.f32 %v662
      %v1687 = vcvt.s32.f32 %v663
      %v1688 = vcvt.s32.f32 %v664
      %v1689 = vcvt.s32.f32 %v665
      %v1690 = vcvt.s32.f32 %v666
      %v1691 = vcvt.s32.f32 %v667
      %v1692 = vcvt.s32.f32 %v668
      %v1693 = vcvt.s32.f32 %v669
      %v1694 = vcvt.s32.f32 %v670
      %v1695 = vcvt.s32.f32 %v671
      %v1696 = vcvt.s32.f32 %v672
      %v1697 = vcvt.s32.f32 %v673
      %v1698 = vcvt.s32.f32 %v674
      %v1699 = vcvt.s32.f32 %v675
      %v1700 = vcvt.s32.f32 %v676
      %v1701 = vcvt.s32.f32 %v677
      %v1702 = vcvt.s32.f32 %v678
      %v1703 = vcvt.s32.f32 %v679
      %v1704 = vcvt.s32.f32 %v680
      %v1705 = vcvt.s32.f32 %v681
      %v1706 = vcvt.s32.f32 %v682
      %v1707 = vcvt.s32.f32 %v683
      %v1708 = vcvt.s32.f32 %v684
      %v1709 = vcvt.s32.f32 %v685
      %v1710 = vcvt.s32.f32 %v686
      %v1711 = vcvt.s32.f32 %v687
      %v1712 = vcvt.s32.f32 %v688
      %v1713 = vcvt.s32.f32 %v689
      %v1714 = vcvt.s32.f32 %v690
      %v1715 = vcvt.s32.f32 %v691
      %v1716 = vcvt.s32.f32 %v692
      %v1717 = vcvt.s32.f32 %v693
      %v1718 = vcvt.s32.f32 %v694
      %v1719 = vcvt.s32.f32 %v695
      %v1720 = vcvt.s32.f32 %v696
      %v1721 = vcvt.s32.f32 %v697
      %v1722 = vcvt.s32.f32 %v698
      %v1723 = vcvt.s32.f32 %v699
      %v1724 = vcvt.s32.f32 %v700
      %v1725 = vcvt.s32.f32 %v701
      %v1726 = vcvt.s32.f32 %v702
      %v1727 = vcvt.s32.f32 %v703
      %v1728 = vcvt.s32.f32 %v704
      %v1729 = vcvt.s32.f32 %v705
      %v1730 = vcvt.s32.f32 %v706
      %v1731 = vcvt.s32.f32 %v707
      %v1732 = vcvt.s32.f32 %v708
      %v1733 = vcvt.s32.f32 %v709
      %v1734 = vcvt.s32.f32 %v710
      %v1735 = vcvt.s32.f32 %v711
      %v1736 = vcvt.s32.f32 %v712
      %v1737 = vcvt.s32.f32 %v713
      %v1738 = vcvt.s32.f32 %v714
      %v1739 = vcvt.s32.f32 %v715
      %v1740 = vcvt.s32.f32 %v716
      %v1741 = vcvt.s32.f32 %v717
      %v1742 = vcvt.s32.f32 %v718
      %v1743 = vcvt.s32.f32 %v719
      %v1744 = vcvt.s32.f32 %v720
      %v1745 = vcvt.s32.f32 %v721
      %v1746 = vcvt.s32.f32 %v722
      %v1747 = vcvt.s32.f32 %v723
      %v1748 = vcvt.s32.f32 %v724
      %v1749 = vcvt.s32.f32 %v725
      %v1750 = vcvt.s32.f32 %v726
      %v1751 = vcvt.s32.f32 %v727
      %v1752 = vcvt.s32.f32 %v728
      %v1753 = vcvt.s32.f32 %v729
      %v1754 = vcvt.s32.f32 %v730
      %v1755 = vcvt.s32.f32 %v731
      %v1756 = vcvt.s32.f32 %v732
      %v1757 = vcvt.s32.f32 %v733
      %v1758 = vcvt.s32.f32 %v734
      %v1759 = vcvt.s32.f32 %v735
      %v1760 = vcvt.s32.f32 %v736
      %v1761 = vcvt.s32.f32 %v737
      %v1762 = vcvt.s32.f32 %v738
      %v1763 = vcvt.s32.f32 %v739
      %v1764 = vcvt.s32.f32 %v740
      %v1765 = vcvt.s32.f32 %v741
      %v1766 = vcvt.s32.f32 %v742
      %v1767 = vcvt.s32.f32 %v743
      %v1768 = vcvt.s32.f32 %v744
      %v1769 = vcvt.s32.f32 %v745
      %v1770 = vcvt.s32.f32 %v746
      %v1771 = vcvt.s32.f32 %v747
      %v1772 = vcvt.s32.f32 %v748
      %v1773 = vcvt.s32.f32 %v749
      %v1774 = vcvt.s32.f32 %v750
      %v1775 = vcvt.s32.f32 %v751
      %v1776 = vcvt.s32.f32 %v752
      %v1777 = vcvt.s32.f32 %v753
      %v1778 = vcvt.s32.f32 %v754
      %v1779 = vcvt.s32.f32 %v755
      %v1780 = vcvt.s32.f32 %v756
      %v1781 = vcvt.s32.f32 %v757
      %v1782 = vcvt.s32.f32 %v758
      %v1783 = vcvt.s32.f32 %v759
      %v1784 = vcvt.s32.f32 %v760
      %v1785 = vcvt.s32.f32 %v761
      %v1786 = vcvt.s32.f32 %v762
      %v1787 = vcvt.s32.f32 %v763
      %v1788 = vcvt.s32.f32 %v764
      %v1789 = vcvt.s32.f32 %v765
      %v1790 = vcvt.s32.f32 %v766
      %v1791 = vcvt.s32.f32 %v767
      %v1792 = vcvt.s32.f32 %v768
      %v1793 = vcvt.s32.f32 %v769
      %v1794 = vcvt.s32.f32 %v770
      %v1795 = vcvt.s32.f32 %v771
      %v1796 = vcvt.s32.f32 %v772
      %v1797 = vcvt.s32.f32 %v773
      %v1798 = vcvt.s32.f32 %v774
      %v1799 = vcvt.s32.f32 %v775
      %v1800 = vcvt.s32.f32 %v776
      %v1801 = vcvt.s32.f32 %v777
      %v1802 = vcvt.s32.f32 %v778
      %v1803 = vcvt.s32.f32 %v779
      %v1804 = vcvt.s32.f32 %v780
      %v1805 = vcvt.s32.f32 %v781
      %v1806 = vcvt.s32.f32 %v782
      %v1807 = vcvt.s32.f32 %v783
      %v1808 = vcvt.s32.f32 %v784
      %v1809 = vcvt.s32.f32 %v785
      %v1810 = vcvt.s32.f32 %v786
      %v1811 = vcvt.s32.f32 %v787
      %v1812 = vcvt.s32.f32 %v788
      %v1813 = vcvt.s32.f32 %v789
      %v1814 = vcvt.s32.f32 %v790
      %v1815 = vcvt.s32.f32 %v791
      %v1816 = vcvt.s32.f32 %v792
      %v1817 = vcvt.s32.f32 %v793
      %v1818 = vcvt.s32.f32 %v794
      %v1819 = vcvt.s32.f32 %v795
      %v1820 = vcvt.s32.f32 %v796
      %v1821 = vcvt.s32.f32 %v797
      %v1822 = vcvt.s32.f32 %v798
      %v1823 = vcvt.s32.f32 %v799
      %v1824 = vcvt.s32.f32 %v800
      %v1825 = vcvt.s32.f32 %v801
      %v1826 = vcvt.s32.f32 %v802
      %v1827 = vcvt.s32.f32 %v803
      %v1828 = vcvt.s32.f32 %v804
      %v1829 = vcvt.s32.f32 %v805
      %v1830 = vcvt.s32.f32 %v806
      %v1831 = vcvt.s32.f32 %v807
      %v1832 = vcvt.s32.f32 %v808
      %v1833 = vcvt.s32.f32 %v809
      %v1834 = vcvt.s32.f32 %v810
      %v1835 = vcvt.s32.f32 %v811
      %v1836 = vcvt.s32.f32 %v812
      %v1837 = vcvt.s32.f32 %v813
      %v1838 = vcvt.s32.f32 %v814
      %v1839 = vcvt.s32.f32 %v815
      %v1840 = vcvt.s32.f32 %v816
      %v1841 = vcvt.s32.f32 %v817
      %v1842 = vcvt.s32.f32 %v818
      %v1843 = vcvt.s32.f32 %v819
      %v1844 = vcvt.s32.f32 %v820
      %v1845 = vcvt.s32.f32 %v821
      %v1846 = vcvt.s32.f32 %v822
      %v1847 = vcvt.s32.f32 %v823
      %v1848 = vcvt.s32.f32 %v824
      %v1849 = vcvt.s32.f32 %v825
      %v1850 = vcvt.s32.f32 %v826
      %v1851 = vcvt.s32.f32 %v827
      %v1852 = vcvt.s32.f32 %v828
      %v1853 = vcvt.s32.f32 %v829
      %v1854 = vcvt.s32.f32 %v830
      %v1855 = vcvt.s32.f32 %v831
      %v1856 = vcvt.s32.f32 %v832
      %v1857 = vcvt.s32.f32 %v833
      %v1858 = vcvt.s32.f32 %v834
      %v1859 = vcvt.s32.f32 %v835
      %v1860 = vcvt.s32.f32 %v836
      %v1861 = vcvt.s32.f32 %v837
      %v1862 = vcvt.s32.f32 %v838
      %v1863 = vcvt.s32.f32 %v839
      %v1864 = vcvt.s32.f32 %v840
      %v1865 = vcvt.s32.f32 %v841
      %v1866 = vcvt.s32.f32 %v842
      %v1867 = vcvt.s32.f32 %v843
      %v1868 = vcvt.s32.f32 %v844
      %v1869 = vcvt.s32.f32 %v845
      %v1870 = vcvt.s32.f32 %v846
      %v1871 = vcvt.s32.f32 %v847
      %v1872 = vcvt.s32.f32 %v848
      %v1873 = vcvt.s32.f32 %v849
      %v1874 = vcvt.s32.f32 %v850
      %v1875 = vcvt.s32.f32 %v851
      %v1876 = vcvt.s32.f32 %v852
      %v1877 = vcvt.s32.f32 %v853
      %v1878 = vcvt.s32.f32 %v854
      %v1879 = vcvt.s32.f32 %v855
      %v1880 = vcvt.s32.f32 %v856
      %v1881 = vcvt.s32.f32 %v857
      %v1882 = vcvt.s32.f32 %v858
      %v1883 = vcvt.s32.f32 %v859
      %v1884 = vcvt.s32.f32 %v860
      %v1885 = vcvt.s32.f32 %v861
      %v1886 = vcvt.s32.f32 %v862
      %v1887 = vcvt.s32.f32 %v863
      %v1888 = vcvt.s32.f32 %v864
      %v1889 = vcvt.s32.f32 %v865
      %v1890 = vcvt.s32.f32 %v866
      %v1891 = vcvt.s32.f32 %v867
      %v1892 = vcvt.s32.f32 %v868
      %v1893 = vcvt.s32.f32 %v869
      %v1894 = vcvt.s32.f32 %v870
      %v1895 = vcvt.s32.f32 %v871
      %v1896 = vcvt.s32.f32 %v872
      %v1897 = vcvt.s32.f32 %v873
      %v1898 = vcvt.s32.f32 %v874
      %v1899 = vcvt.s32.f32 %v875
      %v1900 = vcvt.s32.f32 %v876
      %v1901 = vcvt.s32.f32 %v877
      %v1902 = vcvt.s32.f32 %v878
      %v1903 = vcvt.s32.f32 %v879
      %v1904 = vcvt.s32.f32 %v880
      %v1905 = vcvt.s32.f32 %v881
      %v1906 = vcvt.s32.f32 %v882
      %v1907 = vcvt.s32.f32 %v883
      %v1908 = vcvt.s32.f32 %v884
      %v1909 = vcvt.s32.f32 %v885
      %v1910 = vcvt.s32.f32 %v886
      %v1911 = vcvt.s32.f32 %v887
      %v1912 = vcvt.s32.f32 %v888
      %v1913 = vcvt.s32.f32 %v889
      %v1914 = vcvt.s32.f32 %v890
      %v1915 = vcvt.s32.f32 %v891
      %v1916 = vcvt.s32.f32 %v892
      %v1917 = vcvt.s32.f32 %v893
      %v1918 = vcvt.s32.f32 %v894
      %v1919 = vcvt.s32.f32 %v895
      %v1920 = vcvt.s32.f32 %v896
      %v1921 = vcvt.s32.f32 %v897
      %v1922 = vcvt.s32.f32 %v898
      %v1923 = vcvt.s32.f32 %v899
      %v1924 = vcvt.s32.f32 %v900
      %v1925 = vcvt.s32.f32 %v901
      %v1926 = vcvt.s32.f32 %v902
      %v1927 = vcvt.s32.f32 %v903
      %v1928 = vcvt.s32.f32 %v904
      %v1929 = vcvt.s32.f32 %v905
      %v1930 = vcvt.s32.f32 %v906
      %v1931 = vcvt.s32.f32 %v907
      %v1932 = vcvt.s32.f32 %v908
      %v1933 = vcvt.s32.f32 %v909
      %v1934 = vcvt.s32.f32 %v910
      %v1935 = vcvt.s32.f32 %v911
      %v1936 = vcvt.s32.f32 %v912
      %v1937 = vcvt.s32.f32 %v913
      %v1938 = vcvt.s32.f32 %v914
      %v1939 = vcvt.s32.f32 %v915
      %v1940 = vcvt.s32.f32 %v916
      %v1941 = vcvt.s32.f32 %v917
      %v1942 = vcvt.s32.f32 %v918
      %v1943 = vcvt.s32.f32 %v919
      %v1944 = vcvt.s32.f32 %v920
      %v1945 = vcvt.s32.f32 %v921
      %v1946 = vcvt.s32.f32 %v922
      %v1947 = vcvt.s32.f32 %v923
      %v1948 = vcvt.s32.f32 %v924
      %v1949 = vcvt.s32.f32 %v925
      %v1950 = vcvt.s32.f32 %v926
      %v1951 = vcvt.s32.f32 %v927
      %v1952 = vcvt.s32.f32 %v928
      %v1953 = vcvt.s32.f32 %v929
      %v1954 = vcvt.s32.f32 %v930
      %v1955 = vcvt.s32.f32 %v931
      %v1956 = vcvt.s32.f32 %v932
      %v1957 = vcvt.s32.f32 %v933
      %v1958 = vcvt.s32.f32 %v934
      %v1959 = vcvt.s32.f32 %v935
      %v1960 = vcvt.s32.f32 %v936
      %v1961 = vcvt.s32.f32 %v937
      %v1962 = vcvt.s32.f32 %v938
      %v1963 = vcvt.s32.f32 %v939
      %v1964 = vcvt.s32.f32 %v940
      %v1965 = vcvt.s32.f32 %v941
      %v1966 = vcvt.s32.f32 %v942
      %v1967 = vcvt.s32.f32 %v943
      %v1968 = vcvt.s32.f32 %v944
      %v1969 = vcvt.s32.f32 %v945
      %v1970 = vcvt.s32.f32 %v946
      %v1971 = vcvt.s32.f32 %v947
      %v1972 = vcvt.s32.f32 %v948
      %v1973 = vcvt.s32.f32 %v949
      %v1974 = vcvt.s32.f32 %v950
      %v1975 = vcvt.s32.f32 %v951
      %v1976 = vcvt.s32.f32 %v952
      %v1977 = vcvt.s32.f32 %v953
      %v1978 = vcvt.s32.f32 %v954
      %v1979 = vcvt.s32.f32 %v955
      %v1980 = vcvt.s32.f32 %v956
      %v1981 = vcvt.s32.f32 %v957
      %v1982 = vcvt.s32.f32 %v958
      %v1983 = vcvt.s32.f32 %v959
      %v1984 = vcvt.s32.f32 %v960
      %v1985 = vcvt.s32.f32 %v961
      %v1986 = vcvt.s32.f32 %v962
      %v1987 = vcvt.s32.f32 %v963
      %v1988 = vcvt.s32.f32 %v964
      %v1989 = vcvt.s32.f32 %v965
      %v1990 = vcvt.s32.f32 %v966
      %v1991 = vcvt.s32.f32 %v967
      %v1992 = vcvt.s32.f32 %v968
      %v1993 = vcvt.s32.f32 %v969
      %v1994 = vcvt.s32.f32 %v970
      %v1995 = vcvt.s32.f32 %v971
      %v1996 = vcvt.s32.f32 %v972
      %v1997 = vcvt.s32.f32 %v973
      %v1998 = vcvt.s32.f32 %v974
      %v1999 = vcvt.s32.f32 %v975
      %v2000 = vcvt.s32.f32 %v976
      %v2001 = vcvt.s32.f32 %v977
      %v2002 = vcvt.s32.f32 %v978
      %v2003 = vcvt.s32.f32 %v979
      %v2004 = vcvt.s32.f32 %v980
      %v2005 = vcvt.s32.f32 %v981
      %v2006 = vcvt.s32.f32 %v982
      %v2007 = vcvt.s32.f32 %v983
      %v2008 = vcvt.s32.f32 %v984
      %v2009 = vcvt.s32.f32 %v985
      %v2010 = vcvt.s32.f32 %v986
      %v2011 = vcvt.s32.f32 %v987
      %v2012 = vcvt.s32.f32 %v988
      %v2013 = vcvt.s32.f32 %v989
      %v2014 = vcvt.s32.f32 %v990
      %v2015 = vcvt.s32.f32 %v991
      %v2016 = vcvt.s32.f32 %v992
      %v2017 = vcvt.s32.f32 %v993
      %v2018 = vcvt.s32.f32 %v994
      %v2019 = vcvt.s32.f32 %v995
      %v2020 = vcvt.s32.f32 %v996
      %v2021 = vcvt.s32.f32 %v997
      %v2022 = vcvt.s32.f32 %v998
      %v2023 = vcvt.s32.f32 %v999
      %v2024 = vcvt.s32.f32 %v1000
      %v2025 = vcvt.s32.f32 %v1001
      %v2026 = vcvt.s32.f32 %v1002
      %v2027 = vcvt.s32.f32 %v1003
      %v2028 = vcvt.s32.f32 %v1004
      %v2029 = vcvt.s32.f32 %v1005
      %v2030 = vcvt.s32.f32 %v1006
      %v2031 = vcvt.s32.f32 %v1007
      %v2032 = vcvt.s32.f32 %v1008
      %v2033 = vcvt.s32.f32 %v1009
      %v2034 = vcvt.s32.f32 %v1010
      %v2035 = vcvt.s32.f32 %v1011
      %v2036 = vcvt.s32.f32 %v1012
      %v2037 = vcvt.s32.f32 %v1013
      %v2038 = vcvt.s32.f32 %v1014
      %v2039 = vcvt.s32.f32 %v1015
      %v2040 = vcvt.s32.f32 %v1016
      %v2041 = vcvt.s32.f32 %v1017
      %v2042 = vcvt.s32.f32 %v1018
      %v2043 = vcvt.s32.f32 %v1019
      %v2044 = vcvt.s32.f32 %v1020
      %v2045 = vcvt.s32.f32 %v1021
      %v2046 = vcvt.s32.f32 %v1022
      %v2047 = vcvt.s32.f32 %v1023
      %v2048 = vcvt.s32.f32 %v1024
      %v2049 = vcvt.s32.f32 %v1025
      %v2050 = vcvt.s32.f32 %v1026
      %v2051 = vcvt.s32.f32 %v1027
      %v2052 = vcvt.s32.f32 %v1028
      %v2053 = vcvt.s32.f32 %v1029
      %v2054 = vcvt.s32.f32 %v1030
      %v2055 = vcvt.s32.f32 %v1031
      %v2056 = vcvt.s32.f32 %v1032
      %v2057 = vcvt.s32.f32 %v1033
      %v2058 = vcvt.s32.f32 %v1034
      %v2059 = vcvt.s32.f32 %v1035
      %v2060 = vcvt.s32.f32 %v1036
      %v2061 = vcvt.s32.f32 %v1037
      %v2062 = vcvt.s32.f32 %v1038
      %v2063 = vcvt.s32.f32 %v1039
      %v2064 = vcvt.s32.f32 %v1040
      %v2065 = vcvt.s32.f32 %v1041
      %v2066 = vcvt.s32.f32 %v1042
      %v2067 = vcvt.s32.f32 %v1043
      %v2068 = vcvt.s32.f32 %v1044
      %v2069 = vcvt.s32.f32 %v1045
      %v2070 = vcvt.s32.f32 %v1046
      %v2071 = vcvt.s32.f32 %v1047
      %v2072 = vcvt.s32.f32 %v1048
      %v2073 = vcvt.s32.f32 %v1049
      %v2074 = vcvt.s32.f32 %v1050
      %v2075 = vcvt.s32.f32 %v1051
      %v2076 = vcvt.s32.f32 %v1052
      %v2077 = vcvt.s32.f32 %v1053
      %v2078 = vcvt.s32.f32 %v1054
      %v2079 = vcvt.s32.f32 %v1055
      %v2080 = vcvt.s32.f32 %v1056
      %v2081 = vcvt.s32.f32 %v1057
      %v2082 = vcvt.s32.f32 %v1058
      %v2083 = vcvt.s32.f32 %v1059
      %v2084 = vcvt.s32.f32 %v1060
      %v2085 = vcvt.s32.f32 %v1061
      %v2086 = vcvt.s32.f32 %v1062
      %v2087 = vcvt.s32.f32 %v1063
      %v2088 = vcvt.s32.f32 %v1064
      %v2089 = vcvt.s32.f32 %v1065
      %v2090 = vcvt.s32.f32 %v1066
      %v2091 = vcvt.s32.f32 %v1067
      %v2092 = vcvt.s32.f32 %v1068
      %v2093 = vcvt.s32.f32 %v1069
      %v2094 = vcvt.s32.f32 %v1070
      %v2095 = vcvt.s32.f32 %v1071
      %v2096 = vcvt.s32.f32 %v1072
      %v2097 = vcvt.s32.f32 %v1073
      %v2098 = vcvt.s32.f32 %v1074
      %v2099 = vcvt.s32.f32 %v1075
      %v2100 = vcvt.s32.f32 %v1076
      %v2101 = vcvt.s32.f32 %v1077
      %v2102 = vcvt.s32.f32 %v1078
      %v2103 = vcvt.s32.f32 %v1079
      %v2104 = vcvt.s32.f32 %v1080
      %v2105 = vcvt.s32.f32 %v1081
      %v2106 = vcvt.s32.f32 %v1082
      %v2107 = vcvt.s32.f32 %v1083
      %v2108 = vcvt.s32.f32 %v1084
      %v2109 = vcvt.s32.f32 %v1085
      %v2110 = vcvt.s32.f32 %v1086
      %v2111 = vcvt.s32.f32 %v1087
      %v2112 = vcvt.s32.f32 %v1088
      %v2113 = vcvt.s32.f32 %v1089
      %v2114 = vcvt.s32.f32 %v1090
      %v2115 = vcvt.s32.f32 %v1091
      %v2116 = vcvt.s32.f32 %v1092
      %v2117 = vcvt.s32.f32 %v1093
      %v2118 = vcvt.s32.f32 %v1094
      %v2119 = vcvt.s32.f32 %v1095
      %v2120 = vcvt.s32.f32 %v1096
      %v2121 = vcvt.s32.f32 %v1097
      %v2122 = vcvt.s32.f32 %v1098
      %v2123 = vcvt.s32.f32 %v1099
      %v2124 = vcvt.s32.f32 %v1100
      %v2125 = vcvt.s32.f32 %v1101
      %v2126 = vcvt.s32.f32 %v1102
      %v2127 = vcvt.s32.f32 %v1103
      %v2128 = vcvt.s32.f32 %v1104
      %v2129 = vcvt.s32.f32 %v1105
      %v2130 = vcvt.s32.f32 %v1106
      %v2131 = vcvt.s32.f32 %v1107
      %v2132 = vcvt.s32.f32 %v1108
      %v2133 = vcvt.s32.f32 %v1109
      %v2134 = vcvt.s32.f32 %v1110
      %v2135 = vcvt.s32.f32 %v1111
      %v2136 = vcvt.s32.f32 %v1112
      %v2137 = vcvt.s32.f32 %v1113
      %v2138 = vcvt.s32.f32 %v1114
      %v2139 = vcvt.s32.f32 %v1115
      %v2140 = vcvt.s32.f32 %v1116
      %v2141 = vcvt.s32.f32 %v1117
      %v2142 = vcvt.s32.f32 %v1118
      %v2143 = vcvt.s32.f32 %v1119
      %v2144 = vcvt.s32.f32 %v1120
      %v2145 = vcvt.s32.f32 %v1121
      %v2146 = vcvt.s32.f32 %v1122
      %v2147 = vcvt.s32.f32 %v1123
      %v2148 = vcvt.s32.f32 %v1124
      %v2149 = vcvt.s32.f32 %v1125
      %v2150 = vcvt.s32.f32 %v1126
      %v2151 = vcvt.s32.f32 %v1127
      %v2152 = vcvt.s32.f32 %v1128
      %v2153 = vcvt.s32.f32 %v1129
      %v2154 = vcvt.s32.f32 %v1130
      %v2155 = vcvt.s32.f32 %v1131
      %v2156 = vcvt.s32.f32 %v1132
      %v2157 = vcvt.s32.f32 %v1133
      %v2158 = vcvt.s32.f32 %v1134
      %v2159 = vcvt.s32.f32 %v1135
      %v2160 = vcvt.s32.f32 %v1136
      %v2161 = vcvt.s32.f32 %v1137
      %v2162 = vcvt.s32.f32 %v1138
      %v2163 = vcvt.s32.f32 %v1139
      %v2164 = vcvt.s32.f32 %v1140
      %v2165 = vcvt.s32.f32 %v1141
      %v2166 = vcvt.s32.f32 %v1142
      %v2167 = vcvt.s32.f32 %v1143
      %v2168 = vcvt.s32.f32 %v1144
      %v2169 = vcvt.s32.f32 %v1145
      %v2170 = vcvt.s32.f32 %v1146
      %v2171 = vcvt.s32.f32 %v1147
      %v2172 = vcvt.s32.f32 %v1148
      %v2173 = vcvt.s32.f32 %v1149
      %v2174 = vcvt.s32.f32 %v1150
      %v2175 = vcvt.s32.f32 %v1151
      %v2176 = vcvt.s32.f32 %v1152
      %v2177 = vcvt.s32.f32 %v1153
      %v2178 = vcvt.s32.f32 %v1154
      %v2179 = vcvt.s32.f32 %v1155
      %v2180 = vcvt.s32.f32 %v1156
      %v2181 = vcvt.s32.f32 %v1157
      %v2182 = vcvt.s32.f32 %v1158
      %v2183 = vcvt.s32.f32 %v1159
      %v2184 = vcvt.s32.f32 %v1160
      %v2185 = vcvt.s32.f32 %v1161
      %v2186 = vcvt.s32.f32 %v1162
      %v2187 = vcvt.s32.f32 %v1163
      %v2188 = vcvt.s32.f32 %v1164
      %v2189 = vcvt.s32.f32 %v1165
      %v2190 = vcvt.s32.f32 %v1166
      %v2191 = vcvt.s32.f32 %v1167
      %v2192 = vcvt.s32.f32 %v1168
      %v2193 = vcvt.s32.f32 %v1169
      %v2194 = vcvt.s32.f32 %v1170
      %v2195 = vcvt.s32.f32 %v1171
      %v2196 = vcvt.s32.f32 %v1172
      %v2197 = vcvt.s32.f32 %v1173
      %v2198 = vcvt.s32.f32 %v1174
      %v2199 = vcvt.s32.f32 %v1175
      %v2200 = vcvt.s32.f32 %v1176
      %v2201 = vcvt.s32.f32 %v1177
      %v2202 = vcvt.s32.f32 %v1178
      %v2203 = vcvt.s32.f32 %v1179
      %v2204 = vcvt.s32.f32 %v1180
      %v2205 = vcvt.s32.f32 %v1181
      %v2206 = vcvt.s32.f32 %v1182
      %v2207 = vcvt.s32.f32 %v1183
      %v2208 = vcvt.s32.f32 %v1184
      %v2209 = vcvt.s32.f32 %v1185
      %v2210 = vcvt.s32.f32 %v1186
      %v2211 = vcvt.s32.f32 %v1187
      %v2212 = vcvt.s32.f32 %v1188
      %v2213 = vcvt.s32.f32 %v1189
      %v2214 = vcvt.s32.f32 %v1190
      %v2215 = vcvt.s32.f32 %v1191
      %v2216 = vcvt.s32.f32 %v1192
      %v2217 = vcvt.s32.f32 %v1193
      %v2218 = vcvt.s32.f32 %v1194
      %v2219 = vcvt.s32.f32 %v1195
      %v2220 = vcvt.s32.f32 %v1196
      %v2221 = vcvt.s32.f32 %v1197
      %v2222 = vcvt.s32.f32 %v1198
      %v2223 = vcvt.s32.f32 %v1199
      %v2224 = vcvt.s32.f32 %v1200
      %v2225 = vcvt.s32.f32 %v1201
      %v2226 = vcvt.s32.f32 %v1202
      %v2227 = vcvt.s32.f32 %v1203
      %v2228 = vcvt.s32.f32 %v1204
      %v2229 = vcvt.s32.f32 %v1205
      %v2230 = vcvt.s32.f32 %v1206
      %v2231 = vcvt.s32.f32 %v1207
      %v2232 = vcvt.s32.f32 %v1208
      %v2233 = vcvt.s32.f32 %v1209
      %v2234 = vcvt.s32.f32 %v1210
      %v2235 = vcvt.s32.f32 %v1211
      %v2236 = vcvt.s32.f32 %v1212
      %v2237 = vcvt.s32.f32 %v1213
      %v2238 = vcvt.s32.f32 %v1214
      %v2239 = vcvt.s32.f32 %v1215
      %v2240 = vcvt.s32.f32 %v1216
      %v2241 = vcvt.s32.f32 %v1217
      %v2242 = vcvt.s32.f32 %v1218
      %v2243 = vcvt.s32.f32 %v1219
      %v2244 = vcvt.s32.f32 %v1220
      %v2245 = vcvt.s32.f32 %v1221
      %v2246 = vcvt.s32.f32 %v1222
      %v2247 = vcvt.s32.f32 %v1223
      %v2248 = vcvt.s32.f32 %v1224
      %v2249 = vcvt.s32.f32 %v1225
      %v2250 = vcvt.s32.f32 %v1226
      %v2251 = vcvt.s32.f32 %v1227
      %v2252 = vcvt.s32.f32 %v1228
      %v2253 = vcvt.s32.f32 %v1229
      %v2254 = vcvt.s32.f32 %v1230
      %v2255 = vcvt.s32.f32 %v1231
      %v2256 = vcvt.s32.f32 %v1232
      %v2257 = vcvt.s32.f32 %v1233
      %v2258 = vcvt.s32.f32 %v1234
      %v2259 = vcvt.s32.f32 %v1235
      %v2260 = vcvt.s32.f32 %v1236
      %v2261 = vcvt.s32.f32 %v1237
      %v2262 = vcvt.s32.f32 %v1238
      %v2263 = vcvt.s32.f32 %v1239
      %v2264 = vcvt.s32.f32 %v1240
      %v2265 = vcvt.s32.f32 %v1241
      %v2266 = vcvt.s32.f32 %v1242
      %v2267 = vcvt.s32.f32 %v1243
      %v2268 = vcvt.s32.f32 %v1244
      %v2269 = vcvt.s32.f32 %v1245
      %v2270 = vcvt.s32.f32 %v1246
      %v2271 = vcvt.s32.f32 %v1247
      %v2272 = vcvt.s32.f32 %v1248
      %v2273 = vcvt.s32.f32 %v1249
      %v2274 = vcvt.s32.f32 %v1250
      %v2275 = vcvt.s32.f32 %v1251
      %v2276 = vcvt.s32.f32 %v1252
      %v2277 = vcvt.s32.f32 %v1253
      %v2278 = vcvt.s32.f32 %v1254
      %v2279 = vcvt.s32.f32 %v1255
      %v2280 = vcvt.s32.f32 %v1256
      %v2281 = vcvt.s32.f32 %v1257
      %v2282 = vcvt.s32.f32 %v1258
      %v2283 = vcvt.s32.f32 %v1259
      %v2284 = vcvt.s32.f32 %v1260
      %v2285 = vcvt.s32.f32 %v1261
      %v2286 = vcvt.s32.f32 %v1262
      %v2287 = vcvt.s32.f32 %v1263
      %v2288 = vcvt.s32.f32 %v1264
      %v2289 = vcvt.s32.f32 %v1265
      %v2290 = vcvt.s32.f32 %v1266
      %v2291 = vcvt.s32.f32 %v1267
      %v2292 = vcvt.s32.f32 %v1268
      %v2293 = vcvt.s32.f32 %v1269
      %v2294 = vcvt.s32.f32 %v1270
      %v2295 = vcvt.s32.f32 %v1271
      %v2296 = vcvt.s32.f32 %v1272
      %v2297 = vcvt.s32.f32 %v1273
      %v2298 = vcvt.s32.f32 %v1274
      %v2299 = vcvt.s32.f32 %v1275
      %v2300 = vcvt.s32.f32 %v1276
      %v2301 = vcvt.s32.f32 %v1277
      %v2302 = vcvt.s32.f32 %v1278
      %v2303 = vcvt.s32.f32 %v1279
      %v2304 = vcvt.s32.f32 %v1280
      %v2305 = vcvt.s32.f32 %v1281
      %v2306 = vcvt.s32.f32 %v1282
      %v2307 = vcvt.s32.f32 %v1283
      %v2308 = vcvt.s32.f32 %v1284
      %v2309 = vcvt.s32.f32 %v1285
      %v2310 = vcvt.s32.f32 %v1286
      %v2311 = vcvt.s32.f32 %v1287
      %v2312 = vcvt.s32.f32 %v1288
      %v2313 = vcvt.s32.f32 %v1289
      %v2314 = vcvt.s32.f32 %v1290
      %v2315 = vcvt.s32.f32 %v1291
      %v2316 = vcvt.s32.f32 %v1292
      %v2317 = vcvt.s32.f32 %v1293
      %v2318 = vcvt.s32.f32 %v1294
      %v2319 = vcvt.s32.f32 %v1295
      %v2320 = vcvt.s32.f32 %v1296
      %v2321 = vcvt.s32.f32 %v1297
      %v2322 = vcvt.s32.f32 %v1298
      %v2323 = vcvt.s32.f32 %v1299
      %v2324 = vcvt.s32.f32 %v1300
      %v2325 = vcvt.s32.f32 %v1301
      %v2326 = vcvt.s32.f32 %v1302
      %v2327 = vcvt.s32.f32 %v1303
      %v2328 = vcvt.s32.f32 %v1304
      %v2329 = vcvt.s32.f32 %v1305
      %v2330 = vcvt.s32.f32 %v1306
      %v2331 = vcvt.s32.f32 %v1307
      %v2332 = vcvt.s32.f32 %v1308
      %v2333 = vcvt.s32.f32 %v1309
      %v2334 = vcvt.s32.f32 %v1310
      %v2335 = vcvt.s32.f32 %v1311
      %v2336 = vcvt.s32.f32 %v1312
      %v2337 = vcvt.s32.f32 %v1313
      %v2338 = vcvt.s32.f32 %v1314
      %v2339 = vcvt.s32.f32 %v1315
      %v2340 = vcvt.s32.f32 %v1316
      %v2341 = vcvt.s32.f32 %v1317
      %v2342 = vcvt.s32.f32 %v1318
      %v2343 = vcvt.s32.f32 %v1319
      %v2344 = vcvt.s32.f32 %v1320
      %v2345 = vcvt.s32.f32 %v1321
      %v2346 = vcvt.s32.f32 %v1322
      %v2347 = vcvt.s32.f32 %v1323
      %v2348 = vcvt.s32.f32 %v1324
      %v2349 = vld [vmem:[%s3] sm:$0xff]
      %v2351 = vlaneseq
      %v2352 = vshrl.u32 %v2351, 7
      %v2353 = vsub.s32 0, %v2352
      %v2354 = vrot.slane %v2349, %v2353
      %v2355 = vlaneseq
      %v2356 = vshrl.u32 %v2355, 7
      %v2357 = vsub.s32 1, %v2356
      %v2358 = vrot.slane %v2349, %v2357
      %v2359 = vlaneseq
      %v2360 = vshrl.u32 %v2359, 7
      %v2361 = vsub.s32 2, %v2360
      %v2362 = vrot.slane %v2349, %v2361
      %v2363 = vlaneseq
      %v2364 = vshrl.u32 %v2363, 7
      %v2365 = vsub.s32 3, %v2364
      %v2366 = vrot.slane %v2349, %v2365
      %v2367 = vlaneseq
      %v2368 = vshrl.u32 %v2367, 7
      %v2369 = vsub.s32 4, %v2368
      %v2370 = vrot.slane %v2349, %v2369
      %v2371 = vlaneseq
      %v2372 = vshrl.u32 %v2371, 7
      %v2373 = vsub.s32 5, %v2372
      %v2374 = vrot.slane %v2349, %v2373
      %v2375 = vlaneseq
      %v2376 = vshrl.u32 %v2375, 7
      %v2377 = vsub.s32 6, %v2376
      %v2378 = vrot.slane %v2349, %v2377
      %v2379 = vlaneseq
      %v2380 = vshrl.u32 %v2379, 7
      %v2381 = vsub.s32 7, %v2380
      %v2382 = vrot.slane %v2349, %v2381
      %v2391 = vmul.f32 %v1325, %v2354
      %v2392 = vmul.f32 %v1326, %v2358
      %v2393 = vmul.f32 %v1327, %v2362
      %v2394 = vmul.f32 %v1328, %v2366
      %v2395 = vmul.f32 %v1329, %v2370
      %v2396 = vmul.f32 %v1330, %v2374
      %v2397 = vmul.f32 %v1331, %v2378
      %v2398 = vmul.f32 %v1332, %v2382
      %v2399 = vmul.f32 %v1333, %v2354
      %v2400 = vmul.f32 %v1334, %v2358
      %v2401 = vmul.f32 %v1335, %v2362
      %v2402 = vmul.f32 %v1336, %v2366
      %v2403 = vmul.f32 %v1337, %v2370
      %v2404 = vmul.f32 %v1338, %v2374
      %v2405 = vmul.f32 %v1339, %v2378
      %v2406 = vmul.f32 %v1340, %v2382
      %v2407 = vmul.f32 %v1341, %v2354
      %v2408 = vmul.f32 %v1342, %v2358
      %v2409 = vmul.f32 %v1343, %v2362
      %v2410 = vmul.f32 %v1344, %v2366
      %v2411 = vmul.f32 %v1345, %v2370
      %v2412 = vmul.f32 %v1346, %v2374
      %v2413 = vmul.f32 %v1347, %v2378
      %v2414 = vmul.f32 %v1348, %v2382
      %v2415 = vmul.f32 %v1349, %v2354
      %v2416 = vmul.f32 %v1350, %v2358
      %v2417 = vmul.f32 %v1351, %v2362
      %v2418 = vmul.f32 %v1352, %v2366
      %v2419 = vmul.f32 %v1353, %v2370
      %v2420 = vmul.f32 %v1354, %v2374
      %v2421 = vmul.f32 %v1355, %v2378
      %v2422 = vmul.f32 %v1356, %v2382
      %v2423 = vmul.f32 %v1357, %v2354
      %v2424 = vmul.f32 %v1358, %v2358
      %v2425 = vmul.f32 %v1359, %v2362
      %v2426 = vmul.f32 %v1360, %v2366
      %v2427 = vmul.f32 %v1361, %v2370
      %v2428 = vmul.f32 %v1362, %v2374
      %v2429 = vmul.f32 %v1363, %v2378
      %v2430 = vmul.f32 %v1364, %v2382
      %v2431 = vmul.f32 %v1365, %v2354
      %v2432 = vmul.f32 %v1366, %v2358
      %v2433 = vmul.f32 %v1367, %v2362
      %v2434 = vmul.f32 %v1368, %v2366
      %v2435 = vmul.f32 %v1369, %v2370
      %v2436 = vmul.f32 %v1370, %v2374
      %v2437 = vmul.f32 %v1371, %v2378
      %v2438 = vmul.f32 %v1372, %v2382
      %v2439 = vmul.f32 %v1373, %v2354
      %v2440 = vmul.f32 %v1374, %v2358
      %v2441 = vmul.f32 %v1375, %v2362
      %v2442 = vmul.f32 %v1376, %v2366
      %v2443 = vmul.f32 %v1377, %v2370
      %v2444 = vmul.f32 %v1378, %v2374
      %v2445 = vmul.f32 %v1379, %v2378
      %v2446 = vmul.f32 %v1380, %v2382
      %v2447 = vmul.f32 %v1381, %v2354
      %v2448 = vmul.f32 %v1382, %v2358
      %v2449 = vmul.f32 %v1383, %v2362
      %v2450 = vmul.f32 %v1384, %v2366
      %v2451 = vmul.f32 %v1385, %v2370
      %v2452 = vmul.f32 %v1386, %v2374
      %v2453 = vmul.f32 %v1387, %v2378
      %v2454 = vmul.f32 %v1388, %v2382
      %v2455 = vmul.f32 %v1389, %v2354
      %v2456 = vmul.f32 %v1390, %v2358
      %v2457 = vmul.f32 %v1391, %v2362
      %v2458 = vmul.f32 %v1392, %v2366
      %v2459 = vmul.f32 %v1393, %v2370
      %v2460 = vmul.f32 %v1394, %v2374
      %v2461 = vmul.f32 %v1395, %v2378
      %v2462 = vmul.f32 %v1396, %v2382
      %v2463 = vmul.f32 %v1397, %v2354
      %v2464 = vmul.f32 %v1398, %v2358
      %v2465 = vmul.f32 %v1399, %v2362
      %v2466 = vmul.f32 %v1400, %v2366
      %v2467 = vmul.f32 %v1401, %v2370
      %v2468 = vmul.f32 %v1402, %v2374
      %v2469 = vmul.f32 %v1403, %v2378
      %v2470 = vmul.f32 %v1404, %v2382
      %v2471 = vmul.f32 %v1405, %v2354
      %v2472 = vmul.f32 %v1406, %v2358
      %v2473 = vmul.f32 %v1407, %v2362
      %v2474 = vmul.f32 %v1408, %v2366
      %v2475 = vmul.f32 %v1409, %v2370
      %v2476 = vmul.f32 %v1410, %v2374
      %v2477 = vmul.f32 %v1411, %v2378
      %v2478 = vmul.f32 %v1412, %v2382
      %v2479 = vmul.f32 %v1413, %v2354
      %v2480 = vmul.f32 %v1414, %v2358
      %v2481 = vmul.f32 %v1415, %v2362
      %v2482 = vmul.f32 %v1416, %v2366
      %v2483 = vmul.f32 %v1417, %v2370
      %v2484 = vmul.f32 %v1418, %v2374
      %v2485 = vmul.f32 %v1419, %v2378
      %v2486 = vmul.f32 %v1420, %v2382
      %v2487 = vmul.f32 %v1421, %v2354
      %v2488 = vmul.f32 %v1422, %v2358
      %v2489 = vmul.f32 %v1423, %v2362
      %v2490 = vmul.f32 %v1424, %v2366
      %v2491 = vmul.f32 %v1425, %v2370
      %v2492 = vmul.f32 %v1426, %v2374
      %v2493 = vmul.f32 %v1427, %v2378
      %v2494 = vmul.f32 %v1428, %v2382
      %v2495 = vmul.f32 %v1429, %v2354
      %v2496 = vmul.f32 %v1430, %v2358
      %v2497 = vmul.f32 %v1431, %v2362
      %v2498 = vmul.f32 %v1432, %v2366
      %v2499 = vmul.f32 %v1433, %v2370
      %v2500 = vmul.f32 %v1434, %v2374
      %v2501 = vmul.f32 %v1435, %v2378
      %v2502 = vmul.f32 %v1436, %v2382
      %v2503 = vmul.f32 %v1437, %v2354
      %v2504 = vmul.f32 %v1438, %v2358
      %v2505 = vmul.f32 %v1439, %v2362
      %v2506 = vmul.f32 %v1440, %v2366
      %v2507 = vmul.f32 %v1441, %v2370
      %v2508 = vmul.f32 %v1442, %v2374
      %v2509 = vmul.f32 %v1443, %v2378
      %v2510 = vmul.f32 %v1444, %v2382
      %v2511 = vmul.f32 %v1445, %v2354
      %v2512 = vmul.f32 %v1446, %v2358
      %v2513 = vmul.f32 %v1447, %v2362
      %v2514 = vmul.f32 %v1448, %v2366
      %v2515 = vmul.f32 %v1449, %v2370
      %v2516 = vmul.f32 %v1450, %v2374
      %v2517 = vmul.f32 %v1451, %v2378
      %v2518 = vmul.f32 %v1452, %v2382
      %v2519 = vmul.f32 %v1453, %v2354
      %v2520 = vmul.f32 %v1454, %v2358
      %v2521 = vmul.f32 %v1455, %v2362
      %v2522 = vmul.f32 %v1456, %v2366
      %v2523 = vmul.f32 %v1457, %v2370
      %v2524 = vmul.f32 %v1458, %v2374
      %v2525 = vmul.f32 %v1459, %v2378
      %v2526 = vmul.f32 %v1460, %v2382
      %v2527 = vmul.f32 %v1461, %v2354
      %v2528 = vmul.f32 %v1462, %v2358
      %v2529 = vmul.f32 %v1463, %v2362
      %v2530 = vmul.f32 %v1464, %v2366
      %v2531 = vmul.f32 %v1465, %v2370
      %v2532 = vmul.f32 %v1466, %v2374
      %v2533 = vmul.f32 %v1467, %v2378
      %v2534 = vmul.f32 %v1468, %v2382
      %v2535 = vmul.f32 %v1469, %v2354
      %v2536 = vmul.f32 %v1470, %v2358
      %v2537 = vmul.f32 %v1471, %v2362
      %v2538 = vmul.f32 %v1472, %v2366
      %v2539 = vmul.f32 %v1473, %v2370
      %v2540 = vmul.f32 %v1474, %v2374
      %v2541 = vmul.f32 %v1475, %v2378
      %v2542 = vmul.f32 %v1476, %v2382
      %v2543 = vmul.f32 %v1477, %v2354
      %v2544 = vmul.f32 %v1478, %v2358
      %v2545 = vmul.f32 %v1479, %v2362
      %v2546 = vmul.f32 %v1480, %v2366
      %v2547 = vmul.f32 %v1481, %v2370
      %v2548 = vmul.f32 %v1482, %v2374
      %v2549 = vmul.f32 %v1483, %v2378
      %v2550 = vmul.f32 %v1484, %v2382
      %v2551 = vmul.f32 %v1485, %v2354
      %v2552 = vmul.f32 %v1486, %v2358
      %v2553 = vmul.f32 %v1487, %v2362
      %v2554 = vmul.f32 %v1488, %v2366
      %v2555 = vmul.f32 %v1489, %v2370
      %v2556 = vmul.f32 %v1490, %v2374
      %v2557 = vmul.f32 %v1491, %v2378
      %v2558 = vmul.f32 %v1492, %v2382
      %v2559 = vmul.f32 %v1493, %v2354
      %v2560 = vmul.f32 %v1494, %v2358
      %v2561 = vmul.f32 %v1495, %v2362
      %v2562 = vmul.f32 %v1496, %v2366
      %v2563 = vmul.f32 %v1497, %v2370
      %v2564 = vmul.f32 %v1498, %v2374
      %v2565 = vmul.f32 %v1499, %v2378
      %v2566 = vmul.f32 %v1500, %v2382
      %v2567 = vmul.f32 %v1501, %v2354
      %v2568 = vmul.f32 %v1502, %v2358
      %v2569 = vmul.f32 %v1503, %v2362
      %v2570 = vmul.f32 %v1504, %v2366
      %v2571 = vmul.f32 %v1505, %v2370
      %v2572 = vmul.f32 %v1506, %v2374
      %v2573 = vmul.f32 %v1507, %v2378
      %v2574 = vmul.f32 %v1508, %v2382
      %v2575 = vmul.f32 %v1509, %v2354
      %v2576 = vmul.f32 %v1510, %v2358
      %v2577 = vmul.f32 %v1511, %v2362
      %v2578 = vmul.f32 %v1512, %v2366
      %v2579 = vmul.f32 %v1513, %v2370
      %v2580 = vmul.f32 %v1514, %v2374
      %v2581 = vmul.f32 %v1515, %v2378
      %v2582 = vmul.f32 %v1516, %v2382
      %v2583 = vmul.f32 %v1517, %v2354
      %v2584 = vmul.f32 %v1518, %v2358
      %v2585 = vmul.f32 %v1519, %v2362
      %v2586 = vmul.f32 %v1520, %v2366
      %v2587 = vmul.f32 %v1521, %v2370
      %v2588 = vmul.f32 %v1522, %v2374
      %v2589 = vmul.f32 %v1523, %v2378
      %v2590 = vmul.f32 %v1524, %v2382
      %v2591 = vmul.f32 %v1525, %v2354
      %v2592 = vmul.f32 %v1526, %v2358
      %v2593 = vmul.f32 %v1527, %v2362
      %v2594 = vmul.f32 %v1528, %v2366
      %v2595 = vmul.f32 %v1529, %v2370
      %v2596 = vmul.f32 %v1530, %v2374
      %v2597 = vmul.f32 %v1531, %v2378
      %v2598 = vmul.f32 %v1532, %v2382
      %v2599 = vmul.f32 %v1533, %v2354
      %v2600 = vmul.f32 %v1534, %v2358
      %v2601 = vmul.f32 %v1535, %v2362
      %v2602 = vmul.f32 %v1536, %v2366
      %v2603 = vmul.f32 %v1537, %v2370
      %v2604 = vmul.f32 %v1538, %v2374
      %v2605 = vmul.f32 %v1539, %v2378
      %v2606 = vmul.f32 %v1540, %v2382
      %v2607 = vmul.f32 %v1541, %v2354
      %v2608 = vmul.f32 %v1542, %v2358
      %v2609 = vmul.f32 %v1543, %v2362
      %v2610 = vmul.f32 %v1544, %v2366
      %v2611 = vmul.f32 %v1545, %v2370
      %v2612 = vmul.f32 %v1546, %v2374
      %v2613 = vmul.f32 %v1547, %v2378
      %v2614 = vmul.f32 %v1548, %v2382
      %v2615 = vmul.f32 %v1549, %v2354
      %v2616 = vmul.f32 %v1550, %v2358
      %v2617 = vmul.f32 %v1551, %v2362
      %v2618 = vmul.f32 %v1552, %v2366
      %v2619 = vmul.f32 %v1553, %v2370
      %v2620 = vmul.f32 %v1554, %v2374
      %v2621 = vmul.f32 %v1555, %v2378
      %v2622 = vmul.f32 %v1556, %v2382
      %v2623 = vmul.f32 %v1557, %v2354
      %v2624 = vmul.f32 %v1558, %v2358
      %v2625 = vmul.f32 %v1559, %v2362
      %v2626 = vmul.f32 %v1560, %v2366
      %v2627 = vmul.f32 %v1561, %v2370
      %v2628 = vmul.f32 %v1562, %v2374
      %v2629 = vmul.f32 %v1563, %v2378
      %v2630 = vmul.f32 %v1564, %v2382
      %v2631 = vmul.f32 %v1565, %v2354
      %v2632 = vmul.f32 %v1566, %v2358
      %v2633 = vmul.f32 %v1567, %v2362
      %v2634 = vmul.f32 %v1568, %v2366
      %v2635 = vmul.f32 %v1569, %v2370
      %v2636 = vmul.f32 %v1570, %v2374
      %v2637 = vmul.f32 %v1571, %v2378
      %v2638 = vmul.f32 %v1572, %v2382
      %v2639 = vmul.f32 %v1573, %v2354
      %v2640 = vmul.f32 %v1574, %v2358
      %v2641 = vmul.f32 %v1575, %v2362
      %v2642 = vmul.f32 %v1576, %v2366
      %v2643 = vmul.f32 %v1577, %v2370
      %v2644 = vmul.f32 %v1578, %v2374
      %v2645 = vmul.f32 %v1579, %v2378
      %v2646 = vmul.f32 %v1580, %v2382
      %v2647 = vmul.f32 %v1581, %v2354
      %v2648 = vmul.f32 %v1582, %v2358
      %v2649 = vmul.f32 %v1583, %v2362
      %v2650 = vmul.f32 %v1584, %v2366
      %v2651 = vmul.f32 %v1585, %v2370
      %v2652 = vmul.f32 %v1586, %v2374
      %v2653 = vmul.f32 %v1587, %v2378
      %v2654 = vmul.f32 %v1588, %v2382
      %v2655 = vmul.f32 %v1589, %v2354
      %v2656 = vmul.f32 %v1590, %v2358
      %v2657 = vmul.f32 %v1591, %v2362
      %v2658 = vmul.f32 %v1592, %v2366
      %v2659 = vmul.f32 %v1593, %v2370
      %v2660 = vmul.f32 %v1594, %v2374
      %v2661 = vmul.f32 %v1595, %v2378
      %v2662 = vmul.f32 %v1596, %v2382
      %v2663 = vmul.f32 %v1597, %v2354
      %v2664 = vmul.f32 %v1598, %v2358
      %v2665 = vmul.f32 %v1599, %v2362
      %v2666 = vmul.f32 %v1600, %v2366
      %v2667 = vmul.f32 %v1601, %v2370
      %v2668 = vmul.f32 %v1602, %v2374
      %v2669 = vmul.f32 %v1603, %v2378
      %v2670 = vmul.f32 %v1604, %v2382
      %v2671 = vmul.f32 %v1605, %v2354
      %v2672 = vmul.f32 %v1606, %v2358
      %v2673 = vmul.f32 %v1607, %v2362
      %v2674 = vmul.f32 %v1608, %v2366
      %v2675 = vmul.f32 %v1609, %v2370
      %v2676 = vmul.f32 %v1610, %v2374
      %v2677 = vmul.f32 %v1611, %v2378
      %v2678 = vmul.f32 %v1612, %v2382
      %v2679 = vmul.f32 %v1613, %v2354
      %v2680 = vmul.f32 %v1614, %v2358
      %v2681 = vmul.f32 %v1615, %v2362
      %v2682 = vmul.f32 %v1616, %v2366
      %v2683 = vmul.f32 %v1617, %v2370
      %v2684 = vmul.f32 %v1618, %v2374
      %v2685 = vmul.f32 %v1619, %v2378
      %v2686 = vmul.f32 %v1620, %v2382
      %v2687 = vmul.f32 %v1621, %v2354
      %v2688 = vmul.f32 %v1622, %v2358
      %v2689 = vmul.f32 %v1623, %v2362
      %v2690 = vmul.f32 %v1624, %v2366
      %v2691 = vmul.f32 %v1625, %v2370
      %v2692 = vmul.f32 %v1626, %v2374
      %v2693 = vmul.f32 %v1627, %v2378
      %v2694 = vmul.f32 %v1628, %v2382
      %v2695 = vmul.f32 %v1629, %v2354
      %v2696 = vmul.f32 %v1630, %v2358
      %v2697 = vmul.f32 %v1631, %v2362
      %v2698 = vmul.f32 %v1632, %v2366
      %v2699 = vmul.f32 %v1633, %v2370
      %v2700 = vmul.f32 %v1634, %v2374
      %v2701 = vmul.f32 %v1635, %v2378
      %v2702 = vmul.f32 %v1636, %v2382
      %v2703 = vmul.f32 %v1637, %v2354
      %v2704 = vmul.f32 %v1638, %v2358
      %v2705 = vmul.f32 %v1639, %v2362
      %v2706 = vmul.f32 %v1640, %v2366
      %v2707 = vmul.f32 %v1641, %v2370
      %v2708 = vmul.f32 %v1642, %v2374
      %v2709 = vmul.f32 %v1643, %v2378
      %v2710 = vmul.f32 %v1644, %v2382
      %v2711 = vmul.f32 %v1645, %v2354
      %v2712 = vmul.f32 %v1646, %v2358
      %v2713 = vmul.f32 %v1647, %v2362
      %v2714 = vmul.f32 %v1648, %v2366
      %v2715 = vmul.f32 %v1649, %v2370
      %v2716 = vmul.f32 %v1650, %v2374
      %v2717 = vmul.f32 %v1651, %v2378
      %v2718 = vmul.f32 %v1652, %v2382
      %v2719 = vmul.f32 %v1653, %v2354
      %v2720 = vmul.f32 %v1654, %v2358
      %v2721 = vmul.f32 %v1655, %v2362
      %v2722 = vmul.f32 %v1656, %v2366
      %v2723 = vmul.f32 %v1657, %v2370
      %v2724 = vmul.f32 %v1658, %v2374
      %v2725 = vmul.f32 %v1659, %v2378
      %v2726 = vmul.f32 %v1660, %v2382
      %v2727 = vmul.f32 %v1661, %v2354
      %v2728 = vmul.f32 %v1662, %v2358
      %v2729 = vmul.f32 %v1663, %v2362
      %v2730 = vmul.f32 %v1664, %v2366
      %v2731 = vmul.f32 %v1665, %v2370
      %v2732 = vmul.f32 %v1666, %v2374
      %v2733 = vmul.f32 %v1667, %v2378
      %v2734 = vmul.f32 %v1668, %v2382
      %v2735 = vmul.f32 %v1669, %v2354
      %v2736 = vmul.f32 %v1670, %v2358
      %v2737 = vmul.f32 %v1671, %v2362
      %v2738 = vmul.f32 %v1672, %v2366
      %v2739 = vmul.f32 %v1673, %v2370
      %v2740 = vmul.f32 %v1674, %v2374
      %v2741 = vmul.f32 %v1675, %v2378
      %v2742 = vmul.f32 %v1676, %v2382
      %v2743 = vmul.f32 %v1677, %v2354
      %v2744 = vmul.f32 %v1678, %v2358
      %v2745 = vmul.f32 %v1679, %v2362
      %v2746 = vmul.f32 %v1680, %v2366
      %v2747 = vmul.f32 %v1681, %v2370
      %v2748 = vmul.f32 %v1682, %v2374
      %v2749 = vmul.f32 %v1683, %v2378
      %v2750 = vmul.f32 %v1684, %v2382
      %v2751 = vmul.f32 %v1685, %v2354
      %v2752 = vmul.f32 %v1686, %v2358
      %v2753 = vmul.f32 %v1687, %v2362
      %v2754 = vmul.f32 %v1688, %v2366
      %v2755 = vmul.f32 %v1689, %v2370
      %v2756 = vmul.f32 %v1690, %v2374
      %v2757 = vmul.f32 %v1691, %v2378
      %v2758 = vmul.f32 %v1692, %v2382
      %v2759 = vmul.f32 %v1693, %v2354
      %v2760 = vmul.f32 %v1694, %v2358
      %v2761 = vmul.f32 %v1695, %v2362
      %v2762 = vmul.f32 %v1696, %v2366
      %v2763 = vmul.f32 %v1697, %v2370
      %v2764 = vmul.f32 %v1698, %v2374
      %v2765 = vmul.f32 %v1699, %v2378
      %v2766 = vmul.f32 %v1700, %v2382
      %v2767 = vmul.f32 %v1701, %v2354
      %v2768 = vmul.f32 %v1702, %v2358
      %v2769 = vmul.f32 %v1703, %v2362
      %v2770 = vmul.f32 %v1704, %v2366
      %v2771 = vmul.f32 %v1705, %v2370
      %v2772 = vmul.f32 %v1706, %v2374
      %v2773 = vmul.f32 %v1707, %v2378
      %v2774 = vmul.f32 %v1708, %v2382
      %v2775 = vmul.f32 %v1709, %v2354
      %v2776 = vmul.f32 %v1710, %v2358
      %v2777 = vmul.f32 %v1711, %v2362
      %v2778 = vmul.f32 %v1712, %v2366
      %v2779 = vmul.f32 %v1713, %v2370
      %v2780 = vmul.f32 %v1714, %v2374
      %v2781 = vmul.f32 %v1715, %v2378
      %v2782 = vmul.f32 %v1716, %v2382
      %v2783 = vmul.f32 %v1717, %v2354
      %v2784 = vmul.f32 %v1718, %v2358
      %v2785 = vmul.f32 %v1719, %v2362
      %v2786 = vmul.f32 %v1720, %v2366
      %v2787 = vmul.f32 %v1721, %v2370
      %v2788 = vmul.f32 %v1722, %v2374
      %v2789 = vmul.f32 %v1723, %v2378
      %v2790 = vmul.f32 %v1724, %v2382
      %v2791 = vmul.f32 %v1725, %v2354
      %v2792 = vmul.f32 %v1726, %v2358
      %v2793 = vmul.f32 %v1727, %v2362
      %v2794 = vmul.f32 %v1728, %v2366
      %v2795 = vmul.f32 %v1729, %v2370
      %v2796 = vmul.f32 %v1730, %v2374
      %v2797 = vmul.f32 %v1731, %v2378
      %v2798 = vmul.f32 %v1732, %v2382
      %v2799 = vmul.f32 %v1733, %v2354
      %v2800 = vmul.f32 %v1734, %v2358
      %v2801 = vmul.f32 %v1735, %v2362
      %v2802 = vmul.f32 %v1736, %v2366
      %v2803 = vmul.f32 %v1737, %v2370
      %v2804 = vmul.f32 %v1738, %v2374
      %v2805 = vmul.f32 %v1739, %v2378
      %v2806 = vmul.f32 %v1740, %v2382
      %v2807 = vmul.f32 %v1741, %v2354
      %v2808 = vmul.f32 %v1742, %v2358
      %v2809 = vmul.f32 %v1743, %v2362
      %v2810 = vmul.f32 %v1744, %v2366
      %v2811 = vmul.f32 %v1745, %v2370
      %v2812 = vmul.f32 %v1746, %v2374
      %v2813 = vmul.f32 %v1747, %v2378
      %v2814 = vmul.f32 %v1748, %v2382
      %v2815 = vmul.f32 %v1749, %v2354
      %v2816 = vmul.f32 %v1750, %v2358
      %v2817 = vmul.f32 %v1751, %v2362
      %v2818 = vmul.f32 %v1752, %v2366
      %v2819 = vmul.f32 %v1753, %v2370
      %v2820 = vmul.f32 %v1754, %v2374
      %v2821 = vmul.f32 %v1755, %v2378
      %v2822 = vmul.f32 %v1756, %v2382
      %v2823 = vmul.f32 %v1757, %v2354
      %v2824 = vmul.f32 %v1758, %v2358
      %v2825 = vmul.f32 %v1759, %v2362
      %v2826 = vmul.f32 %v1760, %v2366
      %v2827 = vmul.f32 %v1761, %v2370
      %v2828 = vmul.f32 %v1762, %v2374
      %v2829 = vmul.f32 %v1763, %v2378
      %v2830 = vmul.f32 %v1764, %v2382
      %v2831 = vmul.f32 %v1765, %v2354
      %v2832 = vmul.f32 %v1766, %v2358
      %v2833 = vmul.f32 %v1767, %v2362
      %v2834 = vmul.f32 %v1768, %v2366
      %v2835 = vmul.f32 %v1769, %v2370
      %v2836 = vmul.f32 %v1770, %v2374
      %v2837 = vmul.f32 %v1771, %v2378
      %v2838 = vmul.f32 %v1772, %v2382
      %v2839 = vmul.f32 %v1773, %v2354
      %v2840 = vmul.f32 %v1774, %v2358
      %v2841 = vmul.f32 %v1775, %v2362
      %v2842 = vmul.f32 %v1776, %v2366
      %v2843 = vmul.f32 %v1777, %v2370
      %v2844 = vmul.f32 %v1778, %v2374
      %v2845 = vmul.f32 %v1779, %v2378
      %v2846 = vmul.f32 %v1780, %v2382
      %v2847 = vmul.f32 %v1781, %v2354
      %v2848 = vmul.f32 %v1782, %v2358
      %v2849 = vmul.f32 %v1783, %v2362
      %v2850 = vmul.f32 %v1784, %v2366
      %v2851 = vmul.f32 %v1785, %v2370
      %v2852 = vmul.f32 %v1786, %v2374
      %v2853 = vmul.f32 %v1787, %v2378
      %v2854 = vmul.f32 %v1788, %v2382
      %v2855 = vmul.f32 %v1789, %v2354
      %v2856 = vmul.f32 %v1790, %v2358
      %v2857 = vmul.f32 %v1791, %v2362
      %v2858 = vmul.f32 %v1792, %v2366
      %v2859 = vmul.f32 %v1793, %v2370
      %v2860 = vmul.f32 %v1794, %v2374
      %v2861 = vmul.f32 %v1795, %v2378
      %v2862 = vmul.f32 %v1796, %v2382
      %v2863 = vmul.f32 %v1797, %v2354
      %v2864 = vmul.f32 %v1798, %v2358
      %v2865 = vmul.f32 %v1799, %v2362
      %v2866 = vmul.f32 %v1800, %v2366
      %v2867 = vmul.f32 %v1801, %v2370
      %v2868 = vmul.f32 %v1802, %v2374
      %v2869 = vmul.f32 %v1803, %v2378
      %v2870 = vmul.f32 %v1804, %v2382
      %v2871 = vmul.f32 %v1805, %v2354
      %v2872 = vmul.f32 %v1806, %v2358
      %v2873 = vmul.f32 %v1807, %v2362
      %v2874 = vmul.f32 %v1808, %v2366
      %v2875 = vmul.f32 %v1809, %v2370
      %v2876 = vmul.f32 %v1810, %v2374
      %v2877 = vmul.f32 %v1811, %v2378
      %v2878 = vmul.f32 %v1812, %v2382
      %v2879 = vmul.f32 %v1813, %v2354
      %v2880 = vmul.f32 %v1814, %v2358
      %v2881 = vmul.f32 %v1815, %v2362
      %v2882 = vmul.f32 %v1816, %v2366
      %v2883 = vmul.f32 %v1817, %v2370
      %v2884 = vmul.f32 %v1818, %v2374
      %v2885 = vmul.f32 %v1819, %v2378
      %v2886 = vmul.f32 %v1820, %v2382
      %v2887 = vmul.f32 %v1821, %v2354
      %v2888 = vmul.f32 %v1822, %v2358
      %v2889 = vmul.f32 %v1823, %v2362
      %v2890 = vmul.f32 %v1824, %v2366
      %v2891 = vmul.f32 %v1825, %v2370
      %v2892 = vmul.f32 %v1826, %v2374
      %v2893 = vmul.f32 %v1827, %v2378
      %v2894 = vmul.f32 %v1828, %v2382
      %v2895 = vmul.f32 %v1829, %v2354
      %v2896 = vmul.f32 %v1830, %v2358
      %v2897 = vmul.f32 %v1831, %v2362
      %v2898 = vmul.f32 %v1832, %v2366
      %v2899 = vmul.f32 %v1833, %v2370
      %v2900 = vmul.f32 %v1834, %v2374
      %v2901 = vmul.f32 %v1835, %v2378
      %v2902 = vmul.f32 %v1836, %v2382
      %v2903 = vmul.f32 %v1837, %v2354
      %v2904 = vmul.f32 %v1838, %v2358
      %v2905 = vmul.f32 %v1839, %v2362
      %v2906 = vmul.f32 %v1840, %v2366
      %v2907 = vmul.f32 %v1841, %v2370
      %v2908 = vmul.f32 %v1842, %v2374
      %v2909 = vmul.f32 %v1843, %v2378
      %v2910 = vmul.f32 %v1844, %v2382
      %v2911 = vmul.f32 %v1845, %v2354
      %v2912 = vmul.f32 %v1846, %v2358
      %v2913 = vmul.f32 %v1847, %v2362
      %v2914 = vmul.f32 %v1848, %v2366
      %v2915 = vmul.f32 %v1849, %v2370
      %v2916 = vmul.f32 %v1850, %v2374
      %v2917 = vmul.f32 %v1851, %v2378
      %v2918 = vmul.f32 %v1852, %v2382
      %v2919 = vmul.f32 %v1853, %v2354
      %v2920 = vmul.f32 %v1854, %v2358
      %v2921 = vmul.f32 %v1855, %v2362
      %v2922 = vmul.f32 %v1856, %v2366
      %v2923 = vmul.f32 %v1857, %v2370
      %v2924 = vmul.f32 %v1858, %v2374
      %v2925 = vmul.f32 %v1859, %v2378
      %v2926 = vmul.f32 %v1860, %v2382
      %v2927 = vmul.f32 %v1861, %v2354
      %v2928 = vmul.f32 %v1862, %v2358
      %v2929 = vmul.f32 %v1863, %v2362
      %v2930 = vmul.f32 %v1864, %v2366
      %v2931 = vmul.f32 %v1865, %v2370
      %v2932 = vmul.f32 %v1866, %v2374
      %v2933 = vmul.f32 %v1867, %v2378
      %v2934 = vmul.f32 %v1868, %v2382
      %v2935 = vmul.f32 %v1869, %v2354
      %v2936 = vmul.f32 %v1870, %v2358
      %v2937 = vmul.f32 %v1871, %v2362
      %v2938 = vmul.f32 %v1872, %v2366
      %v2939 = vmul.f32 %v1873, %v2370
      %v2940 = vmul.f32 %v1874, %v2374
      %v2941 = vmul.f32 %v1875, %v2378
      %v2942 = vmul.f32 %v1876, %v2382
      %v2943 = vmul.f32 %v1877, %v2354
      %v2944 = vmul.f32 %v1878, %v2358
      %v2945 = vmul.f32 %v1879, %v2362
      %v2946 = vmul.f32 %v1880, %v2366
      %v2947 = vmul.f32 %v1881, %v2370
      %v2948 = vmul.f32 %v1882, %v2374
      %v2949 = vmul.f32 %v1883, %v2378
      %v2950 = vmul.f32 %v1884, %v2382
      %v2951 = vmul.f32 %v1885, %v2354
      %v2952 = vmul.f32 %v1886, %v2358
      %v2953 = vmul.f32 %v1887, %v2362
      %v2954 = vmul.f32 %v1888, %v2366
      %v2955 = vmul.f32 %v1889, %v2370
      %v2956 = vmul.f32 %v1890, %v2374
      %v2957 = vmul.f32 %v1891, %v2378
      %v2958 = vmul.f32 %v1892, %v2382
      %v2959 = vmul.f32 %v1893, %v2354
      %v2960 = vmul.f32 %v1894, %v2358
      %v2961 = vmul.f32 %v1895, %v2362
      %v2962 = vmul.f32 %v1896, %v2366
      %v2963 = vmul.f32 %v1897, %v2370
      %v2964 = vmul.f32 %v1898, %v2374
      %v2965 = vmul.f32 %v1899, %v2378
      %v2966 = vmul.f32 %v1900, %v2382
      %v2967 = vmul.f32 %v1901, %v2354
      %v2968 = vmul.f32 %v1902, %v2358
      %v2969 = vmul.f32 %v1903, %v2362
      %v2970 = vmul.f32 %v1904, %v2366
      %v2971 = vmul.f32 %v1905, %v2370
      %v2972 = vmul.f32 %v1906, %v2374
      %v2973 = vmul.f32 %v1907, %v2378
      %v2974 = vmul.f32 %v1908, %v2382
      %v2975 = vmul.f32 %v1909, %v2354
      %v2976 = vmul.f32 %v1910, %v2358
      %v2977 = vmul.f32 %v1911, %v2362
      %v2978 = vmul.f32 %v1912, %v2366
      %v2979 = vmul.f32 %v1913, %v2370
      %v2980 = vmul.f32 %v1914, %v2374
      %v2981 = vmul.f32 %v1915, %v2378
      %v2982 = vmul.f32 %v1916, %v2382
      %v2983 = vmul.f32 %v1917, %v2354
      %v2984 = vmul.f32 %v1918, %v2358
      %v2985 = vmul.f32 %v1919, %v2362
      %v2986 = vmul.f32 %v1920, %v2366
      %v2987 = vmul.f32 %v1921, %v2370
      %v2988 = vmul.f32 %v1922, %v2374
      %v2989 = vmul.f32 %v1923, %v2378
      %v2990 = vmul.f32 %v1924, %v2382
      %v2991 = vmul.f32 %v1925, %v2354
      %v2992 = vmul.f32 %v1926, %v2358
      %v2993 = vmul.f32 %v1927, %v2362
      %v2994 = vmul.f32 %v1928, %v2366
      %v2995 = vmul.f32 %v1929, %v2370
      %v2996 = vmul.f32 %v1930, %v2374
      %v2997 = vmul.f32 %v1931, %v2378
      %v2998 = vmul.f32 %v1932, %v2382
      %v2999 = vmul.f32 %v1933, %v2354
      %v3000 = vmul.f32 %v1934, %v2358
      %v3001 = vmul.f32 %v1935, %v2362
      %v3002 = vmul.f32 %v1936, %v2366
      %v3003 = vmul.f32 %v1937, %v2370
      %v3004 = vmul.f32 %v1938, %v2374
      %v3005 = vmul.f32 %v1939, %v2378
      %v3006 = vmul.f32 %v1940, %v2382
      %v3007 = vmul.f32 %v1941, %v2354
      %v3008 = vmul.f32 %v1942, %v2358
      %v3009 = vmul.f32 %v1943, %v2362
      %v3010 = vmul.f32 %v1944, %v2366
      %v3011 = vmul.f32 %v1945, %v2370
      %v3012 = vmul.f32 %v1946, %v2374
      %v3013 = vmul.f32 %v1947, %v2378
      %v3014 = vmul.f32 %v1948, %v2382
      %v3015 = vmul.f32 %v1949, %v2354
      %v3016 = vmul.f32 %v1950, %v2358
      %v3017 = vmul.f32 %v1951, %v2362
      %v3018 = vmul.f32 %v1952, %v2366
      %v3019 = vmul.f32 %v1953, %v2370
      %v3020 = vmul.f32 %v1954, %v2374
      %v3021 = vmul.f32 %v1955, %v2378
      %v3022 = vmul.f32 %v1956, %v2382
      %v3023 = vmul.f32 %v1957, %v2354
      %v3024 = vmul.f32 %v1958, %v2358
      %v3025 = vmul.f32 %v1959, %v2362
      %v3026 = vmul.f32 %v1960, %v2366
      %v3027 = vmul.f32 %v1961, %v2370
      %v3028 = vmul.f32 %v1962, %v2374
      %v3029 = vmul.f32 %v1963, %v2378
      %v3030 = vmul.f32 %v1964, %v2382
      %v3031 = vmul.f32 %v1965, %v2354
      %v3032 = vmul.f32 %v1966, %v2358
      %v3033 = vmul.f32 %v1967, %v2362
      %v3034 = vmul.f32 %v1968, %v2366
      %v3035 = vmul.f32 %v1969, %v2370
      %v3036 = vmul.f32 %v1970, %v2374
      %v3037 = vmul.f32 %v1971, %v2378
      %v3038 = vmul.f32 %v1972, %v2382
      %v3039 = vmul.f32 %v1973, %v2354
      %v3040 = vmul.f32 %v1974, %v2358
      %v3041 = vmul.f32 %v1975, %v2362
      %v3042 = vmul.f32 %v1976, %v2366
      %v3043 = vmul.f32 %v1977, %v2370
      %v3044 = vmul.f32 %v1978, %v2374
      %v3045 = vmul.f32 %v1979, %v2378
      %v3046 = vmul.f32 %v1980, %v2382
      %v3047 = vmul.f32 %v1981, %v2354
      %v3048 = vmul.f32 %v1982, %v2358
      %v3049 = vmul.f32 %v1983, %v2362
      %v3050 = vmul.f32 %v1984, %v2366
      %v3051 = vmul.f32 %v1985, %v2370
      %v3052 = vmul.f32 %v1986, %v2374
      %v3053 = vmul.f32 %v1987, %v2378
      %v3054 = vmul.f32 %v1988, %v2382
      %v3055 = vmul.f32 %v1989, %v2354
      %v3056 = vmul.f32 %v1990, %v2358
      %v3057 = vmul.f32 %v1991, %v2362
      %v3058 = vmul.f32 %v1992, %v2366
      %v3059 = vmul.f32 %v1993, %v2370
      %v3060 = vmul.f32 %v1994, %v2374
      %v3061 = vmul.f32 %v1995, %v2378
      %v3062 = vmul.f32 %v1996, %v2382
      %v3063 = vmul.f32 %v1997, %v2354
      %v3064 = vmul.f32 %v1998, %v2358
      %v3065 = vmul.f32 %v1999, %v2362
      %v3066 = vmul.f32 %v2000, %v2366
      %v3067 = vmul.f32 %v2001, %v2370
      %v3068 = vmul.f32 %v2002, %v2374
      %v3069 = vmul.f32 %v2003, %v2378
      %v3070 = vmul.f32 %v2004, %v2382
      %v3071 = vmul.f32 %v2005, %v2354
      %v3072 = vmul.f32 %v2006, %v2358
      %v3073 = vmul.f32 %v2007, %v2362
      %v3074 = vmul.f32 %v2008, %v2366
      %v3075 = vmul.f32 %v2009, %v2370
      %v3076 = vmul.f32 %v2010, %v2374
      %v3077 = vmul.f32 %v2011, %v2378
      %v3078 = vmul.f32 %v2012, %v2382
      %v3079 = vmul.f32 %v2013, %v2354
      %v3080 = vmul.f32 %v2014, %v2358
      %v3081 = vmul.f32 %v2015, %v2362
      %v3082 = vmul.f32 %v2016, %v2366
      %v3083 = vmul.f32 %v2017, %v2370
      %v3084 = vmul.f32 %v2018, %v2374
      %v3085 = vmul.f32 %v2019, %v2378
      %v3086 = vmul.f32 %v2020, %v2382
      %v3087 = vmul.f32 %v2021, %v2354
      %v3088 = vmul.f32 %v2022, %v2358
      %v3089 = vmul.f32 %v2023, %v2362
      %v3090 = vmul.f32 %v2024, %v2366
      %v3091 = vmul.f32 %v2025, %v2370
      %v3092 = vmul.f32 %v2026, %v2374
      %v3093 = vmul.f32 %v2027, %v2378
      %v3094 = vmul.f32 %v2028, %v2382
      %v3095 = vmul.f32 %v2029, %v2354
      %v3096 = vmul.f32 %v2030, %v2358
      %v3097 = vmul.f32 %v2031, %v2362
      %v3098 = vmul.f32 %v2032, %v2366
      %v3099 = vmul.f32 %v2033, %v2370
      %v3100 = vmul.f32 %v2034, %v2374
      %v3101 = vmul.f32 %v2035, %v2378
      %v3102 = vmul.f32 %v2036, %v2382
      %v3103 = vmul.f32 %v2037, %v2354
      %v3104 = vmul.f32 %v2038, %v2358
      %v3105 = vmul.f32 %v2039, %v2362
      %v3106 = vmul.f32 %v2040, %v2366
      %v3107 = vmul.f32 %v2041, %v2370
      %v3108 = vmul.f32 %v2042, %v2374
      %v3109 = vmul.f32 %v2043, %v2378
      %v3110 = vmul.f32 %v2044, %v2382
      %v3111 = vmul.f32 %v2045, %v2354
      %v3112 = vmul.f32 %v2046, %v2358
      %v3113 = vmul.f32 %v2047, %v2362
      %v3114 = vmul.f32 %v2048, %v2366
      %v3115 = vmul.f32 %v2049, %v2370
      %v3116 = vmul.f32 %v2050, %v2374
      %v3117 = vmul.f32 %v2051, %v2378
      %v3118 = vmul.f32 %v2052, %v2382
      %v3119 = vmul.f32 %v2053, %v2354
      %v3120 = vmul.f32 %v2054, %v2358
      %v3121 = vmul.f32 %v2055, %v2362
      %v3122 = vmul.f32 %v2056, %v2366
      %v3123 = vmul.f32 %v2057, %v2370
      %v3124 = vmul.f32 %v2058, %v2374
      %v3125 = vmul.f32 %v2059, %v2378
      %v3126 = vmul.f32 %v2060, %v2382
      %v3127 = vmul.f32 %v2061, %v2354
      %v3128 = vmul.f32 %v2062, %v2358
      %v3129 = vmul.f32 %v2063, %v2362
      %v3130 = vmul.f32 %v2064, %v2366
      %v3131 = vmul.f32 %v2065, %v2370
      %v3132 = vmul.f32 %v2066, %v2374
      %v3133 = vmul.f32 %v2067, %v2378
      %v3134 = vmul.f32 %v2068, %v2382
      %v3135 = vmul.f32 %v2069, %v2354
      %v3136 = vmul.f32 %v2070, %v2358
      %v3137 = vmul.f32 %v2071, %v2362
      %v3138 = vmul.f32 %v2072, %v2366
      %v3139 = vmul.f32 %v2073, %v2370
      %v3140 = vmul.f32 %v2074, %v2374
      %v3141 = vmul.f32 %v2075, %v2378
      %v3142 = vmul.f32 %v2076, %v2382
      %v3143 = vmul.f32 %v2077, %v2354
      %v3144 = vmul.f32 %v2078, %v2358
      %v3145 = vmul.f32 %v2079, %v2362
      %v3146 = vmul.f32 %v2080, %v2366
      %v3147 = vmul.f32 %v2081, %v2370
      %v3148 = vmul.f32 %v2082, %v2374
      %v3149 = vmul.f32 %v2083, %v2378
      %v3150 = vmul.f32 %v2084, %v2382
      %v3151 = vmul.f32 %v2085, %v2354
      %v3152 = vmul.f32 %v2086, %v2358
      %v3153 = vmul.f32 %v2087, %v2362
      %v3154 = vmul.f32 %v2088, %v2366
      %v3155 = vmul.f32 %v2089, %v2370
      %v3156 = vmul.f32 %v2090, %v2374
      %v3157 = vmul.f32 %v2091, %v2378
      %v3158 = vmul.f32 %v2092, %v2382
      %v3159 = vmul.f32 %v2093, %v2354
      %v3160 = vmul.f32 %v2094, %v2358
      %v3161 = vmul.f32 %v2095, %v2362
      %v3162 = vmul.f32 %v2096, %v2366
      %v3163 = vmul.f32 %v2097, %v2370
      %v3164 = vmul.f32 %v2098, %v2374
      %v3165 = vmul.f32 %v2099, %v2378
      %v3166 = vmul.f32 %v2100, %v2382
      %v3167 = vmul.f32 %v2101, %v2354
      %v3168 = vmul.f32 %v2102, %v2358
      %v3169 = vmul.f32 %v2103, %v2362
      %v3170 = vmul.f32 %v2104, %v2366
      %v3171 = vmul.f32 %v2105, %v2370
      %v3172 = vmul.f32 %v2106, %v2374
      %v3173 = vmul.f32 %v2107, %v2378
      %v3174 = vmul.f32 %v2108, %v2382
      %v3175 = vmul.f32 %v2109, %v2354
      %v3176 = vmul.f32 %v2110, %v2358
      %v3177 = vmul.f32 %v2111, %v2362
      %v3178 = vmul.f32 %v2112, %v2366
      %v3179 = vmul.f32 %v2113, %v2370
      %v3180 = vmul.f32 %v2114, %v2374
      %v3181 = vmul.f32 %v2115, %v2378
      %v3182 = vmul.f32 %v2116, %v2382
      %v3183 = vmul.f32 %v2117, %v2354
      %v3184 = vmul.f32 %v2118, %v2358
      %v3185 = vmul.f32 %v2119, %v2362
      %v3186 = vmul.f32 %v2120, %v2366
      %v3187 = vmul.f32 %v2121, %v2370
      %v3188 = vmul.f32 %v2122, %v2374
      %v3189 = vmul.f32 %v2123, %v2378
      %v3190 = vmul.f32 %v2124, %v2382
      %v3191 = vmul.f32 %v2125, %v2354
      %v3192 = vmul.f32 %v2126, %v2358
      %v3193 = vmul.f32 %v2127, %v2362
      %v3194 = vmul.f32 %v2128, %v2366
      %v3195 = vmul.f32 %v2129, %v2370
      %v3196 = vmul.f32 %v2130, %v2374
      %v3197 = vmul.f32 %v2131, %v2378
      %v3198 = vmul.f32 %v2132, %v2382
      %v3199 = vmul.f32 %v2133, %v2354
      %v3200 = vmul.f32 %v2134, %v2358
      %v3201 = vmul.f32 %v2135, %v2362
      %v3202 = vmul.f32 %v2136, %v2366
      %v3203 = vmul.f32 %v2137, %v2370
      %v3204 = vmul.f32 %v2138, %v2374
      %v3205 = vmul.f32 %v2139, %v2378
      %v3206 = vmul.f32 %v2140, %v2382
      %v3207 = vmul.f32 %v2141, %v2354
      %v3208 = vmul.f32 %v2142, %v2358
      %v3209 = vmul.f32 %v2143, %v2362
      %v3210 = vmul.f32 %v2144, %v2366
      %v3211 = vmul.f32 %v2145, %v2370
      %v3212 = vmul.f32 %v2146, %v2374
      %v3213 = vmul.f32 %v2147, %v2378
      %v3214 = vmul.f32 %v2148, %v2382
      %v3215 = vmul.f32 %v2149, %v2354
      %v3216 = vmul.f32 %v2150, %v2358
      %v3217 = vmul.f32 %v2151, %v2362
      %v3218 = vmul.f32 %v2152, %v2366
      %v3219 = vmul.f32 %v2153, %v2370
      %v3220 = vmul.f32 %v2154, %v2374
      %v3221 = vmul.f32 %v2155, %v2378
      %v3222 = vmul.f32 %v2156, %v2382
      %v3223 = vmul.f32 %v2157, %v2354
      %v3224 = vmul.f32 %v2158, %v2358
      %v3225 = vmul.f32 %v2159, %v2362
      %v3226 = vmul.f32 %v2160, %v2366
      %v3227 = vmul.f32 %v2161, %v2370
      %v3228 = vmul.f32 %v2162, %v2374
      %v3229 = vmul.f32 %v2163, %v2378
      %v3230 = vmul.f32 %v2164, %v2382
      %v3231 = vmul.f32 %v2165, %v2354
      %v3232 = vmul.f32 %v2166, %v2358
      %v3233 = vmul.f32 %v2167, %v2362
      %v3234 = vmul.f32 %v2168, %v2366
      %v3235 = vmul.f32 %v2169, %v2370
      %v3236 = vmul.f32 %v2170, %v2374
      %v3237 = vmul.f32 %v2171, %v2378
      %v3238 = vmul.f32 %v2172, %v2382
      %v3239 = vmul.f32 %v2173, %v2354
      %v3240 = vmul.f32 %v2174, %v2358
      %v3241 = vmul.f32 %v2175, %v2362
      %v3242 = vmul.f32 %v2176, %v2366
      %v3243 = vmul.f32 %v2177, %v2370
      %v3244 = vmul.f32 %v2178, %v2374
      %v3245 = vmul.f32 %v2179, %v2378
      %v3246 = vmul.f32 %v2180, %v2382
      %v3247 = vmul.f32 %v2181, %v2354
      %v3248 = vmul.f32 %v2182, %v2358
      %v3249 = vmul.f32 %v2183, %v2362
      %v3250 = vmul.f32 %v2184, %v2366
      %v3251 = vmul.f32 %v2185, %v2370
      %v3252 = vmul.f32 %v2186, %v2374
      %v3253 = vmul.f32 %v2187, %v2378
      %v3254 = vmul.f32 %v2188, %v2382
      %v3255 = vmul.f32 %v2189, %v2354
      %v3256 = vmul.f32 %v2190, %v2358
      %v3257 = vmul.f32 %v2191, %v2362
      %v3258 = vmul.f32 %v2192, %v2366
      %v3259 = vmul.f32 %v2193, %v2370
      %v3260 = vmul.f32 %v2194, %v2374
      %v3261 = vmul.f32 %v2195, %v2378
      %v3262 = vmul.f32 %v2196, %v2382
      %v3263 = vmul.f32 %v2197, %v2354
      %v3264 = vmul.f32 %v2198, %v2358
      %v3265 = vmul.f32 %v2199, %v2362
      %v3266 = vmul.f32 %v2200, %v2366
      %v3267 = vmul.f32 %v2201, %v2370
      %v3268 = vmul.f32 %v2202, %v2374
      %v3269 = vmul.f32 %v2203, %v2378
      %v3270 = vmul.f32 %v2204, %v2382
      %v3271 = vmul.f32 %v2205, %v2354
      %v3272 = vmul.f32 %v2206, %v2358
      %v3273 = vmul.f32 %v2207, %v2362
      %v3274 = vmul.f32 %v2208, %v2366
      %v3275 = vmul.f32 %v2209, %v2370
      %v3276 = vmul.f32 %v2210, %v2374
      %v3277 = vmul.f32 %v2211, %v2378
      %v3278 = vmul.f32 %v2212, %v2382
      %v3279 = vmul.f32 %v2213, %v2354
      %v3280 = vmul.f32 %v2214, %v2358
      %v3281 = vmul.f32 %v2215, %v2362
      %v3282 = vmul.f32 %v2216, %v2366
      %v3283 = vmul.f32 %v2217, %v2370
      %v3284 = vmul.f32 %v2218, %v2374
      %v3285 = vmul.f32 %v2219, %v2378
      %v3286 = vmul.f32 %v2220, %v2382
      %v3287 = vmul.f32 %v2221, %v2354
      %v3288 = vmul.f32 %v2222, %v2358
      %v3289 = vmul.f32 %v2223, %v2362
      %v3290 = vmul.f32 %v2224, %v2366
      %v3291 = vmul.f32 %v2225, %v2370
      %v3292 = vmul.f32 %v2226, %v2374
      %v3293 = vmul.f32 %v2227, %v2378
      %v3294 = vmul.f32 %v2228, %v2382
      %v3295 = vmul.f32 %v2229, %v2354
      %v3296 = vmul.f32 %v2230, %v2358
      %v3297 = vmul.f32 %v2231, %v2362
      %v3298 = vmul.f32 %v2232, %v2366
      %v3299 = vmul.f32 %v2233, %v2370
      %v3300 = vmul.f32 %v2234, %v2374
      %v3301 = vmul.f32 %v2235, %v2378
      %v3302 = vmul.f32 %v2236, %v2382
      %v3303 = vmul.f32 %v2237, %v2354
      %v3304 = vmul.f32 %v2238, %v2358
      %v3305 = vmul.f32 %v2239, %v2362
      %v3306 = vmul.f32 %v2240, %v2366
      %v3307 = vmul.f32 %v2241, %v2370
      %v3308 = vmul.f32 %v2242, %v2374
      %v3309 = vmul.f32 %v2243, %v2378
      %v3310 = vmul.f32 %v2244, %v2382
      %v3311 = vmul.f32 %v2245, %v2354
      %v3312 = vmul.f32 %v2246, %v2358
      %v3313 = vmul.f32 %v2247, %v2362
      %v3314 = vmul.f32 %v2248, %v2366
      %v3315 = vmul.f32 %v2249, %v2370
      %v3316 = vmul.f32 %v2250, %v2374
      %v3317 = vmul.f32 %v2251, %v2378
      %v3318 = vmul.f32 %v2252, %v2382
      %v3319 = vmul.f32 %v2253, %v2354
      %v3320 = vmul.f32 %v2254, %v2358
      %v3321 = vmul.f32 %v2255, %v2362
      %v3322 = vmul.f32 %v2256, %v2366
      %v3323 = vmul.f32 %v2257, %v2370
      %v3324 = vmul.f32 %v2258, %v2374
      %v3325 = vmul.f32 %v2259, %v2378
      %v3326 = vmul.f32 %v2260, %v2382
      %v3327 = vmul.f32 %v2261, %v2354
      %v3328 = vmul.f32 %v2262, %v2358
      %v3329 = vmul.f32 %v2263, %v2362
      %v3330 = vmul.f32 %v2264, %v2366
      %v3331 = vmul.f32 %v2265, %v2370
      %v3332 = vmul.f32 %v2266, %v2374
      %v3333 = vmul.f32 %v2267, %v2378
      %v3334 = vmul.f32 %v2268, %v2382
      %v3335 = vmul.f32 %v2269, %v2354
      %v3336 = vmul.f32 %v2270, %v2358
      %v3337 = vmul.f32 %v2271, %v2362
      %v3338 = vmul.f32 %v2272, %v2366
      %v3339 = vmul.f32 %v2273, %v2370
      %v3340 = vmul.f32 %v2274, %v2374
      %v3341 = vmul.f32 %v2275, %v2378
      %v3342 = vmul.f32 %v2276, %v2382
      %v3343 = vmul.f32 %v2277, %v2354
      %v3344 = vmul.f32 %v2278, %v2358
      %v3345 = vmul.f32 %v2279, %v2362
      %v3346 = vmul.f32 %v2280, %v2366
      %v3347 = vmul.f32 %v2281, %v2370
      %v3348 = vmul.f32 %v2282, %v2374
      %v3349 = vmul.f32 %v2283, %v2378
      %v3350 = vmul.f32 %v2284, %v2382
      %v3351 = vmul.f32 %v2285, %v2354
      %v3352 = vmul.f32 %v2286, %v2358
      %v3353 = vmul.f32 %v2287, %v2362
      %v3354 = vmul.f32 %v2288, %v2366
      %v3355 = vmul.f32 %v2289, %v2370
      %v3356 = vmul.f32 %v2290, %v2374
      %v3357 = vmul.f32 %v2291, %v2378
      %v3358 = vmul.f32 %v2292, %v2382
      %v3359 = vmul.f32 %v2293, %v2354
      %v3360 = vmul.f32 %v2294, %v2358
      %v3361 = vmul.f32 %v2295, %v2362
      %v3362 = vmul.f32 %v2296, %v2366
      %v3363 = vmul.f32 %v2297, %v2370
      %v3364 = vmul.f32 %v2298, %v2374
      %v3365 = vmul.f32 %v2299, %v2378
      %v3366 = vmul.f32 %v2300, %v2382
      %v3367 = vmul.f32 %v2301, %v2354
      %v3368 = vmul.f32 %v2302, %v2358
      %v3369 = vmul.f32 %v2303, %v2362
      %v3370 = vmul.f32 %v2304, %v2366
      %v3371 = vmul.f32 %v2305, %v2370
      %v3372 = vmul.f32 %v2306, %v2374
      %v3373 = vmul.f32 %v2307, %v2378
      %v3374 = vmul.f32 %v2308, %v2382
      %v3375 = vmul.f32 %v2309, %v2354
      %v3376 = vmul.f32 %v2310, %v2358
      %v3377 = vmul.f32 %v2311, %v2362
      %v3378 = vmul.f32 %v2312, %v2366
      %v3379 = vmul.f32 %v2313, %v2370
      %v3380 = vmul.f32 %v2314, %v2374
      %v3381 = vmul.f32 %v2315, %v2378
      %v3382 = vmul.f32 %v2316, %v2382
      %v3383 = vmul.f32 %v2317, %v2354
      %v3384 = vmul.f32 %v2318, %v2358
      %v3385 = vmul.f32 %v2319, %v2362
      %v3386 = vmul.f32 %v2320, %v2366
      %v3387 = vmul.f32 %v2321, %v2370
      %v3388 = vmul.f32 %v2322, %v2374
      %v3389 = vmul.f32 %v2323, %v2378
      %v3390 = vmul.f32 %v2324, %v2382
      %v3391 = vmul.f32 %v2325, %v2354
      %v3392 = vmul.f32 %v2326, %v2358
      %v3393 = vmul.f32 %v2327, %v2362
      %v3394 = vmul.f32 %v2328, %v2366
      %v3395 = vmul.f32 %v2329, %v2370
      %v3396 = vmul.f32 %v2330, %v2374
      %v3397 = vmul.f32 %v2331, %v2378
      %v3398 = vmul.f32 %v2332, %v2382
      %v3399 = vmul.f32 %v2333, %v2354
      %v3400 = vmul.f32 %v2334, %v2358
      %v3401 = vmul.f32 %v2335, %v2362
      %v3402 = vmul.f32 %v2336, %v2366
      %v3403 = vmul.f32 %v2337, %v2370
      %v3404 = vmul.f32 %v2338, %v2374
      %v3405 = vmul.f32 %v2339, %v2378
      %v3406 = vmul.f32 %v2340, %v2382
      %v3407 = vmul.f32 %v2341, %v2354
      %v3408 = vmul.f32 %v2342, %v2358
      %v3409 = vmul.f32 %v2343, %v2362
      %v3410 = vmul.f32 %v2344, %v2366
      %v3411 = vmul.f32 %v2345, %v2370
      %v3412 = vmul.f32 %v2346, %v2374
      %v3413 = vmul.f32 %v2347, %v2378
      %v3414 = vmul.f32 %v2348, %v2382
      %v3415 = vpack.c.bf16 %v2399, %v2391
      %v3416 = vpack.c.bf16 %v2400, %v2392
      %v3417 = vpack.c.bf16 %v2401, %v2393
      %v3418 = vpack.c.bf16 %v2402, %v2394
      %v3419 = vpack.c.bf16 %v2403, %v2395
      %v3420 = vpack.c.bf16 %v2404, %v2396
      %v3421 = vpack.c.bf16 %v2405, %v2397
      %v3422 = vpack.c.bf16 %v2406, %v2398
      %v3423 = vpack.c.bf16 %v2415, %v2407
      %v3424 = vpack.c.bf16 %v2416, %v2408
      %v3425 = vpack.c.bf16 %v2417, %v2409
      %v3426 = vpack.c.bf16 %v2418, %v2410
      %v3427 = vpack.c.bf16 %v2419, %v2411
      %v3428 = vpack.c.bf16 %v2420, %v2412
      %v3429 = vpack.c.bf16 %v2421, %v2413
      %v3430 = vpack.c.bf16 %v2422, %v2414
      %v3431 = vpack.c.bf16 %v2431, %v2423
      %v3432 = vpack.c.bf16 %v2432, %v2424
      %v3433 = vpack.c.bf16 %v2433, %v2425
      %v3434 = vpack.c.bf16 %v2434, %v2426
      %v3435 = vpack.c.bf16 %v2435, %v2427
      %v3436 = vpack.c.bf16 %v2436, %v2428
      %v3437 = vpack.c.bf16 %v2437, %v2429
      %v3438 = vpack.c.bf16 %v2438, %v2430
      %v3439 = vpack.c.bf16 %v2447, %v2439
      %v3440 = vpack.c.bf16 %v2448, %v2440
      %v3441 = vpack.c.bf16 %v2449, %v2441
      %v3442 = vpack.c.bf16 %v2450, %v2442
      %v3443 = vpack.c.bf16 %v2451, %v2443
      %v3444 = vpack.c.bf16 %v2452, %v2444
      %v3445 = vpack.c.bf16 %v2453, %v2445
      %v3446 = vpack.c.bf16 %v2454, %v2446
      %v3447 = vpack.c.bf16 %v2463, %v2455
      %v3448 = vpack.c.bf16 %v2464, %v2456
      %v3449 = vpack.c.bf16 %v2465, %v2457
      %v3450 = vpack.c.bf16 %v2466, %v2458
      %v3451 = vpack.c.bf16 %v2467, %v2459
      %v3452 = vpack.c.bf16 %v2468, %v2460
      %v3453 = vpack.c.bf16 %v2469, %v2461
      %v3454 = vpack.c.bf16 %v2470, %v2462
      %v3455 = vpack.c.bf16 %v2479, %v2471
      %v3456 = vpack.c.bf16 %v2480, %v2472
      %v3457 = vpack.c.bf16 %v2481, %v2473
      %v3458 = vpack.c.bf16 %v2482, %v2474
      %v3459 = vpack.c.bf16 %v2483, %v2475
      %v3460 = vpack.c.bf16 %v2484, %v2476
      %v3461 = vpack.c.bf16 %v2485, %v2477
      %v3462 = vpack.c.bf16 %v2486, %v2478
      %v3463 = vpack.c.bf16 %v2495, %v2487
      %v3464 = vpack.c.bf16 %v2496, %v2488
      %v3465 = vpack.c.bf16 %v2497, %v2489
      %v3466 = vpack.c.bf16 %v2498, %v2490
      %v3467 = vpack.c.bf16 %v2499, %v2491
      %v3468 = vpack.c.bf16 %v2500, %v2492
      %v3469 = vpack.c.bf16 %v2501, %v2493
      %v3470 = vpack.c.bf16 %v2502, %v2494
      %v3471 = vpack.c.bf16 %v2511, %v2503
      %v3472 = vpack.c.bf16 %v2512, %v2504
      %v3473 = vpack.c.bf16 %v2513, %v2505
      %v3474 = vpack.c.bf16 %v2514, %v2506
      %v3475 = vpack.c.bf16 %v2515, %v2507
      %v3476 = vpack.c.bf16 %v2516, %v2508
      %v3477 = vpack.c.bf16 %v2517, %v2509
      %v3478 = vpack.c.bf16 %v2518, %v2510
      %v3479 = vpack.c.bf16 %v2527, %v2519
      %v3480 = vpack.c.bf16 %v2528, %v2520
      %v3481 = vpack.c.bf16 %v2529, %v2521
      %v3482 = vpack.c.bf16 %v2530, %v2522
      %v3483 = vpack.c.bf16 %v2531, %v2523
      %v3484 = vpack.c.bf16 %v2532, %v2524
      %v3485 = vpack.c.bf16 %v2533, %v2525
      %v3486 = vpack.c.bf16 %v2534, %v2526
      %v3487 = vpack.c.bf16 %v2543, %v2535
      %v3488 = vpack.c.bf16 %v2544, %v2536
      %v3489 = vpack.c.bf16 %v2545, %v2537
      %v3490 = vpack.c.bf16 %v2546, %v2538
      %v3491 = vpack.c.bf16 %v2547, %v2539
      %v3492 = vpack.c.bf16 %v2548, %v2540
      %v3493 = vpack.c.bf16 %v2549, %v2541
      %v3494 = vpack.c.bf16 %v2550, %v2542
      %v3495 = vpack.c.bf16 %v2559, %v2551
      %v3496 = vpack.c.bf16 %v2560, %v2552
      %v3497 = vpack.c.bf16 %v2561, %v2553
      %v3498 = vpack.c.bf16 %v2562, %v2554
      %v3499 = vpack.c.bf16 %v2563, %v2555
      %v3500 = vpack.c.bf16 %v2564, %v2556
      %v3501 = vpack.c.bf16 %v2565, %v2557
      %v3502 = vpack.c.bf16 %v2566, %v2558
      %v3503 = vpack.c.bf16 %v2575, %v2567
      %v3504 = vpack.c.bf16 %v2576, %v2568
      %v3505 = vpack.c.bf16 %v2577, %v2569
      %v3506 = vpack.c.bf16 %v2578, %v2570
      %v3507 = vpack.c.bf16 %v2579, %v2571
      %v3508 = vpack.c.bf16 %v2580, %v2572
      %v3509 = vpack.c.bf16 %v2581, %v2573
      %v3510 = vpack.c.bf16 %v2582, %v2574
      %v3511 = vpack.c.bf16 %v2591, %v2583
      %v3512 = vpack.c.bf16 %v2592, %v2584
      %v3513 = vpack.c.bf16 %v2593, %v2585
      %v3514 = vpack.c.bf16 %v2594, %v2586
      %v3515 = vpack.c.bf16 %v2595, %v2587
      %v3516 = vpack.c.bf16 %v2596, %v2588
      %v3517 = vpack.c.bf16 %v2597, %v2589
      %v3518 = vpack.c.bf16 %v2598, %v2590
      %v3519 = vpack.c.bf16 %v2607, %v2599
      %v3520 = vpack.c.bf16 %v2608, %v2600
      %v3521 = vpack.c.bf16 %v2609, %v2601
      %v3522 = vpack.c.bf16 %v2610, %v2602
      %v3523 = vpack.c.bf16 %v2611, %v2603
      %v3524 = vpack.c.bf16 %v2612, %v2604
      %v3525 = vpack.c.bf16 %v2613, %v2605
      %v3526 = vpack.c.bf16 %v2614, %v2606
      %v3527 = vpack.c.bf16 %v2623, %v2615
      %v3528 = vpack.c.bf16 %v2624, %v2616
      %v3529 = vpack.c.bf16 %v2625, %v2617
      %v3530 = vpack.c.bf16 %v2626, %v2618
      %v3531 = vpack.c.bf16 %v2627, %v2619
      %v3532 = vpack.c.bf16 %v2628, %v2620
      %v3533 = vpack.c.bf16 %v2629, %v2621
      %v3534 = vpack.c.bf16 %v2630, %v2622
      %v3535 = vpack.c.bf16 %v2639, %v2631
      %v3536 = vpack.c.bf16 %v2640, %v2632
      %v3537 = vpack.c.bf16 %v2641, %v2633
      %v3538 = vpack.c.bf16 %v2642, %v2634
      %v3539 = vpack.c.bf16 %v2643, %v2635
      %v3540 = vpack.c.bf16 %v2644, %v2636
      %v3541 = vpack.c.bf16 %v2645, %v2637
      %v3542 = vpack.c.bf16 %v2646, %v2638
      %v3543 = vpack.c.bf16 %v2655, %v2647
      %v3544 = vpack.c.bf16 %v2656, %v2648
      %v3545 = vpack.c.bf16 %v2657, %v2649
      %v3546 = vpack.c.bf16 %v2658, %v2650
      %v3547 = vpack.c.bf16 %v2659, %v2651
      %v3548 = vpack.c.bf16 %v2660, %v2652
      %v3549 = vpack.c.bf16 %v2661, %v2653
      %v3550 = vpack.c.bf16 %v2662, %v2654
      %v3551 = vpack.c.bf16 %v2671, %v2663
      %v3552 = vpack.c.bf16 %v2672, %v2664
      %v3553 = vpack.c.bf16 %v2673, %v2665
      %v3554 = vpack.c.bf16 %v2674, %v2666
      %v3555 = vpack.c.bf16 %v2675, %v2667
      %v3556 = vpack.c.bf16 %v2676, %v2668
      %v3557 = vpack.c.bf16 %v2677, %v2669
      %v3558 = vpack.c.bf16 %v2678, %v2670
      %v3559 = vpack.c.bf16 %v2687, %v2679
      %v3560 = vpack.c.bf16 %v2688, %v2680
      %v3561 = vpack.c.bf16 %v2689, %v2681
      %v3562 = vpack.c.bf16 %v2690, %v2682
      %v3563 = vpack.c.bf16 %v2691, %v2683
      %v3564 = vpack.c.bf16 %v2692, %v2684
      %v3565 = vpack.c.bf16 %v2693, %v2685
      %v3566 = vpack.c.bf16 %v2694, %v2686
      %v3567 = vpack.c.bf16 %v2703, %v2695
      %v3568 = vpack.c.bf16 %v2704, %v2696
      %v3569 = vpack.c.bf16 %v2705, %v2697
      %v3570 = vpack.c.bf16 %v2706, %v2698
      %v3571 = vpack.c.bf16 %v2707, %v2699
      %v3572 = vpack.c.bf16 %v2708, %v2700
      %v3573 = vpack.c.bf16 %v2709, %v2701
      %v3574 = vpack.c.bf16 %v2710, %v2702
      %v3575 = vpack.c.bf16 %v2719, %v2711
      %v3576 = vpack.c.bf16 %v2720, %v2712
      %v3577 = vpack.c.bf16 %v2721, %v2713
      %v3578 = vpack.c.bf16 %v2722, %v2714
      %v3579 = vpack.c.bf16 %v2723, %v2715
      %v3580 = vpack.c.bf16 %v2724, %v2716
      %v3581 = vpack.c.bf16 %v2725, %v2717
      %v3582 = vpack.c.bf16 %v2726, %v2718
      %v3583 = vpack.c.bf16 %v2735, %v2727
      %v3584 = vpack.c.bf16 %v2736, %v2728
      %v3585 = vpack.c.bf16 %v2737, %v2729
      %v3586 = vpack.c.bf16 %v2738, %v2730
      %v3587 = vpack.c.bf16 %v2739, %v2731
      %v3588 = vpack.c.bf16 %v2740, %v2732
      %v3589 = vpack.c.bf16 %v2741, %v2733
      %v3590 = vpack.c.bf16 %v2742, %v2734
      %v3591 = vpack.c.bf16 %v2751, %v2743
      %v3592 = vpack.c.bf16 %v2752, %v2744
      %v3593 = vpack.c.bf16 %v2753, %v2745
      %v3594 = vpack.c.bf16 %v2754, %v2746
      %v3595 = vpack.c.bf16 %v2755, %v2747
      %v3596 = vpack.c.bf16 %v2756, %v2748
      %v3597 = vpack.c.bf16 %v2757, %v2749
      %v3598 = vpack.c.bf16 %v2758, %v2750
      %v3599 = vpack.c.bf16 %v2767, %v2759
      %v3600 = vpack.c.bf16 %v2768, %v2760
      %v3601 = vpack.c.bf16 %v2769, %v2761
      %v3602 = vpack.c.bf16 %v2770, %v2762
      %v3603 = vpack.c.bf16 %v2771, %v2763
      %v3604 = vpack.c.bf16 %v2772, %v2764
      %v3605 = vpack.c.bf16 %v2773, %v2765
      %v3606 = vpack.c.bf16 %v2774, %v2766
      %v3607 = vpack.c.bf16 %v2783, %v2775
      %v3608 = vpack.c.bf16 %v2784, %v2776
      %v3609 = vpack.c.bf16 %v2785, %v2777
      %v3610 = vpack.c.bf16 %v2786, %v2778
      %v3611 = vpack.c.bf16 %v2787, %v2779
      %v3612 = vpack.c.bf16 %v2788, %v2780
      %v3613 = vpack.c.bf16 %v2789, %v2781
      %v3614 = vpack.c.bf16 %v2790, %v2782
      %v3615 = vpack.c.bf16 %v2799, %v2791
      %v3616 = vpack.c.bf16 %v2800, %v2792
      %v3617 = vpack.c.bf16 %v2801, %v2793
      %v3618 = vpack.c.bf16 %v2802, %v2794
      %v3619 = vpack.c.bf16 %v2803, %v2795
      %v3620 = vpack.c.bf16 %v2804, %v2796
      %v3621 = vpack.c.bf16 %v2805, %v2797
      %v3622 = vpack.c.bf16 %v2806, %v2798
      %v3623 = vpack.c.bf16 %v2815, %v2807
      %v3624 = vpack.c.bf16 %v2816, %v2808
      %v3625 = vpack.c.bf16 %v2817, %v2809
      %v3626 = vpack.c.bf16 %v2818, %v2810
      %v3627 = vpack.c.bf16 %v2819, %v2811
      %v3628 = vpack.c.bf16 %v2820, %v2812
      %v3629 = vpack.c.bf16 %v2821, %v2813
      %v3630 = vpack.c.bf16 %v2822, %v2814
      %v3631 = vpack.c.bf16 %v2831, %v2823
      %v3632 = vpack.c.bf16 %v2832, %v2824
      %v3633 = vpack.c.bf16 %v2833, %v2825
      %v3634 = vpack.c.bf16 %v2834, %v2826
      %v3635 = vpack.c.bf16 %v2835, %v2827
      %v3636 = vpack.c.bf16 %v2836, %v2828
      %v3637 = vpack.c.bf16 %v2837, %v2829
      %v3638 = vpack.c.bf16 %v2838, %v2830
      %v3639 = vpack.c.bf16 %v2847, %v2839
      %v3640 = vpack.c.bf16 %v2848, %v2840
      %v3641 = vpack.c.bf16 %v2849, %v2841
      %v3642 = vpack.c.bf16 %v2850, %v2842
      %v3643 = vpack.c.bf16 %v2851, %v2843
      %v3644 = vpack.c.bf16 %v2852, %v2844
      %v3645 = vpack.c.bf16 %v2853, %v2845
      %v3646 = vpack.c.bf16 %v2854, %v2846
      %v3647 = vpack.c.bf16 %v2863, %v2855
      %v3648 = vpack.c.bf16 %v2864, %v2856
      %v3649 = vpack.c.bf16 %v2865, %v2857
      %v3650 = vpack.c.bf16 %v2866, %v2858
      %v3651 = vpack.c.bf16 %v2867, %v2859
      %v3652 = vpack.c.bf16 %v2868, %v2860
      %v3653 = vpack.c.bf16 %v2869, %v2861
      %v3654 = vpack.c.bf16 %v2870, %v2862
      %v3655 = vpack.c.bf16 %v2879, %v2871
      %v3656 = vpack.c.bf16 %v2880, %v2872
      %v3657 = vpack.c.bf16 %v2881, %v2873
      %v3658 = vpack.c.bf16 %v2882, %v2874
      %v3659 = vpack.c.bf16 %v2883, %v2875
      %v3660 = vpack.c.bf16 %v2884, %v2876
      %v3661 = vpack.c.bf16 %v2885, %v2877
      %v3662 = vpack.c.bf16 %v2886, %v2878
      %v3663 = vpack.c.bf16 %v2895, %v2887
      %v3664 = vpack.c.bf16 %v2896, %v2888
      %v3665 = vpack.c.bf16 %v2897, %v2889
      %v3666 = vpack.c.bf16 %v2898, %v2890
      %v3667 = vpack.c.bf16 %v2899, %v2891
      %v3668 = vpack.c.bf16 %v2900, %v2892
      %v3669 = vpack.c.bf16 %v2901, %v2893
      %v3670 = vpack.c.bf16 %v2902, %v2894
      %v3671 = vpack.c.bf16 %v2911, %v2903
      %v3672 = vpack.c.bf16 %v2912, %v2904
      %v3673 = vpack.c.bf16 %v2913, %v2905
      %v3674 = vpack.c.bf16 %v2914, %v2906
      %v3675 = vpack.c.bf16 %v2915, %v2907
      %v3676 = vpack.c.bf16 %v2916, %v2908
      %v3677 = vpack.c.bf16 %v2917, %v2909
      %v3678 = vpack.c.bf16 %v2918, %v2910
      %v3679 = vpack.c.bf16 %v2927, %v2919
      %v3680 = vpack.c.bf16 %v2928, %v2920
      %v3681 = vpack.c.bf16 %v2929, %v2921
      %v3682 = vpack.c.bf16 %v2930, %v2922
      %v3683 = vpack.c.bf16 %v2931, %v2923
      %v3684 = vpack.c.bf16 %v2932, %v2924
      %v3685 = vpack.c.bf16 %v2933, %v2925
      %v3686 = vpack.c.bf16 %v2934, %v2926
      %v3687 = vpack.c.bf16 %v2943, %v2935
      %v3688 = vpack.c.bf16 %v2944, %v2936
      %v3689 = vpack.c.bf16 %v2945, %v2937
      %v3690 = vpack.c.bf16 %v2946, %v2938
      %v3691 = vpack.c.bf16 %v2947, %v2939
      %v3692 = vpack.c.bf16 %v2948, %v2940
      %v3693 = vpack.c.bf16 %v2949, %v2941
      %v3694 = vpack.c.bf16 %v2950, %v2942
      %v3695 = vpack.c.bf16 %v2959, %v2951
      %v3696 = vpack.c.bf16 %v2960, %v2952
      %v3697 = vpack.c.bf16 %v2961, %v2953
      %v3698 = vpack.c.bf16 %v2962, %v2954
      %v3699 = vpack.c.bf16 %v2963, %v2955
      %v3700 = vpack.c.bf16 %v2964, %v2956
      %v3701 = vpack.c.bf16 %v2965, %v2957
      %v3702 = vpack.c.bf16 %v2966, %v2958
      %v3703 = vpack.c.bf16 %v2975, %v2967
      %v3704 = vpack.c.bf16 %v2976, %v2968
      %v3705 = vpack.c.bf16 %v2977, %v2969
      %v3706 = vpack.c.bf16 %v2978, %v2970
      %v3707 = vpack.c.bf16 %v2979, %v2971
      %v3708 = vpack.c.bf16 %v2980, %v2972
      %v3709 = vpack.c.bf16 %v2981, %v2973
      %v3710 = vpack.c.bf16 %v2982, %v2974
      %v3711 = vpack.c.bf16 %v2991, %v2983
      %v3712 = vpack.c.bf16 %v2992, %v2984
      %v3713 = vpack.c.bf16 %v2993, %v2985
      %v3714 = vpack.c.bf16 %v2994, %v2986
      %v3715 = vpack.c.bf16 %v2995, %v2987
      %v3716 = vpack.c.bf16 %v2996, %v2988
      %v3717 = vpack.c.bf16 %v2997, %v2989
      %v3718 = vpack.c.bf16 %v2998, %v2990
      %v3719 = vpack.c.bf16 %v3007, %v2999
      %v3720 = vpack.c.bf16 %v3008, %v3000
      %v3721 = vpack.c.bf16 %v3009, %v3001
      %v3722 = vpack.c.bf16 %v3010, %v3002
      %v3723 = vpack.c.bf16 %v3011, %v3003
      %v3724 = vpack.c.bf16 %v3012, %v3004
      %v3725 = vpack.c.bf16 %v3013, %v3005
      %v3726 = vpack.c.bf16 %v3014, %v3006
      %v3727 = vpack.c.bf16 %v3023, %v3015
      %v3728 = vpack.c.bf16 %v3024, %v3016
      %v3729 = vpack.c.bf16 %v3025, %v3017
      %v3730 = vpack.c.bf16 %v3026, %v3018
      %v3731 = vpack.c.bf16 %v3027, %v3019
      %v3732 = vpack.c.bf16 %v3028, %v3020
      %v3733 = vpack.c.bf16 %v3029, %v3021
      %v3734 = vpack.c.bf16 %v3030, %v3022
      %v3735 = vpack.c.bf16 %v3039, %v3031
      %v3736 = vpack.c.bf16 %v3040, %v3032
      %v3737 = vpack.c.bf16 %v3041, %v3033
      %v3738 = vpack.c.bf16 %v3042, %v3034
      %v3739 = vpack.c.bf16 %v3043, %v3035
      %v3740 = vpack.c.bf16 %v3044, %v3036
      %v3741 = vpack.c.bf16 %v3045, %v3037
      %v3742 = vpack.c.bf16 %v3046, %v3038
      %v3743 = vpack.c.bf16 %v3055, %v3047
      %v3744 = vpack.c.bf16 %v3056, %v3048
      %v3745 = vpack.c.bf16 %v3057, %v3049
      %v3746 = vpack.c.bf16 %v3058, %v3050
      %v3747 = vpack.c.bf16 %v3059, %v3051
      %v3748 = vpack.c.bf16 %v3060, %v3052
      %v3749 = vpack.c.bf16 %v3061, %v3053
      %v3750 = vpack.c.bf16 %v3062, %v3054
      %v3751 = vpack.c.bf16 %v3071, %v3063
      %v3752 = vpack.c.bf16 %v3072, %v3064
      %v3753 = vpack.c.bf16 %v3073, %v3065
      %v3754 = vpack.c.bf16 %v3074, %v3066
      %v3755 = vpack.c.bf16 %v3075, %v3067
      %v3756 = vpack.c.bf16 %v3076, %v3068
      %v3757 = vpack.c.bf16 %v3077, %v3069
      %v3758 = vpack.c.bf16 %v3078, %v3070
      %v3759 = vpack.c.bf16 %v3087, %v3079
      %v3760 = vpack.c.bf16 %v3088, %v3080
      %v3761 = vpack.c.bf16 %v3089, %v3081
      %v3762 = vpack.c.bf16 %v3090, %v3082
      %v3763 = vpack.c.bf16 %v3091, %v3083
      %v3764 = vpack.c.bf16 %v3092, %v3084
      %v3765 = vpack.c.bf16 %v3093, %v3085
      %v3766 = vpack.c.bf16 %v3094, %v3086
      %v3767 = vpack.c.bf16 %v3103, %v3095
      %v3768 = vpack.c.bf16 %v3104, %v3096
      %v3769 = vpack.c.bf16 %v3105, %v3097
      %v3770 = vpack.c.bf16 %v3106, %v3098
      %v3771 = vpack.c.bf16 %v3107, %v3099
      %v3772 = vpack.c.bf16 %v3108, %v3100
      %v3773 = vpack.c.bf16 %v3109, %v3101
      %v3774 = vpack.c.bf16 %v3110, %v3102
      %v3775 = vpack.c.bf16 %v3119, %v3111
      %v3776 = vpack.c.bf16 %v3120, %v3112
      %v3777 = vpack.c.bf16 %v3121, %v3113
      %v3778 = vpack.c.bf16 %v3122, %v3114
      %v3779 = vpack.c.bf16 %v3123, %v3115
      %v3780 = vpack.c.bf16 %v3124, %v3116
      %v3781 = vpack.c.bf16 %v3125, %v3117
      %v3782 = vpack.c.bf16 %v3126, %v3118
      %v3783 = vpack.c.bf16 %v3135, %v3127
      %v3784 = vpack.c.bf16 %v3136, %v3128
      %v3785 = vpack.c.bf16 %v3137, %v3129
      %v3786 = vpack.c.bf16 %v3138, %v3130
      %v3787 = vpack.c.bf16 %v3139, %v3131
      %v3788 = vpack.c.bf16 %v3140, %v3132
      %v3789 = vpack.c.bf16 %v3141, %v3133
      %v3790 = vpack.c.bf16 %v3142, %v3134
      %v3791 = vpack.c.bf16 %v3151, %v3143
      %v3792 = vpack.c.bf16 %v3152, %v3144
      %v3793 = vpack.c.bf16 %v3153, %v3145
      %v3794 = vpack.c.bf16 %v3154, %v3146
      %v3795 = vpack.c.bf16 %v3155, %v3147
      %v3796 = vpack.c.bf16 %v3156, %v3148
      %v3797 = vpack.c.bf16 %v3157, %v3149
      %v3798 = vpack.c.bf16 %v3158, %v3150
      %v3799 = vpack.c.bf16 %v3167, %v3159
      %v3800 = vpack.c.bf16 %v3168, %v3160
      %v3801 = vpack.c.bf16 %v3169, %v3161
      %v3802 = vpack.c.bf16 %v3170, %v3162
      %v3803 = vpack.c.bf16 %v3171, %v3163
      %v3804 = vpack.c.bf16 %v3172, %v3164
      %v3805 = vpack.c.bf16 %v3173, %v3165
      %v3806 = vpack.c.bf16 %v3174, %v3166
      %v3807 = vpack.c.bf16 %v3183, %v3175
      %v3808 = vpack.c.bf16 %v3184, %v3176
      %v3809 = vpack.c.bf16 %v3185, %v3177
      %v3810 = vpack.c.bf16 %v3186, %v3178
      %v3811 = vpack.c.bf16 %v3187, %v3179
      %v3812 = vpack.c.bf16 %v3188, %v3180
      %v3813 = vpack.c.bf16 %v3189, %v3181
      %v3814 = vpack.c.bf16 %v3190, %v3182
      %v3815 = vpack.c.bf16 %v3199, %v3191
      %v3816 = vpack.c.bf16 %v3200, %v3192
      %v3817 = vpack.c.bf16 %v3201, %v3193
      %v3818 = vpack.c.bf16 %v3202, %v3194
      %v3819 = vpack.c.bf16 %v3203, %v3195
      %v3820 = vpack.c.bf16 %v3204, %v3196
      %v3821 = vpack.c.bf16 %v3205, %v3197
      %v3822 = vpack.c.bf16 %v3206, %v3198
      %v3823 = vpack.c.bf16 %v3215, %v3207
      %v3824 = vpack.c.bf16 %v3216, %v3208
      %v3825 = vpack.c.bf16 %v3217, %v3209
      %v3826 = vpack.c.bf16 %v3218, %v3210
      %v3827 = vpack.c.bf16 %v3219, %v3211
      %v3828 = vpack.c.bf16 %v3220, %v3212
      %v3829 = vpack.c.bf16 %v3221, %v3213
      %v3830 = vpack.c.bf16 %v3222, %v3214
      %v3831 = vpack.c.bf16 %v3231, %v3223
      %v3832 = vpack.c.bf16 %v3232, %v3224
      %v3833 = vpack.c.bf16 %v3233, %v3225
      %v3834 = vpack.c.bf16 %v3234, %v3226
      %v3835 = vpack.c.bf16 %v3235, %v3227
      %v3836 = vpack.c.bf16 %v3236, %v3228
      %v3837 = vpack.c.bf16 %v3237, %v3229
      %v3838 = vpack.c.bf16 %v3238, %v3230
      %v3839 = vpack.c.bf16 %v3247, %v3239
      %v3840 = vpack.c.bf16 %v3248, %v3240
      %v3841 = vpack.c.bf16 %v3249, %v3241
      %v3842 = vpack.c.bf16 %v3250, %v3242
      %v3843 = vpack.c.bf16 %v3251, %v3243
      %v3844 = vpack.c.bf16 %v3252, %v3244
      %v3845 = vpack.c.bf16 %v3253, %v3245
      %v3846 = vpack.c.bf16 %v3254, %v3246
      %v3847 = vpack.c.bf16 %v3263, %v3255
      %v3848 = vpack.c.bf16 %v3264, %v3256
      %v3849 = vpack.c.bf16 %v3265, %v3257
      %v3850 = vpack.c.bf16 %v3266, %v3258
      %v3851 = vpack.c.bf16 %v3267, %v3259
      %v3852 = vpack.c.bf16 %v3268, %v3260
      %v3853 = vpack.c.bf16 %v3269, %v3261
      %v3854 = vpack.c.bf16 %v3270, %v3262
      %v3855 = vpack.c.bf16 %v3279, %v3271
      %v3856 = vpack.c.bf16 %v3280, %v3272
      %v3857 = vpack.c.bf16 %v3281, %v3273
      %v3858 = vpack.c.bf16 %v3282, %v3274
      %v3859 = vpack.c.bf16 %v3283, %v3275
      %v3860 = vpack.c.bf16 %v3284, %v3276
      %v3861 = vpack.c.bf16 %v3285, %v3277
      %v3862 = vpack.c.bf16 %v3286, %v3278
      %v3863 = vpack.c.bf16 %v3295, %v3287
      %v3864 = vpack.c.bf16 %v3296, %v3288
      %v3865 = vpack.c.bf16 %v3297, %v3289
      %v3866 = vpack.c.bf16 %v3298, %v3290
      %v3867 = vpack.c.bf16 %v3299, %v3291
      %v3868 = vpack.c.bf16 %v3300, %v3292
      %v3869 = vpack.c.bf16 %v3301, %v3293
      %v3870 = vpack.c.bf16 %v3302, %v3294
      %v3871 = vpack.c.bf16 %v3311, %v3303
      %v3872 = vpack.c.bf16 %v3312, %v3304
      %v3873 = vpack.c.bf16 %v3313, %v3305
      %v3874 = vpack.c.bf16 %v3314, %v3306
      %v3875 = vpack.c.bf16 %v3315, %v3307
      %v3876 = vpack.c.bf16 %v3316, %v3308
      %v3877 = vpack.c.bf16 %v3317, %v3309
      %v3878 = vpack.c.bf16 %v3318, %v3310
      %v3879 = vpack.c.bf16 %v3327, %v3319
      %v3880 = vpack.c.bf16 %v3328, %v3320
      %v3881 = vpack.c.bf16 %v3329, %v3321
      %v3882 = vpack.c.bf16 %v3330, %v3322
      %v3883 = vpack.c.bf16 %v3331, %v3323
      %v3884 = vpack.c.bf16 %v3332, %v3324
      %v3885 = vpack.c.bf16 %v3333, %v3325
      %v3886 = vpack.c.bf16 %v3334, %v3326
      %v3887 = vpack.c.bf16 %v3343, %v3335
      %v3888 = vpack.c.bf16 %v3344, %v3336
      %v3889 = vpack.c.bf16 %v3345, %v3337
      %v3890 = vpack.c.bf16 %v3346, %v3338
      %v3891 = vpack.c.bf16 %v3347, %v3339
      %v3892 = vpack.c.bf16 %v3348, %v3340
      %v3893 = vpack.c.bf16 %v3349, %v3341
      %v3894 = vpack.c.bf16 %v3350, %v3342
      %v3895 = vpack.c.bf16 %v3359, %v3351
      %v3896 = vpack.c.bf16 %v3360, %v3352
      %v3897 = vpack.c.bf16 %v3361, %v3353
      %v3898 = vpack.c.bf16 %v3362, %v3354
      %v3899 = vpack.c.bf16 %v3363, %v3355
      %v3900 = vpack.c.bf16 %v3364, %v3356
      %v3901 = vpack.c.bf16 %v3365, %v3357
      %v3902 = vpack.c.bf16 %v3366, %v3358
      %v3903 = vpack.c.bf16 %v3375, %v3367
      %v3904 = vpack.c.bf16 %v3376, %v3368
      %v3905 = vpack.c.bf16 %v3377, %v3369
      %v3906 = vpack.c.bf16 %v3378, %v3370
      %v3907 = vpack.c.bf16 %v3379, %v3371
      %v3908 = vpack.c.bf16 %v3380, %v3372
      %v3909 = vpack.c.bf16 %v3381, %v3373
      %v3910 = vpack.c.bf16 %v3382, %v3374
      %v3911 = vpack.c.bf16 %v3391, %v3383
      %v3912 = vpack.c.bf16 %v3392, %v3384
      %v3913 = vpack.c.bf16 %v3393, %v3385
      %v3914 = vpack.c.bf16 %v3394, %v3386
      %v3915 = vpack.c.bf16 %v3395, %v3387
      %v3916 = vpack.c.bf16 %v3396, %v3388
      %v3917 = vpack.c.bf16 %v3397, %v3389
      %v3918 = vpack.c.bf16 %v3398, %v3390
      %v3919 = vpack.c.bf16 %v3407, %v3399
      %v3920 = vpack.c.bf16 %v3408, %v3400
      %v3921 = vpack.c.bf16 %v3409, %v3401
      %v3922 = vpack.c.bf16 %v3410, %v3402
      %v3923 = vpack.c.bf16 %v3411, %v3403
      %v3924 = vpack.c.bf16 %v3412, %v3404
      %v3925 = vpack.c.bf16 %v3413, %v3405
      %v3926 = vpack.c.bf16 %v3414, %v3406
      %3927 = vst [vmem:[#allocation2] sm:$0xff] %v3415
      %3928 = vst [vmem:[#allocation2 + $0x8] sm:$0xff] %v3416
      %3929 = vst [vmem:[#allocation2 + $0x10] sm:$0xff] %v3417
      %3930 = vst [vmem:[#allocation2 + $0x18] sm:$0xff] %v3418
      %3931 = vst [vmem:[#allocation2 + $0x20] sm:$0xff] %v3419
      %3932 = vst [vmem:[#allocation2 + $0x28] sm:$0xff] %v3420
      %3933 = vst [vmem:[#allocation2 + $0x30] sm:$0xff] %v3421
      %3934 = vst [vmem:[#allocation2 + $0x38] sm:$0xff] %v3422
      %3935 = vst [vmem:[#allocation2 + $0x40] sm:$0xff] %v3423
      %3936 = vst [vmem:[#allocation2 + $0x48] sm:$0xff] %v3424
      %3937 = vst [vmem:[#allocation2 + $0x50] sm:$0xff] %v3425
      %3938 = vst [vmem:[#allocation2 + $0x58] sm:$0xff] %v3426
      %3939 = vst [vmem:[#allocation2 + $0x60] sm:$0xff] %v3427
      %3940 = vst [vmem:[#allocation2 + $0x68] sm:$0xff] %v3428
      %3941 = vst [vmem:[#allocation2 + $0x70] sm:$0xff] %v3429
      %3942 = vst [vmem:[#allocation2 + $0x78] sm:$0xff] %v3430
      %3943 = vst [vmem:[#allocation2 + $0x80] sm:$0xff] %v3431
      %3944 = vst [vmem:[#allocation2 + $0x88] sm:$0xff] %v3432
      %3945 = vst [vmem:[#allocation2 + $0x90] sm:$0xff] %v3433
      %3946 = vst [vmem:[#allocation2 + $0x98] sm:$0xff] %v3434
      %3947 = vst [vmem:[#allocation2 + $0xa0] sm:$0xff] %v3435
      %3948 = vst [vmem:[#allocation2 + $0xa8] sm:$0xff] %v3436
      %3949 = vst [vmem:[#allocation2 + $0xb0] sm:$0xff] %v3437
      %3950 = vst [vmem:[#allocation2 + $0xb8] sm:$0xff] %v3438
      %3951 = vst [vmem:[#allocation2 + $0xc0] sm:$0xff] %v3439
      %3952 = vst [vmem:[#allocation2 + $0xc8] sm:$0xff] %v3440
      %3953 = vst [vmem:[#allocation2 + $0xd0] sm:$0xff] %v3441
      %3954 = vst [vmem:[#allocation2 + $0xd8] sm:$0xff] %v3442
      %3955 = vst [vmem:[#allocation2 + $0xe0] sm:$0xff] %v3443
      %3956 = vst [vmem:[#allocation2 + $0xe8] sm:$0xff] %v3444
      %3957 = vst [vmem:[#allocation2 + $0xf0] sm:$0xff] %v3445
      %3958 = vst [vmem:[#allocation2 + $0xf8] sm:$0xff] %v3446
      %3959 = vst [vmem:[#allocation2 + $0x100] sm:$0xff] %v3447
      %3960 = vst [vmem:[#allocation2 + $0x108] sm:$0xff] %v3448
      %3961 = vst [vmem:[#allocation2 + $0x110] sm:$0xff] %v3449
      %3962 = vst [vmem:[#allocation2 + $0x118] sm:$0xff] %v3450
      %3963 = vst [vmem:[#allocation2 + $0x120] sm:$0xff] %v3451
      %3964 = vst [vmem:[#allocation2 + $0x128] sm:$0xff] %v3452
      %3965 = vst [vmem:[#allocation2 + $0x130] sm:$0xff] %v3453
      %3966 = vst [vmem:[#allocation2 + $0x138] sm:$0xff] %v3454
      %3967 = vst [vmem:[#allocation2 + $0x140] sm:$0xff] %v3455
      %3968 = vst [vmem:[#allocation2 + $0x148] sm:$0xff] %v3456
      %3969 = vst [vmem:[#allocation2 + $0x150] sm:$0xff] %v3457
      %3970 = vst [vmem:[#allocation2 + $0x158] sm:$0xff] %v3458
      %3971 = vst [vmem:[#allocation2 + $0x160] sm:$0xff] %v3459
      %3972 = vst [vmem:[#allocation2 + $0x168] sm:$0xff] %v3460
      %3973 = vst [vmem:[#allocation2 + $0x170] sm:$0xff] %v3461
      %3974 = vst [vmem:[#allocation2 + $0x178] sm:$0xff] %v3462
      %3975 = vst [vmem:[#allocation2 + $0x180] sm:$0xff] %v3463
      %3976 = vst [vmem:[#allocation2 + $0x188] sm:$0xff] %v3464
      %3977 = vst [vmem:[#allocation2 + $0x190] sm:$0xff] %v3465
      %3978 = vst [vmem:[#allocation2 + $0x198] sm:$0xff] %v3466
      %3979 = vst [vmem:[#allocation2 + $0x1a0] sm:$0xff] %v3467
      %3980 = vst [vmem:[#allocation2 + $0x1a8] sm:$0xff] %v3468
      %3981 = vst [vmem:[#allocation2 + $0x1b0] sm:$0xff] %v3469
      %3982 = vst [vmem:[#allocation2 + $0x1b8] sm:$0xff] %v3470
      %3983 = vst [vmem:[#allocation2 + $0x1c0] sm:$0xff] %v3471
      %3984 = vst [vmem:[#allocation2 + $0x1c8] sm:$0xff] %v3472
      %3985 = vst [vmem:[#allocation2 + $0x1d0] sm:$0xff] %v3473
      %3986 = vst [vmem:[#allocation2 + $0x1d8] sm:$0xff] %v3474
      %3987 = vst [vmem:[#allocation2 + $0x1e0] sm:$0xff] %v3475
      %3988 = vst [vmem:[#allocation2 + $0x1e8] sm:$0xff] %v3476
      %3989 = vst [vmem:[#allocation2 + $0x1f0] sm:$0xff] %v3477
      %3990 = vst [vmem:[#allocation2 + $0x1f8] sm:$0xff] %v3478
      %3991 = vst [vmem:[#allocation2 + $0x200] sm:$0xff] %v3479
      %3992 = vst [vmem:[#allocation2 + $0x208] sm:$0xff] %v3480
      %3993 = vst [vmem:[#allocation2 + $0x210] sm:$0xff] %v3481
      %3994 = vst [vmem:[#allocation2 + $0x218] sm:$0xff] %v3482
      %3995 = vst [vmem:[#allocation2 + $0x220] sm:$0xff] %v3483
      %3996 = vst [vmem:[#allocation2 + $0x228] sm:$0xff] %v3484
      %3997 = vst [vmem:[#allocation2 + $0x230] sm:$0xff] %v3485
      %3998 = vst [vmem:[#allocation2 + $0x238] sm:$0xff] %v3486
      %3999 = vst [vmem:[#allocation2 + $0x240] sm:$0xff] %v3487
      %4000 = vst [vmem:[#allocation2 + $0x248] sm:$0xff] %v3488
      %4001 = vst [vmem:[#allocation2 + $0x250] sm:$0xff] %v3489
      %4002 = vst [vmem:[#allocation2 + $0x258] sm:$0xff] %v3490
      %4003 = vst [vmem:[#allocation2 + $0x260] sm:$0xff] %v3491
      %4004 = vst [vmem:[#allocation2 + $0x268] sm:$0xff] %v3492
      %4005 = vst [vmem:[#allocation2 + $0x270] sm:$0xff] %v3493
      %4006 = vst [vmem:[#allocation2 + $0x278] sm:$0xff] %v3494
      %4007 = vst [vmem:[#allocation2 + $0x280] sm:$0xff] %v3495
      %4008 = vst [vmem:[#allocation2 + $0x288] sm:$0xff] %v3496
      %4009 = vst [vmem:[#allocation2 + $0x290] sm:$0xff] %v3497
      %4010 = vst [vmem:[#allocation2 + $0x298] sm:$0xff] %v3498
      %4011 = vst [vmem:[#allocation2 + $0x2a0] sm:$0xff] %v3499
      %4012 = vst [vmem:[#allocation2 + $0x2a8] sm:$0xff] %v3500
      %4013 = vst [vmem:[#allocation2 + $0x2b0] sm:$0xff] %v3501
      %4014 = vst [vmem:[#allocation2 + $0x2b8] sm:$0xff] %v3502
      %4015 = vst [vmem:[#allocation2 + $0x2c0] sm:$0xff] %v3503
      %4016 = vst [vmem:[#allocation2 + $0x2c8] sm:$0xff] %v3504
      %4017 = vst [vmem:[#allocation2 + $0x2d0] sm:$0xff] %v3505
      %4018 = vst [vmem:[#allocation2 + $0x2d8] sm:$0xff] %v3506
      %4019 = vst [vmem:[#allocation2 + $0x2e0] sm:$0xff] %v3507
      %4020 = vst [vmem:[#allocation2 + $0x2e8] sm:$0xff] %v3508
      %4021 = vst [vmem:[#allocation2 + $0x2f0] sm:$0xff] %v3509
      %4022 = vst [vmem:[#allocation2 + $0x2f8] sm:$0xff] %v3510
      %4023 = vst [vmem:[#allocation2 + $0x300] sm:$0xff] %v3511
      %4024 = vst [vmem:[#allocation2 + $0x308] sm:$0xff] %v3512
      %4025 = vst [vmem:[#allocation2 + $0x310] sm:$0xff] %v3513
      %4026 = vst [vmem:[#allocation2 + $0x318] sm:$0xff] %v3514
      %4027 = vst [vmem:[#allocation2 + $0x320] sm:$0xff] %v3515
      %4028 = vst [vmem:[#allocation2 + $0x328] sm:$0xff] %v3516
      %4029 = vst [vmem:[#allocation2 + $0x330] sm:$0xff] %v3517
      %4030 = vst [vmem:[#allocation2 + $0x338] sm:$0xff] %v3518
      %4031 = vst [vmem:[#allocation2 + $0x340] sm:$0xff] %v3519
      %4032 = vst [vmem:[#allocation2 + $0x348] sm:$0xff] %v3520
      %4033 = vst [vmem:[#allocation2 + $0x350] sm:$0xff] %v3521
      %4034 = vst [vmem:[#allocation2 + $0x358] sm:$0xff] %v3522
      %4035 = vst [vmem:[#allocation2 + $0x360] sm:$0xff] %v3523
      %4036 = vst [vmem:[#allocation2 + $0x368] sm:$0xff] %v3524
      %4037 = vst [vmem:[#allocation2 + $0x370] sm:$0xff] %v3525
      %4038 = vst [vmem:[#allocation2 + $0x378] sm:$0xff] %v3526
      %4039 = vst [vmem:[#allocation2 + $0x380] sm:$0xff] %v3527
      %4040 = vst [vmem:[#allocation2 + $0x388] sm:$0xff] %v3528
      %4041 = vst [vmem:[#allocation2 + $0x390] sm:$0xff] %v3529
      %4042 = vst [vmem:[#allocation2 + $0x398] sm:$0xff] %v3530
      %4043 = vst [vmem:[#allocation2 + $0x3a0] sm:$0xff] %v3531
      %4044 = vst [vmem:[#allocation2 + $0x3a8] sm:$0xff] %v3532
      %4045 = vst [vmem:[#allocation2 + $0x3b0] sm:$0xff] %v3533
      %4046 = vst [vmem:[#allocation2 + $0x3b8] sm:$0xff] %v3534
      %4047 = vst [vmem:[#allocation2 + $0x3c0] sm:$0xff] %v3535
      %4048 = vst [vmem:[#allocation2 + $0x3c8] sm:$0xff] %v3536
      %4049 = vst [vmem:[#allocation2 + $0x3d0] sm:$0xff] %v3537
      %4050 = vst [vmem:[#allocation2 + $0x3d8] sm:$0xff] %v3538
      %4051 = vst [vmem:[#allocation2 + $0x3e0] sm:$0xff] %v3539
      %4052 = vst [vmem:[#allocation2 + $0x3e8] sm:$0xff] %v3540
      %4053 = vst [vmem:[#allocation2 + $0x3f0] sm:$0xff] %v3541
      %4054 = vst [vmem:[#allocation2 + $0x3f8] sm:$0xff] %v3542
      %4055 = vst [vmem:[#allocation2 + $0x400] sm:$0xff] %v3543
      %4056 = vst [vmem:[#allocation2 + $0x408] sm:$0xff] %v3544
      %4057 = vst [vmem:[#allocation2 + $0x410] sm:$0xff] %v3545
      %4058 = vst [vmem:[#allocation2 + $0x418] sm:$0xff] %v3546
      %4059 = vst [vmem:[#allocation2 + $0x420] sm:$0xff] %v3547
      %4060 = vst [vmem:[#allocation2 + $0x428] sm:$0xff] %v3548
      %4061 = vst [vmem:[#allocation2 + $0x430] sm:$0xff] %v3549
      %4062 = vst [vmem:[#allocation2 + $0x438] sm:$0xff] %v3550
      %4063 = vst [vmem:[#allocation2 + $0x440] sm:$0xff] %v3551
      %4064 = vst [vmem:[#allocation2 + $0x448] sm:$0xff] %v3552
      %4065 = vst [vmem:[#allocation2 + $0x450] sm:$0xff] %v3553
      %4066 = vst [vmem:[#allocation2 + $0x458] sm:$0xff] %v3554
      %4067 = vst [vmem:[#allocation2 + $0x460] sm:$0xff] %v3555
      %4068 = vst [vmem:[#allocation2 + $0x468] sm:$0xff] %v3556
      %4069 = vst [vmem:[#allocation2 + $0x470] sm:$0xff] %v3557
      %4070 = vst [vmem:[#allocation2 + $0x478] sm:$0xff] %v3558
      %4071 = vst [vmem:[#allocation2 + $0x480] sm:$0xff] %v3559
      %4072 = vst [vmem:[#allocation2 + $0x488] sm:$0xff] %v3560
      %4073 = vst [vmem:[#allocation2 + $0x490] sm:$0xff] %v3561
      %4074 = vst [vmem:[#allocation2 + $0x498] sm:$0xff] %v3562
      %4075 = vst [vmem:[#allocation2 + $0x4a0] sm:$0xff] %v3563
      %4076 = vst [vmem:[#allocation2 + $0x4a8] sm:$0xff] %v3564
      %4077 = vst [vmem:[#allocation2 + $0x4b0] sm:$0xff] %v3565
      %4078 = vst [vmem:[#allocation2 + $0x4b8] sm:$0xff] %v3566
      %4079 = vst [vmem:[#allocation2 + $0x4c0] sm:$0xff] %v3567
      %4080 = vst [vmem:[#allocation2 + $0x4c8] sm:$0xff] %v3568
      %4081 = vst [vmem:[#allocation2 + $0x4d0] sm:$0xff] %v3569
      %4082 = vst [vmem:[#allocation2 + $0x4d8] sm:$0xff] %v3570
      %4083 = vst [vmem:[#allocation2 + $0x4e0] sm:$0xff] %v3571
      %4084 = vst [vmem:[#allocation2 + $0x4e8] sm:$0xff] %v3572
      %4085 = vst [vmem:[#allocation2 + $0x4f0] sm:$0xff] %v3573
      %4086 = vst [vmem:[#allocation2 + $0x4f8] sm:$0xff] %v3574
      %4087 = vst [vmem:[#allocation2 + $0x500] sm:$0xff] %v3575
      %4088 = vst [vmem:[#allocation2 + $0x508] sm:$0xff] %v3576
      %4089 = vst [vmem:[#allocation2 + $0x510] sm:$0xff] %v3577
      %4090 = vst [vmem:[#allocation2 + $0x518] sm:$0xff] %v3578
      %4091 = vst [vmem:[#allocation2 + $0x520] sm:$0xff] %v3579
      %4092 = vst [vmem:[#allocation2 + $0x528] sm:$0xff] %v3580
      %4093 = vst [vmem:[#allocation2 + $0x530] sm:$0xff] %v3581
      %4094 = vst [vmem:[#allocation2 + $0x538] sm:$0xff] %v3582
      %4095 = vst [vmem:[#allocation2 + $0x540] sm:$0xff] %v3583
      %4096 = vst [vmem:[#allocation2 + $0x548] sm:$0xff] %v3584
      %4097 = vst [vmem:[#allocation2 + $0x550] sm:$0xff] %v3585
      %4098 = vst [vmem:[#allocation2 + $0x558] sm:$0xff] %v3586
      %4099 = vst [vmem:[#allocation2 + $0x560] sm:$0xff] %v3587
      %4100 = vst [vmem:[#allocation2 + $0x568] sm:$0xff] %v3588
      %4101 = vst [vmem:[#allocation2 + $0x570] sm:$0xff] %v3589
      %4102 = vst [vmem:[#allocation2 + $0x578] sm:$0xff] %v3590
      %4103 = vst [vmem:[#allocation2 + $0x580] sm:$0xff] %v3591
      %4104 = vst [vmem:[#allocation2 + $0x588] sm:$0xff] %v3592
      %4105 = vst [vmem:[#allocation2 + $0x590] sm:$0xff] %v3593
      %4106 = vst [vmem:[#allocation2 + $0x598] sm:$0xff] %v3594
      %4107 = vst [vmem:[#allocation2 + $0x5a0] sm:$0xff] %v3595
      %4108 = vst [vmem:[#allocation2 + $0x5a8] sm:$0xff] %v3596
      %4109 = vst [vmem:[#allocation2 + $0x5b0] sm:$0xff] %v3597
      %4110 = vst [vmem:[#allocation2 + $0x5b8] sm:$0xff] %v3598
      %4111 = vst [vmem:[#allocation2 + $0x5c0] sm:$0xff] %v3599
      %4112 = vst [vmem:[#allocation2 + $0x5c8] sm:$0xff] %v3600
      %4113 = vst [vmem:[#allocation2 + $0x5d0] sm:$0xff] %v3601
      %4114 = vst [vmem:[#allocation2 + $0x5d8] sm:$0xff] %v3602
      %4115 = vst [vmem:[#allocation2 + $0x5e0] sm:$0xff] %v3603
      %4116 = vst [vmem:[#allocation2 + $0x5e8] sm:$0xff] %v3604
      %4117 = vst [vmem:[#allocation2 + $0x5f0] sm:$0xff] %v3605
      %4118 = vst [vmem:[#allocation2 + $0x5f8] sm:$0xff] %v3606
      %4119 = vst [vmem:[#allocation2 + $0x600] sm:$0xff] %v3607
      %4120 = vst [vmem:[#allocation2 + $0x608] sm:$0xff] %v3608
      %4121 = vst [vmem:[#allocation2 + $0x610] sm:$0xff] %v3609
      %4122 = vst [vmem:[#allocation2 + $0x618] sm:$0xff] %v3610
      %4123 = vst [vmem:[#allocation2 + $0x620] sm:$0xff] %v3611
      %4124 = vst [vmem:[#allocation2 + $0x628] sm:$0xff] %v3612
      %4125 = vst [vmem:[#allocation2 + $0x630] sm:$0xff] %v3613
      %4126 = vst [vmem:[#allocation2 + $0x638] sm:$0xff] %v3614
      %4127 = vst [vmem:[#allocation2 + $0x640] sm:$0xff] %v3615
      %4128 = vst [vmem:[#allocation2 + $0x648] sm:$0xff] %v3616
      %4129 = vst [vmem:[#allocation2 + $0x650] sm:$0xff] %v3617
      %4130 = vst [vmem:[#allocation2 + $0x658] sm:$0xff] %v3618
      %4131 = vst [vmem:[#allocation2 + $0x660] sm:$0xff] %v3619
      %4132 = vst [vmem:[#allocation2 + $0x668] sm:$0xff] %v3620
      %4133 = vst [vmem:[#allocation2 + $0x670] sm:$0xff] %v3621
      %4134 = vst [vmem:[#allocation2 + $0x678] sm:$0xff] %v3622
      %4135 = vst [vmem:[#allocation2 + $0x680] sm:$0xff] %v3623
      %4136 = vst [vmem:[#allocation2 + $0x688] sm:$0xff] %v3624
      %4137 = vst [vmem:[#allocation2 + $0x690] sm:$0xff] %v3625
      %4138 = vst [vmem:[#allocation2 + $0x698] sm:$0xff] %v3626
      %4139 = vst [vmem:[#allocation2 + $0x6a0] sm:$0xff] %v3627
      %4140 = vst [vmem:[#allocation2 + $0x6a8] sm:$0xff] %v3628
      %4141 = vst [vmem:[#allocation2 + $0x6b0] sm:$0xff] %v3629
      %4142 = vst [vmem:[#allocation2 + $0x6b8] sm:$0xff] %v3630
      %4143 = vst [vmem:[#allocation2 + $0x6c0] sm:$0xff] %v3631
      %4144 = vst [vmem:[#allocation2 + $0x6c8] sm:$0xff] %v3632
      %4145 = vst [vmem:[#allocation2 + $0x6d0] sm:$0xff] %v3633
      %4146 = vst [vmem:[#allocation2 + $0x6d8] sm:$0xff] %v3634
      %4147 = vst [vmem:[#allocation2 + $0x6e0] sm:$0xff] %v3635
      %4148 = vst [vmem:[#allocation2 + $0x6e8] sm:$0xff] %v3636
      %4149 = vst [vmem:[#allocation2 + $0x6f0] sm:$0xff] %v3637
      %4150 = vst [vmem:[#allocation2 + $0x6f8] sm:$0xff] %v3638
      %4151 = vst [vmem:[#allocation2 + $0x700] sm:$0xff] %v3639
      %4152 = vst [vmem:[#allocation2 + $0x708] sm:$0xff] %v3640
      %4153 = vst [vmem:[#allocation2 + $0x710] sm:$0xff] %v3641
      %4154 = vst [vmem:[#allocation2 + $0x718] sm:$0xff] %v3642
      %4155 = vst [vmem:[#allocation2 + $0x720] sm:$0xff] %v3643
      %4156 = vst [vmem:[#allocation2 + $0x728] sm:$0xff] %v3644
      %4157 = vst [vmem:[#allocation2 + $0x730] sm:$0xff] %v3645
      %4158 = vst [vmem:[#allocation2 + $0x738] sm:$0xff] %v3646
      %4159 = vst [vmem:[#allocation2 + $0x740] sm:$0xff] %v3647
      %4160 = vst [vmem:[#allocation2 + $0x748] sm:$0xff] %v3648
      %4161 = vst [vmem:[#allocation2 + $0x750] sm:$0xff] %v3649
      %4162 = vst [vmem:[#allocation2 + $0x758] sm:$0xff] %v3650
      %4163 = vst [vmem:[#allocation2 + $0x760] sm:$0xff] %v3651
      %4164 = vst [vmem:[#allocation2 + $0x768] sm:$0xff] %v3652
      %4165 = vst [vmem:[#allocation2 + $0x770] sm:$0xff] %v3653
      %4166 = vst [vmem:[#allocation2 + $0x778] sm:$0xff] %v3654
      %4167 = vst [vmem:[#allocation2 + $0x780] sm:$0xff] %v3655
      %4168 = vst [vmem:[#allocation2 + $0x788] sm:$0xff] %v3656
      %4169 = vst [vmem:[#allocation2 + $0x790] sm:$0xff] %v3657
      %4170 = vst [vmem:[#allocation2 + $0x798] sm:$0xff] %v3658
      %4171 = vst [vmem:[#allocation2 + $0x7a0] sm:$0xff] %v3659
      %4172 = vst [vmem:[#allocation2 + $0x7a8] sm:$0xff] %v3660
      %4173 = vst [vmem:[#allocation2 + $0x7b0] sm:$0xff] %v3661
      %4174 = vst [vmem:[#allocation2 + $0x7b8] sm:$0xff] %v3662
      %4175 = vst [vmem:[#allocation2 + $0x7c0] sm:$0xff] %v3663
      %4176 = vst [vmem:[#allocation2 + $0x7c8] sm:$0xff] %v3664
      %4177 = vst [vmem:[#allocation2 + $0x7d0] sm:$0xff] %v3665
      %4178 = vst [vmem:[#allocation2 + $0x7d8] sm:$0xff] %v3666
      %4179 = vst [vmem:[#allocation2 + $0x7e0] sm:$0xff] %v3667
      %4180 = vst [vmem:[#allocation2 + $0x7e8] sm:$0xff] %v3668
      %4181 = vst [vmem:[#allocation2 + $0x7f0] sm:$0xff] %v3669
      %4182 = vst [vmem:[#allocation2 + $0x7f8] sm:$0xff] %v3670
      %4183 = vst [vmem:[#allocation2 + $0x800] sm:$0xff] %v3671
      %4184 = vst [vmem:[#allocation2 + $0x808] sm:$0xff] %v3672
      %4185 = vst [vmem:[#allocation2 + $0x810] sm:$0xff] %v3673
      %4186 = vst [vmem:[#allocation2 + $0x818] sm:$0xff] %v3674
      %4187 = vst [vmem:[#allocation2 + $0x820] sm:$0xff] %v3675
      %4188 = vst [vmem:[#allocation2 + $0x828] sm:$0xff] %v3676
      %4189 = vst [vmem:[#allocation2 + $0x830] sm:$0xff] %v3677
      %4190 = vst [vmem:[#allocation2 + $0x838] sm:$0xff] %v3678
      %4191 = vst [vmem:[#allocation2 + $0x840] sm:$0xff] %v3679
      %4192 = vst [vmem:[#allocation2 + $0x848] sm:$0xff] %v3680
      %4193 = vst [vmem:[#allocation2 + $0x850] sm:$0xff] %v3681
      %4194 = vst [vmem:[#allocation2 + $0x858] sm:$0xff] %v3682
      %4195 = vst [vmem:[#allocation2 + $0x860] sm:$0xff] %v3683
      %4196 = vst [vmem:[#allocation2 + $0x868] sm:$0xff] %v3684
      %4197 = vst [vmem:[#allocation2 + $0x870] sm:$0xff] %v3685
      %4198 = vst [vmem:[#allocation2 + $0x878] sm:$0xff] %v3686
      %4199 = vst [vmem:[#allocation2 + $0x880] sm:$0xff] %v3687
      %4200 = vst [vmem:[#allocation2 + $0x888] sm:$0xff] %v3688
      %4201 = vst [vmem:[#allocation2 + $0x890] sm:$0xff] %v3689
      %4202 = vst [vmem:[#allocation2 + $0x898] sm:$0xff] %v3690
      %4203 = vst [vmem:[#allocation2 + $0x8a0] sm:$0xff] %v3691
      %4204 = vst [vmem:[#allocation2 + $0x8a8] sm:$0xff] %v3692
      %4205 = vst [vmem:[#allocation2 + $0x8b0] sm:$0xff] %v3693
      %4206 = vst [vmem:[#allocation2 + $0x8b8] sm:$0xff] %v3694
      %4207 = vst [vmem:[#allocation2 + $0x8c0] sm:$0xff] %v3695
      %4208 = vst [vmem:[#allocation2 + $0x8c8] sm:$0xff] %v3696
      %4209 = vst [vmem:[#allocation2 + $0x8d0] sm:$0xff] %v3697
      %4210 = vst [vmem:[#allocation2 + $0x8d8] sm:$0xff] %v3698
      %4211 = vst [vmem:[#allocation2 + $0x8e0] sm:$0xff] %v3699
      %4212 = vst [vmem:[#allocation2 + $0x8e8] sm:$0xff] %v3700
      %4213 = vst [vmem:[#allocation2 + $0x8f0] sm:$0xff] %v3701
      %4214 = vst [vmem:[#allocation2 + $0x8f8] sm:$0xff] %v3702
      %4215 = vst [vmem:[#allocation2 + $0x900] sm:$0xff] %v3703
      %4216 = vst [vmem:[#allocation2 + $0x908] sm:$0xff] %v3704
      %4217 = vst [vmem:[#allocation2 + $0x910] sm:$0xff] %v3705
      %4218 = vst [vmem:[#allocation2 + $0x918] sm:$0xff] %v3706
      %4219 = vst [vmem:[#allocation2 + $0x920] sm:$0xff] %v3707
      %4220 = vst [vmem:[#allocation2 + $0x928] sm:$0xff] %v3708
      %4221 = vst [vmem:[#allocation2 + $0x930] sm:$0xff] %v3709
      %4222 = vst [vmem:[#allocation2 + $0x938] sm:$0xff] %v3710
      %4223 = vst [vmem:[#allocation2 + $0x940] sm:$0xff] %v3711
      %4224 = vst [vmem:[#allocation2 + $0x948] sm:$0xff] %v3712
      %4225 = vst [vmem:[#allocation2 + $0x950] sm:$0xff] %v3713
      %4226 = vst [vmem:[#allocation2 + $0x958] sm:$0xff] %v3714
      %4227 = vst [vmem:[#allocation2 + $0x960] sm:$0xff] %v3715
      %4228 = vst [vmem:[#allocation2 + $0x968] sm:$0xff] %v3716
      %4229 = vst [vmem:[#allocation2 + $0x970] sm:$0xff] %v3717
      %4230 = vst [vmem:[#allocation2 + $0x978] sm:$0xff] %v3718
      %4231 = vst [vmem:[#allocation2 + $0x980] sm:$0xff] %v3719
      %4232 = vst [vmem:[#allocation2 + $0x988] sm:$0xff] %v3720
      %4233 = vst [vmem:[#allocation2 + $0x990] sm:$0xff] %v3721
      %4234 = vst [vmem:[#allocation2 + $0x998] sm:$0xff] %v3722
      %4235 = vst [vmem:[#allocation2 + $0x9a0] sm:$0xff] %v3723
      %4236 = vst [vmem:[#allocation2 + $0x9a8] sm:$0xff] %v3724
      %4237 = vst [vmem:[#allocation2 + $0x9b0] sm:$0xff] %v3725
      %4238 = vst [vmem:[#allocation2 + $0x9b8] sm:$0xff] %v3726
      %4239 = vst [vmem:[#allocation2 + $0x9c0] sm:$0xff] %v3727
      %4240 = vst [vmem:[#allocation2 + $0x9c8] sm:$0xff] %v3728
      %4241 = vst [vmem:[#allocation2 + $0x9d0] sm:$0xff] %v3729
      %4242 = vst [vmem:[#allocation2 + $0x9d8] sm:$0xff] %v3730
      %4243 = vst [vmem:[#allocation2 + $0x9e0] sm:$0xff] %v3731
      %4244 = vst [vmem:[#allocation2 + $0x9e8] sm:$0xff] %v3732
      %4245 = vst [vmem:[#allocation2 + $0x9f0] sm:$0xff] %v3733
      %4246 = vst [vmem:[#allocation2 + $0x9f8] sm:$0xff] %v3734
      %4247 = vst [vmem:[#allocation2 + $0xa00] sm:$0xff] %v3735
      %4248 = vst [vmem:[#allocation2 + $0xa08] sm:$0xff] %v3736
      %4249 = vst [vmem:[#allocation2 + $0xa10] sm:$0xff] %v3737
      %4250 = vst [vmem:[#allocation2 + $0xa18] sm:$0xff] %v3738
      %4251 = vst [vmem:[#allocation2 + $0xa20] sm:$0xff] %v3739
      %4252 = vst [vmem:[#allocation2 + $0xa28] sm:$0xff] %v3740
      %4253 = vst [vmem:[#allocation2 + $0xa30] sm:$0xff] %v3741
      %4254 = vst [vmem:[#allocation2 + $0xa38] sm:$0xff] %v3742
      %4255 = vst [vmem:[#allocation2 + $0xa40] sm:$0xff] %v3743
      %4256 = vst [vmem:[#allocation2 + $0xa48] sm:$0xff] %v3744
      %4257 = vst [vmem:[#allocation2 + $0xa50] sm:$0xff] %v3745
      %4258 = vst [vmem:[#allocation2 + $0xa58] sm:$0xff] %v3746
      %4259 = vst [vmem:[#allocation2 + $0xa60] sm:$0xff] %v3747
      %4260 = vst [vmem:[#allocation2 + $0xa68] sm:$0xff] %v3748
      %4261 = vst [vmem:[#allocation2 + $0xa70] sm:$0xff] %v3749
      %4262 = vst [vmem:[#allocation2 + $0xa78] sm:$0xff] %v3750
      %4263 = vst [vmem:[#allocation2 + $0xa80] sm:$0xff] %v3751
      %4264 = vst [vmem:[#allocation2 + $0xa88] sm:$0xff] %v3752
      %4265 = vst [vmem:[#allocation2 + $0xa90] sm:$0xff] %v3753
      %4266 = vst [vmem:[#allocation2 + $0xa98] sm:$0xff] %v3754
      %4267 = vst [vmem:[#allocation2 + $0xaa0] sm:$0xff] %v3755
      %4268 = vst [vmem:[#allocation2 + $0xaa8] sm:$0xff] %v3756
      %4269 = vst [vmem:[#allocation2 + $0xab0] sm:$0xff] %v3757
      %4270 = vst [vmem:[#allocation2 + $0xab8] sm:$0xff] %v3758
      %4271 = vst [vmem:[#allocation2 + $0xac0] sm:$0xff] %v3759
      %4272 = vst [vmem:[#allocation2 + $0xac8] sm:$0xff] %v3760
      %4273 = vst [vmem:[#allocation2 + $0xad0] sm:$0xff] %v3761
      %4274 = vst [vmem:[#allocation2 + $0xad8] sm:$0xff] %v3762
      %4275 = vst [vmem:[#allocation2 + $0xae0] sm:$0xff] %v3763
      %4276 = vst [vmem:[#allocation2 + $0xae8] sm:$0xff] %v3764
      %4277 = vst [vmem:[#allocation2 + $0xaf0] sm:$0xff] %v3765
      %4278 = vst [vmem:[#allocation2 + $0xaf8] sm:$0xff] %v3766
      %4279 = vst [vmem:[#allocation2 + $0xb00] sm:$0xff] %v3767
      %4280 = vst [vmem:[#allocation2 + $0xb08] sm:$0xff] %v3768
      %4281 = vst [vmem:[#allocation2 + $0xb10] sm:$0xff] %v3769
      %4282 = vst [vmem:[#allocation2 + $0xb18] sm:$0xff] %v3770
      %4283 = vst [vmem:[#allocation2 + $0xb20] sm:$0xff] %v3771
      %4284 = vst [vmem:[#allocation2 + $0xb28] sm:$0xff] %v3772
      %4285 = vst [vmem:[#allocation2 + $0xb30] sm:$0xff] %v3773
      %4286 = vst [vmem:[#allocation2 + $0xb38] sm:$0xff] %v3774
      %4287 = vst [vmem:[#allocation2 + $0xb40] sm:$0xff] %v3775
      %4288 = vst [vmem:[#allocation2 + $0xb48] sm:$0xff] %v3776
      %4289 = vst [vmem:[#allocation2 + $0xb50] sm:$0xff] %v3777
      %4290 = vst [vmem:[#allocation2 + $0xb58] sm:$0xff] %v3778
      %4291 = vst [vmem:[#allocation2 + $0xb60] sm:$0xff] %v3779
      %4292 = vst [vmem:[#allocation2 + $0xb68] sm:$0xff] %v3780
      %4293 = vst [vmem:[#allocation2 + $0xb70] sm:$0xff] %v3781
      %4294 = vst [vmem:[#allocation2 + $0xb78] sm:$0xff] %v3782
      %4295 = vst [vmem:[#allocation2 + $0xb80] sm:$0xff] %v3783
      %4296 = vst [vmem:[#allocation2 + $0xb88] sm:$0xff] %v3784
      %4297 = vst [vmem:[#allocation2 + $0xb90] sm:$0xff] %v3785
      %4298 = vst [vmem:[#allocation2 + $0xb98] sm:$0xff] %v3786
      %4299 = vst [vmem:[#allocation2 + $0xba0] sm:$0xff] %v3787
      %4300 = vst [vmem:[#allocation2 + $0xba8] sm:$0xff] %v3788
      %4301 = vst [vmem:[#allocation2 + $0xbb0] sm:$0xff] %v3789
      %4302 = vst [vmem:[#allocation2 + $0xbb8] sm:$0xff] %v3790
      %4303 = vst [vmem:[#allocation2 + $0xbc0] sm:$0xff] %v3791
      %4304 = vst [vmem:[#allocation2 + $0xbc8] sm:$0xff] %v3792
      %4305 = vst [vmem:[#allocation2 + $0xbd0] sm:$0xff] %v3793
      %4306 = vst [vmem:[#allocation2 + $0xbd8] sm:$0xff] %v3794
      %4307 = vst [vmem:[#allocation2 + $0xbe0] sm:$0xff] %v3795
      %4308 = vst [vmem:[#allocation2 + $0xbe8] sm:$0xff] %v3796
      %4309 = vst [vmem:[#allocation2 + $0xbf0] sm:$0xff] %v3797
      %4310 = vst [vmem:[#allocation2 + $0xbf8] sm:$0xff] %v3798
      %4311 = vst [vmem:[#allocation2 + $0xc00] sm:$0xff] %v3799
      %4312 = vst [vmem:[#allocation2 + $0xc08] sm:$0xff] %v3800
      %4313 = vst [vmem:[#allocation2 + $0xc10] sm:$0xff] %v3801
      %4314 = vst [vmem:[#allocation2 + $0xc18] sm:$0xff] %v3802
      %4315 = vst [vmem:[#allocation2 + $0xc20] sm:$0xff] %v3803
      %4316 = vst [vmem:[#allocation2 + $0xc28] sm:$0xff] %v3804
      %4317 = vst [vmem:[#allocation2 + $0xc30] sm:$0xff] %v3805
      %4318 = vst [vmem:[#allocation2 + $0xc38] sm:$0xff] %v3806
      %4319 = vst [vmem:[#allocation2 + $0xc40] sm:$0xff] %v3807
      %4320 = vst [vmem:[#allocation2 + $0xc48] sm:$0xff] %v3808
      %4321 = vst [vmem:[#allocation2 + $0xc50] sm:$0xff] %v3809
      %4322 = vst [vmem:[#allocation2 + $0xc58] sm:$0xff] %v3810
      %4323 = vst [vmem:[#allocation2 + $0xc60] sm:$0xff] %v3811
      %4324 = vst [vmem:[#allocation2 + $0xc68] sm:$0xff] %v3812
      %4325 = vst [vmem:[#allocation2 + $0xc70] sm:$0xff] %v3813
      %4326 = vst [vmem:[#allocation2 + $0xc78] sm:$0xff] %v3814
      %4327 = vst [vmem:[#allocation2 + $0xc80] sm:$0xff] %v3815
      %4328 = vst [vmem:[#allocation2 + $0xc88] sm:$0xff] %v3816
      %4329 = vst [vmem:[#allocation2 + $0xc90] sm:$0xff] %v3817
      %4330 = vst [vmem:[#allocation2 + $0xc98] sm:$0xff] %v3818
      %4331 = vst [vmem:[#allocation2 + $0xca0] sm:$0xff] %v3819
      %4332 = vst [vmem:[#allocation2 + $0xca8] sm:$0xff] %v3820
      %4333 = vst [vmem:[#allocation2 + $0xcb0] sm:$0xff] %v3821
      %4334 = vst [vmem:[#allocation2 + $0xcb8] sm:$0xff] %v3822
      %4335 = vst [vmem:[#allocation2 + $0xcc0] sm:$0xff] %v3823
      %4336 = vst [vmem:[#allocation2 + $0xcc8] sm:$0xff] %v3824
      %4337 = vst [vmem:[#allocation2 + $0xcd0] sm:$0xff] %v3825
      %4338 = vst [vmem:[#allocation2 + $0xcd8] sm:$0xff] %v3826
      %4339 = vst [vmem:[#allocation2 + $0xce0] sm:$0xff] %v3827
      %4340 = vst [vmem:[#allocation2 + $0xce8] sm:$0xff] %v3828
      %4341 = vst [vmem:[#allocation2 + $0xcf0] sm:$0xff] %v3829
      %4342 = vst [vmem:[#allocation2 + $0xcf8] sm:$0xff] %v3830
      %4343 = vst [vmem:[#allocation2 + $0xd00] sm:$0xff] %v3831
      %4344 = vst [vmem:[#allocation2 + $0xd08] sm:$0xff] %v3832
      %4345 = vst [vmem:[#allocation2 + $0xd10] sm:$0xff] %v3833
      %4346 = vst [vmem:[#allocation2 + $0xd18] sm:$0xff] %v3834
      %4347 = vst [vmem:[#allocation2 + $0xd20] sm:$0xff] %v3835
      %4348 = vst [vmem:[#allocation2 + $0xd28] sm:$0xff] %v3836
      %4349 = vst [vmem:[#allocation2 + $0xd30] sm:$0xff] %v3837
      %4350 = vst [vmem:[#allocation2 + $0xd38] sm:$0xff] %v3838
      %4351 = vst [vmem:[#allocation2 + $0xd40] sm:$0xff] %v3839
      %4352 = vst [vmem:[#allocation2 + $0xd48] sm:$0xff] %v3840
      %4353 = vst [vmem:[#allocation2 + $0xd50] sm:$0xff] %v3841
      %4354 = vst [vmem:[#allocation2 + $0xd58] sm:$0xff] %v3842
      %4355 = vst [vmem:[#allocation2 + $0xd60] sm:$0xff] %v3843
      %4356 = vst [vmem:[#allocation2 + $0xd68] sm:$0xff] %v3844
      %4357 = vst [vmem:[#allocation2 + $0xd70] sm:$0xff] %v3845
      %4358 = vst [vmem:[#allocation2 + $0xd78] sm:$0xff] %v3846
      %4359 = vst [vmem:[#allocation2 + $0xd80] sm:$0xff] %v3847
      %4360 = vst [vmem:[#allocation2 + $0xd88] sm:$0xff] %v3848
      %4361 = vst [vmem:[#allocation2 + $0xd90] sm:$0xff] %v3849
      %4362 = vst [vmem:[#allocation2 + $0xd98] sm:$0xff] %v3850
      %4363 = vst [vmem:[#allocation2 + $0xda0] sm:$0xff] %v3851
      %4364 = vst [vmem:[#allocation2 + $0xda8] sm:$0xff] %v3852
      %4365 = vst [vmem:[#allocation2 + $0xdb0] sm:$0xff] %v3853
      %4366 = vst [vmem:[#allocation2 + $0xdb8] sm:$0xff] %v3854
      %4367 = vst [vmem:[#allocation2 + $0xdc0] sm:$0xff] %v3855
      %4368 = vst [vmem:[#allocation2 + $0xdc8] sm:$0xff] %v3856
      %4369 = vst [vmem:[#allocation2 + $0xdd0] sm:$0xff] %v3857
      %4370 = vst [vmem:[#allocation2 + $0xdd8] sm:$0xff] %v3858
      %4371 = vst [vmem:[#allocation2 + $0xde0] sm:$0xff] %v3859
      %4372 = vst [vmem:[#allocation2 + $0xde8] sm:$0xff] %v3860
      %4373 = vst [vmem:[#allocation2 + $0xdf0] sm:$0xff] %v3861
      %4374 = vst [vmem:[#allocation2 + $0xdf8] sm:$0xff] %v3862
      %4375 = vst [vmem:[#allocation2 + $0xe00] sm:$0xff] %v3863
      %4376 = vst [vmem:[#allocation2 + $0xe08] sm:$0xff] %v3864
      %4377 = vst [vmem:[#allocation2 + $0xe10] sm:$0xff] %v3865
      %4378 = vst [vmem:[#allocation2 + $0xe18] sm:$0xff] %v3866
      %4379 = vst [vmem:[#allocation2 + $0xe20] sm:$0xff] %v3867
      %4380 = vst [vmem:[#allocation2 + $0xe28] sm:$0xff] %v3868
      %4381 = vst [vmem:[#allocation2 + $0xe30] sm:$0xff] %v3869
      %4382 = vst [vmem:[#allocation2 + $0xe38] sm:$0xff] %v3870
      %4383 = vst [vmem:[#allocation2 + $0xe40] sm:$0xff] %v3871
      %4384 = vst [vmem:[#allocation2 + $0xe48] sm:$0xff] %v3872
      %4385 = vst [vmem:[#allocation2 + $0xe50] sm:$0xff] %v3873
      %4386 = vst [vmem:[#allocation2 + $0xe58] sm:$0xff] %v3874
      %4387 = vst [vmem:[#allocation2 + $0xe60] sm:$0xff] %v3875
      %4388 = vst [vmem:[#allocation2 + $0xe68] sm:$0xff] %v3876
      %4389 = vst [vmem:[#allocation2 + $0xe70] sm:$0xff] %v3877
      %4390 = vst [vmem:[#allocation2 + $0xe78] sm:$0xff] %v3878
      %4391 = vst [vmem:[#allocation2 + $0xe80] sm:$0xff] %v3879
      %4392 = vst [vmem:[#allocation2 + $0xe88] sm:$0xff] %v3880
      %4393 = vst [vmem:[#allocation2 + $0xe90] sm:$0xff] %v3881
      %4394 = vst [vmem:[#allocation2 + $0xe98] sm:$0xff] %v3882
      %4395 = vst [vmem:[#allocation2 + $0xea0] sm:$0xff] %v3883
      %4396 = vst [vmem:[#allocation2 + $0xea8] sm:$0xff] %v3884
      %4397 = vst [vmem:[#allocation2 + $0xeb0] sm:$0xff] %v3885
      %4398 = vst [vmem:[#allocation2 + $0xeb8] sm:$0xff] %v3886
      %4399 = vst [vmem:[#allocation2 + $0xec0] sm:$0xff] %v3887
      %4400 = vst [vmem:[#allocation2 + $0xec8] sm:$0xff] %v3888
      %4401 = vst [vmem:[#allocation2 + $0xed0] sm:$0xff] %v3889
      %4402 = vst [vmem:[#allocation2 + $0xed8] sm:$0xff] %v3890
      %4403 = vst [vmem:[#allocation2 + $0xee0] sm:$0xff] %v3891
      %4404 = vst [vmem:[#allocation2 + $0xee8] sm:$0xff] %v3892
      %4405 = vst [vmem:[#allocation2 + $0xef0] sm:$0xff] %v3893
      %4406 = vst [vmem:[#allocation2 + $0xef8] sm:$0xff] %v3894
      %4407 = vst [vmem:[#allocation2 + $0xf00] sm:$0xff] %v3895
      %4408 = vst [vmem:[#allocation2 + $0xf08] sm:$0xff] %v3896
      %4409 = vst [vmem:[#allocation2 + $0xf10] sm:$0xff] %v3897
      %4410 = vst [vmem:[#allocation2 + $0xf18] sm:$0xff] %v3898
      %4411 = vst [vmem:[#allocation2 + $0xf20] sm:$0xff] %v3899
      %4412 = vst [vmem:[#allocation2 + $0xf28] sm:$0xff] %v3900
      %4413 = vst [vmem:[#allocation2 + $0xf30] sm:$0xff] %v3901
      %4414 = vst [vmem:[#allocation2 + $0xf38] sm:$0xff] %v3902
      %4415 = vst [vmem:[#allocation2 + $0xf40] sm:$0xff] %v3903
      %4416 = vst [vmem:[#allocation2 + $0xf48] sm:$0xff] %v3904
      %4417 = vst [vmem:[#allocation2 + $0xf50] sm:$0xff] %v3905
      %4418 = vst [vmem:[#allocation2 + $0xf58] sm:$0xff] %v3906
      %4419 = vst [vmem:[#allocation2 + $0xf60] sm:$0xff] %v3907
      %4420 = vst [vmem:[#allocation2 + $0xf68] sm:$0xff] %v3908
      %4421 = vst [vmem:[#allocation2 + $0xf70] sm:$0xff] %v3909
      %4422 = vst [vmem:[#allocation2 + $0xf78] sm:$0xff] %v3910
      %4423 = vst [vmem:[#allocation2 + $0xf80] sm:$0xff] %v3911
      %4424 = vst [vmem:[#allocation2 + $0xf88] sm:$0xff] %v3912
      %4425 = vst [vmem:[#allocation2 + $0xf90] sm:$0xff] %v3913
      %4426 = vst [vmem:[#allocation2 + $0xf98] sm:$0xff] %v3914
      %4427 = vst [vmem:[#allocation2 + $0xfa0] sm:$0xff] %v3915
      %4428 = vst [vmem:[#allocation2 + $0xfa8] sm:$0xff] %v3916
      %4429 = vst [vmem:[#allocation2 + $0xfb0] sm:$0xff] %v3917
      %4430 = vst [vmem:[#allocation2 + $0xfb8] sm:$0xff] %v3918
      %4431 = vst [vmem:[#allocation2 + $0xfc0] sm:$0xff] %v3919
      %4432 = vst [vmem:[#allocation2 + $0xfc8] sm:$0xff] %v3920
      %4433 = vst [vmem:[#allocation2 + $0xfd0] sm:$0xff] %v3921
      %4434 = vst [vmem:[#allocation2 + $0xfd8] sm:$0xff] %v3922
      %4435 = vst [vmem:[#allocation2 + $0xfe0] sm:$0xff] %v3923
      %4436 = vst [vmem:[#allocation2 + $0xfe8] sm:$0xff] %v3924
      %4437 = vst [vmem:[#allocation2 + $0xff0] sm:$0xff] %v3925
      %4438 = vst [vmem:[#allocation2 + $0xff8] sm:$0xff] %v3926
    $region37: #{actor_forward.1} parent=1 // pred_fallthru
      _
    %v4439 = vld [vmem:[%s0] sm:$0xf]
    %v4440 = vld [vmem:[%s0 + $0x4] sm:$0xf]
    %v4441 = vld [vmem:[%s1] sm:$0xff]
    %v4442 = vld [vmem:[%s1 + $0x8] sm:$0xff]
    %v4443 = vld [vmem:[%s1 + $0x10] sm:$0xff]
    %v4444 = vld [vmem:[%s1 + $0x18] sm:$0xff]
    %v4445 = vld [vmem:[%s1 + $0x20] sm:$0xff]
    %v4446 = vld [vmem:[%s1 + $0x28] sm:$0xff]
    %v4447 = vld [vmem:[%s1 + $0x30] sm:$0xff]
    %v4448 = vld [vmem:[%s1 + $0x38] sm:$0xff]
    %v4449 = vld [vmem:[%s1 + $0x40] sm:$0xff]
    %v4450 = vld [vmem:[%s1 + $0x48] sm:$0xff]
    %v4451 = vld [vmem:[%s1 + $0x50] sm:$0xff]
    %v4452 = vld [vmem:[%s1 + $0x58] sm:$0xff]
    %v4453 = vld [vmem:[%s1 + $0x60] sm:$0xff]
    %v4454 = vld [vmem:[%s1 + $0x68] sm:$0xff]
    %v4455 = vld [vmem:[%s1 + $0x70] sm:$0xff]
    %v4456 = vld [vmem:[%s1 + $0x78] sm:$0xff]
    %v4459 = vunpack.c.l.b16 %v4439
    %v4460 = vunpack.c.l.b16 %v4440
    %v4461 = vpack.c.b16 %v4460, %v4459
    %v4478 = vunpack.c.l.b16 %v4441
    %v4479 = vunpack.c.h.b16 %v4441
    %v4480 = vunpack.c.l.b16 %v4442
    %v4481 = vunpack.c.h.b16 %v4442
    %v4482 = vunpack.c.l.b16 %v4443
    %v4483 = vunpack.c.h.b16 %v4443
    %v4484 = vunpack.c.l.b16 %v4444
    %v4485 = vunpack.c.h.b16 %v4444
    %v4486 = vunpack.c.l.b16 %v4445
    %v4487 = vunpack.c.h.b16 %v4445
    %v4488 = vunpack.c.l.b16 %v4446
    %v4489 = vunpack.c.h.b16 %v4446
    %v4490 = vunpack.c.l.b16 %v4447
    %v4491 = vunpack.c.h.b16 %v4447
    %v4492 = vunpack.c.l.b16 %v4448
    %v4493 = vunpack.c.h.b16 %v4448
    %v4494 = vunpack.c.l.b16 %v4449
    %v4495 = vunpack.c.h.b16 %v4449
    %v4496 = vunpack.c.l.b16 %v4450
    %v4497 = vunpack.c.h.b16 %v4450
    %v4498 = vunpack.c.l.b16 %v4451
    %v4499 = vunpack.c.h.b16 %v4451
    %v4500 = vunpack.c.l.b16 %v4452
    %v4501 = vunpack.c.h.b16 %v4452
    %v4502 = vunpack.c.l.b16 %v4453
    %v4503 = vunpack.c.h.b16 %v4453
    %v4504 = vunpack.c.l.b16 %v4454
    %v4505 = vunpack.c.h.b16 %v4454
    %v4506 = vunpack.c.l.b16 %v4455
    %v4507 = vunpack.c.h.b16 %v4455
    %v4508 = vunpack.c.l.b16 %v4456
    %v4509 = vunpack.c.h.b16 %v4456
    %v4510 = vpack.c.b16 %v4486, %v4478
    %v4511 = vpack.c.b16 %v4487, %v4479
    %v4512 = vpack.c.b16 %v4488, %v4480
    %v4513 = vpack.c.b16 %v4489, %v4481
    %v4514 = vpack.c.b16 %v4490, %v4482
    %v4515 = vpack.c.b16 %v4491, %v4483
    %v4516 = vpack.c.b16 %v4492, %v4484
    %v4517 = vpack.c.b16 %v4493, %v4485
    %v4518 = vpack.c.b16 %v4502, %v4494
    %v4519 = vpack.c.b16 %v4503, %v4495
    %v4520 = vpack.c.b16 %v4504, %v4496
    %v4521 = vpack.c.b16 %v4505, %v4497
    %v4522 = vpack.c.b16 %v4506, %v4498
    %v4523 = vpack.c.b16 %v4507, %v4499
    %v4524 = vpack.c.b16 %v4508, %v4500
    %v4525 = vpack.c.b16 %v4509, %v4501
    %vm4542 = vcmask 261120
    %v4544 = vsel %vm4542, %v4461, 0
    %4546 = vmatprep.subr.bf16.mxu0 %v4511
    %4547 = vmatpush1.bf16.msra.mxu0 %v4510
    %4548 = vmatprep.subr.bf16.mxu0 %v4519
    %4549 = vmatpush1.bf16.msra.mxu0 %v4518
    %4550 = vmatprep.subr.bf16.mxu0 0
    %4551 = vmatpush1.bf16.msra.mxu0 0
    %4552 = vmatprep.subr.bf16.mxu0 0
    %4553 = vmatpush1.bf16.msra.mxu0 0
    %4554 = vmatprep.subr.bf16.mxu0 0
    %4555 = vmatpush1.bf16.msra.mxu0 0
    %4556 = vmatprep.subr.bf16.mxu0 0
    %4557 = vmatpush1.bf16.msra.mxu0 0
    %4558 = vmatprep.subr.bf16.mxu0 0
    %4559 = vmatpush1.bf16.msra.mxu0 0
    %4560 = vmatprep.subr.bf16.mxu0 0
    %4561 = vmatpush1.bf16.msra.mxu0 0
    %4562 = vmatprep.subr.bf16.mxu0 0
    %4563 = vmatpush1.bf16.msra.mxu0 0
    %4564 = vmatprep.subr.bf16.mxu0 0
    %4565 = vmatpush1.bf16.msra.mxu0 0
    %4566 = vmatprep.subr.bf16.mxu0 0
    %4567 = vmatpush1.bf16.msra.mxu0 0
    %4568 = vmatprep.subr.bf16.mxu0 0
    %4569 = vmatpush1.bf16.msra.mxu0 0
    %4570 = vmatprep.subr.bf16.mxu0 0
    %4571 = vmatpush1.bf16.msra.mxu0 0
    %4572 = vmatprep.subr.bf16.mxu0 0
    %4573 = vmatpush1.bf16.msra.mxu0 0
    %4574 = vmatprep.subr.bf16.mxu0 0
    %4575 = vmatpush1.bf16.msra.mxu0 0
    %4576 = vmatprep.subr.bf16.mxu0 0
    %4577 = vmatpush1.bf16.msra.mxu0 0
    %4578 = vmatprep.mubr.bf16.mxu0 0
    %4579 = vmatmul.mubr.bf16.gmra.mrb[0].mxu0 %v4544
    %v4580 = vpop.f32.mrb[0].mxu0
    %v4581 = vadd.f32 0.0, %v4580
    %v4582 = vpop.f32.mrb[0].mxu0
    %v4583 = vadd.f32 0.0, %v4582
    %v4584 = vpop.f32.mrb[0].mxu0
    %v4585 = vadd.f32 0.0, %v4584
    %v4586 = vpop.f32.mrb[0].mxu0
    %v4587 = vadd.f32 0.0, %v4586
    %4588 = vdwg.mxu0
    %4589 = vmatprep.subr.bf16.mxu0 %v4513
    %4590 = vmatpush1.bf16.msra.mxu0 %v4512
    %4591 = vmatprep.subr.bf16.mxu0 %v4521
    %4592 = vmatpush1.bf16.msra.mxu0 %v4520
    %4593 = vmatprep.subr.bf16.mxu0 0
    %4594 = vmatpush1.bf16.msra.mxu0 0
    %4595 = vmatprep.subr.bf16.mxu0 0
    %4596 = vmatpush1.bf16.msra.mxu0 0
    %4597 = vmatprep.subr.bf16.mxu0 0
    %4598 = vmatpush1.bf16.msra.mxu0 0
    %4599 = vmatprep.subr.bf16.mxu0 0
    %4600 = vmatpush1.bf16.msra.mxu0 0
    %4601 = vmatprep.subr.bf16.mxu0 0
    %4602 = vmatpush1.bf16.msra.mxu0 0
    %4603 = vmatprep.subr.bf16.mxu0 0
    %4604 = vmatpush1.bf16.msra.mxu0 0
    %4605 = vmatprep.subr.bf16.mxu0 0
    %4606 = vmatpush1.bf16.msra.mxu0 0
    %4607 = vmatprep.subr.bf16.mxu0 0
    %4608 = vmatpush1.bf16.msra.mxu0 0
    %4609 = vmatprep.subr.bf16.mxu0 0
    %4610 = vmatpush1.bf16.msra.mxu0 0
    %4611 = vmatprep.subr.bf16.mxu0 0
    %4612 = vmatpush1.bf16.msra.mxu0 0
    %4613 = vmatprep.subr.bf16.mxu0 0
    %4614 = vmatpush1.bf16.msra.mxu0 0
    %4615 = vmatprep.subr.bf16.mxu0 0
    %4616 = vmatpush1.bf16.msra.mxu0 0
    %4617 = vmatprep.subr.bf16.mxu0 0
    %4618 = vmatpush1.bf16.msra.mxu0 0
    %4619 = vmatprep.subr.bf16.mxu0 0
    %4620 = vmatpush1.bf16.msra.mxu0 0
    %4621 = vmatprep.mubr.bf16.mxu0 0
    %4622 = vmatmul.mubr.bf16.gmra.mrb[0].mxu0 %v4544
    %v4623 = vpop.f32.mrb[0].mxu0
    %v4624 = vadd.f32 0.0, %v4623
    %v4625 = vpop.f32.mrb[0].mxu0
    %v4626 = vadd.f32 0.0, %v4625
    %v4627 = vpop.f32.mrb[0].mxu0
    %v4628 = vadd.f32 0.0, %v4627
    %v4629 = vpop.f32.mrb[0].mxu0
    %v4630 = vadd.f32 0.0, %v4629
    %4631 = vdwg.mxu0
    %4632 = vmatprep.subr.bf16.mxu0 %v4515
    %4633 = vmatpush1.bf16.msra.mxu0 %v4514
    %4634 = vmatprep.subr.bf16.mxu0 %v4523
    %4635 = vmatpush1.bf16.msra.mxu0 %v4522
    %4636 = vmatprep.subr.bf16.mxu0 0
    %4637 = vmatpush1.bf16.msra.mxu0 0
    %4638 = vmatprep.subr.bf16.mxu0 0
    %4639 = vmatpush1.bf16.msra.mxu0 0
    %4640 = vmatprep.subr.bf16.mxu0 0
    %4641 = vmatpush1.bf16.msra.mxu0 0
    %4642 = vmatprep.subr.bf16.mxu0 0
    %4643 = vmatpush1.bf16.msra.mxu0 0
    %4644 = vmatprep.subr.bf16.mxu0 0
    %4645 = vmatpush1.bf16.msra.mxu0 0
    %4646 = vmatprep.subr.bf16.mxu0 0
    %4647 = vmatpush1.bf16.msra.mxu0 0
    %4648 = vmatprep.subr.bf16.mxu0 0
    %4649 = vmatpush1.bf16.msra.mxu0 0
    %4650 = vmatprep.subr.bf16.mxu0 0
    %4651 = vmatpush1.bf16.msra.mxu0 0
    %4652 = vmatprep.subr.bf16.mxu0 0
    %4653 = vmatpush1.bf16.msra.mxu0 0
    %4654 = vmatprep.subr.bf16.mxu0 0
    %4655 = vmatpush1.bf16.msra.mxu0 0
    %4656 = vmatprep.subr.bf16.mxu0 0
    %4657 = vmatpush1.bf16.msra.mxu0 0
    %4658 = vmatprep.subr.bf16.mxu0 0
    %4659 = vmatpush1.bf16.msra.mxu0 0
    %4660 = vmatprep.subr.bf16.mxu0 0
    %4661 = vmatpush1.bf16.msra.mxu0 0
    %4662 = vmatprep.subr.bf16.mxu0 0
    %4663 = vmatpush1.bf16.msra.mxu0 0
    %4664 = vmatprep.mubr.bf16.mxu0 0
    %4665 = vmatmul.mubr.bf16.gmra.mrb[0].mxu0 %v4544
    %v4666 = vpop.f32.mrb[0].mxu0
    %v4667 = vadd.f32 0.0, %v4666
    %v4668 = vpop.f32.mrb[0].mxu0
    %v4669 = vadd.f32 0.0, %v4668
    %v4670 = vpop.f32.mrb[0].mxu0
    %v4671 = vadd.f32 0.0, %v4670
    %v4672 = vpop.f32.mrb[0].mxu0
    %v4673 = vadd.f32 0.0, %v4672
    %4674 = vdwg.mxu0
    %4675 = vmatprep.subr.bf16.mxu0 %v4517
    %4676 = vmatpush1.bf16.msra.mxu0 %v4516
    %4677 = vmatprep.subr.bf16.mxu0 %v4525
    %4678 = vmatpush1.bf16.msra.mxu0 %v4524
    %4679 = vmatprep.subr.bf16.mxu0 0
    %4680 = vmatpush1.bf16.msra.mxu0 0
    %4681 = vmatprep.subr.bf16.mxu0 0
    %4682 = vmatpush1.bf16.msra.mxu0 0
    %4683 = vmatprep.subr.bf16.mxu0 0
    %4684 = vmatpush1.bf16.msra.mxu0 0
    %4685 = vmatprep.subr.bf16.mxu0 0
    %4686 = vmatpush1.bf16.msra.mxu0 0
    %4687 = vmatprep.subr.bf16.mxu0 0
    %4688 = vmatpush1.bf16.msra.mxu0 0
    %4689 = vmatprep.subr.bf16.mxu0 0
    %4690 = vmatpush1.bf16.msra.mxu0 0
    %4691 = vmatprep.subr.bf16.mxu0 0
    %4692 = vmatpush1.bf16.msra.mxu0 0
    %4693 = vmatprep.subr.bf16.mxu0 0
    %4694 = vmatpush1.bf16.msra.mxu0 0
    %4695 = vmatprep.subr.bf16.mxu0 0
    %4696 = vmatpush1.bf16.msra.mxu0 0
    %4697 = vmatprep.subr.bf16.mxu0 0
    %4698 = vmatpush1.bf16.msra.mxu0 0
    %4699 = vmatprep.subr.bf16.mxu0 0
    %4700 = vmatpush1.bf16.msra.mxu0 0
    %4701 = vmatprep.subr.bf16.mxu0 0
    %4702 = vmatpush1.bf16.msra.mxu0 0
    %4703 = vmatprep.subr.bf16.mxu0 0
    %4704 = vmatpush1.bf16.msra.mxu0 0
    %4705 = vmatprep.subr.bf16.mxu0 0
    %4706 = vmatpush1.bf16.msra.mxu0 0
    %4707 = vmatprep.mubr.bf16.mxu0 0
    %4708 = vmatmul.mubr.bf16.gmra.mrb[0].mxu0 %v4544
    %v4709 = vpop.f32.mrb[0].mxu0
    %v4710 = vadd.f32 0.0, %v4709
    %v4711 = vpop.f32.mrb[0].mxu0
    %v4712 = vadd.f32 0.0, %v4711
    %v4713 = vpop.f32.mrb[0].mxu0
    %v4714 = vadd.f32 0.0, %v4713
    %v4715 = vpop.f32.mrb[0].mxu0
    %v4716 = vadd.f32 0.0, %v4715
    %4717 = vdwg.mxu0
    %v4718 = vmax.f32 %v4581, 0.0
    %v4719 = vmax.f32 %v4583, 0.0
    %v4720 = vmax.f32 %v4624, 0.0
    %v4721 = vmax.f32 %v4626, 0.0
    %v4722 = vmax.f32 %v4667, 0.0
    %v4723 = vmax.f32 %v4669, 0.0
    %v4724 = vmax.f32 %v4710, 0.0
    %v4725 = vmax.f32 %v4712, 0.0
    %v4726 = vmax.f32 %v4585, 0.0
    %v4727 = vmax.f32 %v4587, 0.0
    %v4728 = vmax.f32 %v4628, 0.0
    %v4729 = vmax.f32 %v4630, 0.0
    %v4730 = vmax.f32 %v4671, 0.0
    %v4731 = vmax.f32 %v4673, 0.0
    %v4732 = vmax.f32 %v4714, 0.0
    %v4733 = vmax.f32 %v4716, 0.0
    %v4734 = vpack.c.bf16 %v4726, %v4718
    %v4735 = vpack.c.bf16 %v4727, %v4719
    %v4736 = vpack.c.bf16 %v4728, %v4720
    %v4737 = vpack.c.bf16 %v4729, %v4721
    %v4738 = vpack.c.bf16 %v4730, %v4722
    %v4739 = vpack.c.bf16 %v4731, %v4723
    %v4740 = vpack.c.bf16 %v4732, %v4724
    %v4741 = vpack.c.bf16 %v4733, %v4725
    %v4742 = vld [vmem:[#allocation2] sm:$0xff]
    %v4743 = vld [vmem:[#allocation2 + $0x8] sm:$0xff]
    %v4744 = vld [vmem:[#allocation2 + $0x10] sm:$0xff]
    %v4745 = vld [vmem:[#allocation2 + $0x18] sm:$0xff]
    %v4746 = vld [vmem:[#allocation2 + $0x20] sm:$0xff]
    %v4747 = vld [vmem:[#allocation2 + $0x28] sm:$0xff]
    %v4748 = vld [vmem:[#allocation2 + $0x30] sm:$0xff]
    %v4749 = vld [vmem:[#allocation2 + $0x38] sm:$0xff]
    %v4750 = vld [vmem:[#allocation2 + $0x40] sm:$0xff]
    %v4751 = vld [vmem:[#allocation2 + $0x48] sm:$0xff]
    %v4752 = vld [vmem:[#allocation2 + $0x50] sm:$0xff]
    %v4753 = vld [vmem:[#allocation2 + $0x58] sm:$0xff]
    %v4754 = vld [vmem:[#allocation2 + $0x60] sm:$0xff]
    %v4755 = vld [vmem:[#allocation2 + $0x68] sm:$0xff]
    %v4756 = vld [vmem:[#allocation2 + $0x70] sm:$0xff]
    %v4757 = vld [vmem:[#allocation2 + $0x78] sm:$0xff]
    %v4758 = vld [vmem:[#allocation2 + $0x80] sm:$0xff]
    %v4759 = vld [vmem:[#allocation2 + $0x88] sm:$0xff]
    %v4760 = vld [vmem:[#allocation2 + $0x90] sm:$0xff]
    %v4761 = vld [vmem:[#allocation2 + $0x98] sm:$0xff]
    %v4762 = vld [vmem:[#allocation2 + $0xa0] sm:$0xff]
    %v4763 = vld [vmem:[#allocation2 + $0xa8] sm:$0xff]
    %v4764 = vld [vmem:[#allocation2 + $0xb0] sm:$0xff]
    %v4765 = vld [vmem:[#allocation2 + $0xb8] sm:$0xff]
    %v4766 = vld [vmem:[#allocation2 + $0xc0] sm:$0xff]
    %v4767 = vld [vmem:[#allocation2 + $0xc8] sm:$0xff]
    %v4768 = vld [vmem:[#allocation2 + $0xd0] sm:$0xff]
    %v4769 = vld [vmem:[#allocation2 + $0xd8] sm:$0xff]
    %v4770 = vld [vmem:[#allocation2 + $0xe0] sm:$0xff]
    %v4771 = vld [vmem:[#allocation2 + $0xe8] sm:$0xff]
    %v4772 = vld [vmem:[#allocation2 + $0xf0] sm:$0xff]
    %v4773 = vld [vmem:[#allocation2 + $0xf8] sm:$0xff]
    %v4774 = vld [vmem:[#allocation2 + $0x100] sm:$0xff]
    %v4775 = vld [vmem:[#allocation2 + $0x108] sm:$0xff]
    %v4776 = vld [vmem:[#allocation2 + $0x110] sm:$0xff]
    %v4777 = vld [vmem:[#allocation2 + $0x118] sm:$0xff]
    %v4778 = vld [vmem:[#allocation2 + $0x120] sm:$0xff]
    %v4779 = vld [vmem:[#allocation2 + $0x128] sm:$0xff]
    %v4780 = vld [vmem:[#allocation2 + $0x130] sm:$0xff]
    %v4781 = vld [vmem:[#allocation2 + $0x138] sm:$0xff]
    %v4782 = vld [vmem:[#allocation2 + $0x140] sm:$0xff]
    %v4783 = vld [vmem:[#allocation2 + $0x148] sm:$0xff]
    %v4784 = vld [vmem:[#allocation2 + $0x150] sm:$0xff]
    %v4785 = vld [vmem:[#allocation2 + $0x158] sm:$0xff]
    %v4786 = vld [vmem:[#allocation2 + $0x160] sm:$0xff]
    %v4787 = vld [vmem:[#allocation2 + $0x168] sm:$0xff]
    %v4788 = vld [vmem:[#allocation2 + $0x170] sm:$0xff]
    %v4789 = vld [vmem:[#allocation2 + $0x178] sm:$0xff]
    %v4790 = vld [vmem:[#allocation2 + $0x180] sm:$0xff]
    %v4791 = vld [vmem:[#allocation2 + $0x188] sm:$0xff]
    %v4792 = vld [vmem:[#allocation2 + $0x190] sm:$0xff]
    %v4793 = vld [vmem:[#allocation2 + $0x198] sm:$0xff]
    %v4794 = vld [vmem:[#allocation2 + $0x1a0] sm:$0xff]
    %v4795 = vld [vmem:[#allocation2 + $0x1a8] sm:$0xff]
    %v4796 = vld [vmem:[#allocation2 + $0x1b0] sm:$0xff]
    %v4797 = vld [vmem:[#allocation2 + $0x1b8] sm:$0xff]
    %v4798 = vld [vmem:[#allocation2 + $0x1c0] sm:$0xff]
    %v4799 = vld [vmem:[#allocation2 + $0x1c8] sm:$0xff]
    %v4800 = vld [vmem:[#allocation2 + $0x1d0] sm:$0xff]
    %v4801 = vld [vmem:[#allocation2 + $0x1d8] sm:$0xff]
    %v4802 = vld [vmem:[#allocation2 + $0x1e0] sm:$0xff]
    %v4803 = vld [vmem:[#allocation2 + $0x1e8] sm:$0xff]
    %v4804 = vld [vmem:[#allocation2 + $0x1f0] sm:$0xff]
    %v4805 = vld [vmem:[#allocation2 + $0x1f8] sm:$0xff]
    %v4806 = vld [vmem:[#allocation2 + $0x200] sm:$0xff]
    %v4807 = vld [vmem:[#allocation2 + $0x208] sm:$0xff]
    %v4808 = vld [vmem:[#allocation2 + $0x210] sm:$0xff]
    %v4809 = vld [vmem:[#allocation2 + $0x218] sm:$0xff]
    %v4810 = vld [vmem:[#allocation2 + $0x220] sm:$0xff]
    %v4811 = vld [vmem:[#allocation2 + $0x228] sm:$0xff]
    %v4812 = vld [vmem:[#allocation2 + $0x230] sm:$0xff]
    %v4813 = vld [vmem:[#allocation2 + $0x238] sm:$0xff]
    %v4814 = vld [vmem:[#allocation2 + $0x240] sm:$0xff]
    %v4815 = vld [vmem:[#allocation2 + $0x248] sm:$0xff]
    %v4816 = vld [vmem:[#allocation2 + $0x250] sm:$0xff]
    %v4817 = vld [vmem:[#allocation2 + $0x258] sm:$0xff]
    %v4818 = vld [vmem:[#allocation2 + $0x260] sm:$0xff]
    %v4819 = vld [vmem:[#allocation2 + $0x268] sm:$0xff]
    %v4820 = vld [vmem:[#allocation2 + $0x270] sm:$0xff]
    %v4821 = vld [vmem:[#allocation2 + $0x278] sm:$0xff]
    %v4822 = vld [vmem:[#allocation2 + $0x280] sm:$0xff]
    %v4823 = vld [vmem:[#allocation2 + $0x288] sm:$0xff]
    %v4824 = vld [vmem:[#allocation2 + $0x290] sm:$0xff]
    %v4825 = vld [vmem:[#allocation2 + $0x298] sm:$0xff]
    %v4826 = vld [vmem:[#allocation2 + $0x2a0] sm:$0xff]
    %v4827 = vld [vmem:[#allocation2 + $0x2a8] sm:$0xff]
    %v4828 = vld [vmem:[#allocation2 + $0x2b0] sm:$0xff]
    %v4829 = vld [vmem:[#allocation2 + $0x2b8] sm:$0xff]
    %v4830 = vld [vmem:[#allocation2 + $0x2c0] sm:$0xff]
    %v4831 = vld [vmem:[#allocation2 + $0x2c8] sm:$0xff]
    %v4832 = vld [vmem:[#allocation2 + $0x2d0] sm:$0xff]
    %v4833 = vld [vmem:[#allocation2 + $0x2d8] sm:$0xff]
    %v4834 = vld [vmem:[#allocation2 + $0x2e0] sm:$0xff]
    %v4835 = vld [vmem:[#allocation2 + $0x2e8] sm:$0xff]
    %v4836 = vld [vmem:[#allocation2 + $0x2f0] sm:$0xff]
    %v4837 = vld [vmem:[#allocation2 + $0x2f8] sm:$0xff]
    %v4838 = vld [vmem:[#allocation2 + $0x300] sm:$0xff]
    %v4839 = vld [vmem:[#allocation2 + $0x308] sm:$0xff]
    %v4840 = vld [vmem:[#allocation2 + $0x310] sm:$0xff]
    %v4841 = vld [vmem:[#allocation2 + $0x318] sm:$0xff]
    %v4842 = vld [vmem:[#allocation2 + $0x320] sm:$0xff]
    %v4843 = vld [vmem:[#allocation2 + $0x328] sm:$0xff]
    %v4844 = vld [vmem:[#allocation2 + $0x330] sm:$0xff]
    %v4845 = vld [vmem:[#allocation2 + $0x338] sm:$0xff]
    %v4846 = vld [vmem:[#allocation2 + $0x340] sm:$0xff]
    %v4847 = vld [vmem:[#allocation2 + $0x348] sm:$0xff]
    %v4848 = vld [vmem:[#allocation2 + $0x350] sm:$0xff]
    %v4849 = vld [vmem:[#allocation2 + $0x358] sm:$0xff]
    %v4850 = vld [vmem:[#allocation2 + $0x360] sm:$0xff]
    %v4851 = vld [vmem:[#allocation2 + $0x368] sm:$0xff]
    %v4852 = vld [vmem:[#allocation2 + $0x370] sm:$0xff]
    %v4853 = vld [vmem:[#allocation2 + $0x378] sm:$0xff]
    %v4854 = vld [vmem:[#allocation2 + $0x380] sm:$0xff]
    %v4855 = vld [vmem:[#allocation2 + $0x388] sm:$0xff]
    %v4856 = vld [vmem:[#allocation2 + $0x390] sm:$0xff]
    %v4857 = vld [vmem:[#allocation2 + $0x398] sm:$0xff]
    %v4858 = vld [vmem:[#allocation2 + $0x3a0] sm:$0xff]
    %v4859 = vld [vmem:[#allocation2 + $0x3a8] sm:$0xff]
    %v4860 = vld [vmem:[#allocation2 + $0x3b0] sm:$0xff]
    %v4861 = vld [vmem:[#allocation2 + $0x3b8] sm:$0xff]
    %v4862 = vld [vmem:[#allocation2 + $0x3c0] sm:$0xff]
    %v4863 = vld [vmem:[#allocation2 + $0x3c8] sm:$0xff]
    %v4864 = vld [vmem:[#allocation2 + $0x3d0] sm:$0xff]
    %v4865 = vld [vmem:[#allocation2 + $0x3d8] sm:$0xff]
    %v4866 = vld [vmem:[#allocation2 + $0x3e0] sm:$0xff]
    %v4867 = vld [vmem:[#allocation2 + $0x3e8] sm:$0xff]
    %v4868 = vld [vmem:[#allocation2 + $0x3f0] sm:$0xff]
    %v4869 = vld [vmem:[#allocation2 + $0x3f8] sm:$0xff]
    %v4870 = vld [vmem:[#allocation2 + $0x400] sm:$0xff]
    %v4871 = vld [vmem:[#allocation2 + $0x408] sm:$0xff]
    %v4872 = vld [vmem:[#allocation2 + $0x410] sm:$0xff]
    %v4873 = vld [vmem:[#allocation2 + $0x418] sm:$0xff]
    %v4874 = vld [vmem:[#allocation2 + $0x420] sm:$0xff]
    %v4875 = vld [vmem:[#allocation2 + $0x428] sm:$0xff]
    %v4876 = vld [vmem:[#allocation2 + $0x430] sm:$0xff]
    %v4877 = vld [vmem:[#allocation2 + $0x438] sm:$0xff]
    %v4878 = vld [vmem:[#allocation2 + $0x440] sm:$0xff]
    %v4879 = vld [vmem:[#allocation2 + $0x448] sm:$0xff]
    %v4880 = vld [vmem:[#allocation2 + $0x450] sm:$0xff]
    %v4881 = vld [vmem:[#allocation2 + $0x458] sm:$0xff]
    %v4882 = vld [vmem:[#allocation2 + $0x460] sm:$0xff]
    %v4883 = vld [vmem:[#allocation2 + $0x468] sm:$0xff]
    %v4884 = vld [vmem:[#allocation2 + $0x470] sm:$0xff]
    %v4885 = vld [vmem:[#allocation2 + $0x478] sm:$0xff]
    %v4886 = vld [vmem:[#allocation2 + $0x480] sm:$0xff]
    %v4887 = vld [vmem:[#allocation2 + $0x488] sm:$0xff]
    %v4888 = vld [vmem:[#allocation2 + $0x490] sm:$0xff]
    %v4889 = vld [vmem:[#allocation2 + $0x498] sm:$0xff]
    %v4890 = vld [vmem:[#allocation2 + $0x4a0] sm:$0xff]
    %v4891 = vld [vmem:[#allocation2 + $0x4a8] sm:$0xff]
    %v4892 = vld [vmem:[#allocation2 + $0x4b0] sm:$0xff]
    %v4893 = vld [vmem:[#allocation2 + $0x4b8] sm:$0xff]
    %v4894 = vld [vmem:[#allocation2 + $0x4c0] sm:$0xff]
    %v4895 = vld [vmem:[#allocation2 + $0x4c8] sm:$0xff]
    %v4896 = vld [vmem:[#allocation2 + $0x4d0] sm:$0xff]
    %v4897 = vld [vmem:[#allocation2 + $0x4d8] sm:$0xff]
    %v4898 = vld [vmem:[#allocation2 + $0x4e0] sm:$0xff]
    %v4899 = vld [vmem:[#allocation2 + $0x4e8] sm:$0xff]
    %v4900 = vld [vmem:[#allocation2 + $0x4f0] sm:$0xff]
    %v4901 = vld [vmem:[#allocation2 + $0x4f8] sm:$0xff]
    %v4902 = vld [vmem:[#allocation2 + $0x500] sm:$0xff]
    %v4903 = vld [vmem:[#allocation2 + $0x508] sm:$0xff]
    %v4904 = vld [vmem:[#allocation2 + $0x510] sm:$0xff]
    %v4905 = vld [vmem:[#allocation2 + $0x518] sm:$0xff]
    %v4906 = vld [vmem:[#allocation2 + $0x520] sm:$0xff]
    %v4907 = vld [vmem:[#allocation2 + $0x528] sm:$0xff]
    %v4908 = vld [vmem:[#allocation2 + $0x530] sm:$0xff]
    %v4909 = vld [vmem:[#allocation2 + $0x538] sm:$0xff]
    %v4910 = vld [vmem:[#allocation2 + $0x540] sm:$0xff]
    %v4911 = vld [vmem:[#allocation2 + $0x548] sm:$0xff]
    %v4912 = vld [vmem:[#allocation2 + $0x550] sm:$0xff]
    %v4913 = vld [vmem:[#allocation2 + $0x558] sm:$0xff]
    %v4914 = vld [vmem:[#allocation2 + $0x560] sm:$0xff]
    %v4915 = vld [vmem:[#allocation2 + $0x568] sm:$0xff]
    %v4916 = vld [vmem:[#allocation2 + $0x570] sm:$0xff]
    %v4917 = vld [vmem:[#allocation2 + $0x578] sm:$0xff]
    %v4918 = vld [vmem:[#allocation2 + $0x580] sm:$0xff]
    %v4919 = vld [vmem:[#allocation2 + $0x588] sm:$0xff]
    %v4920 = vld [vmem:[#allocation2 + $0x590] sm:$0xff]
    %v4921 = vld [vmem:[#allocation2 + $0x598] sm:$0xff]
    %v4922 = vld [vmem:[#allocation2 + $0x5a0] sm:$0xff]
    %v4923 = vld [vmem:[#allocation2 + $0x5a8] sm:$0xff]
    %v4924 = vld [vmem:[#allocation2 + $0x5b0] sm:$0xff]
    %v4925 = vld [vmem:[#allocation2 + $0x5b8] sm:$0xff]
    %v4926 = vld [vmem:[#allocation2 + $0x5c0] sm:$0xff]
    %v4927 = vld [vmem:[#allocation2 + $0x5c8] sm:$0xff]
    %v4928 = vld [vmem:[#allocation2 + $0x5d0] sm:$0xff]
    %v4929 = vld [vmem:[#allocation2 + $0x5d8] sm:$0xff]
    %v4930 = vld [vmem:[#allocation2 + $0x5e0] sm:$0xff]
    %v4931 = vld [vmem:[#allocation2 + $0x5e8] sm:$0xff]
    %v4932 = vld [vmem:[#allocation2 + $0x5f0] sm:$0xff]
    %v4933 = vld [vmem:[#allocation2 + $0x5f8] sm:$0xff]
    %v4934 = vld [vmem:[#allocation2 + $0x600] sm:$0xff]
    %v4935 = vld [vmem:[#allocation2 + $0x608] sm:$0xff]
    %v4936 = vld [vmem:[#allocation2 + $0x610] sm:$0xff]
    %v4937 = vld [vmem:[#allocation2 + $0x618] sm:$0xff]
    %v4938 = vld [vmem:[#allocation2 + $0x620] sm:$0xff]
    %v4939 = vld [vmem:[#allocation2 + $0x628] sm:$0xff]
    %v4940 = vld [vmem:[#allocation2 + $0x630] sm:$0xff]
    %v4941 = vld [vmem:[#allocation2 + $0x638] sm:$0xff]
    %v4942 = vld [vmem:[#allocation2 + $0x640] sm:$0xff]
    %v4943 = vld [vmem:[#allocation2 + $0x648] sm:$0xff]
    %v4944 = vld [vmem:[#allocation2 + $0x650] sm:$0xff]
    %v4945 = vld [vmem:[#allocation2 + $0x658] sm:$0xff]
    %v4946 = vld [vmem:[#allocation2 + $0x660] sm:$0xff]
    %v4947 = vld [vmem:[#allocation2 + $0x668] sm:$0xff]
    %v4948 = vld [vmem:[#allocation2 + $0x670] sm:$0xff]
    %v4949 = vld [vmem:[#allocation2 + $0x678] sm:$0xff]
    %v4950 = vld [vmem:[#allocation2 + $0x680] sm:$0xff]
    %v4951 = vld [vmem:[#allocation2 + $0x688] sm:$0xff]
    %v4952 = vld [vmem:[#allocation2 + $0x690] sm:$0xff]
    %v4953 = vld [vmem:[#allocation2 + $0x698] sm:$0xff]
    %v4954 = vld [vmem:[#allocation2 + $0x6a0] sm:$0xff]
    %v4955 = vld [vmem:[#allocation2 + $0x6a8] sm:$0xff]
    %v4956 = vld [vmem:[#allocation2 + $0x6b0] sm:$0xff]
    %v4957 = vld [vmem:[#allocation2 + $0x6b8] sm:$0xff]
    %v4958 = vld [vmem:[#allocation2 + $0x6c0] sm:$0xff]
    %v4959 = vld [vmem:[#allocation2 + $0x6c8] sm:$0xff]
    %v4960 = vld [vmem:[#allocation2 + $0x6d0] sm:$0xff]
    %v4961 = vld [vmem:[#allocation2 + $0x6d8] sm:$0xff]
    %v4962 = vld [vmem:[#allocation2 + $0x6e0] sm:$0xff]
    %v4963 = vld [vmem:[#allocation2 + $0x6e8] sm:$0xff]
    %v4964 = vld [vmem:[#allocation2 + $0x6f0] sm:$0xff]
    %v4965 = vld [vmem:[#allocation2 + $0x6f8] sm:$0xff]
    %v4966 = vld [vmem:[#allocation2 + $0x700] sm:$0xff]
    %v4967 = vld [vmem:[#allocation2 + $0x708] sm:$0xff]
    %v4968 = vld [vmem:[#allocation2 + $0x710] sm:$0xff]
    %v4969 = vld [vmem:[#allocation2 + $0x718] sm:$0xff]
    %v4970 = vld [vmem:[#allocation2 + $0x720] sm:$0xff]
    %v4971 = vld [vmem:[#allocation2 + $0x728] sm:$0xff]
    %v4972 = vld [vmem:[#allocation2 + $0x730] sm:$0xff]
    %v4973 = vld [vmem:[#allocation2 + $0x738] sm:$0xff]
    %v4974 = vld [vmem:[#allocation2 + $0x740] sm:$0xff]
    %v4975 = vld [vmem:[#allocation2 + $0x748] sm:$0xff]
    %v4976 = vld [vmem:[#allocation2 + $0x750] sm:$0xff]
    %v4977 = vld [vmem:[#allocation2 + $0x758] sm:$0xff]
    %v4978 = vld [vmem:[#allocation2 + $0x760] sm:$0xff]
    %v4979 = vld [vmem:[#allocation2 + $0x768] sm:$0xff]
    %v4980 = vld [vmem:[#allocation2 + $0x770] sm:$0xff]
    %v4981 = vld [vmem:[#allocation2 + $0x778] sm:$0xff]
    %v4982 = vld [vmem:[#allocation2 + $0x780] sm:$0xff]
    %v4983 = vld [vmem:[#allocation2 + $0x788] sm:$0xff]
    %v4984 = vld [vmem:[#allocation2 + $0x790] sm:$0xff]
    %v4985 = vld [vmem:[#allocation2 + $0x798] sm:$0xff]
    %v4986 = vld [vmem:[#allocation2 + $0x7a0] sm:$0xff]
    %v4987 = vld [vmem:[#allocation2 + $0x7a8] sm:$0xff]
    %v4988 = vld [vmem:[#allocation2 + $0x7b0] sm:$0xff]
    %v4989 = vld [vmem:[#allocation2 + $0x7b8] sm:$0xff]
    %v4990 = vld [vmem:[#allocation2 + $0x7c0] sm:$0xff]
    %v4991 = vld [vmem:[#allocation2 + $0x7c8] sm:$0xff]
    %v4992 = vld [vmem:[#allocation2 + $0x7d0] sm:$0xff]
    %v4993 = vld [vmem:[#allocation2 + $0x7d8] sm:$0xff]
    %v4994 = vld [vmem:[#allocation2 + $0x7e0] sm:$0xff]
    %v4995 = vld [vmem:[#allocation2 + $0x7e8] sm:$0xff]
    %v4996 = vld [vmem:[#allocation2 + $0x7f0] sm:$0xff]
    %v4997 = vld [vmem:[#allocation2 + $0x7f8] sm:$0xff]
    %v4998 = vld [vmem:[#allocation2 + $0x800] sm:$0xff]
    %v4999 = vld [vmem:[#allocation2 + $0x808] sm:$0xff]
    %v5000 = vld [vmem:[#allocation2 + $0x810] sm:$0xff]
    %v5001 = vld [vmem:[#allocation2 + $0x818] sm:$0xff]
    %v5002 = vld [vmem:[#allocation2 + $0x820] sm:$0xff]
    %v5003 = vld [vmem:[#allocation2 + $0x828] sm:$0xff]
    %v5004 = vld [vmem:[#allocation2 + $0x830] sm:$0xff]
    %v5005 = vld [vmem:[#allocation2 + $0x838] sm:$0xff]
    %v5006 = vld [vmem:[#allocation2 + $0x840] sm:$0xff]
    %v5007 = vld [vmem:[#allocation2 + $0x848] sm:$0xff]
    %v5008 = vld [vmem:[#allocation2 + $0x850] sm:$0xff]
    %v5009 = vld [vmem:[#allocation2 + $0x858] sm:$0xff]
    %v5010 = vld [vmem:[#allocation2 + $0x860] sm:$0xff]
    %v5011 = vld [vmem:[#allocation2 + $0x868] sm:$0xff]
    %v5012 = vld [vmem:[#allocation2 + $0x870] sm:$0xff]
    %v5013 = vld [vmem:[#allocation2 + $0x878] sm:$0xff]
    %v5014 = vld [vmem:[#allocation2 + $0x880] sm:$0xff]
    %v5015 = vld [vmem:[#allocation2 + $0x888] sm:$0xff]
    %v5016 = vld [vmem:[#allocation2 + $0x890] sm:$0xff]
    %v5017 = vld [vmem:[#allocation2 + $0x898] sm:$0xff]
    %v5018 = vld [vmem:[#allocation2 + $0x8a0] sm:$0xff]
    %v5019 = vld [vmem:[#allocation2 + $0x8a8] sm:$0xff]
    %v5020 = vld [vmem:[#allocation2 + $0x8b0] sm:$0xff]
    %v5021 = vld [vmem:[#allocation2 + $0x8b8] sm:$0xff]
    %v5022 = vld [vmem:[#allocation2 + $0x8c0] sm:$0xff]
    %v5023 = vld [vmem:[#allocation2 + $0x8c8] sm:$0xff]
    %v5024 = vld [vmem:[#allocation2 + $0x8d0] sm:$0xff]
    %v5025 = vld [vmem:[#allocation2 + $0x8d8] sm:$0xff]
    %v5026 = vld [vmem:[#allocation2 + $0x8e0] sm:$0xff]
    %v5027 = vld [vmem:[#allocation2 + $0x8e8] sm:$0xff]
    %v5028 = vld [vmem:[#allocation2 + $0x8f0] sm:$0xff]
    %v5029 = vld [vmem:[#allocation2 + $0x8f8] sm:$0xff]
    %v5030 = vld [vmem:[#allocation2 + $0x900] sm:$0xff]
    %v5031 = vld [vmem:[#allocation2 + $0x908] sm:$0xff]
    %v5032 = vld [vmem:[#allocation2 + $0x910] sm:$0xff]
    %v5033 = vld [vmem:[#allocation2 + $0x918] sm:$0xff]
    %v5034 = vld [vmem:[#allocation2 + $0x920] sm:$0xff]
    %v5035 = vld [vmem:[#allocation2 + $0x928] sm:$0xff]
    %v5036 = vld [vmem:[#allocation2 + $0x930] sm:$0xff]
    %v5037 = vld [vmem:[#allocation2 + $0x938] sm:$0xff]
    %v5038 = vld [vmem:[#allocation2 + $0x940] sm:$0xff]
    %v5039 = vld [vmem:[#allocation2 + $0x948] sm:$0xff]
    %v5040 = vld [vmem:[#allocation2 + $0x950] sm:$0xff]
    %v5041 = vld [vmem:[#allocation2 + $0x958] sm:$0xff]
    %v5042 = vld [vmem:[#allocation2 + $0x960] sm:$0xff]
    %v5043 = vld [vmem:[#allocation2 + $0x968] sm:$0xff]
    %v5044 = vld [vmem:[#allocation2 + $0x970] sm:$0xff]
    %v5045 = vld [vmem:[#allocation2 + $0x978] sm:$0xff]
    %v5046 = vld [vmem:[#allocation2 + $0x980] sm:$0xff]
    %v5047 = vld [vmem:[#allocation2 + $0x988] sm:$0xff]
    %v5048 = vld [vmem:[#allocation2 + $0x990] sm:$0xff]
    %v5049 = vld [vmem:[#allocation2 + $0x998] sm:$0xff]
    %v5050 = vld [vmem:[#allocation2 + $0x9a0] sm:$0xff]
    %v5051 = vld [vmem:[#allocation2 + $0x9a8] sm:$0xff]
    %v5052 = vld [vmem:[#allocation2 + $0x9b0] sm:$0xff]
    %v5053 = vld [vmem:[#allocation2 + $0x9b8] sm:$0xff]
    %v5054 = vld [vmem:[#allocation2 + $0x9c0] sm:$0xff]
    %v5055 = vld [vmem:[#allocation2 + $0x9c8] sm:$0xff]
    %v5056 = vld [vmem:[#allocation2 + $0x9d0] sm:$0xff]
    %v5057 = vld [vmem:[#allocation2 + $0x9d8] sm:$0xff]
    %v5058 = vld [vmem:[#allocation2 + $0x9e0] sm:$0xff]
    %v5059 = vld [vmem:[#allocation2 + $0x9e8] sm:$0xff]
    %v5060 = vld [vmem:[#allocation2 + $0x9f0] sm:$0xff]
    %v5061 = vld [vmem:[#allocation2 + $0x9f8] sm:$0xff]
    %v5062 = vld [vmem:[#allocation2 + $0xa00] sm:$0xff]
    %v5063 = vld [vmem:[#allocation2 + $0xa08] sm:$0xff]
    %v5064 = vld [vmem:[#allocation2 + $0xa10] sm:$0xff]
    %v5065 = vld [vmem:[#allocation2 + $0xa18] sm:$0xff]
    %v5066 = vld [vmem:[#allocation2 + $0xa20] sm:$0xff]
    %v5067 = vld [vmem:[#allocation2 + $0xa28] sm:$0xff]
    %v5068 = vld [vmem:[#allocation2 + $0xa30] sm:$0xff]
    %v5069 = vld [vmem:[#allocation2 + $0xa38] sm:$0xff]
    %v5070 = vld [vmem:[#allocation2 + $0xa40] sm:$0xff]
    %v5071 = vld [vmem:[#allocation2 + $0xa48] sm:$0xff]
    %v5072 = vld [vmem:[#allocation2 + $0xa50] sm:$0xff]
    %v5073 = vld [vmem:[#allocation2 + $0xa58] sm:$0xff]
    %v5074 = vld [vmem:[#allocation2 + $0xa60] sm:$0xff]
    %v5075 = vld [vmem:[#allocation2 + $0xa68] sm:$0xff]
    %v5076 = vld [vmem:[#allocation2 + $0xa70] sm:$0xff]
    %v5077 = vld [vmem:[#allocation2 + $0xa78] sm:$0xff]
    %v5078 = vld [vmem:[#allocation2 + $0xa80] sm:$0xff]
    %v5079 = vld [vmem:[#allocation2 + $0xa88] sm:$0xff]
    %v5080 = vld [vmem:[#allocation2 + $0xa90] sm:$0xff]
    %v5081 = vld [vmem:[#allocation2 + $0xa98] sm:$0xff]
    %v5082 = vld [vmem:[#allocation2 + $0xaa0] sm:$0xff]
    %v5083 = vld [vmem:[#allocation2 + $0xaa8] sm:$0xff]
    %v5084 = vld [vmem:[#allocation2 + $0xab0] sm:$0xff]
    %v5085 = vld [vmem:[#allocation2 + $0xab8] sm:$0xff]
    %v5086 = vld [vmem:[#allocation2 + $0xac0] sm:$0xff]
    %v5087 = vld [vmem:[#allocation2 + $0xac8] sm:$0xff]
    %v5088 = vld [vmem:[#allocation2 + $0xad0] sm:$0xff]
    %v5089 = vld [vmem:[#allocation2 + $0xad8] sm:$0xff]
    %v5090 = vld [vmem:[#allocation2 + $0xae0] sm:$0xff]
    %v5091 = vld [vmem:[#allocation2 + $0xae8] sm:$0xff]
    %v5092 = vld [vmem:[#allocation2 + $0xaf0] sm:$0xff]
    %v5093 = vld [vmem:[#allocation2 + $0xaf8] sm:$0xff]
    %v5094 = vld [vmem:[#allocation2 + $0xb00] sm:$0xff]
    %v5095 = vld [vmem:[#allocation2 + $0xb08] sm:$0xff]
    %v5096 = vld [vmem:[#allocation2 + $0xb10] sm:$0xff]
    %v5097 = vld [vmem:[#allocation2 + $0xb18] sm:$0xff]
    %v5098 = vld [vmem:[#allocation2 + $0xb20] sm:$0xff]
    %v5099 = vld [vmem:[#allocation2 + $0xb28] sm:$0xff]
    %v5100 = vld [vmem:[#allocation2 + $0xb30] sm:$0xff]
    %v5101 = vld [vmem:[#allocation2 + $0xb38] sm:$0xff]
    %v5102 = vld [vmem:[#allocation2 + $0xb40] sm:$0xff]
    %v5103 = vld [vmem:[#allocation2 + $0xb48] sm:$0xff]
    %v5104 = vld [vmem:[#allocation2 + $0xb50] sm:$0xff]
    %v5105 = vld [vmem:[#allocation2 + $0xb58] sm:$0xff]
    %v5106 = vld [vmem:[#allocation2 + $0xb60] sm:$0xff]
    %v5107 = vld [vmem:[#allocation2 + $0xb68] sm:$0xff]
    %v5108 = vld [vmem:[#allocation2 + $0xb70] sm:$0xff]
    %v5109 = vld [vmem:[#allocation2 + $0xb78] sm:$0xff]
    %v5110 = vld [vmem:[#allocation2 + $0xb80] sm:$0xff]
    %v5111 = vld [vmem:[#allocation2 + $0xb88] sm:$0xff]
    %v5112 = vld [vmem:[#allocation2 + $0xb90] sm:$0xff]
    %v5113 = vld [vmem:[#allocation2 + $0xb98] sm:$0xff]
    %v5114 = vld [vmem:[#allocation2 + $0xba0] sm:$0xff]
    %v5115 = vld [vmem:[#allocation2 + $0xba8] sm:$0xff]
    %v5116 = vld [vmem:[#allocation2 + $0xbb0] sm:$0xff]
    %v5117 = vld [vmem:[#allocation2 + $0xbb8] sm:$0xff]
    %v5118 = vld [vmem:[#allocation2 + $0xbc0] sm:$0xff]
    %v5119 = vld [vmem:[#allocation2 + $0xbc8] sm:$0xff]
    %v5120 = vld [vmem:[#allocation2 + $0xbd0] sm:$0xff]
    %v5121 = vld [vmem:[#allocation2 + $0xbd8] sm:$0xff]
    %v5122 = vld [vmem:[#allocation2 + $0xbe0] sm:$0xff]
    %v5123 = vld [vmem:[#allocation2 + $0xbe8] sm:$0xff]
    %v5124 = vld [vmem:[#allocation2 + $0xbf0] sm:$0xff]
    %v5125 = vld [vmem:[#allocation2 + $0xbf8] sm:$0xff]
    %v5126 = vld [vmem:[#allocation2 + $0xc00] sm:$0xff]
    %v5127 = vld [vmem:[#allocation2 + $0xc08] sm:$0xff]
    %v5128 = vld [vmem:[#allocation2 + $0xc10] sm:$0xff]
    %v5129 = vld [vmem:[#allocation2 + $0xc18] sm:$0xff]
    %v5130 = vld [vmem:[#allocation2 + $0xc20] sm:$0xff]
    %v5131 = vld [vmem:[#allocation2 + $0xc28] sm:$0xff]
    %v5132 = vld [vmem:[#allocation2 + $0xc30] sm:$0xff]
    %v5133 = vld [vmem:[#allocation2 + $0xc38] sm:$0xff]
    %v5134 = vld [vmem:[#allocation2 + $0xc40] sm:$0xff]
    %v5135 = vld [vmem:[#allocation2 + $0xc48] sm:$0xff]
    %v5136 = vld [vmem:[#allocation2 + $0xc50] sm:$0xff]
    %v5137 = vld [vmem:[#allocation2 + $0xc58] sm:$0xff]
    %v5138 = vld [vmem:[#allocation2 + $0xc60] sm:$0xff]
    %v5139 = vld [vmem:[#allocation2 + $0xc68] sm:$0xff]
    %v5140 = vld [vmem:[#allocation2 + $0xc70] sm:$0xff]
    %v5141 = vld [vmem:[#allocation2 + $0xc78] sm:$0xff]
    %v5142 = vld [vmem:[#allocation2 + $0xc80] sm:$0xff]
    %v5143 = vld [vmem:[#allocation2 + $0xc88] sm:$0xff]
    %v5144 = vld [vmem:[#allocation2 + $0xc90] sm:$0xff]
    %v5145 = vld [vmem:[#allocation2 + $0xc98] sm:$0xff]
    %v5146 = vld [vmem:[#allocation2 + $0xca0] sm:$0xff]
    %v5147 = vld [vmem:[#allocation2 + $0xca8] sm:$0xff]
    %v5148 = vld [vmem:[#allocation2 + $0xcb0] sm:$0xff]
    %v5149 = vld [vmem:[#allocation2 + $0xcb8] sm:$0xff]
    %v5150 = vld [vmem:[#allocation2 + $0xcc0] sm:$0xff]
    %v5151 = vld [vmem:[#allocation2 + $0xcc8] sm:$0xff]
    %v5152 = vld [vmem:[#allocation2 + $0xcd0] sm:$0xff]
    %v5153 = vld [vmem:[#allocation2 + $0xcd8] sm:$0xff]
    %v5154 = vld [vmem:[#allocation2 + $0xce0] sm:$0xff]
    %v5155 = vld [vmem:[#allocation2 + $0xce8] sm:$0xff]
    %v5156 = vld [vmem:[#allocation2 + $0xcf0] sm:$0xff]
    %v5157 = vld [vmem:[#allocation2 + $0xcf8] sm:$0xff]
    %v5158 = vld [vmem:[#allocation2 + $0xd00] sm:$0xff]
    %v5159 = vld [vmem:[#allocation2 + $0xd08] sm:$0xff]
    %v5160 = vld [vmem:[#allocation2 + $0xd10] sm:$0xff]
    %v5161 = vld [vmem:[#allocation2 + $0xd18] sm:$0xff]
    %v5162 = vld [vmem:[#allocation2 + $0xd20] sm:$0xff]
    %v5163 = vld [vmem:[#allocation2 + $0xd28] sm:$0xff]
    %v5164 = vld [vmem:[#allocation2 + $0xd30] sm:$0xff]
    %v5165 = vld [vmem:[#allocation2 + $0xd38] sm:$0xff]
    %v5166 = vld [vmem:[#allocation2 + $0xd40] sm:$0xff]
    %v5167 = vld [vmem:[#allocation2 + $0xd48] sm:$0xff]
    %v5168 = vld [vmem:[#allocation2 + $0xd50] sm:$0xff]
    %v5169 = vld [vmem:[#allocation2 + $0xd58] sm:$0xff]
    %v5170 = vld [vmem:[#allocation2 + $0xd60] sm:$0xff]
    %v5171 = vld [vmem:[#allocation2 + $0xd68] sm:$0xff]
    %v5172 = vld [vmem:[#allocation2 + $0xd70] sm:$0xff]
    %v5173 = vld [vmem:[#allocation2 + $0xd78] sm:$0xff]
    %v5174 = vld [vmem:[#allocation2 + $0xd80] sm:$0xff]
    %v5175 = vld [vmem:[#allocation2 + $0xd88] sm:$0xff]
    %v5176 = vld [vmem:[#allocation2 + $0xd90] sm:$0xff]
    %v5177 = vld [vmem:[#allocation2 + $0xd98] sm:$0xff]
    %v5178 = vld [vmem:[#allocation2 + $0xda0] sm:$0xff]
    %v5179 = vld [vmem:[#allocation2 + $0xda8] sm:$0xff]
    %v5180 = vld [vmem:[#allocation2 + $0xdb0] sm:$0xff]
    %v5181 = vld [vmem:[#allocation2 + $0xdb8] sm:$0xff]
    %v5182 = vld [vmem:[#allocation2 + $0xdc0] sm:$0xff]
    %v5183 = vld [vmem:[#allocation2 + $0xdc8] sm:$0xff]
    %v5184 = vld [vmem:[#allocation2 + $0xdd0] sm:$0xff]
    %v5185 = vld [vmem:[#allocation2 + $0xdd8] sm:$0xff]
    %v5186 = vld [vmem:[#allocation2 + $0xde0] sm:$0xff]
    %v5187 = vld [vmem:[#allocation2 + $0xde8] sm:$0xff]
    %v5188 = vld [vmem:[#allocation2 + $0xdf0] sm:$0xff]
    %v5189 = vld [vmem:[#allocation2 + $0xdf8] sm:$0xff]
    %v5190 = vld [vmem:[#allocation2 + $0xe00] sm:$0xff]
    %v5191 = vld [vmem:[#allocation2 + $0xe08] sm:$0xff]
    %v5192 = vld [vmem:[#allocation2 + $0xe10] sm:$0xff]
    %v5193 = vld [vmem:[#allocation2 + $0xe18] sm:$0xff]
    %v5194 = vld [vmem:[#allocation2 + $0xe20] sm:$0xff]
    %v5195 = vld [vmem:[#allocation2 + $0xe28] sm:$0xff]
    %v5196 = vld [vmem:[#allocation2 + $0xe30] sm:$0xff]
    %v5197 = vld [vmem:[#allocation2 + $0xe38] sm:$0xff]
    %v5198 = vld [vmem:[#allocation2 + $0xe40] sm:$0xff]
    %v5199 = vld [vmem:[#allocation2 + $0xe48] sm:$0xff]
    %v5200 = vld [vmem:[#allocation2 + $0xe50] sm:$0xff]
    %v5201 = vld [vmem:[#allocation2 + $0xe58] sm:$0xff]
    %v5202 = vld [vmem:[#allocation2 + $0xe60] sm:$0xff]
    %v5203 = vld [vmem:[#allocation2 + $0xe68] sm:$0xff]
    %v5204 = vld [vmem:[#allocation2 + $0xe70] sm:$0xff]
    %v5205 = vld [vmem:[#allocation2 + $0xe78] sm:$0xff]
    %v5206 = vld [vmem:[#allocation2 + $0xe80] sm:$0xff]
    %v5207 = vld [vmem:[#allocation2 + $0xe88] sm:$0xff]
    %v5208 = vld [vmem:[#allocation2 + $0xe90] sm:$0xff]
    %v5209 = vld [vmem:[#allocation2 + $0xe98] sm:$0xff]
    %v5210 = vld [vmem:[#allocation2 + $0xea0] sm:$0xff]
    %v5211 = vld [vmem:[#allocation2 + $0xea8] sm:$0xff]
    %v5212 = vld [vmem:[#allocation2 + $0xeb0] sm:$0xff]
    %v5213 = vld [vmem:[#allocation2 + $0xeb8] sm:$0xff]
    %v5214 = vld [vmem:[#allocation2 + $0xec0] sm:$0xff]
    %v5215 = vld [vmem:[#allocation2 + $0xec8] sm:$0xff]
    %v5216 = vld [vmem:[#allocation2 + $0xed0] sm:$0xff]
    %v5217 = vld [vmem:[#allocation2 + $0xed8] sm:$0xff]
    %v5218 = vld [vmem:[#allocation2 + $0xee0] sm:$0xff]
    %v5219 = vld [vmem:[#allocation2 + $0xee8] sm:$0xff]
    %v5220 = vld [vmem:[#allocation2 + $0xef0] sm:$0xff]
    %v5221 = vld [vmem:[#allocation2 + $0xef8] sm:$0xff]
    %v5222 = vld [vmem:[#allocation2 + $0xf00] sm:$0xff]
    %v5223 = vld [vmem:[#allocation2 + $0xf08] sm:$0xff]
    %v5224 = vld [vmem:[#allocation2 + $0xf10] sm:$0xff]
    %v5225 = vld [vmem:[#allocation2 + $0xf18] sm:$0xff]
    %v5226 = vld [vmem:[#allocation2 + $0xf20] sm:$0xff]
    %v5227 = vld [vmem:[#allocation2 + $0xf28] sm:$0xff]
    %v5228 = vld [vmem:[#allocation2 + $0xf30] sm:$0xff]
    %v5229 = vld [vmem:[#allocation2 + $0xf38] sm:$0xff]
    %v5230 = vld [vmem:[#allocation2 + $0xf40] sm:$0xff]
    %v5231 = vld [vmem:[#allocation2 + $0xf48] sm:$0xff]
    %v5232 = vld [vmem:[#allocation2 + $0xf50] sm:$0xff]
    %v5233 = vld [vmem:[#allocation2 + $0xf58] sm:$0xff]
    %v5234 = vld [vmem:[#allocation2 + $0xf60] sm:$0xff]
    %v5235 = vld [vmem:[#allocation2 + $0xf68] sm:$0xff]
    %v5236 = vld [vmem:[#allocation2 + $0xf70] sm:$0xff]
    %v5237 = vld [vmem:[#allocation2 + $0xf78] sm:$0xff]
    %v5238 = vld [vmem:[#allocation2 + $0xf80] sm:$0xff]
    %v5239 = vld [vmem:[#allocation2 + $0xf88] sm:$0xff]
    %v5240 = vld [vmem:[#allocation2 + $0xf90] sm:$0xff]
    %v5241 = vld [vmem:[#allocation2 + $0xf98] sm:$0xff]
    %v5242 = vld [vmem:[#allocation2 + $0xfa0] sm:$0xff]
    %v5243 = vld [vmem:[#allocation2 + $0xfa8] sm:$0xff]
    %v5244 = vld [vmem:[#allocation2 + $0xfb0] sm:$0xff]
    %v5245 = vld [vmem:[#allocation2 + $0xfb8] sm:$0xff]
    %v5246 = vld [vmem:[#allocation2 + $0xfc0] sm:$0xff]
    %v5247 = vld [vmem:[#allocation2 + $0xfc8] sm:$0xff]
    %v5248 = vld [vmem:[#allocation2 + $0xfd0] sm:$0xff]
    %v5249 = vld [vmem:[#allocation2 + $0xfd8] sm:$0xff]
    %v5250 = vld [vmem:[#allocation2 + $0xfe0] sm:$0xff]
    %v5251 = vld [vmem:[#allocation2 + $0xfe8] sm:$0xff]
    %v5252 = vld [vmem:[#allocation2 + $0xff0] sm:$0xff]
    %v5253 = vld [vmem:[#allocation2 + $0xff8] sm:$0xff]
    %v5254 = vld [vmem:[%s4] sm:$0xff]
    %v5256 = vlaneseq
    %v5257 = vshrl.u32 %v5256, 7
    %v5258 = vsub.s32 0, %v5257
    %v5259 = vrot.slane %v5254, %v5258
    %v5260 = vlaneseq
    %v5261 = vshrl.u32 %v5260, 7
    %v5262 = vsub.s32 1, %v5261
    %v5263 = vrot.slane %v5254, %v5262
    %v5264 = vlaneseq
    %v5265 = vshrl.u32 %v5264, 7
    %v5266 = vsub.s32 2, %v5265
    %v5267 = vrot.slane %v5254, %v5266
    %v5268 = vlaneseq
    %v5269 = vshrl.u32 %v5268, 7
    %v5270 = vsub.s32 3, %v5269
    %v5271 = vrot.slane %v5254, %v5270
    %v5272 = vlaneseq
    %v5273 = vshrl.u32 %v5272, 7
    %v5274 = vsub.s32 4, %v5273
    %v5275 = vrot.slane %v5254, %v5274
    %v5276 = vlaneseq
    %v5277 = vshrl.u32 %v5276, 7
    %v5278 = vsub.s32 5, %v5277
    %v5279 = vrot.slane %v5254, %v5278
    %v5280 = vlaneseq
    %v5281 = vshrl.u32 %v5280, 7
    %v5282 = vsub.s32 6, %v5281
    %v5283 = vrot.slane %v5254, %v5282
    %v5284 = vlaneseq
    %v5285 = vshrl.u32 %v5284, 7
    %v5286 = vsub.s32 7, %v5285
    %v5287 = vrot.slane %v5254, %v5286
    %5296 = vmatprep.subr.bf16.mxu0 %v4743
    %5297 = vmatpush1.bf16.msra.mxu0 %v4742
    %5298 = vmatprep.subr.bf16.mxu0 %v4751
    %5299 = vmatpush1.bf16.msra.mxu0 %v4750
    %5300 = vmatprep.subr.bf16.mxu0 %v4759
    %5301 = vmatpush1.bf16.msra.mxu0 %v4758
    %5302 = vmatprep.subr.bf16.mxu0 %v4767
    %5303 = vmatpush1.bf16.msra.mxu0 %v4766
    %5304 = vmatprep.subr.bf16.mxu0 %v4775
    %5305 = vmatpush1.bf16.msra.mxu0 %v4774
    %5306 = vmatprep.subr.bf16.mxu0 %v4783
    %5307 = vmatpush1.bf16.msra.mxu0 %v4782
    %5308 = vmatprep.subr.bf16.mxu0 %v4791
    %5309 = vmatpush1.bf16.msra.mxu0 %v4790
    %5310 = vmatprep.subr.bf16.mxu0 %v4799
    %5311 = vmatpush1.bf16.msra.mxu0 %v4798
    %5312 = vmatprep.subr.bf16.mxu0 %v4807
    %5313 = vmatpush1.bf16.msra.mxu0 %v4806
    %5314 = vmatprep.subr.bf16.mxu0 %v4815
    %5315 = vmatpush1.bf16.msra.mxu0 %v4814
    %5316 = vmatprep.subr.bf16.mxu0 %v4823
    %5317 = vmatpush1.bf16.msra.mxu0 %v4822
    %5318 = vmatprep.subr.bf16.mxu0 %v4831
    %5319 = vmatpush1.bf16.msra.mxu0 %v4830
    %5320 = vmatprep.subr.bf16.mxu0 %v4839
    %5321 = vmatpush1.bf16.msra.mxu0 %v4838
    %5322 = vmatprep.subr.bf16.mxu0 %v4847
    %5323 = vmatpush1.bf16.msra.mxu0 %v4846
    %5324 = vmatprep.subr.bf16.mxu0 %v4855
    %5325 = vmatpush1.bf16.msra.mxu0 %v4854
    %5326 = vmatprep.subr.bf16.mxu0 %v4863
    %5327 = vmatpush1.bf16.msra.mxu0 %v4862
    %5328 = vmatprep.mubr.bf16.mxu0 %v4735
    %5329 = vmatmul.mubr.bf16.gmra.mrb[0].mxu0 %v4734
    %v5330 = vpop.f32.mrb[0].mxu0
    %v5331 = vadd.f32 %v5259, %v5330
    %v5332 = vpop.f32.mrb[0].mxu0
    %v5333 = vadd.f32 %v5263, %v5332
    %v5334 = vpop.f32.mrb[0].mxu0
    %v5335 = vadd.f32 %v5259, %v5334
    %v5336 = vpop.f32.mrb[0].mxu0
    %v5337 = vadd.f32 %v5263, %v5336
    %5338 = vdwg.mxu0
    %5339 = vmatprep.subr.bf16.mxu0 %v4871
    %5340 = vmatpush1.bf16.msra.mxu0 %v4870
    %5341 = vmatprep.subr.bf16.mxu0 %v4879
    %5342 = vmatpush1.bf16.msra.mxu0 %v4878
    %5343 = vmatprep.subr.bf16.mxu0 %v4887
    %5344 = vmatpush1.bf16.msra.mxu0 %v4886
    %5345 = vmatprep.subr.bf16.mxu0 %v4895
    %5346 = vmatpush1.bf16.msra.mxu0 %v4894
    %5347 = vmatprep.subr.bf16.mxu0 %v4903
    %5348 = vmatpush1.bf16.msra.mxu0 %v4902
    %5349 = vmatprep.subr.bf16.mxu0 %v4911
    %5350 = vmatpush1.bf16.msra.mxu0 %v4910
    %5351 = vmatprep.subr.bf16.mxu0 %v4919
    %5352 = vmatpush1.bf16.msra.mxu0 %v4918
    %5353 = vmatprep.subr.bf16.mxu0 %v4927
    %5354 = vmatpush1.bf16.msra.mxu0 %v4926
    %5355 = vmatprep.subr.bf16.mxu0 %v4935
    %5356 = vmatpush1.bf16.msra.mxu0 %v4934
    %5357 = vmatprep.subr.bf16.mxu0 %v4943
    %5358 = vmatpush1.bf16.msra.mxu0 %v4942
    %5359 = vmatprep.subr.bf16.mxu0 %v4951
    %5360 = vmatpush1.bf16.msra.mxu0 %v4950
    %5361 = vmatprep.subr.bf16.mxu0 %v4959
    %5362 = vmatpush1.bf16.msra.mxu0 %v4958
    %5363 = vmatprep.subr.bf16.mxu0 %v4967
    %5364 = vmatpush1.bf16.msra.mxu0 %v4966
    %5365 = vmatprep.subr.bf16.mxu0 %v4975
    %5366 = vmatpush1.bf16.msra.mxu0 %v4974
    %5367 = vmatprep.subr.bf16.mxu0 %v4983
    %5368 = vmatpush1.bf16.msra.mxu0 %v4982
    %5369 = vmatprep.subr.bf16.mxu0 %v4991
    %5370 = vmatpush1.bf16.msra.mxu0 %v4990
    %5371 = vmatprep.mubr.bf16.mxu0 %v4737
    %5372 = vmatmul.mubr.bf16.gmra.mrb[0].mxu0 %v4736
    %v5373 = vpop.f32.mrb[0].mxu0
    %v5374 = vadd.f32 %v5331, %v5373
    %v5375 = vpop.f32.mrb[0].mxu0
    %v5376 = vadd.f32 %v5333, %v5375
    %v5377 = vpop.f32.mrb[0].mxu0
    %v5378 = vadd.f32 %v5335, %v5377
    %v5379 = vpop.f32.mrb[0].mxu0
    %v5380 = vadd.f32 %v5337, %v5379
    %5381 = vdwg.mxu0
    %5382 = vmatprep.subr.bf16.mxu0 %v4999
    %5383 = vmatpush1.bf16.msra.mxu0 %v4998
    %5384 = vmatprep.subr.bf16.mxu0 %v5007
    %5385 = vmatpush1.bf16.msra.mxu0 %v5006
    %5386 = vmatprep.subr.bf16.mxu0 %v5015
    %5387 = vmatpush1.bf16.msra.mxu0 %v5014
    %5388 = vmatprep.subr.bf16.mxu0 %v5023
    %5389 = vmatpush1.bf16.msra.mxu0 %v5022
    %5390 = vmatprep.subr.bf16.mxu0 %v5031
    %5391 = vmatpush1.bf16.msra.mxu0 %v5030
    %5392 = vmatprep.subr.bf16.mxu0 %v5039
    %5393 = vmatpush1.bf16.msra.mxu0 %v5038
    %5394 = vmatprep.subr.bf16.mxu0 %v5047
    %5395 = vmatpush1.bf16.msra.mxu0 %v5046
    %5396 = vmatprep.subr.bf16.mxu0 %v5055
    %5397 = vmatpush1.bf16.msra.mxu0 %v5054
    %5398 = vmatprep.subr.bf16.mxu0 %v5063
    %5399 = vmatpush1.bf16.msra.mxu0 %v5062
    %5400 = vmatprep.subr.bf16.mxu0 %v5071
    %5401 = vmatpush1.bf16.msra.mxu0 %v5070
    %5402 = vmatprep.subr.bf16.mxu0 %v5079
    %5403 = vmatpush1.bf16.msra.mxu0 %v5078
    %5404 = vmatprep.subr.bf16.mxu0 %v5087
    %5405 = vmatpush1.bf16.msra.mxu0 %v5086
    %5406 = vmatprep.subr.bf16.mxu0 %v5095
    %5407 = vmatpush1.bf16.msra.mxu0 %v5094
    %5408 = vmatprep.subr.bf16.mxu0 %v5103
    %5409 = vmatpush1.bf16.msra.mxu0 %v5102
    %5410 = vmatprep.subr.bf16.mxu0 %v5111
    %5411 = vmatpush1.bf16.msra.mxu0 %v5110
    %5412 = vmatprep.subr.bf16.mxu0 %v5119
    %5413 = vmatpush1.bf16.msra.mxu0 %v5118
    %5414 = vmatprep.mubr.bf16.mxu0 %v4739
    %5415 = vmatmul.mubr.bf16.gmra.mrb[0].mxu0 %v4738
    %v5416 = vpop.f32.mrb[0].mxu0
    %v5417 = vadd.f32 %v5374, %v5416
    %v5418 = vpop.f32.mrb[0].mxu0
    %v5419 = vadd.f32 %v5376, %v5418
    %v5420 = vpop.f32.mrb[0].mxu0
    %v5421 = vadd.f32 %v5378, %v5420
    %v5422 = vpop.f32.mrb[0].mxu0
    %v5423 = vadd.f32 %v5380, %v5422
    %5424 = vdwg.mxu0
    %5425 = vmatprep.subr.bf16.mxu0 %v5127
    %5426 = vmatpush1.bf16.msra.mxu0 %v5126
    %5427 = vmatprep.subr.bf16.mxu0 %v5135
    %5428 = vmatpush1.bf16.msra.mxu0 %v5134
    %5429 = vmatprep.subr.bf16.mxu0 %v5143
    %5430 = vmatpush1.bf16.msra.mxu0 %v5142
    %5431 = vmatprep.subr.bf16.mxu0 %v5151
    %5432 = vmatpush1.bf16.msra.mxu0 %v5150
    %5433 = vmatprep.subr.bf16.mxu0 %v5159
    %5434 = vmatpush1.bf16.msra.mxu0 %v5158
    %5435 = vmatprep.subr.bf16.mxu0 %v5167
    %5436 = vmatpush1.bf16.msra.mxu0 %v5166
    %5437 = vmatprep.subr.bf16.mxu0 %v5175
    %5438 = vmatpush1.bf16.msra.mxu0 %v5174
    %5439 = vmatprep.subr.bf16.mxu0 %v5183
    %5440 = vmatpush1.bf16.msra.mxu0 %v5182
    %5441 = vmatprep.subr.bf16.mxu0 %v5191
    %5442 = vmatpush1.bf16.msra.mxu0 %v5190
    %5443 = vmatprep.subr.bf16.mxu0 %v5199
    %5444 = vmatpush1.bf16.msra.mxu0 %v5198
    %5445 = vmatprep.subr.bf16.mxu0 %v5207
    %5446 = vmatpush1.bf16.msra.mxu0 %v5206
    %5447 = vmatprep.subr.bf16.mxu0 %v5215
    %5448 = vmatpush1.bf16.msra.mxu0 %v5214
    %5449 = vmatprep.subr.bf16.mxu0 %v5223
    %5450 = vmatpush1.bf16.msra.mxu0 %v5222
    %5451 = vmatprep.subr.bf16.mxu0 %v5231
    %5452 = vmatpush1.bf16.msra.mxu0 %v5230
    %5453 = vmatprep.subr.bf16.mxu0 %v5239
    %5454 = vmatpush1.bf16.msra.mxu0 %v5238
    %5455 = vmatprep.subr.bf16.mxu0 %v5247
    %5456 = vmatpush1.bf16.msra.mxu0 %v5246
    %5457 = vmatprep.mubr.bf16.mxu0 %v4741
    %5458 = vmatmul.mubr.bf16.gmra.mrb[0].mxu0 %v4740
    %v5459 = vpop.f32.mrb[0].mxu0
    %v5460 = vadd.f32 %v5417, %v5459
    %v5461 = vpop.f32.mrb[0].mxu0
    %v5462 = vadd.f32 %v5419, %v5461
    %v5463 = vpop.f32.mrb[0].mxu0
    %v5464 = vadd.f32 %v5421, %v5463
    %v5465 = vpop.f32.mrb[0].mxu0
    %v5466 = vadd.f32 %v5423, %v5465
    %5467 = vdwg.mxu0
    %5468 = vmatprep.subr.bf16.mxu0 %v4745
    %5469 = vmatpush1.bf16.msra.mxu0 %v4744
    %5470 = vmatprep.subr.bf16.mxu0 %v4753
    %5471 = vmatpush1.bf16.msra.mxu0 %v4752
    %5472 = vmatprep.subr.bf16.mxu0 %v4761
    %5473 = vmatpush1.bf16.msra.mxu0 %v4760
    %5474 = vmatprep.subr.bf16.mxu0 %v4769
    %5475 = vmatpush1.bf16.msra.mxu0 %v4768
    %5476 = vmatprep.subr.bf16.mxu0 %v4777
    %5477 = vmatpush1.bf16.msra.mxu0 %v4776
    %5478 = vmatprep.subr.bf16.mxu0 %v4785
    %5479 = vmatpush1.bf16.msra.mxu0 %v4784
    %5480 = vmatprep.subr.bf16.mxu0 %v4793
    %5481 = vmatpush1.bf16.msra.mxu0 %v4792
    %5482 = vmatprep.subr.bf16.mxu0 %v4801
    %5483 = vmatpush1.bf16.msra.mxu0 %v4800
    %5484 = vmatprep.subr.bf16.mxu0 %v4809
    %5485 = vmatpush1.bf16.msra.mxu0 %v4808
    %5486 = vmatprep.subr.bf16.mxu0 %v4817
    %5487 = vmatpush1.bf16.msra.mxu0 %v4816
    %5488 = vmatprep.subr.bf16.mxu0 %v4825
    %5489 = vmatpush1.bf16.msra.mxu0 %v4824
    %5490 = vmatprep.subr.bf16.mxu0 %v4833
    %5491 = vmatpush1.bf16.msra.mxu0 %v4832
    %5492 = vmatprep.subr.bf16.mxu0 %v4841
    %5493 = vmatpush1.bf16.msra.mxu0 %v4840
    %5494 = vmatprep.subr.bf16.mxu0 %v4849
    %5495 = vmatpush1.bf16.msra.mxu0 %v4848
    %5496 = vmatprep.subr.bf16.mxu0 %v4857
    %5497 = vmatpush1.bf16.msra.mxu0 %v4856
    %5498 = vmatprep.subr.bf16.mxu0 %v4865
    %5499 = vmatpush1.bf16.msra.mxu0 %v4864
    %5500 = vmatprep.mubr.bf16.mxu0 %v4735
    %5501 = vmatmul.mubr.bf16.gmra.mrb[0].mxu0 %v4734
    %v5502 = vpop.f32.mrb[0].mxu0
    %v5503 = vadd.f32 %v5267, %v5502
    %v5504 = vpop.f32.mrb[0].mxu0
    %v5505 = vadd.f32 %v5271, %v5504
    %v5506 = vpop.f32.mrb[0].mxu0
    %v5507 = vadd.f32 %v5267, %v5506
    %v5508 = vpop.f32.mrb[0].mxu0
    %v5509 = vadd.f32 %v5271, %v5508
    %5510 = vdwg.mxu0
    %5511 = vmatprep.subr.bf16.mxu0 %v4873
    %5512 = vmatpush1.bf16.msra.mxu0 %v4872
    %5513 = vmatprep.subr.bf16.mxu0 %v4881
    %5514 = vmatpush1.bf16.msra.mxu0 %v4880
    %5515 = vmatprep.subr.bf16.mxu0 %v4889
    %5516 = vmatpush1.bf16.msra.mxu0 %v4888
    %5517 = vmatprep.subr.bf16.mxu0 %v4897
    %5518 = vmatpush1.bf16.msra.mxu0 %v4896
    %5519 = vmatprep.subr.bf16.mxu0 %v4905
    %5520 = vmatpush1.bf16.msra.mxu0 %v4904
    %5521 = vmatprep.subr.bf16.mxu0 %v4913
    %5522 = vmatpush1.bf16.msra.mxu0 %v4912
    %5523 = vmatprep.subr.bf16.mxu0 %v4921
    %5524 = vmatpush1.bf16.msra.mxu0 %v4920
    %5525 = vmatprep.subr.bf16.mxu0 %v4929
    %5526 = vmatpush1.bf16.msra.mxu0 %v4928
    %5527 = vmatprep.subr.bf16.mxu0 %v4937
    %5528 = vmatpush1.bf16.msra.mxu0 %v4936
    %5529 = vmatprep.subr.bf16.mxu0 %v4945
    %5530 = vmatpush1.bf16.msra.mxu0 %v4944
    %5531 = vmatprep.subr.bf16.mxu0 %v4953
    %5532 = vmatpush1.bf16.msra.mxu0 %v4952
    %5533 = vmatprep.subr.bf16.mxu0 %v4961
    %5534 = vmatpush1.bf16.msra.mxu0 %v4960
    %5535 = vmatprep.subr.bf16.mxu0 %v4969
    %5536 = vmatpush1.bf16.msra.mxu0 %v4968
    %5537 = vmatprep.subr.bf16.mxu0 %v4977
    %5538 = vmatpush1.bf16.msra.mxu0 %v4976
    %5539 = vmatprep.subr.bf16.mxu0 %v4985
    %5540 = vmatpush1.bf16.msra.mxu0 %v4984
    %5541 = vmatprep.subr.bf16.mxu0 %v4993
    %5542 = vmatpush1.bf16.msra.mxu0 %v4992
    %5543 = vmatprep.mubr.bf16.mxu0 %v4737
    %5544 = vmatmul.mubr.bf16.gmra.mrb[0].mxu0 %v4736
    %v5545 = vpop.f32.mrb[0].mxu0
    %v5546 = vadd.f32 %v5503, %v5545
    %v5547 = vpop.f32.mrb[0].mxu0
    %v5548 = vadd.f32 %v5505, %v5547
    %v5549 = vpop.f32.mrb[0].mxu0
    %v5550 = vadd.f32 %v5507, %v5549
    %v5551 = vpop.f32.mrb[0].mxu0
    %v5552 = vadd.f32 %v5509, %v5551
    %5553 = vdwg.mxu0
    %5554 = vmatprep.subr.bf16.mxu0 %v5001
    %5555 = vmatpush1.bf16.msra.mxu0 %v5000
    %5556 = vmatprep.subr.bf16.mxu0 %v5009
    %5557 = vmatpush1.bf16.msra.mxu0 %v5008
    %5558 = vmatprep.subr.bf16.mxu0 %v5017
    %5559 = vmatpush1.bf16.msra.mxu0 %v5016
    %5560 = vmatprep.subr.bf16.mxu0 %v5025
    %5561 = vmatpush1.bf16.msra.mxu0 %v5024
    %5562 = vmatprep.subr.bf16.mxu0 %v5033
    %5563 = vmatpush1.bf16.msra.mxu0 %v5032
    %5564 = vmatprep.subr.bf16.mxu0 %v5041
    %5565 = vmatpush1.bf16.msra.mxu0 %v5040
    %5566 = vmatprep.subr.bf16.mxu0 %v5049
    %5567 = vmatpush1.bf16.msra.mxu0 %v5048
    %5568 = vmatprep.subr.bf16.mxu0 %v5057
    %5569 = vmatpush1.bf16.msra.mxu0 %v5056
    %5570 = vmatprep.subr.bf16.mxu0 %v5065
    %5571 = vmatpush1.bf16.msra.mxu0 %v5064
    %5572 = vmatprep.subr.bf16.mxu0 %v5073
    %5573 = vmatpush1.bf16.msra.mxu0 %v5072
    %5574 = vmatprep.subr.bf16.mxu0 %v5081
    %5575 = vmatpush1.bf16.msra.mxu0 %v5080
    %5576 = vmatprep.subr.bf16.mxu0 %v5089
    %5577 = vmatpush1.bf16.msra.mxu0 %v5088
    %5578 = vmatprep.subr.bf16.mxu0 %v5097
    %5579 = vmatpush1.bf16.msra.mxu0 %v5096
    %5580 = vmatprep.subr.bf16.mxu0 %v5105
    %5581 = vmatpush1.bf16.msra.mxu0 %v5104
    %5582 = vmatprep.subr.bf16.mxu0 %v5113
    %5583 = vmatpush1.bf16.msra.mxu0 %v5112
    %5584 = vmatprep.subr.bf16.mxu0 %v5121
    %5585 = vmatpush1.bf16.msra.mxu0 %v5120
    %5586 = vmatprep.mubr.bf16.mxu0 %v4739
    %5587 = vmatmul.mubr.bf16.gmra.mrb[0].mxu0 %v4738
    %v5588 = vpop.f32.mrb[0].mxu0
    %v5589 = vadd.f32 %v5546, %v5588
    %v5590 = vpop.f32.mrb[0].mxu0
    %v5591 = vadd.f32 %v5548, %v5590
    %v5592 = vpop.f32.mrb[0].mxu0
    %v5593 = vadd.f32 %v5550, %v5592
    %v5594 = vpop.f32.mrb[0].mxu0
    %v5595 = vadd.f32 %v5552, %v5594
    %5596 = vdwg.mxu0
    %5597 = vmatprep.subr.bf16.mxu0 %v5129
    %5598 = vmatpush1.bf16.msra.mxu0 %v5128
    %5599 = vmatprep.subr.bf16.mxu0 %v5137
    %5600 = vmatpush1.bf16.msra.mxu0 %v5136
    %5601 = vmatprep.subr.bf16.mxu0 %v5145
    %5602 = vmatpush1.bf16.msra.mxu0 %v5144
    %5603 = vmatprep.subr.bf16.mxu0 %v5153
    %5604 = vmatpush1.bf16.msra.mxu0 %v5152
    %5605 = vmatprep.subr.bf16.mxu0 %v5161
    %5606 = vmatpush1.bf16.msra.mxu0 %v5160
    %5607 = vmatprep.subr.bf16.mxu0 %v5169
    %5608 = vmatpush1.bf16.msra.mxu0 %v5168
    %5609 = vmatprep.subr.bf16.mxu0 %v5177
    %5610 = vmatpush1.bf16.msra.mxu0 %v5176
    %5611 = vmatprep.subr.bf16.mxu0 %v5185
    %5612 = vmatpush1.bf16.msra.mxu0 %v5184
    %5613 = vmatprep.subr.bf16.mxu0 %v5193
    %5614 = vmatpush1.bf16.msra.mxu0 %v5192
    %5615 = vmatprep.subr.bf16.mxu0 %v5201
    %5616 = vmatpush1.bf16.msra.mxu0 %v5200
    %5617 = vmatprep.subr.bf16.mxu0 %v5209
    %5618 = vmatpush1.bf16.msra.mxu0 %v5208
    %5619 = vmatprep.subr.bf16.mxu0 %v5217
    %5620 = vmatpush1.bf16.msra.mxu0 %v5216
    %5621 = vmatprep.subr.bf16.mxu0 %v5225
    %5622 = vmatpush1.bf16.msra.mxu0 %v5224
    %5623 = vmatprep.subr.bf16.mxu0 %v5233
    %5624 = vmatpush1.bf16.msra.mxu0 %v5232
    %5625 = vmatprep.subr.bf16.mxu0 %v5241
    %5626 = vmatpush1.bf16.msra.mxu0 %v5240
    %5627 = vmatprep.subr.bf16.mxu0 %v5249
    %5628 = vmatpush1.bf16.msra.mxu0 %v5248
    %5629 = vmatprep.mubr.bf16.mxu0 %v4741
    %5630 = vmatmul.mubr.bf16.gmra.mrb[0].mxu0 %v4740
    %v5631 = vpop.f32.mrb[0].mxu0
    %v5632 = vadd.f32 %v5589, %v5631
    %v5633 = vpop.f32.mrb[0].mxu0
    %v5634 = vadd.f32 %v5591, %v5633
    %v5635 = vpop.f32.mrb[0].mxu0
    %v5636 = vadd.f32 %v5593, %v5635
    %v5637 = vpop.f32.mrb[0].mxu0
    %v5638 = vadd.f32 %v5595, %v5637
    %5639 = vdwg.mxu0
    %5640 = vmatprep.subr.bf16.mxu0 %v4747
    %5641 = vmatpush1.bf16.msra.mxu0 %v4746
    %5642 = vmatprep.subr.bf16.mxu0 %v4755
    %5643 = vmatpush1.bf16.msra.mxu0 %v4754
    %5644 = vmatprep.subr.bf16.mxu0 %v4763
    %5645 = vmatpush1.bf16.msra.mxu0 %v4762
    %5646 = vmatprep.subr.bf16.mxu0 %v4771
    %5647 = vmatpush1.bf16.msra.mxu0 %v4770
    %5648 = vmatprep.subr.bf16.mxu0 %v4779
    %5649 = vmatpush1.bf16.msra.mxu0 %v4778
    %5650 = vmatprep.subr.bf16.mxu0 %v4787
    %5651 = vmatpush1.bf16.msra.mxu0 %v4786
    %5652 = vmatprep.subr.bf16.mxu0 %v4795
    %5653 = vmatpush1.bf16.msra.mxu0 %v4794
    %5654 = vmatprep.subr.bf16.mxu0 %v4803
    %5655 = vmatpush1.bf16.msra.mxu0 %v4802
    %5656 = vmatprep.subr.bf16.mxu0 %v4811
    %5657 = vmatpush1.bf16.msra.mxu0 %v4810
    %5658 = vmatprep.subr.bf16.mxu0 %v4819
    %5659 = vmatpush1.bf16.msra.mxu0 %v4818
    %5660 = vmatprep.subr.bf16.mxu0 %v4827
    %5661 = vmatpush1.bf16.msra.mxu0 %v4826
    %5662 = vmatprep.subr.bf16.mxu0 %v4835
    %5663 = vmatpush1.bf16.msra.mxu0 %v4834
    %5664 = vmatprep.subr.bf16.mxu0 %v4843
    %5665 = vmatpush1.bf16.msra.mxu0 %v4842
    %5666 = vmatprep.subr.bf16.mxu0 %v4851
    %5667 = vmatpush1.bf16.msra.mxu0 %v4850
    %5668 = vmatprep.subr.bf16.mxu0 %v4859
    %5669 = vmatpush1.bf16.msra.mxu0 %v4858
    %5670 = vmatprep.subr.bf16.mxu0 %v4867
    %5671 = vmatpush1.bf16.msra.mxu0 %v4866
    %5672 = vmatprep.mubr.bf16.mxu0 %v4735
    %5673 = vmatmul.mubr.bf16.gmra.mrb[0].mxu0 %v4734
    %v5674 = vpop.f32.mrb[0].mxu0
    %v5675 = vadd.f32 %v5275, %v5674
    %v5676 = vpop.f32.mrb[0].mxu0
    %v5677 = vadd.f32 %v5279, %v5676
    %v5678 = vpop.f32.mrb[0].mxu0
    %v5679 = vadd.f32 %v5275, %v5678
    %v5680 = vpop.f32.mrb[0].mxu0
    %v5681 = vadd.f32 %v5279, %v5680
    %5682 = vdwg.mxu0
    %5683 = vmatprep.subr.bf16.mxu0 %v4875
    %5684 = vmatpush1.bf16.msra.mxu0 %v4874
    %5685 = vmatprep.subr.bf16.mxu0 %v4883
    %5686 = vmatpush1.bf16.msra.mxu0 %v4882
    %5687 = vmatprep.subr.bf16.mxu0 %v4891
    %5688 = vmatpush1.bf16.msra.mxu0 %v4890
    %5689 = vmatprep.subr.bf16.mxu0 %v4899
    %5690 = vmatpush1.bf16.msra.mxu0 %v4898
    %5691 = vmatprep.subr.bf16.mxu0 %v4907
    %5692 = vmatpush1.bf16.msra.mxu0 %v4906
    %5693 = vmatprep.subr.bf16.mxu0 %v4915
    %5694 = vmatpush1.bf16.msra.mxu0 %v4914
    %5695 = vmatprep.subr.bf16.mxu0 %v4923
    %5696 = vmatpush1.bf16.msra.mxu0 %v4922
    %5697 = vmatprep.subr.bf16.mxu0 %v4931
    %5698 = vmatpush1.bf16.msra.mxu0 %v4930
    %5699 = vmatprep.subr.bf16.mxu0 %v4939
    %5700 = vmatpush1.bf16.msra.mxu0 %v4938
    %5701 = vmatprep.subr.bf16.mxu0 %v4947
    %5702 = vmatpush1.bf16.msra.mxu0 %v4946
    %5703 = vmatprep.subr.bf16.mxu0 %v4955
    %5704 = vmatpush1.bf16.msra.mxu0 %v4954
    %5705 = vmatprep.subr.bf16.mxu0 %v4963
    %5706 = vmatpush1.bf16.msra.mxu0 %v4962
    %5707 = vmatprep.subr.bf16.mxu0 %v4971
    %5708 = vmatpush1.bf16.msra.mxu0 %v4970
    %5709 = vmatprep.subr.bf16.mxu0 %v4979
    %5710 = vmatpush1.bf16.msra.mxu0 %v4978
    %5711 = vmatprep.subr.bf16.mxu0 %v4987
    %5712 = vmatpush1.bf16.msra.mxu0 %v4986
    %5713 = vmatprep.subr.bf16.mxu0 %v4995
    %5714 = vmatpush1.bf16.msra.mxu0 %v4994
    %5715 = vmatprep.mubr.bf16.mxu0 %v4737
    %5716 = vmatmul.mubr.bf16.gmra.mrb[0].mxu0 %v4736
    %v5717 = vpop.f32.mrb[0].mxu0
    %v5718 = vadd.f32 %v5675, %v5717
    %v5719 = vpop.f32.mrb[0].mxu0
    %v5720 = vadd.f32 %v5677, %v5719
    %v5721 = vpop.f32.mrb[0].mxu0
    %v5722 = vadd.f32 %v5679, %v5721
    %v5723 = vpop.f32.mrb[0].mxu0
    %v5724 = vadd.f32 %v5681, %v5723
    %5725 = vdwg.mxu0
    %5726 = vmatprep.subr.bf16.mxu0 %v5003
    %5727 = vmatpush1.bf16.msra.mxu0 %v5002
    %5728 = vmatprep.subr.bf16.mxu0 %v5011
    %5729 = vmatpush1.bf16.msra.mxu0 %v5010
    %5730 = vmatprep.subr.bf16.mxu0 %v5019
    %5731 = vmatpush1.bf16.msra.mxu0 %v5018
    %5732 = vmatprep.subr.bf16.mxu0 %v5027
    %5733 = vmatpush1.bf16.msra.mxu0 %v5026
    %5734 = vmatprep.subr.bf16.mxu0 %v5035
    %5735 = vmatpush1.bf16.msra.mxu0 %v5034
    %5736 = vmatprep.subr.bf16.mxu0 %v5043
    %5737 = vmatpush1.bf16.msra.mxu0 %v5042
    %5738 = vmatprep.subr.bf16.mxu0 %v5051
    %5739 = vmatpush1.bf16.msra.mxu0 %v5050
    %5740 = vmatprep.subr.bf16.mxu0 %v5059
    %5741 = vmatpush1.bf16.msra.mxu0 %v5058
    %5742 = vmatprep.subr.bf16.mxu0 %v5067
    %5743 = vmatpush1.bf16.msra.mxu0 %v5066
    %5744 = vmatprep.subr.bf16.mxu0 %v5075
    %5745 = vmatpush1.bf16.msra.mxu0 %v5074
    %5746 = vmatprep.subr.bf16.mxu0 %v5083
    %5747 = vmatpush1.bf16.msra.mxu0 %v5082
    %5748 = vmatprep.subr.bf16.mxu0 %v5091
    %5749 = vmatpush1.bf16.msra.mxu0 %v5090
    %5750 = vmatprep.subr.bf16.mxu0 %v5099
    %5751 = vmatpush1.bf16.msra.mxu0 %v5098
    %5752 = vmatprep.subr.bf16.mxu0 %v5107
    %5753 = vmatpush1.bf16.msra.mxu0 %v5106
    %5754 = vmatprep.subr.bf16.mxu0 %v5115
    %5755 = vmatpush1.bf16.msra.mxu0 %v5114
    %5756 = vmatprep.subr.bf16.mxu0 %v5123
    %5757 = vmatpush1.bf16.msra.mxu0 %v5122
    %5758 = vmatprep.mubr.bf16.mxu0 %v4739
    %5759 = vmatmul.mubr.bf16.gmra.mrb[0].mxu0 %v4738
    %v5760 = vpop.f32.mrb[0].mxu0
    %v5761 = vadd.f32 %v5718, %v5760
    %v5762 = vpop.f32.mrb[0].mxu0
    %v5763 = vadd.f32 %v5720, %v5762
    %v5764 = vpop.f32.mrb[0].mxu0
    %v5765 = vadd.f32 %v5722, %v5764
    %v5766 = vpop.f32.mrb[0].mxu0
    %v5767 = vadd.f32 %v5724, %v5766
    %5768 = vdwg.mxu0
    %5769 = vmatprep.subr.bf16.mxu0 %v5131
    %5770 = vmatpush1.bf16.msra.mxu0 %v5130
    %5771 = vmatprep.subr.bf16.mxu0 %v5139
    %5772 = vmatpush1.bf16.msra.mxu0 %v5138
    %5773 = vmatprep.subr.bf16.mxu0 %v5147
    %5774 = vmatpush1.bf16.msra.mxu0 %v5146
    %5775 = vmatprep.subr.bf16.mxu0 %v5155
    %5776 = vmatpush1.bf16.msra.mxu0 %v5154
    %5777 = vmatprep.subr.bf16.mxu0 %v5163
    %5778 = vmatpush1.bf16.msra.mxu0 %v5162
    %5779 = vmatprep.subr.bf16.mxu0 %v5171
    %5780 = vmatpush1.bf16.msra.mxu0 %v5170
    %5781 = vmatprep.subr.bf16.mxu0 %v5179
    %5782 = vmatpush1.bf16.msra.mxu0 %v5178
    %5783 = vmatprep.subr.bf16.mxu0 %v5187
    %5784 = vmatpush1.bf16.msra.mxu0 %v5186
    %5785 = vmatprep.subr.bf16.mxu0 %v5195
    %5786 = vmatpush1.bf16.msra.mxu0 %v5194
    %5787 = vmatprep.subr.bf16.mxu0 %v5203
    %5788 = vmatpush1.bf16.msra.mxu0 %v5202
    %5789 = vmatprep.subr.bf16.mxu0 %v5211
    %5790 = vmatpush1.bf16.msra.mxu0 %v5210
    %5791 = vmatprep.subr.bf16.mxu0 %v5219
    %5792 = vmatpush1.bf16.msra.mxu0 %v5218
    %5793 = vmatprep.subr.bf16.mxu0 %v5227
    %5794 = vmatpush1.bf16.msra.mxu0 %v5226
    %5795 = vmatprep.subr.bf16.mxu0 %v5235
    %5796 = vmatpush1.bf16.msra.mxu0 %v5234
    %5797 = vmatprep.subr.bf16.mxu0 %v5243
    %5798 = vmatpush1.bf16.msra.mxu0 %v5242
    %5799 = vmatprep.subr.bf16.mxu0 %v5251
    %5800 = vmatpush1.bf16.msra.mxu0 %v5250
    %5801 = vmatprep.mubr.bf16.mxu0 %v4741
    %5802 = vmatmul.mubr.bf16.gmra.mrb[0].mxu0 %v4740
    %v5803 = vpop.f32.mrb[0].mxu0
    %v5804 = vadd.f32 %v5761, %v5803
    %v5805 = vpop.f32.mrb[0].mxu0
    %v5806 = vadd.f32 %v5763, %v5805
    %v5807 = vpop.f32.mrb[0].mxu0
    %v5808 = vadd.f32 %v5765, %v5807
    %v5809 = vpop.f32.mrb[0].mxu0
    %v5810 = vadd.f32 %v5767, %v5809
    %5811 = vdwg.mxu0
    %5812 = vmatprep.subr.bf16.mxu0 %v4749
    %5813 = vmatpush1.bf16.msra.mxu0 %v4748
    %5814 = vmatprep.subr.bf16.mxu0 %v4757
    %5815 = vmatpush1.bf16.msra.mxu0 %v4756
    %5816 = vmatprep.subr.bf16.mxu0 %v4765
    %5817 = vmatpush1.bf16.msra.mxu0 %v4764
    %5818 = vmatprep.subr.bf16.mxu0 %v4773
    %5819 = vmatpush1.bf16.msra.mxu0 %v4772
    %5820 = vmatprep.subr.bf16.mxu0 %v4781
    %5821 = vmatpush1.bf16.msra.mxu0 %v4780
    %5822 = vmatprep.subr.bf16.mxu0 %v4789
    %5823 = vmatpush1.bf16.msra.mxu0 %v4788
    %5824 = vmatprep.subr.bf16.mxu0 %v4797
    %5825 = vmatpush1.bf16.msra.mxu0 %v4796
    %5826 = vmatprep.subr.bf16.mxu0 %v4805
    %5827 = vmatpush1.bf16.msra.mxu0 %v4804
    %5828 = vmatprep.subr.bf16.mxu0 %v4813
    %5829 = vmatpush1.bf16.msra.mxu0 %v4812
    %5830 = vmatprep.subr.bf16.mxu0 %v4821
    %5831 = vmatpush1.bf16.msra.mxu0 %v4820
    %5832 = vmatprep.subr.bf16.mxu0 %v4829
    %5833 = vmatpush1.bf16.msra.mxu0 %v4828
    %5834 = vmatprep.subr.bf16.mxu0 %v4837
    %5835 = vmatpush1.bf16.msra.mxu0 %v4836
    %5836 = vmatprep.subr.bf16.mxu0 %v4845
    %5837 = vmatpush1.bf16.msra.mxu0 %v4844
    %5838 = vmatprep.subr.bf16.mxu0 %v4853
    %5839 = vmatpush1.bf16.msra.mxu0 %v4852
    %5840 = vmatprep.subr.bf16.mxu0 %v4861
    %5841 = vmatpush1.bf16.msra.mxu0 %v4860
    %5842 = vmatprep.subr.bf16.mxu0 %v4869
    %5843 = vmatpush1.bf16.msra.mxu0 %v4868
    %5844 = vmatprep.mubr.bf16.mxu0 %v4735
    %5845 = vmatmul.mubr.bf16.gmra.mrb[0].mxu0 %v4734
    %v5846 = vpop.f32.mrb[0].mxu0
    %v5847 = vadd.f32 %v5283, %v5846
    %v5848 = vpop.f32.mrb[0].mxu0
    %v5849 = vadd.f32 %v5287, %v5848
    %v5850 = vpop.f32.mrb[0].mxu0
    %v5851 = vadd.f32 %v5283, %v5850
    %v5852 = vpop.f32.mrb[0].mxu0
    %v5853 = vadd.f32 %v5287, %v5852
    %5854 = vdwg.mxu0
    %5855 = vmatprep.subr.bf16.mxu0 %v4877
    %5856 = vmatpush1.bf16.msra.mxu0 %v4876
    %5857 = vmatprep.subr.bf16.mxu0 %v4885
    %5858 = vmatpush1.bf16.msra.mxu0 %v4884
    %5859 = vmatprep.subr.bf16.mxu0 %v4893
    %5860 = vmatpush1.bf16.msra.mxu0 %v4892
    %5861 = vmatprep.subr.bf16.mxu0 %v4901
    %5862 = vmatpush1.bf16.msra.mxu0 %v4900
    %5863 = vmatprep.subr.bf16.mxu0 %v4909
    %5864 = vmatpush1.bf16.msra.mxu0 %v4908
    %5865 = vmatprep.subr.bf16.mxu0 %v4917
    %5866 = vmatpush1.bf16.msra.mxu0 %v4916
    %5867 = vmatprep.subr.bf16.mxu0 %v4925
    %5868 = vmatpush1.bf16.msra.mxu0 %v4924
    %5869 = vmatprep.subr.bf16.mxu0 %v4933
    %5870 = vmatpush1.bf16.msra.mxu0 %v4932
    %5871 = vmatprep.subr.bf16.mxu0 %v4941
    %5872 = vmatpush1.bf16.msra.mxu0 %v4940
    %5873 = vmatprep.subr.bf16.mxu0 %v4949
    %5874 = vmatpush1.bf16.msra.mxu0 %v4948
    %5875 = vmatprep.subr.bf16.mxu0 %v4957
    %5876 = vmatpush1.bf16.msra.mxu0 %v4956
    %5877 = vmatprep.subr.bf16.mxu0 %v4965
    %5878 = vmatpush1.bf16.msra.mxu0 %v4964
    %5879 = vmatprep.subr.bf16.mxu0 %v4973
    %5880 = vmatpush1.bf16.msra.mxu0 %v4972
    %5881 = vmatprep.subr.bf16.mxu0 %v4981
    %5882 = vmatpush1.bf16.msra.mxu0 %v4980
    %5883 = vmatprep.subr.bf16.mxu0 %v4989
    %5884 = vmatpush1.bf16.msra.mxu0 %v4988
    %5885 = vmatprep.subr.bf16.mxu0 %v4997
    %5886 = vmatpush1.bf16.msra.mxu0 %v4996
    %5887 = vmatprep.mubr.bf16.mxu0 %v4737
    %5888 = vmatmul.mubr.bf16.gmra.mrb[0].mxu0 %v4736
    %v5889 = vpop.f32.mrb[0].mxu0
    %v5890 = vadd.f32 %v5847, %v5889
    %v5891 = vpop.f32.mrb[0].mxu0
    %v5892 = vadd.f32 %v5849, %v5891
    %v5893 = vpop.f32.mrb[0].mxu0
    %v5894 = vadd.f32 %v5851, %v5893
    %v5895 = vpop.f32.mrb[0].mxu0
    %v5896 = vadd.f32 %v5853, %v5895
    %5897 = vdwg.mxu0
    %5898 = vmatprep.subr.bf16.mxu0 %v5005
    %5899 = vmatpush1.bf16.msra.mxu0 %v5004
    %5900 = vmatprep.subr.bf16.mxu0 %v5013
    %5901 = vmatpush1.bf16.msra.mxu0 %v5012
    %5902 = vmatprep.subr.bf16.mxu0 %v5021
    %5903 = vmatpush1.bf16.msra.mxu0 %v5020
    %5904 = vmatprep.subr.bf16.mxu0 %v5029
    %5905 = vmatpush1.bf16.msra.mxu0 %v5028
    %5906 = vmatprep.subr.bf16.mxu0 %v5037
    %5907 = vmatpush1.bf16.msra.mxu0 %v5036
    %5908 = vmatprep.subr.bf16.mxu0 %v5045
    %5909 = vmatpush1.bf16.msra.mxu0 %v5044
    %5910 = vmatprep.subr.bf16.mxu0 %v5053
    %5911 = vmatpush1.bf16.msra.mxu0 %v5052
    %5912 = vmatprep.subr.bf16.mxu0 %v5061
    %5913 = vmatpush1.bf16.msra.mxu0 %v5060
    %5914 = vmatprep.subr.bf16.mxu0 %v5069
    %5915 = vmatpush1.bf16.msra.mxu0 %v5068
    %5916 = vmatprep.subr.bf16.mxu0 %v5077
    %5917 = vmatpush1.bf16.msra.mxu0 %v5076
    %5918 = vmatprep.subr.bf16.mxu0 %v5085
    %5919 = vmatpush1.bf16.msra.mxu0 %v5084
    %5920 = vmatprep.subr.bf16.mxu0 %v5093
    %5921 = vmatpush1.bf16.msra.mxu0 %v5092
    %5922 = vmatprep.subr.bf16.mxu0 %v5101
    %5923 = vmatpush1.bf16.msra.mxu0 %v5100
    %5924 = vmatprep.subr.bf16.mxu0 %v5109
    %5925 = vmatpush1.bf16.msra.mxu0 %v5108
    %5926 = vmatprep.subr.bf16.mxu0 %v5117
    %5927 = vmatpush1.bf16.msra.mxu0 %v5116
    %5928 = vmatprep.subr.bf16.mxu0 %v5125
    %5929 = vmatpush1.bf16.msra.mxu0 %v5124
    %5930 = vmatprep.mubr.bf16.mxu0 %v4739
    %5931 = vmatmul.mubr.bf16.gmra.mrb[0].mxu0 %v4738
    %v5932 = vpop.f32.mrb[0].mxu0
    %v5933 = vadd.f32 %v5890, %v5932
    %v5934 = vpop.f32.mrb[0].mxu0
    %v5935 = vadd.f32 %v5892, %v5934
    %v5936 = vpop.f32.mrb[0].mxu0
    %v5937 = vadd.f32 %v5894, %v5936
    %v5938 = vpop.f32.mrb[0].mxu0
    %v5939 = vadd.f32 %v5896, %v5938
    %5940 = vdwg.mxu0
    %5941 = vmatprep.subr.bf16.mxu0 %v5133
    %5942 = vmatpush1.bf16.msra.mxu0 %v5132
    %5943 = vmatprep.subr.bf16.mxu0 %v5141
    %5944 = vmatpush1.bf16.msra.mxu0 %v5140
    %5945 = vmatprep.subr.bf16.mxu0 %v5149
    %5946 = vmatpush1.bf16.msra.mxu0 %v5148
    %5947 = vmatprep.subr.bf16.mxu0 %v5157
    %5948 = vmatpush1.bf16.msra.mxu0 %v5156
    %5949 = vmatprep.subr.bf16.mxu0 %v5165
    %5950 = vmatpush1.bf16.msra.mxu0 %v5164
    %5951 = vmatprep.subr.bf16.mxu0 %v5173
    %5952 = vmatpush1.bf16.msra.mxu0 %v5172
    %5953 = vmatprep.subr.bf16.mxu0 %v5181
    %5954 = vmatpush1.bf16.msra.mxu0 %v5180
    %5955 = vmatprep.subr.bf16.mxu0 %v5189
    %5956 = vmatpush1.bf16.msra.mxu0 %v5188
    %5957 = vmatprep.subr.bf16.mxu0 %v5197
    %5958 = vmatpush1.bf16.msra.mxu0 %v5196
    %5959 = vmatprep.subr.bf16.mxu0 %v5205
    %5960 = vmatpush1.bf16.msra.mxu0 %v5204
    %5961 = vmatprep.subr.bf16.mxu0 %v5213
    %5962 = vmatpush1.bf16.msra.mxu0 %v5212
    %5963 = vmatprep.subr.bf16.mxu0 %v5221
    %5964 = vmatpush1.bf16.msra.mxu0 %v5220
    %5965 = vmatprep.subr.bf16.mxu0 %v5229
    %5966 = vmatpush1.bf16.msra.mxu0 %v5228
    %5967 = vmatprep.subr.bf16.mxu0 %v5237
    %5968 = vmatpush1.bf16.msra.mxu0 %v5236
    %5969 = vmatprep.subr.bf16.mxu0 %v5245
    %5970 = vmatpush1.bf16.msra.mxu0 %v5244
    %5971 = vmatprep.subr.bf16.mxu0 %v5253
    %5972 = vmatpush1.bf16.msra.mxu0 %v5252
    %5973 = vmatprep.mubr.bf16.mxu0 %v4741
    %5974 = vmatmul.mubr.bf16.gmra.mrb[0].mxu0 %v4740
    %v5975 = vpop.f32.mrb[0].mxu0
    %v5976 = vadd.f32 %v5933, %v5975
    %v5977 = vpop.f32.mrb[0].mxu0
    %v5978 = vadd.f32 %v5935, %v5977
    %v5979 = vpop.f32.mrb[0].mxu0
    %v5980 = vadd.f32 %v5937, %v5979
    %v5981 = vpop.f32.mrb[0].mxu0
    %v5982 = vadd.f32 %v5939, %v5981
    %5983 = vdwg.mxu0
    %v5984 = vmax.f32 %v5460, 0.0
    %v5985 = vmax.f32 %v5462, 0.0
    %v5986 = vmax.f32 %v5632, 0.0
    %v5987 = vmax.f32 %v5634, 0.0
    %v5988 = vmax.f32 %v5804, 0.0
    %v5989 = vmax.f32 %v5806, 0.0
    %v5990 = vmax.f32 %v5976, 0.0
    %v5991 = vmax.f32 %v5978, 0.0
    %v5992 = vmax.f32 %v5464, 0.0
    %v5993 = vmax.f32 %v5466, 0.0
    %v5994 = vmax.f32 %v5636, 0.0
    %v5995 = vmax.f32 %v5638, 0.0
    %v5996 = vmax.f32 %v5808, 0.0
    %v5997 = vmax.f32 %v5810, 0.0
    %v5998 = vmax.f32 %v5980, 0.0
    %v5999 = vmax.f32 %v5982, 0.0
    %v6000 = vpack.c.bf16 %v5992, %v5984
    %v6001 = vpack.c.bf16 %v5993, %v5985
    %v6002 = vpack.c.bf16 %v5994, %v5986
    %v6003 = vpack.c.bf16 %v5995, %v5987
    %v6004 = vpack.c.bf16 %v5996, %v5988
    %v6005 = vpack.c.bf16 %v5997, %v5989
    %v6006 = vpack.c.bf16 %v5998, %v5990
    %v6007 = vpack.c.bf16 %v5999, %v5991
    %v6008 = vld [vmem:[%s5] sm:$0xf]
    %v6009 = vld [vmem:[%s5 + $0x4] sm:$0xf]
    %v6010 = vld [vmem:[%s5 + $0x8] sm:$0xf]
    %v6011 = vld [vmem:[%s5 + $0xc] sm:$0xf]
    %v6012 = vld [vmem:[%s5 + $0x10] sm:$0xf]
    %v6013 = vld [vmem:[%s5 + $0x14] sm:$0xf]
    %v6014 = vld [vmem:[%s5 + $0x18] sm:$0xf]
    %v6015 = vld [vmem:[%s5 + $0x1c] sm:$0xf]
    %v6016 = vld [vmem:[%s5 + $0x20] sm:$0xf]
    %v6017 = vld [vmem:[%s5 + $0x24] sm:$0xf]
    %v6018 = vld [vmem:[%s5 + $0x28] sm:$0xf]
    %v6019 = vld [vmem:[%s5 + $0x2c] sm:$0xf]
    %v6020 = vld [vmem:[%s5 + $0x30] sm:$0xf]
    %v6021 = vld [vmem:[%s5 + $0x34] sm:$0xf]
    %v6022 = vld [vmem:[%s5 + $0x38] sm:$0xf]
    %v6023 = vld [vmem:[%s5 + $0x3c] sm:$0xf]
    %v6024 = vld [vmem:[%s5 + $0x40] sm:$0xf]
    %v6025 = vld [vmem:[%s5 + $0x44] sm:$0xf]
    %v6026 = vld [vmem:[%s5 + $0x48] sm:$0xf]
    %v6027 = vld [vmem:[%s5 + $0x4c] sm:$0xf]
    %v6028 = vld [vmem:[%s5 + $0x50] sm:$0xf]
    %v6029 = vld [vmem:[%s5 + $0x54] sm:$0xf]
    %v6030 = vld [vmem:[%s5 + $0x58] sm:$0xf]
    %v6031 = vld [vmem:[%s5 + $0x5c] sm:$0xf]
    %v6032 = vld [vmem:[%s5 + $0x60] sm:$0xf]
    %v6033 = vld [vmem:[%s5 + $0x64] sm:$0xf]
    %v6034 = vld [vmem:[%s5 + $0x68] sm:$0xf]
    %v6035 = vld [vmem:[%s5 + $0x6c] sm:$0xf]
    %v6036 = vld [vmem:[%s5 + $0x70] sm:$0xf]
    %v6037 = vld [vmem:[%s5 + $0x74] sm:$0xf]
    %v6038 = vld [vmem:[%s5 + $0x78] sm:$0xf]
    %v6039 = vld [vmem:[%s5 + $0x7c] sm:$0xf]
    %v6040 = vld [vmem:[%s5 + $0x80] sm:$0xf]
    %v6041 = vld [vmem:[%s5 + $0x84] sm:$0xf]
    %v6042 = vld [vmem:[%s5 + $0x88] sm:$0xf]
    %v6043 = vld [vmem:[%s5 + $0x8c] sm:$0xf]
    %v6044 = vld [vmem:[%s5 + $0x90] sm:$0xf]
    %v6045 = vld [vmem:[%s5 + $0x94] sm:$0xf]
    %v6046 = vld [vmem:[%s5 + $0x98] sm:$0xf]
    %v6047 = vld [vmem:[%s5 + $0x9c] sm:$0xf]
    %v6048 = vld [vmem:[%s5 + $0xa0] sm:$0xf]
    %v6049 = vld [vmem:[%s5 + $0xa4] sm:$0xf]
    %v6050 = vld [vmem:[%s5 + $0xa8] sm:$0xf]
    %v6051 = vld [vmem:[%s5 + $0xac] sm:$0xf]
    %v6052 = vld [vmem:[%s5 + $0xb0] sm:$0xf]
    %v6053 = vld [vmem:[%s5 + $0xb4] sm:$0xf]
    %v6054 = vld [vmem:[%s5 + $0xb8] sm:$0xf]
    %v6055 = vld [vmem:[%s5 + $0xbc] sm:$0xf]
    %v6056 = vld [vmem:[%s5 + $0xc0] sm:$0xf]
    %v6057 = vld [vmem:[%s5 + $0xc4] sm:$0xf]
    %v6058 = vld [vmem:[%s5 + $0xc8] sm:$0xf]
    %v6059 = vld [vmem:[%s5 + $0xcc] sm:$0xf]
    %v6060 = vld [vmem:[%s5 + $0xd0] sm:$0xf]
    %v6061 = vld [vmem:[%s5 + $0xd4] sm:$0xf]
    %v6062 = vld [vmem:[%s5 + $0xd8] sm:$0xf]
    %v6063 = vld [vmem:[%s5 + $0xdc] sm:$0xf]
    %v6064 = vld [vmem:[%s5 + $0xe0] sm:$0xf]
    %v6065 = vld [vmem:[%s5 + $0xe4] sm:$0xf]
    %v6066 = vld [vmem:[%s5 + $0xe8] sm:$0xf]
    %v6067 = vld [vmem:[%s5 + $0xec] sm:$0xf]
    %v6068 = vld [vmem:[%s5 + $0xf0] sm:$0xf]
    %v6069 = vld [vmem:[%s5 + $0xf4] sm:$0xf]
    %v6070 = vld [vmem:[%s5 + $0xf8] sm:$0xf]
    %v6071 = vld [vmem:[%s5 + $0xfc] sm:$0xf]
    %v6072 = vld [vmem:[%s5 + $0x100] sm:$0xf]
    %v6073 = vld [vmem:[%s5 + $0x104] sm:$0xf]
    %v6074 = vld [vmem:[%s5 + $0x108] sm:$0xf]
    %v6075 = vld [vmem:[%s5 + $0x10c] sm:$0xf]
    %v6076 = vld [vmem:[%s5 + $0x110] sm:$0xf]
    %v6077 = vld [vmem:[%s5 + $0x114] sm:$0xf]
    %v6078 = vld [vmem:[%s5 + $0x118] sm:$0xf]
    %v6079 = vld [vmem:[%s5 + $0x11c] sm:$0xf]
    %v6080 = vld [vmem:[%s5 + $0x120] sm:$0xf]
    %v6081 = vld [vmem:[%s5 + $0x124] sm:$0xf]
    %v6082 = vld [vmem:[%s5 + $0x128] sm:$0xf]
    %v6083 = vld [vmem:[%s5 + $0x12c] sm:$0xf]
    %v6084 = vld [vmem:[%s5 + $0x130] sm:$0xf]
    %v6085 = vld [vmem:[%s5 + $0x134] sm:$0xf]
    %v6086 = vld [vmem:[%s5 + $0x138] sm:$0xf]
    %v6087 = vld [vmem:[%s5 + $0x13c] sm:$0xf]
    %v6088 = vld [vmem:[%s5 + $0x140] sm:$0xf]
    %v6089 = vld [vmem:[%s5 + $0x144] sm:$0xf]
    %v6090 = vld [vmem:[%s5 + $0x148] sm:$0xf]
    %v6091 = vld [vmem:[%s5 + $0x14c] sm:$0xf]
    %v6092 = vld [vmem:[%s5 + $0x150] sm:$0xf]
    %v6093 = vld [vmem:[%s5 + $0x154] sm:$0xf]
    %v6094 = vld [vmem:[%s5 + $0x158] sm:$0xf]
    %v6095 = vld [vmem:[%s5 + $0x15c] sm:$0xf]
    %v6096 = vld [vmem:[%s5 + $0x160] sm:$0xf]
    %v6097 = vld [vmem:[%s5 + $0x164] sm:$0xf]
    %v6098 = vld [vmem:[%s5 + $0x168] sm:$0xf]
    %v6099 = vld [vmem:[%s5 + $0x16c] sm:$0xf]
    %v6100 = vld [vmem:[%s5 + $0x170] sm:$0xf]
    %v6101 = vld [vmem:[%s5 + $0x174] sm:$0xf]
    %v6102 = vld [vmem:[%s5 + $0x178] sm:$0xf]
    %v6103 = vld [vmem:[%s5 + $0x17c] sm:$0xf]
    %v6104 = vld [vmem:[%s5 + $0x180] sm:$0xf]
    %v6105 = vld [vmem:[%s5 + $0x184] sm:$0xf]
    %v6106 = vld [vmem:[%s5 + $0x188] sm:$0xf]
    %v6107 = vld [vmem:[%s5 + $0x18c] sm:$0xf]
    %v6108 = vld [vmem:[%s5 + $0x190] sm:$0xf]
    %v6109 = vld [vmem:[%s5 + $0x194] sm:$0xf]
    %v6110 = vld [vmem:[%s5 + $0x198] sm:$0xf]
    %v6111 = vld [vmem:[%s5 + $0x19c] sm:$0xf]
    %v6112 = vld [vmem:[%s5 + $0x1a0] sm:$0xf]
    %v6113 = vld [vmem:[%s5 + $0x1a4] sm:$0xf]
    %v6114 = vld [vmem:[%s5 + $0x1a8] sm:$0xf]
    %v6115 = vld [vmem:[%s5 + $0x1ac] sm:$0xf]
    %v6116 = vld [vmem:[%s5 + $0x1b0] sm:$0xf]
    %v6117 = vld [vmem:[%s5 + $0x1b4] sm:$0xf]
    %v6118 = vld [vmem:[%s5 + $0x1b8] sm:$0xf]
    %v6119 = vld [vmem:[%s5 + $0x1bc] sm:$0xf]
    %v6120 = vld [vmem:[%s5 + $0x1c0] sm:$0xf]
    %v6121 = vld [vmem:[%s5 + $0x1c4] sm:$0xf]
    %v6122 = vld [vmem:[%s5 + $0x1c8] sm:$0xf]
    %v6123 = vld [vmem:[%s5 + $0x1cc] sm:$0xf]
    %v6124 = vld [vmem:[%s5 + $0x1d0] sm:$0xf]
    %v6125 = vld [vmem:[%s5 + $0x1d4] sm:$0xf]
    %v6126 = vld [vmem:[%s5 + $0x1d8] sm:$0xf]
    %v6127 = vld [vmem:[%s5 + $0x1dc] sm:$0xf]
    %v6128 = vld [vmem:[%s5 + $0x1e0] sm:$0xf]
    %v6129 = vld [vmem:[%s5 + $0x1e4] sm:$0xf]
    %v6130 = vld [vmem:[%s5 + $0x1e8] sm:$0xf]
    %v6131 = vld [vmem:[%s5 + $0x1ec] sm:$0xf]
    %v6132 = vld [vmem:[%s5 + $0x1f0] sm:$0xf]
    %v6133 = vld [vmem:[%s5 + $0x1f4] sm:$0xf]
    %v6134 = vld [vmem:[%s5 + $0x1f8] sm:$0xf]
    %v6135 = vld [vmem:[%s5 + $0x1fc] sm:$0xf]
    %v6136 = vld [vmem:[%s6] sm:$0x1]
    %v6138 = vlaneseq
    %v6139 = vshrl.u32 %v6138, 7
    %v6140 = vsub.s32 0, %v6139
    %v6141 = vrot.slane %v6136, %v6140
    %v6271 = vunpack.c.l.b16 %v6008
    %v6272 = vunpack.c.l.b16 %v6009
    %v6273 = vunpack.c.l.b16 %v6010
    %v6274 = vunpack.c.l.b16 %v6011
    %v6275 = vunpack.c.l.b16 %v6012
    %v6276 = vunpack.c.l.b16 %v6013
    %v6277 = vunpack.c.l.b16 %v6014
    %v6278 = vunpack.c.l.b16 %v6015
    %v6279 = vunpack.c.l.b16 %v6016
    %v6280 = vunpack.c.l.b16 %v6017
    %v6281 = vunpack.c.l.b16 %v6018
    %v6282 = vunpack.c.l.b16 %v6019
    %v6283 = vunpack.c.l.b16 %v6020
    %v6284 = vunpack.c.l.b16 %v6021
    %v6285 = vunpack.c.l.b16 %v6022
    %v6286 = vunpack.c.l.b16 %v6023
    %v6287 = vunpack.c.l.b16 %v6024
    %v6288 = vunpack.c.l.b16 %v6025
    %v6289 = vunpack.c.l.b16 %v6026
    %v6290 = vunpack.c.l.b16 %v6027
    %v6291 = vunpack.c.l.b16 %v6028
    %v6292 = vunpack.c.l.b16 %v6029
    %v6293 = vunpack.c.l.b16 %v6030
    %v6294 = vunpack.c.l.b16 %v6031
    %v6295 = vunpack.c.l.b16 %v6032
    %v6296 = vunpack.c.l.b16 %v6033
    %v6297 = vunpack.c.l.b16 %v6034
    %v6298 = vunpack.c.l.b16 %v6035
    %v6299 = vunpack.c.l.b16 %v6036
    %v6300 = vunpack.c.l.b16 %v6037
    %v6301 = vunpack.c.l.b16 %v6038
    %v6302 = vunpack.c.l.b16 %v6039
    %v6303 = vunpack.c.l.b16 %v6040
    %v6304 = vunpack.c.l.b16 %v6041
    %v6305 = vunpack.c.l.b16 %v6042
    %v6306 = vunpack.c.l.b16 %v6043
    %v6307 = vunpack.c.l.b16 %v6044
    %v6308 = vunpack.c.l.b16 %v6045
    %v6309 = vunpack.c.l.b16 %v6046
    %v6310 = vunpack.c.l.b16 %v6047
    %v6311 = vunpack.c.l.b16 %v6048
    %v6312 = vunpack.c.l.b16 %v6049
    %v6313 = vunpack.c.l.b16 %v6050
    %v6314 = vunpack.c.l.b16 %v6051
    %v6315 = vunpack.c.l.b16 %v6052
    %v6316 = vunpack.c.l.b16 %v6053
    %v6317 = vunpack.c.l.b16 %v6054
    %v6318 = vunpack.c.l.b16 %v6055
    %v6319 = vunpack.c.l.b16 %v6056
    %v6320 = vunpack.c.l.b16 %v6057
    %v6321 = vunpack.c.l.b16 %v6058
    %v6322 = vunpack.c.l.b16 %v6059
    %v6323 = vunpack.c.l.b16 %v6060
    %v6324 = vunpack.c.l.b16 %v6061
    %v6325 = vunpack.c.l.b16 %v6062
    %v6326 = vunpack.c.l.b16 %v6063
    %v6327 = vunpack.c.l.b16 %v6064
    %v6328 = vunpack.c.l.b16 %v6065
    %v6329 = vunpack.c.l.b16 %v6066
    %v6330 = vunpack.c.l.b16 %v6067
    %v6331 = vunpack.c.l.b16 %v6068
    %v6332 = vunpack.c.l.b16 %v6069
    %v6333 = vunpack.c.l.b16 %v6070
    %v6334 = vunpack.c.l.b16 %v6071
    %v6335 = vunpack.c.l.b16 %v6072
    %v6336 = vunpack.c.l.b16 %v6073
    %v6337 = vunpack.c.l.b16 %v6074
    %v6338 = vunpack.c.l.b16 %v6075
    %v6339 = vunpack.c.l.b16 %v6076
    %v6340 = vunpack.c.l.b16 %v6077
    %v6341 = vunpack.c.l.b16 %v6078
    %v6342 = vunpack.c.l.b16 %v6079
    %v6343 = vunpack.c.l.b16 %v6080
    %v6344 = vunpack.c.l.b16 %v6081
    %v6345 = vunpack.c.l.b16 %v6082
    %v6346 = vunpack.c.l.b16 %v6083
    %v6347 = vunpack.c.l.b16 %v6084
    %v6348 = vunpack.c.l.b16 %v6085
    %v6349 = vunpack.c.l.b16 %v6086
    %v6350 = vunpack.c.l.b16 %v6087
    %v6351 = vunpack.c.l.b16 %v6088
    %v6352 = vunpack.c.l.b16 %v6089
    %v6353 = vunpack.c.l.b16 %v6090
    %v6354 = vunpack.c.l.b16 %v6091
    %v6355 = vunpack.c.l.b16 %v6092
    %v6356 = vunpack.c.l.b16 %v6093
    %v6357 = vunpack.c.l.b16 %v6094
    %v6358 = vunpack.c.l.b16 %v6095
    %v6359 = vunpack.c.l.b16 %v6096
    %v6360 = vunpack.c.l.b16 %v6097
    %v6361 = vunpack.c.l.b16 %v6098
    %v6362 = vunpack.c.l.b16 %v6099
    %v6363 = vunpack.c.l.b16 %v6100
    %v6364 = vunpack.c.l.b16 %v6101
    %v6365 = vunpack.c.l.b16 %v6102
    %v6366 = vunpack.c.l.b16 %v6103
    %v6367 = vunpack.c.l.b16 %v6104
    %v6368 = vunpack.c.l.b16 %v6105
    %v6369 = vunpack.c.l.b16 %v6106
    %v6370 = vunpack.c.l.b16 %v6107
    %v6371 = vunpack.c.l.b16 %v6108
    %v6372 = vunpack.c.l.b16 %v6109
    %v6373 = vunpack.c.l.b16 %v6110
    %v6374 = vunpack.c.l.b16 %v6111
    %v6375 = vunpack.c.l.b16 %v6112
    %v6376 = vunpack.c.l.b16 %v6113
    %v6377 = vunpack.c.l.b16 %v6114
    %v6378 = vunpack.c.l.b16 %v6115
    %v6379 = vunpack.c.l.b16 %v6116
    %v6380 = vunpack.c.l.b16 %v6117
    %v6381 = vunpack.c.l.b16 %v6118
    %v6382 = vunpack.c.l.b16 %v6119
    %v6383 = vunpack.c.l.b16 %v6120
    %v6384 = vunpack.c.l.b16 %v6121
    %v6385 = vunpack.c.l.b16 %v6122
    %v6386 = vunpack.c.l.b16 %v6123
    %v6387 = vunpack.c.l.b16 %v6124
    %v6388 = vunpack.c.l.b16 %v6125
    %v6389 = vunpack.c.l.b16 %v6126
    %v6390 = vunpack.c.l.b16 %v6127
    %v6391 = vunpack.c.l.b16 %v6128
    %v6392 = vunpack.c.l.b16 %v6129
    %v6393 = vunpack.c.l.b16 %v6130
    %v6394 = vunpack.c.l.b16 %v6131
    %v6395 = vunpack.c.l.b16 %v6132
    %v6396 = vunpack.c.l.b16 %v6133
    %v6397 = vunpack.c.l.b16 %v6134
    %v6398 = vunpack.c.l.b16 %v6135
    %v6399 = vpack.c.b16 %v6272, %v6271
    %v6400 = vpack.c.b16 %v6274, %v6273
    %v6401 = vpack.c.b16 %v6276, %v6275
    %v6402 = vpack.c.b16 %v6278, %v6277
    %v6403 = vpack.c.b16 %v6280, %v6279
    %v6404 = vpack.c.b16 %v6282, %v6281
    %v6405 = vpack.c.b16 %v6284, %v6283
    %v6406 = vpack.c.b16 %v6286, %v6285
    %v6407 = vpack.c.b16 %v6288, %v6287
    %v6408 = vpack.c.b16 %v6290, %v6289
    %v6409 = vpack.c.b16 %v6292, %v6291
    %v6410 = vpack.c.b16 %v6294, %v6293
    %v6411 = vpack.c.b16 %v6296, %v6295
    %v6412 = vpack.c.b16 %v6298, %v6297
    %v6413 = vpack.c.b16 %v6300, %v6299
    %v6414 = vpack.c.b16 %v6302, %v6301
    %v6415 = vpack.c.b16 %v6304, %v6303
    %v6416 = vpack.c.b16 %v6306, %v6305
    %v6417 = vpack.c.b16 %v6308, %v6307
    %v6418 = vpack.c.b16 %v6310, %v6309
    %v6419 = vpack.c.b16 %v6312, %v6311
    %v6420 = vpack.c.b16 %v6314, %v6313
    %v6421 = vpack.c.b16 %v6316, %v6315
    %v6422 = vpack.c.b16 %v6318, %v6317
    %v6423 = vpack.c.b16 %v6320, %v6319
    %v6424 = vpack.c.b16 %v6322, %v6321
    %v6425 = vpack.c.b16 %v6324, %v6323
    %v6426 = vpack.c.b16 %v6326, %v6325
    %v6427 = vpack.c.b16 %v6328, %v6327
    %v6428 = vpack.c.b16 %v6330, %v6329
    %v6429 = vpack.c.b16 %v6332, %v6331
    %v6430 = vpack.c.b16 %v6334, %v6333
    %v6431 = vpack.c.b16 %v6336, %v6335
    %v6432 = vpack.c.b16 %v6338, %v6337
    %v6433 = vpack.c.b16 %v6340, %v6339
    %v6434 = vpack.c.b16 %v6342, %v6341
    %v6435 = vpack.c.b16 %v6344, %v6343
    %v6436 = vpack.c.b16 %v6346, %v6345
    %v6437 = vpack.c.b16 %v6348, %v6347
    %v6438 = vpack.c.b16 %v6350, %v6349
    %v6439 = vpack.c.b16 %v6352, %v6351
    %v6440 = vpack.c.b16 %v6354, %v6353
    %v6441 = vpack.c.b16 %v6356, %v6355
    %v6442 = vpack.c.b16 %v6358, %v6357
    %v6443 = vpack.c.b16 %v6360, %v6359
    %v6444 = vpack.c.b16 %v6362, %v6361
    %v6445 = vpack.c.b16 %v6364, %v6363
    %v6446 = vpack.c.b16 %v6366, %v6365
    %v6447 = vpack.c.b16 %v6368, %v6367
    %v6448 = vpack.c.b16 %v6370, %v6369
    %v6449 = vpack.c.b16 %v6372, %v6371
    %v6450 = vpack.c.b16 %v6374, %v6373
    %v6451 = vpack.c.b16 %v6376, %v6375
    %v6452 = vpack.c.b16 %v6378, %v6377
    %v6453 = vpack.c.b16 %v6380, %v6379
    %v6454 = vpack.c.b16 %v6382, %v6381
    %v6455 = vpack.c.b16 %v6384, %v6383
    %v6456 = vpack.c.b16 %v6386, %v6385
    %v6457 = vpack.c.b16 %v6388, %v6387
    %v6458 = vpack.c.b16 %v6390, %v6389
    %v6459 = vpack.c.b16 %v6392, %v6391
    %v6460 = vpack.c.b16 %v6394, %v6393
    %v6461 = vpack.c.b16 %v6396, %v6395
    %v6462 = vpack.c.b16 %v6398, %v6397
    %6527 = vmatprep.subr.bf16.mxu0 0
    %6528 = vmatpush1.bf16.msra.mxu0 %v6399
    %6529 = vmatprep.subr.bf16.mxu0 0
    %6530 = vmatpush1.bf16.msra.mxu0 %v6400
    %6531 = vmatprep.subr.bf16.mxu0 0
    %6532 = vmatpush1.bf16.msra.mxu0 %v6401
    %6533 = vmatprep.subr.bf16.mxu0 0
    %6534 = vmatpush1.bf16.msra.mxu0 %v6402
    %6535 = vmatprep.subr.bf16.mxu0 0
    %6536 = vmatpush1.bf16.msra.mxu0 %v6403
    %6537 = vmatprep.subr.bf16.mxu0 0
    %6538 = vmatpush1.bf16.msra.mxu0 %v6404
    %6539 = vmatprep.subr.bf16.mxu0 0
    %6540 = vmatpush1.bf16.msra.mxu0 %v6405
    %6541 = vmatprep.subr.bf16.mxu0 0
    %6542 = vmatpush1.bf16.msra.mxu0 %v6406
    %6543 = vmatprep.subr.bf16.mxu0 0
    %6544 = vmatpush1.bf16.msra.mxu0 %v6407
    %6545 = vmatprep.subr.bf16.mxu0 0
    %6546 = vmatpush1.bf16.msra.mxu0 %v6408
    %6547 = vmatprep.subr.bf16.mxu0 0
    %6548 = vmatpush1.bf16.msra.mxu0 %v6409
    %6549 = vmatprep.subr.bf16.mxu0 0
    %6550 = vmatpush1.bf16.msra.mxu0 %v6410
    %6551 = vmatprep.subr.bf16.mxu0 0
    %6552 = vmatpush1.bf16.msra.mxu0 %v6411
    %6553 = vmatprep.subr.bf16.mxu0 0
    %6554 = vmatpush1.bf16.msra.mxu0 %v6412
    %6555 = vmatprep.subr.bf16.mxu0 0
    %6556 = vmatpush1.bf16.msra.mxu0 %v6413
    %6557 = vmatprep.subr.bf16.mxu0 0
    %6558 = vmatpush1.bf16.msra.mxu0 %v6414
    %6559 = vmatprep.mubr.bf16.mxu0 %v6001
    %6560 = vmatmul.mubr.bf16.gmra.mrb[0].mxu0 %v6000
    %v6561 = vpop.f32.mrb[0].mxu0
    %v6562 = vadd.f32 %v6141, %v6561
    %v6563 = vpop.f32.mrb[0].mxu0
    %v6564 = vpop.f32.mrb[0].mxu0
    %v6565 = vadd.f32 %v6141, %v6564
    %v6566 = vpop.f32.mrb[0].mxu0
    %6567 = vdwg.mxu0
    %6568 = vmatprep.subr.bf16.mxu0 0
    %6569 = vmatpush1.bf16.msra.mxu0 %v6415
    %6570 = vmatprep.subr.bf16.mxu0 0
    %6571 = vmatpush1.bf16.msra.mxu0 %v6416
    %6572 = vmatprep.subr.bf16.mxu0 0
    %6573 = vmatpush1.bf16.msra.mxu0 %v6417
    %6574 = vmatprep.subr.bf16.mxu0 0
    %6575 = vmatpush1.bf16.msra.mxu0 %v6418
    %6576 = vmatprep.subr.bf16.mxu0 0
    %6577 = vmatpush1.bf16.msra.mxu0 %v6419
    %6578 = vmatprep.subr.bf16.mxu0 0
    %6579 = vmatpush1.bf16.msra.mxu0 %v6420
    %6580 = vmatprep.subr.bf16.mxu0 0
    %6581 = vmatpush1.bf16.msra.mxu0 %v6421
    %6582 = vmatprep.subr.bf16.mxu0 0
    %6583 = vmatpush1.bf16.msra.mxu0 %v6422
    %6584 = vmatprep.subr.bf16.mxu0 0
    %6585 = vmatpush1.bf16.msra.mxu0 %v6423
    %6586 = vmatprep.subr.bf16.mxu0 0
    %6587 = vmatpush1.bf16.msra.mxu0 %v6424
    %6588 = vmatprep.subr.bf16.mxu0 0
    %6589 = vmatpush1.bf16.msra.mxu0 %v6425
    %6590 = vmatprep.subr.bf16.mxu0 0
    %6591 = vmatpush1.bf16.msra.mxu0 %v6426
    %6592 = vmatprep.subr.bf16.mxu0 0
    %6593 = vmatpush1.bf16.msra.mxu0 %v6427
    %6594 = vmatprep.subr.bf16.mxu0 0
    %6595 = vmatpush1.bf16.msra.mxu0 %v6428
    %6596 = vmatprep.subr.bf16.mxu0 0
    %6597 = vmatpush1.bf16.msra.mxu0 %v6429
    %6598 = vmatprep.subr.bf16.mxu0 0
    %6599 = vmatpush1.bf16.msra.mxu0 %v6430
    %6600 = vmatprep.mubr.bf16.mxu0 %v6003
    %6601 = vmatmul.mubr.bf16.gmra.mrb[0].mxu0 %v6002
    %v6602 = vpop.f32.mrb[0].mxu0
    %v6603 = vadd.f32 %v6562, %v6602
    %v6604 = vpop.f32.mrb[0].mxu0
    %v6605 = vpop.f32.mrb[0].mxu0
    %v6606 = vadd.f32 %v6565, %v6605
    %v6607 = vpop.f32.mrb[0].mxu0
    %6608 = vdwg.mxu0
    %6609 = vmatprep.subr.bf16.mxu0 0
    %6610 = vmatpush1.bf16.msra.mxu0 %v6431
    %6611 = vmatprep.subr.bf16.mxu0 0
    %6612 = vmatpush1.bf16.msra.mxu0 %v6432
    %6613 = vmatprep.subr.bf16.mxu0 0
    %6614 = vmatpush1.bf16.msra.mxu0 %v6433
    %6615 = vmatprep.subr.bf16.mxu0 0
    %6616 = vmatpush1.bf16.msra.mxu0 %v6434
    %6617 = vmatprep.subr.bf16.mxu0 0
    %6618 = vmatpush1.bf16.msra.mxu0 %v6435
    %6619 = vmatprep.subr.bf16.mxu0 0
    %6620 = vmatpush1.bf16.msra.mxu0 %v6436
    %6621 = vmatprep.subr.bf16.mxu0 0
    %6622 = vmatpush1.bf16.msra.mxu0 %v6437
    %6623 = vmatprep.subr.bf16.mxu0 0
    %6624 = vmatpush1.bf16.msra.mxu0 %v6438
    %6625 = vmatprep.subr.bf16.mxu0 0
    %6626 = vmatpush1.bf16.msra.mxu0 %v6439
    %6627 = vmatprep.subr.bf16.mxu0 0
    %6628 = vmatpush1.bf16.msra.mxu0 %v6440
    %6629 = vmatprep.subr.bf16.mxu0 0
    %6630 = vmatpush1.bf16.msra.mxu0 %v6441
    %6631 = vmatprep.subr.bf16.mxu0 0
    %6632 = vmatpush1.bf16.msra.mxu0 %v6442
    %6633 = vmatprep.subr.bf16.mxu0 0
    %6634 = vmatpush1.bf16.msra.mxu0 %v6443
    %6635 = vmatprep.subr.bf16.mxu0 0
    %6636 = vmatpush1.bf16.msra.mxu0 %v6444
    %6637 = vmatprep.subr.bf16.mxu0 0
    %6638 = vmatpush1.bf16.msra.mxu0 %v6445
    %6639 = vmatprep.subr.bf16.mxu0 0
    %6640 = vmatpush1.bf16.msra.mxu0 %v6446
    %6641 = vmatprep.mubr.bf16.mxu0 %v6005
    %6642 = vmatmul.mubr.bf16.gmra.mrb[0].mxu0 %v6004
    %v6643 = vpop.f32.mrb[0].mxu0
    %v6644 = vadd.f32 %v6603, %v6643
    %v6645 = vpop.f32.mrb[0].mxu0
    %v6646 = vpop.f32.mrb[0].mxu0
    %v6647 = vadd.f32 %v6606, %v6646
    %v6648 = vpop.f32.mrb[0].mxu0
    %6649 = vdwg.mxu0
    %6650 = vmatprep.subr.bf16.mxu0 0
    %6651 = vmatpush1.bf16.msra.mxu0 %v6447
    %6652 = vmatprep.subr.bf16.mxu0 0
    %6653 = vmatpush1.bf16.msra.mxu0 %v6448
    %6654 = vmatprep.subr.bf16.mxu0 0
    %6655 = vmatpush1.bf16.msra.mxu0 %v6449
    %6656 = vmatprep.subr.bf16.mxu0 0
    %6657 = vmatpush1.bf16.msra.mxu0 %v6450
    %6658 = vmatprep.subr.bf16.mxu0 0
    %6659 = vmatpush1.bf16.msra.mxu0 %v6451
    %6660 = vmatprep.subr.bf16.mxu0 0
    %6661 = vmatpush1.bf16.msra.mxu0 %v6452
    %6662 = vmatprep.subr.bf16.mxu0 0
    %6663 = vmatpush1.bf16.msra.mxu0 %v6453
    %6664 = vmatprep.subr.bf16.mxu0 0
    %6665 = vmatpush1.bf16.msra.mxu0 %v6454
    %6666 = vmatprep.subr.bf16.mxu0 0
    %6667 = vmatpush1.bf16.msra.mxu0 %v6455
    %6668 = vmatprep.subr.bf16.mxu0 0
    %6669 = vmatpush1.bf16.msra.mxu0 %v6456
    %6670 = vmatprep.subr.bf16.mxu0 0
    %6671 = vmatpush1.bf16.msra.mxu0 %v6457
    %6672 = vmatprep.subr.bf16.mxu0 0
    %6673 = vmatpush1.bf16.msra.mxu0 %v6458
    %6674 = vmatprep.subr.bf16.mxu0 0
    %6675 = vmatpush1.bf16.msra.mxu0 %v6459
    %6676 = vmatprep.subr.bf16.mxu0 0
    %6677 = vmatpush1.bf16.msra.mxu0 %v6460
    %6678 = vmatprep.subr.bf16.mxu0 0
    %6679 = vmatpush1.bf16.msra.mxu0 %v6461
    %6680 = vmatprep.subr.bf16.mxu0 0
    %6681 = vmatpush1.bf16.msra.mxu0 %v6462
    %6682 = vmatprep.mubr.bf16.mxu0 %v6007
    %6683 = vmatmul.mubr.bf16.gmra.mrb[0].mxu0 %v6006
    %v6684 = vpop.f32.mrb[0].mxu0
    %v6685 = vadd.f32 %v6644, %v6684
    %v6686 = vpop.f32.mrb[0].mxu0
    %v6687 = vpop.f32.mrb[0].mxu0
    %v6688 = vadd.f32 %v6647, %v6687
    %v6689 = vpop.f32.mrb[0].mxu0
    %6690 = vdwg.mxu0
    %v6691 = vtanh.pop %v6685
    %v6692 = vtanh.pop %v6688
    %vm6693 = vcmask 31744
    %6694 = vst.msk [vmem:[%s7] sm:$0xff] %vm6693, %v6691
    %6695 = vst.msk [vmem:[%s7 + $0x8] sm:$0xff] %vm6693, %v6692
    // Predicated region
    $region38: #{actor_forward.1} parent=1 // pred_check
      _
    $region39: #{actor_forward.1} parent=1 // pred_check_branch
      %6697 = sbr.rel (0) target = $region41
    $region40: #{actor_forward.1} parent=1 // pred_region
      _
    $region41: #{actor_forward.1} parent=1 // pred_fallthru
      _
    // Predicated region
    $region42: #{actor_forward.1} parent=1 // pred_check
      _
    $region43: #{actor_forward.1} parent=1 // pred_check_branch
      %6699 = sbr.rel (0) target = $region45
    $region44: #{actor_forward.1} parent=1 // pred_region
      _
    $region45: #{actor_forward.1} parent=1 // pred_fallthru
      _
    %6700 = vsyncpa [#allocation4], 1

</llo_original>
